<compile_context>
chip_gen: v6e
topology: v6e:2x2x1
jax: 0.10.0
libtpu: 0.0.40
codegen_flags: <defaults>
</compile_context>

<pallas_src>
import functools

import jax
import jax.numpy as jnp
from jax import lax
from jax.experimental import pallas as pl
from jax.experimental.pallas import tpu as pltpu


# --------------------- fused (LSTM x2 + output projection) kernel -------------
def _fused_forward_kernel(gx0_ref, w_hh0_ref, w_cat1_ref, b1_ref,
                          h0_ref, c0_ref, lin_w_ref, lin_b_ref,
                          logits_ref, h_n_ref, c_n_ref,
                          acts_ref, *, hidden_dim, seq_len, unroll):
    H = hidden_dim
    batch = h_n_ref.shape[1]

    # Load (bf16) weights once; hoist layer-1 bias broadcast out of the loop
    # (JAX does not CSE broadcast_in_dim).
    w_hh0 = w_hh0_ref[...]                                   # (H, 4H)  bf16
    w_cat1 = w_cat1_ref[...]                                 # (2H, 4H) bf16
    b1 = jnp.broadcast_to(b1_ref[...], (batch, 4 * H))       # f32

    def gates_to_hc(g, c_prev):
        # PyTorch gate order [i, f, g, o]; H multiple of 128 -> aligned slices.
        # One EUP pass over the contiguous [i|f] slab instead of two.
        if_slab = jax.nn.sigmoid(g[:, :2 * H])
        i_g = if_slab[:, :H]
        f_g = if_slab[:, H:]
        g_g = jnp.tanh(g[:, 2 * H:3 * H])
        o_g = jax.nn.sigmoid(g[:, 3 * H:])
        c_new = f_g * c_prev + i_g * g_g
        h_new = o_g * jnp.tanh(c_new)
        return h_new, c_new

    def step(t, carry):
        h0, c0, h1, c1 = carry
        # Layer 0: input projection (+bias) precomputed in the gate table.
        g0 = gx0_ref[t] + jnp.dot(h0.astype(jnp.bfloat16), w_hh0,
                                  preferred_element_type=jnp.float32)
        h0n, c0n = gates_to_hc(g0, c0)
        # Layer 1: single merged matmul over [h0_new | h1] against [w_ih1; w_hh1].
        h_cat = jnp.concatenate([h0n, h1], axis=1).astype(jnp.bfloat16)
        g1 = jnp.dot(h_cat, w_cat1, preferred_element_type=jnp.float32) + b1
        h1n, c1n = gates_to_hc(g1, c1)
        # Stash layer-1 output row-block for the fused epilogue projection.
        row = pl.multiple_of(t * batch, 8)
        acts_ref[pl.ds(row, batch), :] = h1n
        return (h0n, c0n, h1n, c1n)

    init = (h0_ref[0], c0_ref[0], h0_ref[1], c0_ref[1])
    h0f, c0f, h1f, c1f = lax.fori_loop(0, seq_len, step, init, unroll=unroll)

    h_n_ref[0] = h0f
    h_n_ref[1] = h1f
    c_n_ref[0] = c0f
    c_n_ref[1] = c1f

    # Epilogue: one lane-dense MXU matmul over the whole (seq*batch, H) slab.
    acts = acts_ref[...].astype(jnp.bfloat16)
    logits_ref[...] = (jnp.dot(acts, lin_w_ref[...],
                               preferred_element_type=jnp.float32)
                       + lin_b_ref[...])


def fused_forward(gx0, w_hh0_bf, w_cat1_bf, b1, h_0, c_0, lin_w_bf, lin_b_p,
                  *, unroll):
    """gx0: (seq, batch_p, 4H) f32 precomputed layer-0 input gates (bias folded).
    Returns logits (seq*batch_p, vocab_p) f32, h_n, c_n (2, batch_p, H) f32."""
    seq_len, batch_p, four_h = gx0.shape
    H = four_h // 4
    vocab_p = lin_w_bf.shape[1]
    m = seq_len * batch_p

    kernel = functools.partial(_fused_forward_kernel, hidden_dim=H,
                               seq_len=seq_len, unroll=unroll)

    # Explicit VMEM budget (everything is resident; no grid -> no pipelining).
    # TODO(synk): for long seq / large H / large vocab, switch to a time-chunked
    # grid (h/c carried in scratch with pl.when init/finalize) and a
    # vocab-tiled epilogue so v7x's 64 MiB VMEM is not exceeded.
    vmem_bytes = (gx0.size * 4 + w_hh0_bf.size * 2 + w_cat1_bf.size * 2
                  + b1.size * 4 + h_0.size * 4 + c_0.size * 4
                  + lin_w_bf.size * 2 + lin_b_p.size * 4
                  + m * vocab_p * 4          # logits out
                  + 2 * 2 * batch_p * H * 4  # h_n, c_n out
                  + m * H * 4)               # acts scratch
    vmem_limit = int(min(max(2 * vmem_bytes + (2 << 20), 16 << 20), 64 << 20))

    return pl.pallas_call(
        kernel,
        out_shape=(
            jax.ShapeDtypeStruct((m, vocab_p), jnp.float32),
            jax.ShapeDtypeStruct((2, batch_p, H), jnp.float32),
            jax.ShapeDtypeStruct((2, batch_p, H), jnp.float32),
        ),
        scratch_shapes=[pltpu.VMEM((m, H), jnp.float32)],
        compiler_params=pltpu.CompilerParams(vmem_limit_bytes=vmem_limit),
    )(gx0, w_hh0_bf, w_cat1_bf, b1, h_0, c_0, lin_w_bf, lin_b_p)


# ------------------------------ Model wrapper ---------------------------------
class PoetryModelPallas:
    def __init__(self, vocab_size, embedding_dim, hidden_dim, key):
        assert hidden_dim % 128 == 0, "kernel assumes lane-aligned gate slices"
        self.vocab_size = vocab_size
        self.embedding_dim = embedding_dim
        self.hidden_dim = hidden_dim

        keys = jax.random.split(key, 11)
        u_min, u_max = -0.05, 0.05
        H = hidden_dim

        # Embedding weight, uniform(-0.05, 0.05) as in the reference module.
        self.emb = jax.random.uniform(keys[0], (vocab_size, embedding_dim),
                                      jnp.float32, u_min, u_max)

        # 2-layer LSTM params (PyTorch uniform(-1/sqrt(H), 1/sqrt(H))),
        # stored pre-transposed for x @ W form. Gate order [i, f, g, o].
        s = 1.0 / jnp.sqrt(jnp.float32(H))

        def U(k, shape):
            return jax.random.uniform(k, shape, jnp.float32, -s, s)

        # f32 master params (used by the pure-JAX reference).
        self.w_ih0 = U(keys[1], (embedding_dim, 4 * H))
        self.w_hh0 = U(keys[2], (H, 4 * H))
        self.b0 = U(keys[3], (1, 4 * H)) + U(keys[4], (1, 4 * H))   # b_ih + b_hh
        self.w_ih1 = U(keys[5], (H, 4 * H))
        self.w_hh1 = U(keys[6], (H, 4 * H))
        self.b1 = U(keys[7], (1, 4 * H)) + U(keys[8], (1, 4 * H))
        self.lin_w = U(keys[9], (H, vocab_size))
        self.lin_b = jax.random.uniform(keys[10], (1, vocab_size),
                                        jnp.float32, -s, s)

        # ---- derived inference-time parameters for the fused kernel ----
        # (a) per-token layer-0 gate table: take(emb,t) @ w_ih0 + b0
        #     == take(emb @ w_ih0 + b0, t); removes one matmul + one launch.
        self.gate_table = (self.emb @ self.w_ih0 + self.b0).astype(jnp.float32)
        # (b) bf16 MXU weights; layer-1 ih/hh weights merged into one (2H, 4H).
        self.w_hh0_bf = self.w_hh0.astype(jnp.bfloat16)
        self.w_cat1_bf = jnp.concatenate([self.w_ih1, self.w_hh1],
                                         axis=0).astype(jnp.bfloat16)
        # (c) vocab padded to a lane multiple -> unmasked lane-dense stores.
        self.vocab_p = ((vocab_size + 127) // 128) * 128
        pad_v = self.vocab_p - vocab_size
        self.lin_w_bf = jnp.pad(self.lin_w,
                                ((0, 0), (0, pad_v))).astype(jnp.bfloat16)
        self.lin_b_p = jnp.pad(self.lin_b, ((0, 0), (0, pad_v)))

    def __call__(self, tokens, hidden=None):
        """tokens: (seq_len, batch) int32. Returns (logits, (h_n, c_n))."""
        seq_len, batch = tokens.shape
        H = self.hidden_dim
        batch_p = ((batch + 7) // 8) * 8          # pad batch to sublane width

        if hidden is None:
            h_0 = jnp.zeros((2, batch_p, H), jnp.float32)
            c_0 = jnp.zeros((2, batch_p, H), jnp.float32)
        else:
            h_0, c_0 = hidden
            if batch_p != batch:
                pad = ((0, 0), (0, batch_p - batch), (0, 0))
                h_0 = jnp.pad(h_0, pad)
                c_0 = jnp.pad(c_0, pad)

        # TODO(synk): jnp.take clamps out-of-range token ids (nn.Embedding
        # would raise); inputs are assumed to be valid ids in [0, vocab).
        tok_p = tokens
        if batch_p != batch:
            tok_p = jnp.pad(tokens, ((0, 0), (0, batch_p - batch)))
        gx0 = jnp.take(self.gate_table, tok_p, axis=0)    # (seq, batch_p, 4H)

        logits_p, h_n, c_n = fused_forward(
            gx0, self.w_hh0_bf, self.w_cat1_bf, self.b1, h_0, c_0,
            self.lin_w_bf, self.lin_b_p, unroll=min(seq_len, 8))

        # Slice padded batch/vocab back out; flatten time-major like .view().
        logits = (logits_p.reshape(seq_len, batch_p, self.vocab_p)
                  [:, :batch, :self.vocab_size]
                  .reshape(seq_len * batch, self.vocab_size))
        return logits, (h_n[:, :batch], c_n[:, :batch])

    # Pure-JAX f32 reference (for correctness checking).
    def reference(self, tokens, hidden=None):
        seq_len, batch = tokens.shape
        H = self.hidden_dim
        if hidden is None:
            h_0 = jnp.zeros((2, batch, H), jnp.float32)
            c_0 = jnp.zeros((2, batch, H), jnp.float32)
        else:
            h_0, c_0 = hidden
        embeds = jnp.take(self.emb, tokens, axis=0)

        def run_layer(x, w_ih, w_hh, b, h0, c0):
            def step(carry, xt):
                h, c = carry
                g = xt @ w_ih + h @ w_hh + b
                i = jax.nn.sigmoid(g[:, 0 * H:1 * H])
                f = jax.nn.sigmoid(g[:, 1 * H:2 * H])
                gg = jnp.tanh(g[:, 2 * H:3 * H])
                o = jax.nn.sigmoid(g[:, 3 * H:4 * H])
                c = f * c + i * gg
                h = o * jnp.tanh(c)
                return (h, c), h
            (hf, cf), ys = lax.scan(step, (h0, c0), x)
            return ys, hf, cf

        out0, h0f, c0f = run_layer(embeds, self.w_ih0, self.w_hh0, self.b0,
                                   h_0[0], c_0[0])
        out1, h1f, c1f = run_layer(out0, self.w_ih1, self.w_hh1, self.b1,
                                   h_0[1], c_0[1])
        logits = out1.reshape(seq_len * batch, H) @ self.lin_w + self.lin_b
        return logits, (jnp.stack([h0f, h1f]), jnp.stack([c0f, c1f]))


if __name__ == "__main__":
    # Module defaults: embedding_dim=128, hidden_dim=256; small seq/batch/vocab.
    vocab_size = 512
    embedding_dim = 128
    hidden_dim = 256
    seq_len = 8
    batch = 8

    key = jax.random.PRNGKey(0)
    k_params, k_tokens = jax.random.split(key)

    model = PoetryModelPallas(vocab_size, embedding_dim, hidden_dim, k_params)
    tokens = jax.random.randint(k_tokens, (seq_len, batch), 0, vocab_size,
                                dtype=jnp.int32)

    logits, (h_n, c_n) = model(tokens)
    jax.block_until_ready((logits, h_n, c_n))

    assert logits.shape == (seq_len * batch, vocab_size)
    assert h_n.shape == (2, batch, hidden_dim)
    assert c_n.shape == (2, batch, hidden_dim)

    # Numerical check against the pure-f32 JAX reference (kernel uses bf16
    # MXU operands with f32 accumulation, so tolerance is loosened slightly).
    ref_logits, (ref_h, ref_c) = model.reference(tokens)
    assert jnp.allclose(logits, ref_logits, atol=1e-2, rtol=1e-2)
    assert jnp.allclose(h_n, ref_h, atol=1e-2, rtol=1e-2)
    assert jnp.allclose(c_n, ref_c, atol=1e-2, rtol=1e-2)

    print("KERNEL_OK")
</pallas_src>

<mosaic_0001>
module attributes {stable_mosaic.version = 11 : i64} {
  func.func @_fused_forward_kernel(%arg0: memref<8x8x1024xf32, #tpu.memory_space<vmem>>, %arg1: memref<256x1024xbf16, #tpu.memory_space<vmem>>, %arg2: memref<512x1024xbf16, #tpu.memory_space<vmem>>, %arg3: memref<1x1024xf32, #tpu.memory_space<vmem>>, %arg4: memref<2x8x256xf32, #tpu.memory_space<vmem>>, %arg5: memref<2x8x256xf32, #tpu.memory_space<vmem>>, %arg6: memref<256x512xbf16, #tpu.memory_space<vmem>>, %arg7: memref<1x512xf32, #tpu.memory_space<vmem>>, %arg8: memref<64x512xf32, #tpu.memory_space<vmem>>, %arg9: memref<2x8x256xf32, #tpu.memory_space<vmem>>, %arg10: memref<2x8x256xf32, #tpu.memory_space<vmem>>, %arg11: memref<64x256xf32, #tpu.memory_space<vmem>>) attributes {dimension_semantics = [], scalar_prefetch = 0 : i64, scratch_operands = 1 : i64, tpu.core_type = #tpu.core_type<tc>} {
    %c0 = arith.constant 0 : index
    %c0_0 = arith.constant 0 : index
    %0 = vector.load %arg1[%c0, %c0_0] : memref<256x1024xbf16, #tpu.memory_space<vmem>>, vector<256x1024xbf16>
    %c0_1 = arith.constant 0 : index
    %c0_2 = arith.constant 0 : index
    %1 = vector.load %arg2[%c0_1, %c0_2] : memref<512x1024xbf16, #tpu.memory_space<vmem>>, vector<512x1024xbf16>
    %c0_3 = arith.constant 0 : index
    %c0_4 = arith.constant 0 : index
    %2 = vector.load %arg3[%c0_3, %c0_4] : memref<1x1024xf32, #tpu.memory_space<vmem>>, vector<1x1024xf32>
    %3 = vector.shape_cast %2 : vector<1x1024xf32> to vector<1x1024xf32>
    %4 = vector.broadcast %3 : vector<1x1024xf32> to vector<8x1024xf32>
    %c0_5 = arith.constant 0 : index
    %c0_6 = arith.constant 0 : index
    %c0_7 = arith.constant 0 : index
    %5 = vector.load %arg4[%c0_5, %c0_6, %c0_7] : memref<2x8x256xf32, #tpu.memory_space<vmem>>, vector<1x8x256xf32>
    %6 = vector.shape_cast %5 : vector<1x8x256xf32> to vector<8x256xf32>
    %c0_8 = arith.constant 0 : index
    %c0_9 = arith.constant 0 : index
    %c0_10 = arith.constant 0 : index
    %7 = vector.load %arg5[%c0_8, %c0_9, %c0_10] : memref<2x8x256xf32, #tpu.memory_space<vmem>>, vector<1x8x256xf32>
    %8 = vector.shape_cast %7 : vector<1x8x256xf32> to vector<8x256xf32>
    %c1 = arith.constant 1 : index
    %c0_11 = arith.constant 0 : index
    %c0_12 = arith.constant 0 : index
    %9 = vector.load %arg4[%c1, %c0_11, %c0_12] : memref<2x8x256xf32, #tpu.memory_space<vmem>>, vector<1x8x256xf32>
    %10 = vector.shape_cast %9 : vector<1x8x256xf32> to vector<8x256xf32>
    %c1_13 = arith.constant 1 : index
    %c0_14 = arith.constant 0 : index
    %c0_15 = arith.constant 0 : index
    %11 = vector.load %arg5[%c1_13, %c0_14, %c0_15] : memref<2x8x256xf32, #tpu.memory_space<vmem>>, vector<1x8x256xf32>
    %12 = vector.shape_cast %11 : vector<1x8x256xf32> to vector<8x256xf32>
    %c0_i32 = arith.constant 0 : i32
    %13 = arith.index_cast %c0_i32 : i32 to index
    %c0_16 = arith.constant 0 : index
    %c0_17 = arith.constant 0 : index
    %14 = vector.load %arg0[%13, %c0_16, %c0_17] : memref<8x8x1024xf32, #tpu.memory_space<vmem>>, vector<1x8x1024xf32>
    %15 = vector.shape_cast %14 : vector<1x8x1024xf32> to vector<8x1024xf32>
    %16 = arith.truncf %6 : vector<8x256xf32> to vector<8x256xbf16>
    %cst = arith.constant dense<0.000000e+00> : vector<8x1024xf32>
    %17 = tpu.matmul %16, %0, %cst {dimension_numbers = #tpu.dot_dimension_numbers<[1], [0], [0], [1], [0, 0, 1, 1], [], []>} : vector<8x256xbf16>, vector<256x1024xbf16>, vector<8x1024xf32> -> vector<8x1024xf32>
    %18 = arith.addf %15, %17 : vector<8x1024xf32>
    %19 = vector.extract_strided_slice %18 {offsets = [0, 0], sizes = [8, 512], strides = [1, 1]} : vector<8x1024xf32> to vector<8x512xf32>
    %20 = arith.negf %19 : vector<8x512xf32>
    %21 = math.exp %20 : vector<8x512xf32>
    %cst_18 = arith.constant 1.000000e+00 : f32
    %22 = vector.broadcast %cst_18 : f32 to vector<8x512xf32>
    %23 = arith.addf %22, %21 : vector<8x512xf32>
    %24 = arith.divf %22, %23 : vector<8x512xf32>
    %25 = vector.extract_strided_slice %24 {offsets = [0, 0], sizes = [8, 256], strides = [1, 1]} : vector<8x512xf32> to vector<8x256xf32>
    %26 = vector.extract_strided_slice %24 {offsets = [0, 256], sizes = [8, 256], strides = [1, 1]} : vector<8x512xf32> to vector<8x256xf32>
    %27 = vector.extract_strided_slice %18 {offsets = [0, 512], sizes = [8, 256], strides = [1, 1]} : vector<8x1024xf32> to vector<8x256xf32>
    %28 = math.tanh %27 : vector<8x256xf32>
    %29 = vector.extract_strided_slice %18 {offsets = [0, 768], sizes = [8, 256], strides = [1, 1]} : vector<8x1024xf32> to vector<8x256xf32>
    %30 = arith.negf %29 : vector<8x256xf32>
    %31 = math.exp %30 : vector<8x256xf32>
    %cst_19 = arith.constant 1.000000e+00 : f32
    %32 = vector.broadcast %cst_19 : f32 to vector<8x256xf32>
    %33 = arith.addf %32, %31 : vector<8x256xf32>
    %34 = arith.divf %32, %33 : vector<8x256xf32>
    %35 = arith.mulf %26, %8 : vector<8x256xf32>
    %36 = arith.mulf %25, %28 : vector<8x256xf32>
    %37 = arith.addf %35, %36 : vector<8x256xf32>
    %38 = math.tanh %37 : vector<8x256xf32>
    %39 = arith.mulf %34, %38 : vector<8x256xf32>
    %40 = tpu.concatenate %39, %10 in 1 : vector<8x256xf32>, vector<8x256xf32> -> vector<8x512xf32>
    %41 = arith.truncf %40 : vector<8x512xf32> to vector<8x512xbf16>
    %cst_20 = arith.constant dense<0.000000e+00> : vector<8x1024xf32>
    %42 = tpu.matmul %41, %1, %cst_20 {dimension_numbers = #tpu.dot_dimension_numbers<[1], [0], [0], [1], [0, 0, 1, 1], [], []>} : vector<8x512xbf16>, vector<512x1024xbf16>, vector<8x1024xf32> -> vector<8x1024xf32>
    %43 = arith.addf %42, %4 : vector<8x1024xf32>
    %44 = vector.extract_strided_slice %43 {offsets = [0, 0], sizes = [8, 512], strides = [1, 1]} : vector<8x1024xf32> to vector<8x512xf32>
    %45 = arith.negf %44 : vector<8x512xf32>
    %46 = math.exp %45 : vector<8x512xf32>
    %cst_21 = arith.constant 1.000000e+00 : f32
    %47 = vector.broadcast %cst_21 : f32 to vector<8x512xf32>
    %48 = arith.addf %47, %46 : vector<8x512xf32>
    %49 = arith.divf %47, %48 : vector<8x512xf32>
    %50 = vector.extract_strided_slice %49 {offsets = [0, 0], sizes = [8, 256], strides = [1, 1]} : vector<8x512xf32> to vector<8x256xf32>
    %51 = vector.extract_strided_slice %49 {offsets = [0, 256], sizes = [8, 256], strides = [1, 1]} : vector<8x512xf32> to vector<8x256xf32>
    %52 = vector.extract_strided_slice %43 {offsets = [0, 512], sizes = [8, 256], strides = [1, 1]} : vector<8x1024xf32> to vector<8x256xf32>
    %53 = math.tanh %52 : vector<8x256xf32>
    %54 = vector.extract_strided_slice %43 {offsets = [0, 768], sizes = [8, 256], strides = [1, 1]} : vector<8x1024xf32> to vector<8x256xf32>
    %55 = arith.negf %54 : vector<8x256xf32>
    %56 = math.exp %55 : vector<8x256xf32>
    %cst_22 = arith.constant 1.000000e+00 : f32
    %57 = vector.broadcast %cst_22 : f32 to vector<8x256xf32>
    %58 = arith.addf %57, %56 : vector<8x256xf32>
    %59 = arith.divf %57, %58 : vector<8x256xf32>
    %60 = arith.mulf %51, %12 : vector<8x256xf32>
    %61 = arith.mulf %50, %53 : vector<8x256xf32>
    %62 = arith.addf %60, %61 : vector<8x256xf32>
    %63 = math.tanh %62 : vector<8x256xf32>
    %64 = arith.mulf %59, %63 : vector<8x256xf32>
    %c8_i32 = arith.constant 8 : i32
    %65 = arith.muli %c0_i32, %c8_i32 : i32
    %66 = tpu.assume_multiple %65, 8 : i32
    %67 = arith.index_cast %66 : i32 to index
    %c0_23 = arith.constant 0 : index
    %68 = vector.load %arg11[%67, %c0_23] : memref<64x256xf32, #tpu.memory_space<vmem>>, vector<8x256xf32>
    tpu.vector_store %arg11[%67, %c0_23], %64 {strides = array<i32>} : memref<64x256xf32, #tpu.memory_space<vmem>>, vector<8x256xf32>,
    %c1_i32 = arith.constant 1 : i32
    %69 = arith.index_cast %c1_i32 : i32 to index
    %c0_24 = arith.constant 0 : index
    %c0_25 = arith.constant 0 : index
    %70 = vector.load %arg0[%69, %c0_24, %c0_25] : memref<8x8x1024xf32, #tpu.memory_space<vmem>>, vector<1x8x1024xf32>
    %71 = vector.shape_cast %70 : vector<1x8x1024xf32> to vector<8x1024xf32>
    %72 = arith.truncf %39 : vector<8x256xf32> to vector<8x256xbf16>
    %cst_26 = arith.constant dense<0.000000e+00> : vector<8x1024xf32>
    %73 = tpu.matmul %72, %0, %cst_26 {dimension_numbers = #tpu.dot_dimension_numbers<[1], [0], [0], [1], [0, 0, 1, 1], [], []>} : vector<8x256xbf16>, vector<256x1024xbf16>, vector<8x1024xf32> -> vector<8x1024xf32>
    %74 = arith.addf %71, %73 : vector<8x1024xf32>
    %75 = vector.extract_strided_slice %74 {offsets = [0, 0], sizes = [8, 512], strides = [1, 1]} : vector<8x1024xf32> to vector<8x512xf32>
    %76 = arith.negf %75 : vector<8x512xf32>
    %77 = math.exp %76 : vector<8x512xf32>
    %cst_27 = arith.constant 1.000000e+00 : f32
    %78 = vector.broadcast %cst_27 : f32 to vector<8x512xf32>
    %79 = arith.addf %78, %77 : vector<8x512xf32>
    %80 = arith.divf %78, %79 : vector<8x512xf32>
    %81 = vector.extract_strided_slice %80 {offsets = [0, 0], sizes = [8, 256], strides = [1, 1]} : vector<8x512xf32> to vector<8x256xf32>
    %82 = vector.extract_strided_slice %80 {offsets = [0, 256], sizes = [8, 256], strides = [1, 1]} : vector<8x512xf32> to vector<8x256xf32>
    %83 = vector.extract_strided_slice %74 {offsets = [0, 512], sizes = [8, 256], strides = [1, 1]} : vector<8x1024xf32> to vector<8x256xf32>
    %84 = math.tanh %83 : vector<8x256xf32>
    %85 = vector.extract_strided_slice %74 {offsets = [0, 768], sizes = [8, 256], strides = [1, 1]} : vector<8x1024xf32> to vector<8x256xf32>
    %86 = arith.negf %85 : vector<8x256xf32>
    %87 = math.exp %86 : vector<8x256xf32>
    %cst_28 = arith.constant 1.000000e+00 : f32
    %88 = vector.broadcast %cst_28 : f32 to vector<8x256xf32>
    %89 = arith.addf %88, %87 : vector<8x256xf32>
    %90 = arith.divf %88, %89 : vector<8x256xf32>
    %91 = arith.mulf %82, %37 : vector<8x256xf32>
    %92 = arith.mulf %81, %84 : vector<8x256xf32>
    %93 = arith.addf %91, %92 : vector<8x256xf32>
    %94 = math.tanh %93 : vector<8x256xf32>
    %95 = arith.mulf %90, %94 : vector<8x256xf32>
    %96 = tpu.concatenate %95, %64 in 1 : vector<8x256xf32>, vector<8x256xf32> -> vector<8x512xf32>
    %97 = arith.truncf %96 : vector<8x512xf32> to vector<8x512xbf16>
    %cst_29 = arith.constant dense<0.000000e+00> : vector<8x1024xf32>
    %98 = tpu.matmul %97, %1, %cst_29 {dimension_numbers = #tpu.dot_dimension_numbers<[1], [0], [0], [1], [0, 0, 1, 1], [], []>} : vector<8x512xbf16>, vector<512x1024xbf16>, vector<8x1024xf32> -> vector<8x1024xf32>
    %99 = arith.addf %98, %4 : vector<8x1024xf32>
    %100 = vector.extract_strided_slice %99 {offsets = [0, 0], sizes = [8, 512], strides = [1, 1]} : vector<8x1024xf32> to vector<8x512xf32>
    %101 = arith.negf %100 : vector<8x512xf32>
    %102 = math.exp %101 : vector<8x512xf32>
    %cst_30 = arith.constant 1.000000e+00 : f32
    %103 = vector.broadcast %cst_30 : f32 to vector<8x512xf32>
    %104 = arith.addf %103, %102 : vector<8x512xf32>
    %105 = arith.divf %103, %104 : vector<8x512xf32>
    %106 = vector.extract_strided_slice %105 {offsets = [0, 0], sizes = [8, 256], strides = [1, 1]} : vector<8x512xf32> to vector<8x256xf32>
    %107 = vector.extract_strided_slice %105 {offsets = [0, 256], sizes = [8, 256], strides = [1, 1]} : vector<8x512xf32> to vector<8x256xf32>
    %108 = vector.extract_strided_slice %99 {offsets = [0, 512], sizes = [8, 256], strides = [1, 1]} : vector<8x1024xf32> to vector<8x256xf32>
    %109 = math.tanh %108 : vector<8x256xf32>
    %110 = vector.extract_strided_slice %99 {offsets = [0, 768], sizes = [8, 256], strides = [1, 1]} : vector<8x1024xf32> to vector<8x256xf32>
    %111 = arith.negf %110 : vector<8x256xf32>
    %112 = math.exp %111 : vector<8x256xf32>
    %cst_31 = arith.constant 1.000000e+00 : f32
    %113 = vector.broadcast %cst_31 : f32 to vector<8x256xf32>
    %114 = arith.addf %113, %112 : vector<8x256xf32>
    %115 = arith.divf %113, %114 : vector<8x256xf32>
    %116 = arith.mulf %107, %62 : vector<8x256xf32>
    %117 = arith.mulf %106, %109 : vector<8x256xf32>
    %118 = arith.addf %116, %117 : vector<8x256xf32>
    %119 = math.tanh %118 : vector<8x256xf32>
    %120 = arith.mulf %115, %119 : vector<8x256xf32>
    %c8_i32_32 = arith.constant 8 : i32
    %121 = arith.muli %c1_i32, %c8_i32_32 : i32
    %122 = tpu.assume_multiple %121, 8 : i32
    %123 = arith.index_cast %122 : i32 to index
    %c0_33 = arith.constant 0 : index
    %124 = vector.load %arg11[%123, %c0_33] : memref<64x256xf32, #tpu.memory_space<vmem>>, vector<8x256xf32>
    tpu.vector_store %arg11[%123, %c0_33], %120 {strides = array<i32>} : memref<64x256xf32, #tpu.memory_space<vmem>>, vector<8x256xf32>,
    %c2_i32 = arith.constant 2 : i32
    %125 = arith.index_cast %c2_i32 : i32 to index
    %c0_34 = arith.constant 0 : index
    %c0_35 = arith.constant 0 : index
    %126 = vector.load %arg0[%125, %c0_34, %c0_35] : memref<8x8x1024xf32, #tpu.memory_space<vmem>>, vector<1x8x1024xf32>
    %127 = vector.shape_cast %126 : vector<1x8x1024xf32> to vector<8x1024xf32>
    %128 = arith.truncf %95 : vector<8x256xf32> to vector<8x256xbf16>
    %cst_36 = arith.constant dense<0.000000e+00> : vector<8x1024xf32>
    %129 = tpu.matmul %128, %0, %cst_36 {dimension_numbers = #tpu.dot_dimension_numbers<[1], [0], [0], [1], [0, 0, 1, 1], [], []>} : vector<8x256xbf16>, vector<256x1024xbf16>, vector<8x1024xf32> -> vector<8x1024xf32>
    %130 = arith.addf %127, %129 : vector<8x1024xf32>
    %131 = vector.extract_strided_slice %130 {offsets = [0, 0], sizes = [8, 512], strides = [1, 1]} : vector<8x1024xf32> to vector<8x512xf32>
    %132 = arith.negf %131 : vector<8x512xf32>
    %133 = math.exp %132 : vector<8x512xf32>
    %cst_37 = arith.constant 1.000000e+00 : f32
    %134 = vector.broadcast %cst_37 : f32 to vector<8x512xf32>
    %135 = arith.addf %134, %133 : vector<8x512xf32>
    %136 = arith.divf %134, %135 : vector<8x512xf32>
    %137 = vector.extract_strided_slice %136 {offsets = [0, 0], sizes = [8, 256], strides = [1, 1]} : vector<8x512xf32> to vector<8x256xf32>
    %138 = vector.extract_strided_slice %136 {offsets = [0, 256], sizes = [8, 256], strides = [1, 1]} : vector<8x512xf32> to vector<8x256xf32>
    %139 = vector.extract_strided_slice %130 {offsets = [0, 512], sizes = [8, 256], strides = [1, 1]} : vector<8x1024xf32> to vector<8x256xf32>
    %140 = math.tanh %139 : vector<8x256xf32>
    %141 = vector.extract_strided_slice %130 {offsets = [0, 768], sizes = [8, 256], strides = [1, 1]} : vector<8x1024xf32> to vector<8x256xf32>
    %142 = arith.negf %141 : vector<8x256xf32>
    %143 = math.exp %142 : vector<8x256xf32>
    %cst_38 = arith.constant 1.000000e+00 : f32
    %144 = vector.broadcast %cst_38 : f32 to vector<8x256xf32>
    %145 = arith.addf %144, %143 : vector<8x256xf32>
    %146 = arith.divf %144, %145 : vector<8x256xf32>
    %147 = arith.mulf %138, %93 : vector<8x256xf32>
    %148 = arith.mulf %137, %140 : vector<8x256xf32>
    %149 = arith.addf %147, %148 : vector<8x256xf32>
    %150 = math.tanh %149 : vector<8x256xf32>
    %151 = arith.mulf %146, %150 : vector<8x256xf32>
    %152 = tpu.concatenate %151, %120 in 1 : vector<8x256xf32>, vector<8x256xf32> -> vector<8x512xf32>
    %153 = arith.truncf %152 : vector<8x512xf32> to vector<8x512xbf16>
    %cst_39 = arith.constant dense<0.000000e+00> : vector<8x1024xf32>
    %154 = tpu.matmul %153, %1, %cst_39 {dimension_numbers = #tpu.dot_dimension_numbers<[1], [0], [0], [1], [0, 0, 1, 1], [], []>} : vector<8x512xbf16>, vector<512x1024xbf16>, vector<8x1024xf32> -> vector<8x1024xf32>
    %155 = arith.addf %154, %4 : vector<8x1024xf32>
    %156 = vector.extract_strided_slice %155 {offsets = [0, 0], sizes = [8, 512], strides = [1, 1]} : vector<8x1024xf32> to vector<8x512xf32>
    %157 = arith.negf %156 : vector<8x512xf32>
    %158 = math.exp %157 : vector<8x512xf32>
    %cst_40 = arith.constant 1.000000e+00 : f32
    %159 = vector.broadcast %cst_40 : f32 to vector<8x512xf32>
    %160 = arith.addf %159, %158 : vector<8x512xf32>
    %161 = arith.divf %159, %160 : vector<8x512xf32>
    %162 = vector.extract_strided_slice %161 {offsets = [0, 0], sizes = [8, 256], strides = [1, 1]} : vector<8x512xf32> to vector<8x256xf32>
    %163 = vector.extract_strided_slice %161 {offsets = [0, 256], sizes = [8, 256], strides = [1, 1]} : vector<8x512xf32> to vector<8x256xf32>
    %164 = vector.extract_strided_slice %155 {offsets = [0, 512], sizes = [8, 256], strides = [1, 1]} : vector<8x1024xf32> to vector<8x256xf32>
    %165 = math.tanh %164 : vector<8x256xf32>
    %166 = vector.extract_strided_slice %155 {offsets = [0, 768], sizes = [8, 256], strides = [1, 1]} : vector<8x1024xf32> to vector<8x256xf32>
    %167 = arith.negf %166 : vector<8x256xf32>
    %168 = math.exp %167 : vector<8x256xf32>
    %cst_41 = arith.constant 1.000000e+00 : f32
    %169 = vector.broadcast %cst_41 : f32 to vector<8x256xf32>
    %170 = arith.addf %169, %168 : vector<8x256xf32>
    %171 = arith.divf %169, %170 : vector<8x256xf32>
    %172 = arith.mulf %163, %118 : vector<8x256xf32>
    %173 = arith.mulf %162, %165 : vector<8x256xf32>
    %174 = arith.addf %172, %173 : vector<8x256xf32>
    %175 = math.tanh %174 : vector<8x256xf32>
    %176 = arith.mulf %171, %175 : vector<8x256xf32>
    %c8_i32_42 = arith.constant 8 : i32
    %177 = arith.muli %c2_i32, %c8_i32_42 : i32
    %178 = tpu.assume_multiple %177, 8 : i32
    %179 = arith.index_cast %178 : i32 to index
    %c0_43 = arith.constant 0 : index
    %180 = vector.load %arg11[%179, %c0_43] : memref<64x256xf32, #tpu.memory_space<vmem>>, vector<8x256xf32>
    tpu.vector_store %arg11[%179, %c0_43], %176 {strides = array<i32>} : memref<64x256xf32, #tpu.memory_space<vmem>>, vector<8x256xf32>,
    %c3_i32 = arith.constant 3 : i32
    %181 = arith.index_cast %c3_i32 : i32 to index
    %c0_44 = arith.constant 0 : index
    %c0_45 = arith.constant 0 : index
    %182 = vector.load %arg0[%181, %c0_44, %c0_45] : memref<8x8x1024xf32, #tpu.memory_space<vmem>>, vector<1x8x1024xf32>
    %183 = vector.shape_cast %182 : vector<1x8x1024xf32> to vector<8x1024xf32>
    %184 = arith.truncf %151 : vector<8x256xf32> to vector<8x256xbf16>
    %cst_46 = arith.constant dense<0.000000e+00> : vector<8x1024xf32>
    %185 = tpu.matmul %184, %0, %cst_46 {dimension_numbers = #tpu.dot_dimension_numbers<[1], [0], [0], [1], [0, 0, 1, 1], [], []>} : vector<8x256xbf16>, vector<256x1024xbf16>, vector<8x1024xf32> -> vector<8x1024xf32>
    %186 = arith.addf %183, %185 : vector<8x1024xf32>
    %187 = vector.extract_strided_slice %186 {offsets = [0, 0], sizes = [8, 512], strides = [1, 1]} : vector<8x1024xf32> to vector<8x512xf32>
    %188 = arith.negf %187 : vector<8x512xf32>
    %189 = math.exp %188 : vector<8x512xf32>
    %cst_47 = arith.constant 1.000000e+00 : f32
    %190 = vector.broadcast %cst_47 : f32 to vector<8x512xf32>
    %191 = arith.addf %190, %189 : vector<8x512xf32>
    %192 = arith.divf %190, %191 : vector<8x512xf32>
    %193 = vector.extract_strided_slice %192 {offsets = [0, 0], sizes = [8, 256], strides = [1, 1]} : vector<8x512xf32> to vector<8x256xf32>
    %194 = vector.extract_strided_slice %192 {offsets = [0, 256], sizes = [8, 256], strides = [1, 1]} : vector<8x512xf32> to vector<8x256xf32>
    %195 = vector.extract_strided_slice %186 {offsets = [0, 512], sizes = [8, 256], strides = [1, 1]} : vector<8x1024xf32> to vector<8x256xf32>
    %196 = math.tanh %195 : vector<8x256xf32>
    %197 = vector.extract_strided_slice %186 {offsets = [0, 768], sizes = [8, 256], strides = [1, 1]} : vector<8x1024xf32> to vector<8x256xf32>
    %198 = arith.negf %197 : vector<8x256xf32>
    %199 = math.exp %198 : vector<8x256xf32>
    %cst_48 = arith.constant 1.000000e+00 : f32
    %200 = vector.broadcast %cst_48 : f32 to vector<8x256xf32>
    %201 = arith.addf %200, %199 : vector<8x256xf32>
    %202 = arith.divf %200, %201 : vector<8x256xf32>
    %203 = arith.mulf %194, %149 : vector<8x256xf32>
    %204 = arith.mulf %193, %196 : vector<8x256xf32>
    %205 = arith.addf %203, %204 : vector<8x256xf32>
    %206 = math.tanh %205 : vector<8x256xf32>
    %207 = arith.mulf %202, %206 : vector<8x256xf32>
    %208 = tpu.concatenate %207, %176 in 1 : vector<8x256xf32>, vector<8x256xf32> -> vector<8x512xf32>
    %209 = arith.truncf %208 : vector<8x512xf32> to vector<8x512xbf16>
    %cst_49 = arith.constant dense<0.000000e+00> : vector<8x1024xf32>
    %210 = tpu.matmul %209, %1, %cst_49 {dimension_numbers = #tpu.dot_dimension_numbers<[1], [0], [0], [1], [0, 0, 1, 1], [], []>} : vector<8x512xbf16>, vector<512x1024xbf16>, vector<8x1024xf32> -> vector<8x1024xf32>
    %211 = arith.addf %210, %4 : vector<8x1024xf32>
    %212 = vector.extract_strided_slice %211 {offsets = [0, 0], sizes = [8, 512], strides = [1, 1]} : vector<8x1024xf32> to vector<8x512xf32>
    %213 = arith.negf %212 : vector<8x512xf32>
    %214 = math.exp %213 : vector<8x512xf32>
    %cst_50 = arith.constant 1.000000e+00 : f32
    %215 = vector.broadcast %cst_50 : f32 to vector<8x512xf32>
    %216 = arith.addf %215, %214 : vector<8x512xf32>
    %217 = arith.divf %215, %216 : vector<8x512xf32>
    %218 = vector.extract_strided_slice %217 {offsets = [0, 0], sizes = [8, 256], strides = [1, 1]} : vector<8x512xf32> to vector<8x256xf32>
    %219 = vector.extract_strided_slice %217 {offsets = [0, 256], sizes = [8, 256], strides = [1, 1]} : vector<8x512xf32> to vector<8x256xf32>
    %220 = vector.extract_strided_slice %211 {offsets = [0, 512], sizes = [8, 256], strides = [1, 1]} : vector<8x1024xf32> to vector<8x256xf32>
    %221 = math.tanh %220 : vector<8x256xf32>
    %222 = vector.extract_strided_slice %211 {offsets = [0, 768], sizes = [8, 256], strides = [1, 1]} : vector<8x1024xf32> to vector<8x256xf32>
    %223 = arith.negf %222 : vector<8x256xf32>
    %224 = math.exp %223 : vector<8x256xf32>
    %cst_51 = arith.constant 1.000000e+00 : f32
    %225 = vector.broadcast %cst_51 : f32 to vector<8x256xf32>
    %226 = arith.addf %225, %224 : vector<8x256xf32>
    %227 = arith.divf %225, %226 : vector<8x256xf32>
    %228 = arith.mulf %219, %174 : vector<8x256xf32>
    %229 = arith.mulf %218, %221 : vector<8x256xf32>
    %230 = arith.addf %228, %229 : vector<8x256xf32>
    %231 = math.tanh %230 : vector<8x256xf32>
    %232 = arith.mulf %227, %231 : vector<8x256xf32>
    %c8_i32_52 = arith.constant 8 : i32
    %233 = arith.muli %c3_i32, %c8_i32_52 : i32
    %234 = tpu.assume_multiple %233, 8 : i32
    %235 = arith.index_cast %234 : i32 to index
    %c0_53 = arith.constant 0 : index
    %236 = vector.load %arg11[%235, %c0_53] : memref<64x256xf32, #tpu.memory_space<vmem>>, vector<8x256xf32>
    tpu.vector_store %arg11[%235, %c0_53], %232 {strides = array<i32>} : memref<64x256xf32, #tpu.memory_space<vmem>>, vector<8x256xf32>,
    %c4_i32 = arith.constant 4 : i32
    %237 = arith.index_cast %c4_i32 : i32 to index
    %c0_54 = arith.constant 0 : index
    %c0_55 = arith.constant 0 : index
    %238 = vector.load %arg0[%237, %c0_54, %c0_55] : memref<8x8x1024xf32, #tpu.memory_space<vmem>>, vector<1x8x1024xf32>
    %239 = vector.shape_cast %238 : vector<1x8x1024xf32> to vector<8x1024xf32>
    %240 = arith.truncf %207 : vector<8x256xf32> to vector<8x256xbf16>
    %cst_56 = arith.constant dense<0.000000e+00> : vector<8x1024xf32>
    %241 = tpu.matmul %240, %0, %cst_56 {dimension_numbers = #tpu.dot_dimension_numbers<[1], [0], [0], [1], [0, 0, 1, 1], [], []>} : vector<8x256xbf16>, vector<256x1024xbf16>, vector<8x1024xf32> -> vector<8x1024xf32>
    %242 = arith.addf %239, %241 : vector<8x1024xf32>
    %243 = vector.extract_strided_slice %242 {offsets = [0, 0], sizes = [8, 512], strides = [1, 1]} : vector<8x1024xf32> to vector<8x512xf32>
    %244 = arith.negf %243 : vector<8x512xf32>
    %245 = math.exp %244 : vector<8x512xf32>
    %cst_57 = arith.constant 1.000000e+00 : f32
    %246 = vector.broadcast %cst_57 : f32 to vector<8x512xf32>
    %247 = arith.addf %246, %245 : vector<8x512xf32>
    %248 = arith.divf %246, %247 : vector<8x512xf32>
    %249 = vector.extract_strided_slice %248 {offsets = [0, 0], sizes = [8, 256], strides = [1, 1]} : vector<8x512xf32> to vector<8x256xf32>
    %250 = vector.extract_strided_slice %248 {offsets = [0, 256], sizes = [8, 256], strides = [1, 1]} : vector<8x512xf32> to vector<8x256xf32>
    %251 = vector.extract_strided_slice %242 {offsets = [0, 512], sizes = [8, 256], strides = [1, 1]} : vector<8x1024xf32> to vector<8x256xf32>
    %252 = math.tanh %251 : vector<8x256xf32>
    %253 = vector.extract_strided_slice %242 {offsets = [0, 768], sizes = [8, 256], strides = [1, 1]} : vector<8x1024xf32> to vector<8x256xf32>
    %254 = arith.negf %253 : vector<8x256xf32>
    %255 = math.exp %254 : vector<8x256xf32>
    %cst_58 = arith.constant 1.000000e+00 : f32
    %256 = vector.broadcast %cst_58 : f32 to vector<8x256xf32>
    %257 = arith.addf %256, %255 : vector<8x256xf32>
    %258 = arith.divf %256, %257 : vector<8x256xf32>
    %259 = arith.mulf %250, %205 : vector<8x256xf32>
    %260 = arith.mulf %249, %252 : vector<8x256xf32>
    %261 = arith.addf %259, %260 : vector<8x256xf32>
    %262 = math.tanh %261 : vector<8x256xf32>
    %263 = arith.mulf %258, %262 : vector<8x256xf32>
    %264 = tpu.concatenate %263, %232 in 1 : vector<8x256xf32>, vector<8x256xf32> -> vector<8x512xf32>
    %265 = arith.truncf %264 : vector<8x512xf32> to vector<8x512xbf16>
    %cst_59 = arith.constant dense<0.000000e+00> : vector<8x1024xf32>
    %266 = tpu.matmul %265, %1, %cst_59 {dimension_numbers = #tpu.dot_dimension_numbers<[1], [0], [0], [1], [0, 0, 1, 1], [], []>} : vector<8x512xbf16>, vector<512x1024xbf16>, vector<8x1024xf32> -> vector<8x1024xf32>
    %267 = arith.addf %266, %4 : vector<8x1024xf32>
    %268 = vector.extract_strided_slice %267 {offsets = [0, 0], sizes = [8, 512], strides = [1, 1]} : vector<8x1024xf32> to vector<8x512xf32>
    %269 = arith.negf %268 : vector<8x512xf32>
    %270 = math.exp %269 : vector<8x512xf32>
    %cst_60 = arith.constant 1.000000e+00 : f32
    %271 = vector.broadcast %cst_60 : f32 to vector<8x512xf32>
    %272 = arith.addf %271, %270 : vector<8x512xf32>
    %273 = arith.divf %271, %272 : vector<8x512xf32>
    %274 = vector.extract_strided_slice %273 {offsets = [0, 0], sizes = [8, 256], strides = [1, 1]} : vector<8x512xf32> to vector<8x256xf32>
    %275 = vector.extract_strided_slice %273 {offsets = [0, 256], sizes = [8, 256], strides = [1, 1]} : vector<8x512xf32> to vector<8x256xf32>
    %276 = vector.extract_strided_slice %267 {offsets = [0, 512], sizes = [8, 256], strides = [1, 1]} : vector<8x1024xf32> to vector<8x256xf32>
    %277 = math.tanh %276 : vector<8x256xf32>
    %278 = vector.extract_strided_slice %267 {offsets = [0, 768], sizes = [8, 256], strides = [1, 1]} : vector<8x1024xf32> to vector<8x256xf32>
    %279 = arith.negf %278 : vector<8x256xf32>
    %280 = math.exp %279 : vector<8x256xf32>
    %cst_61 = arith.constant 1.000000e+00 : f32
    %281 = vector.broadcast %cst_61 : f32 to vector<8x256xf32>
    %282 = arith.addf %281, %280 : vector<8x256xf32>
    %283 = arith.divf %281, %282 : vector<8x256xf32>
    %284 = arith.mulf %275, %230 : vector<8x256xf32>
    %285 = arith.mulf %274, %277 : vector<8x256xf32>
    %286 = arith.addf %284, %285 : vector<8x256xf32>
    %287 = math.tanh %286 : vector<8x256xf32>
    %288 = arith.mulf %283, %287 : vector<8x256xf32>
    %c8_i32_62 = arith.constant 8 : i32
    %289 = arith.muli %c4_i32, %c8_i32_62 : i32
    %290 = tpu.assume_multiple %289, 8 : i32
    %291 = arith.index_cast %290 : i32 to index
    %c0_63 = arith.constant 0 : index
    %292 = vector.load %arg11[%291, %c0_63] : memref<64x256xf32, #tpu.memory_space<vmem>>, vector<8x256xf32>
    tpu.vector_store %arg11[%291, %c0_63], %288 {strides = array<i32>} : memref<64x256xf32, #tpu.memory_space<vmem>>, vector<8x256xf32>,
    %c5_i32 = arith.constant 5 : i32
    %293 = arith.index_cast %c5_i32 : i32 to index
    %c0_64 = arith.constant 0 : index
    %c0_65 = arith.constant 0 : index
    %294 = vector.load %arg0[%293, %c0_64, %c0_65] : memref<8x8x1024xf32, #tpu.memory_space<vmem>>, vector<1x8x1024xf32>
    %295 = vector.shape_cast %294 : vector<1x8x1024xf32> to vector<8x1024xf32>
    %296 = arith.truncf %263 : vector<8x256xf32> to vector<8x256xbf16>
    %cst_66 = arith.constant dense<0.000000e+00> : vector<8x1024xf32>
    %297 = tpu.matmul %296, %0, %cst_66 {dimension_numbers = #tpu.dot_dimension_numbers<[1], [0], [0], [1], [0, 0, 1, 1], [], []>} : vector<8x256xbf16>, vector<256x1024xbf16>, vector<8x1024xf32> -> vector<8x1024xf32>
    %298 = arith.addf %295, %297 : vector<8x1024xf32>
    %299 = vector.extract_strided_slice %298 {offsets = [0, 0], sizes = [8, 512], strides = [1, 1]} : vector<8x1024xf32> to vector<8x512xf32>
    %300 = arith.negf %299 : vector<8x512xf32>
    %301 = math.exp %300 : vector<8x512xf32>
    %cst_67 = arith.constant 1.000000e+00 : f32
    %302 = vector.broadcast %cst_67 : f32 to vector<8x512xf32>
    %303 = arith.addf %302, %301 : vector<8x512xf32>
    %304 = arith.divf %302, %303 : vector<8x512xf32>
    %305 = vector.extract_strided_slice %304 {offsets = [0, 0], sizes = [8, 256], strides = [1, 1]} : vector<8x512xf32> to vector<8x256xf32>
    %306 = vector.extract_strided_slice %304 {offsets = [0, 256], sizes = [8, 256], strides = [1, 1]} : vector<8x512xf32> to vector<8x256xf32>
    %307 = vector.extract_strided_slice %298 {offsets = [0, 512], sizes = [8, 256], strides = [1, 1]} : vector<8x1024xf32> to vector<8x256xf32>
    %308 = math.tanh %307 : vector<8x256xf32>
    %309 = vector.extract_strided_slice %298 {offsets = [0, 768], sizes = [8, 256], strides = [1, 1]} : vector<8x1024xf32> to vector<8x256xf32>
    %310 = arith.negf %309 : vector<8x256xf32>
    %311 = math.exp %310 : vector<8x256xf32>
    %cst_68 = arith.constant 1.000000e+00 : f32
    %312 = vector.broadcast %cst_68 : f32 to vector<8x256xf32>
    %313 = arith.addf %312, %311 : vector<8x256xf32>
    %314 = arith.divf %312, %313 : vector<8x256xf32>
    %315 = arith.mulf %306, %261 : vector<8x256xf32>
    %316 = arith.mulf %305, %308 : vector<8x256xf32>
    %317 = arith.addf %315, %316 : vector<8x256xf32>
    %318 = math.tanh %317 : vector<8x256xf32>
    %319 = arith.mulf %314, %318 : vector<8x256xf32>
    %320 = tpu.concatenate %319, %288 in 1 : vector<8x256xf32>, vector<8x256xf32> -> vector<8x512xf32>
    %321 = arith.truncf %320 : vector<8x512xf32> to vector<8x512xbf16>
    %cst_69 = arith.constant dense<0.000000e+00> : vector<8x1024xf32>
    %322 = tpu.matmul %321, %1, %cst_69 {dimension_numbers = #tpu.dot_dimension_numbers<[1], [0], [0], [1], [0, 0, 1, 1], [], []>} : vector<8x512xbf16>, vector<512x1024xbf16>, vector<8x1024xf32> -> vector<8x1024xf32>
    %323 = arith.addf %322, %4 : vector<8x1024xf32>
    %324 = vector.extract_strided_slice %323 {offsets = [0, 0], sizes = [8, 512], strides = [1, 1]} : vector<8x1024xf32> to vector<8x512xf32>
    %325 = arith.negf %324 : vector<8x512xf32>
    %326 = math.exp %325 : vector<8x512xf32>
    %cst_70 = arith.constant 1.000000e+00 : f32
    %327 = vector.broadcast %cst_70 : f32 to vector<8x512xf32>
    %328 = arith.addf %327, %326 : vector<8x512xf32>
    %329 = arith.divf %327, %328 : vector<8x512xf32>
    %330 = vector.extract_strided_slice %329 {offsets = [0, 0], sizes = [8, 256], strides = [1, 1]} : vector<8x512xf32> to vector<8x256xf32>
    %331 = vector.extract_strided_slice %329 {offsets = [0, 256], sizes = [8, 256], strides = [1, 1]} : vector<8x512xf32> to vector<8x256xf32>
    %332 = vector.extract_strided_slice %323 {offsets = [0, 512], sizes = [8, 256], strides = [1, 1]} : vector<8x1024xf32> to vector<8x256xf32>
    %333 = math.tanh %332 : vector<8x256xf32>
    %334 = vector.extract_strided_slice %323 {offsets = [0, 768], sizes = [8, 256], strides = [1, 1]} : vector<8x1024xf32> to vector<8x256xf32>
    %335 = arith.negf %334 : vector<8x256xf32>
    %336 = math.exp %335 : vector<8x256xf32>
    %cst_71 = arith.constant 1.000000e+00 : f32
    %337 = vector.broadcast %cst_71 : f32 to vector<8x256xf32>
    %338 = arith.addf %337, %336 : vector<8x256xf32>
    %339 = arith.divf %337, %338 : vector<8x256xf32>
    %340 = arith.mulf %331, %286 : vector<8x256xf32>
    %341 = arith.mulf %330, %333 : vector<8x256xf32>
    %342 = arith.addf %340, %341 : vector<8x256xf32>
    %343 = math.tanh %342 : vector<8x256xf32>
    %344 = arith.mulf %339, %343 : vector<8x256xf32>
    %c8_i32_72 = arith.constant 8 : i32
    %345 = arith.muli %c5_i32, %c8_i32_72 : i32
    %346 = tpu.assume_multiple %345, 8 : i32
    %347 = arith.index_cast %346 : i32 to index
    %c0_73 = arith.constant 0 : index
    %348 = vector.load %arg11[%347, %c0_73] : memref<64x256xf32, #tpu.memory_space<vmem>>, vector<8x256xf32>
    tpu.vector_store %arg11[%347, %c0_73], %344 {strides = array<i32>} : memref<64x256xf32, #tpu.memory_space<vmem>>, vector<8x256xf32>,
    %c6_i32 = arith.constant 6 : i32
    %349 = arith.index_cast %c6_i32 : i32 to index
    %c0_74 = arith.constant 0 : index
    %c0_75 = arith.constant 0 : index
    %350 = vector.load %arg0[%349, %c0_74, %c0_75] : memref<8x8x1024xf32, #tpu.memory_space<vmem>>, vector<1x8x1024xf32>
    %351 = vector.shape_cast %350 : vector<1x8x1024xf32> to vector<8x1024xf32>
    %352 = arith.truncf %319 : vector<8x256xf32> to vector<8x256xbf16>
    %cst_76 = arith.constant dense<0.000000e+00> : vector<8x1024xf32>
    %353 = tpu.matmul %352, %0, %cst_76 {dimension_numbers = #tpu.dot_dimension_numbers<[1], [0], [0], [1], [0, 0, 1, 1], [], []>} : vector<8x256xbf16>, vector<256x1024xbf16>, vector<8x1024xf32> -> vector<8x1024xf32>
    %354 = arith.addf %351, %353 : vector<8x1024xf32>
    %355 = vector.extract_strided_slice %354 {offsets = [0, 0], sizes = [8, 512], strides = [1, 1]} : vector<8x1024xf32> to vector<8x512xf32>
    %356 = arith.negf %355 : vector<8x512xf32>
    %357 = math.exp %356 : vector<8x512xf32>
    %cst_77 = arith.constant 1.000000e+00 : f32
    %358 = vector.broadcast %cst_77 : f32 to vector<8x512xf32>
    %359 = arith.addf %358, %357 : vector<8x512xf32>
    %360 = arith.divf %358, %359 : vector<8x512xf32>
    %361 = vector.extract_strided_slice %360 {offsets = [0, 0], sizes = [8, 256], strides = [1, 1]} : vector<8x512xf32> to vector<8x256xf32>
    %362 = vector.extract_strided_slice %360 {offsets = [0, 256], sizes = [8, 256], strides = [1, 1]} : vector<8x512xf32> to vector<8x256xf32>
    %363 = vector.extract_strided_slice %354 {offsets = [0, 512], sizes = [8, 256], strides = [1, 1]} : vector<8x1024xf32> to vector<8x256xf32>
    %364 = math.tanh %363 : vector<8x256xf32>
    %365 = vector.extract_strided_slice %354 {offsets = [0, 768], sizes = [8, 256], strides = [1, 1]} : vector<8x1024xf32> to vector<8x256xf32>
    %366 = arith.negf %365 : vector<8x256xf32>
    %367 = math.exp %366 : vector<8x256xf32>
    %cst_78 = arith.constant 1.000000e+00 : f32
    %368 = vector.broadcast %cst_78 : f32 to vector<8x256xf32>
    %369 = arith.addf %368, %367 : vector<8x256xf32>
    %370 = arith.divf %368, %369 : vector<8x256xf32>
    %371 = arith.mulf %362, %317 : vector<8x256xf32>
    %372 = arith.mulf %361, %364 : vector<8x256xf32>
    %373 = arith.addf %371, %372 : vector<8x256xf32>
    %374 = math.tanh %373 : vector<8x256xf32>
    %375 = arith.mulf %370, %374 : vector<8x256xf32>
    %376 = tpu.concatenate %375, %344 in 1 : vector<8x256xf32>, vector<8x256xf32> -> vector<8x512xf32>
    %377 = arith.truncf %376 : vector<8x512xf32> to vector<8x512xbf16>
    %cst_79 = arith.constant dense<0.000000e+00> : vector<8x1024xf32>
    %378 = tpu.matmul %377, %1, %cst_79 {dimension_numbers = #tpu.dot_dimension_numbers<[1], [0], [0], [1], [0, 0, 1, 1], [], []>} : vector<8x512xbf16>, vector<512x1024xbf16>, vector<8x1024xf32> -> vector<8x1024xf32>
    %379 = arith.addf %378, %4 : vector<8x1024xf32>
    %380 = vector.extract_strided_slice %379 {offsets = [0, 0], sizes = [8, 512], strides = [1, 1]} : vector<8x1024xf32> to vector<8x512xf32>
    %381 = arith.negf %380 : vector<8x512xf32>
    %382 = math.exp %381 : vector<8x512xf32>
    %cst_80 = arith.constant 1.000000e+00 : f32
    %383 = vector.broadcast %cst_80 : f32 to vector<8x512xf32>
    %384 = arith.addf %383, %382 : vector<8x512xf32>
    %385 = arith.divf %383, %384 : vector<8x512xf32>
    %386 = vector.extract_strided_slice %385 {offsets = [0, 0], sizes = [8, 256], strides = [1, 1]} : vector<8x512xf32> to vector<8x256xf32>
    %387 = vector.extract_strided_slice %385 {offsets = [0, 256], sizes = [8, 256], strides = [1, 1]} : vector<8x512xf32> to vector<8x256xf32>
    %388 = vector.extract_strided_slice %379 {offsets = [0, 512], sizes = [8, 256], strides = [1, 1]} : vector<8x1024xf32> to vector<8x256xf32>
    %389 = math.tanh %388 : vector<8x256xf32>
    %390 = vector.extract_strided_slice %379 {offsets = [0, 768], sizes = [8, 256], strides = [1, 1]} : vector<8x1024xf32> to vector<8x256xf32>
    %391 = arith.negf %390 : vector<8x256xf32>
    %392 = math.exp %391 : vector<8x256xf32>
    %cst_81 = arith.constant 1.000000e+00 : f32
    %393 = vector.broadcast %cst_81 : f32 to vector<8x256xf32>
    %394 = arith.addf %393, %392 : vector<8x256xf32>
    %395 = arith.divf %393, %394 : vector<8x256xf32>
    %396 = arith.mulf %387, %342 : vector<8x256xf32>
    %397 = arith.mulf %386, %389 : vector<8x256xf32>
    %398 = arith.addf %396, %397 : vector<8x256xf32>
    %399 = math.tanh %398 : vector<8x256xf32>
    %400 = arith.mulf %395, %399 : vector<8x256xf32>
    %c8_i32_82 = arith.constant 8 : i32
    %401 = arith.muli %c6_i32, %c8_i32_82 : i32
    %402 = tpu.assume_multiple %401, 8 : i32
    %403 = arith.index_cast %402 : i32 to index
    %c0_83 = arith.constant 0 : index
    %404 = vector.load %arg11[%403, %c0_83] : memref<64x256xf32, #tpu.memory_space<vmem>>, vector<8x256xf32>
    tpu.vector_store %arg11[%403, %c0_83], %400 {strides = array<i32>} : memref<64x256xf32, #tpu.memory_space<vmem>>, vector<8x256xf32>,
    %c7_i32 = arith.constant 7 : i32
    %405 = arith.index_cast %c7_i32 : i32 to index
    %c0_84 = arith.constant 0 : index
    %c0_85 = arith.constant 0 : index
    %406 = vector.load %arg0[%405, %c0_84, %c0_85] : memref<8x8x1024xf32, #tpu.memory_space<vmem>>, vector<1x8x1024xf32>
    %407 = vector.shape_cast %406 : vector<1x8x1024xf32> to vector<8x1024xf32>
    %408 = arith.truncf %375 : vector<8x256xf32> to vector<8x256xbf16>
    %cst_86 = arith.constant dense<0.000000e+00> : vector<8x1024xf32>
    %409 = tpu.matmul %408, %0, %cst_86 {dimension_numbers = #tpu.dot_dimension_numbers<[1], [0], [0], [1], [0, 0, 1, 1], [], []>} : vector<8x256xbf16>, vector<256x1024xbf16>, vector<8x1024xf32> -> vector<8x1024xf32>
    %410 = arith.addf %407, %409 : vector<8x1024xf32>
    %411 = vector.extract_strided_slice %410 {offsets = [0, 0], sizes = [8, 512], strides = [1, 1]} : vector<8x1024xf32> to vector<8x512xf32>
    %412 = arith.negf %411 : vector<8x512xf32>
    %413 = math.exp %412 : vector<8x512xf32>
    %cst_87 = arith.constant 1.000000e+00 : f32
    %414 = vector.broadcast %cst_87 : f32 to vector<8x512xf32>
    %415 = arith.addf %414, %413 : vector<8x512xf32>
    %416 = arith.divf %414, %415 : vector<8x512xf32>
    %417 = vector.extract_strided_slice %416 {offsets = [0, 0], sizes = [8, 256], strides = [1, 1]} : vector<8x512xf32> to vector<8x256xf32>
    %418 = vector.extract_strided_slice %416 {offsets = [0, 256], sizes = [8, 256], strides = [1, 1]} : vector<8x512xf32> to vector<8x256xf32>
    %419 = vector.extract_strided_slice %410 {offsets = [0, 512], sizes = [8, 256], strides = [1, 1]} : vector<8x1024xf32> to vector<8x256xf32>
    %420 = math.tanh %419 : vector<8x256xf32>
    %421 = vector.extract_strided_slice %410 {offsets = [0, 768], sizes = [8, 256], strides = [1, 1]} : vector<8x1024xf32> to vector<8x256xf32>
    %422 = arith.negf %421 : vector<8x256xf32>
    %423 = math.exp %422 : vector<8x256xf32>
    %cst_88 = arith.constant 1.000000e+00 : f32
    %424 = vector.broadcast %cst_88 : f32 to vector<8x256xf32>
    %425 = arith.addf %424, %423 : vector<8x256xf32>
    %426 = arith.divf %424, %425 : vector<8x256xf32>
    %427 = arith.mulf %418, %373 : vector<8x256xf32>
    %428 = arith.mulf %417, %420 : vector<8x256xf32>
    %429 = arith.addf %427, %428 : vector<8x256xf32>
    %430 = math.tanh %429 : vector<8x256xf32>
    %431 = arith.mulf %426, %430 : vector<8x256xf32>
    %432 = tpu.concatenate %431, %400 in 1 : vector<8x256xf32>, vector<8x256xf32> -> vector<8x512xf32>
    %433 = arith.truncf %432 : vector<8x512xf32> to vector<8x512xbf16>
    %cst_89 = arith.constant dense<0.000000e+00> : vector<8x1024xf32>
    %434 = tpu.matmul %433, %1, %cst_89 {dimension_numbers = #tpu.dot_dimension_numbers<[1], [0], [0], [1], [0, 0, 1, 1], [], []>} : vector<8x512xbf16>, vector<512x1024xbf16>, vector<8x1024xf32> -> vector<8x1024xf32>
    %435 = arith.addf %434, %4 : vector<8x1024xf32>
    %436 = vector.extract_strided_slice %435 {offsets = [0, 0], sizes = [8, 512], strides = [1, 1]} : vector<8x1024xf32> to vector<8x512xf32>
    %437 = arith.negf %436 : vector<8x512xf32>
    %438 = math.exp %437 : vector<8x512xf32>
    %cst_90 = arith.constant 1.000000e+00 : f32
    %439 = vector.broadcast %cst_90 : f32 to vector<8x512xf32>
    %440 = arith.addf %439, %438 : vector<8x512xf32>
    %441 = arith.divf %439, %440 : vector<8x512xf32>
    %442 = vector.extract_strided_slice %441 {offsets = [0, 0], sizes = [8, 256], strides = [1, 1]} : vector<8x512xf32> to vector<8x256xf32>
    %443 = vector.extract_strided_slice %441 {offsets = [0, 256], sizes = [8, 256], strides = [1, 1]} : vector<8x512xf32> to vector<8x256xf32>
    %444 = vector.extract_strided_slice %435 {offsets = [0, 512], sizes = [8, 256], strides = [1, 1]} : vector<8x1024xf32> to vector<8x256xf32>
    %445 = math.tanh %444 : vector<8x256xf32>
    %446 = vector.extract_strided_slice %435 {offsets = [0, 768], sizes = [8, 256], strides = [1, 1]} : vector<8x1024xf32> to vector<8x256xf32>
    %447 = arith.negf %446 : vector<8x256xf32>
    %448 = math.exp %447 : vector<8x256xf32>
    %cst_91 = arith.constant 1.000000e+00 : f32
    %449 = vector.broadcast %cst_91 : f32 to vector<8x256xf32>
    %450 = arith.addf %449, %448 : vector<8x256xf32>
    %451 = arith.divf %449, %450 : vector<8x256xf32>
    %452 = arith.mulf %443, %398 : vector<8x256xf32>
    %453 = arith.mulf %442, %445 : vector<8x256xf32>
    %454 = arith.addf %452, %453 : vector<8x256xf32>
    %455 = math.tanh %454 : vector<8x256xf32>
    %456 = arith.mulf %451, %455 : vector<8x256xf32>
    %c8_i32_92 = arith.constant 8 : i32
    %457 = arith.muli %c7_i32, %c8_i32_92 : i32
    %458 = tpu.assume_multiple %457, 8 : i32
    %459 = arith.index_cast %458 : i32 to index
    %c0_93 = arith.constant 0 : index
    %460 = vector.load %arg11[%459, %c0_93] : memref<64x256xf32, #tpu.memory_space<vmem>>, vector<8x256xf32>
    tpu.vector_store %arg11[%459, %c0_93], %456 {strides = array<i32>} : memref<64x256xf32, #tpu.memory_space<vmem>>, vector<8x256xf32>,
    %c8_i32_94 = arith.constant 8 : i32
    %c0_95 = arith.constant 0 : index
    %c0_96 = arith.constant 0 : index
    %c0_97 = arith.constant 0 : index
    %461 = vector.load %arg9[%c0_95, %c0_96, %c0_97] : memref<2x8x256xf32, #tpu.memory_space<vmem>>, vector<1x8x256xf32>
    %462 = vector.shape_cast %461 : vector<1x8x256xf32> to vector<8x256xf32>
    %463 = vector.shape_cast %431 : vector<8x256xf32> to vector<1x8x256xf32>
    tpu.vector_store %arg9[%c0_95, %c0_96, %c0_97], %463 {strides = array<i32>} : memref<2x8x256xf32, #tpu.memory_space<vmem>>, vector<1x8x256xf32>,
    %c1_98 = arith.constant 1 : index
    %c0_99 = arith.constant 0 : index
    %c0_100 = arith.constant 0 : index
    %464 = vector.load %arg9[%c1_98, %c0_99, %c0_100] : memref<2x8x256xf32, #tpu.memory_space<vmem>>, vector<1x8x256xf32>
    %465 = vector.shape_cast %464 : vector<1x8x256xf32> to vector<8x256xf32>
    %466 = vector.shape_cast %456 : vector<8x256xf32> to vector<1x8x256xf32>
    tpu.vector_store %arg9[%c1_98, %c0_99, %c0_100], %466 {strides = array<i32>} : memref<2x8x256xf32, #tpu.memory_space<vmem>>, vector<1x8x256xf32>,
    %c0_101 = arith.constant 0 : index
    %c0_102 = arith.constant 0 : index
    %c0_103 = arith.constant 0 : index
    %467 = vector.load %arg10[%c0_101, %c0_102, %c0_103] : memref<2x8x256xf32, #tpu.memory_space<vmem>>, vector<1x8x256xf32>
    %468 = vector.shape_cast %467 : vector<1x8x256xf32> to vector<8x256xf32>
    %469 = vector.shape_cast %429 : vector<8x256xf32> to vector<1x8x256xf32>
    tpu.vector_store %arg10[%c0_101, %c0_102, %c0_103], %469 {strides = array<i32>} : memref<2x8x256xf32, #tpu.memory_space<vmem>>, vector<1x8x256xf32>,
    %c1_104 = arith.constant 1 : index
    %c0_105 = arith.constant 0 : index
    %c0_106 = arith.constant 0 : index
    %470 = vector.load %arg10[%c1_104, %c0_105, %c0_106] : memref<2x8x256xf32, #tpu.memory_space<vmem>>, vector<1x8x256xf32>
    %471 = vector.shape_cast %470 : vector<1x8x256xf32> to vector<8x256xf32>
    %472 = vector.shape_cast %454 : vector<8x256xf32> to vector<1x8x256xf32>
    tpu.vector_store %arg10[%c1_104, %c0_105, %c0_106], %472 {strides = array<i32>} : memref<2x8x256xf32, #tpu.memory_space<vmem>>, vector<1x8x256xf32>,
    %c0_107 = arith.constant 0 : index
    %c0_108 = arith.constant 0 : index
    %473 = vector.load %arg11[%c0_107, %c0_108] : memref<64x256xf32, #tpu.memory_space<vmem>>, vector<64x256xf32>
    %474 = arith.truncf %473 : vector<64x256xf32> to vector<64x256xbf16>
    %c0_109 = arith.constant 0 : index
    %c0_110 = arith.constant 0 : index
    %475 = vector.load %arg6[%c0_109, %c0_110] : memref<256x512xbf16, #tpu.memory_space<vmem>>, vector<256x512xbf16>
    %cst_111 = arith.constant dense<0.000000e+00> : vector<64x512xf32>
    %476 = tpu.matmul %474, %475, %cst_111 {dimension_numbers = #tpu.dot_dimension_numbers<[1], [0], [0], [1], [0, 0, 1, 1], [], []>} : vector<64x256xbf16>, vector<256x512xbf16>, vector<64x512xf32> -> vector<64x512xf32>
    %c0_112 = arith.constant 0 : index
    %c0_113 = arith.constant 0 : index
    %477 = vector.load %arg7[%c0_112, %c0_113] : memref<1x512xf32, #tpu.memory_space<vmem>>, vector<1x512xf32>
    %478 = vector.broadcast %477 : vector<1x512xf32> to vector<64x512xf32>
    %479 = arith.addf %476, %478 : vector<64x512xf32>
    %c0_114 = arith.constant 0 : index
    %c0_115 = arith.constant 0 : index
    %480 = vector.load %arg8[%c0_114, %c0_115] : memref<64x512xf32, #tpu.memory_space<vmem>>, vector<64x512xf32>
    tpu.vector_store %arg8[%c0_114, %c0_115], %479 {strides = array<i32>} : memref<64x512xf32, #tpu.memory_space<vmem>>, vector<64x512xf32>,
    return
  }
}

</mosaic_0001>

<llo_original>
// kernel: tpu_custom_call.1
$region0: #{tpu_custom_call.1}
  #allocation0 [shape = 'u32[]', space=smem, size = 0x4, offset = 0x4, fixed_abs, tag = 'smem constant byte address 0x4 - core index']
  #allocation1 [shape = 'u32[144,128]{1,0:T(1,128)}', space=vmem, size = 0x12000, scoped, tag = 'internal scratch']
  #allocation2 [shape = 'f32[64,256]{1,0:T(8,128)}', space=vmem, size = 0x10000, scoped, tag = 'scratch operand']
  %s0 = inlined_call_operand.hbm [shape: f32[8,8,1024], index: 0, kind: input, shape index: {}]
  %s1 = inlined_call_operand.hbm [shape: bf16[256,1024], index: 1, kind: input, shape index: {}]
  %s2 = inlined_call_operand.hbm [shape: bf16[512,1024], index: 2, kind: input, shape index: {}]
  %s3 = inlined_call_operand.hbm [shape: f32[1,1024], index: 3, kind: input, shape index: {}]
  %s4 = inlined_call_operand.hbm [shape: f32[2,8,256], index: 4, kind: input, shape index: {}]
  %s5 = inlined_call_operand.hbm [shape: f32[2,8,256], index: 5, kind: input, shape index: {}]
  %s6 = inlined_call_operand.hbm [shape: bf16[256,512], index: 6, kind: input, shape index: {}]
  %s7 = inlined_call_operand.vmem [shape: f32[1,512], index: 7, kind: input, shape index: {}]
  %s8 = inlined_call_operand.hbm [shape: f32[64,512], index: 8, kind: output, shape index: {0}]
  %s9 = inlined_call_operand.hbm [shape: f32[2,8,256], index: 9, kind: output, shape index: {1}]
  %s10 = inlined_call_operand.hbm [shape: f32[2,8,256], index: 10, kind: output, shape index: {2}]
  %11 = xla_tuple %s8, %s9, %s10
  %s12 = sld [smem:[#allocation0]]
  $region86: #{tpu_custom_call.1} parent=0
    _
  %s14 = ssub.s32 1, %s12
  %s15 = scalar_select 0, %s14, %s12
  $region1: #{tpu_custom_call.1} parent=0
    #allocation3 [shape = 'u8[262144]{0}', space=vmem, size = 0x40000, scoped, tag = 'input window, operand 0, single buffered']
    #allocation4 [shape = 's32[1]{0}', space=sflag, size = 0x4, scoped, tag = 'scoped memory for tpu_custom_call.1']
    #allocation5 [shape = 's32[1]{0}', space=sflag, size = 0x4, scoped, tag = 'scoped memory for tpu_custom_call.1']
    #allocation6 [shape = 'u8[524288]{0}', space=vmem, size = 0x80000, scoped, tag = 'input window, operand 1, single buffered']
    #allocation7 [shape = 's32[1]{0}', space=sflag, size = 0x4, scoped, tag = 'scoped memory for tpu_custom_call.1']
    #allocation8 [shape = 'u8[1048576]{0}', space=vmem, size = 0x100000, scoped, tag = 'input window, operand 2, single buffered']
    #allocation9 [shape = 'u8[4096]{0}', space=vmem, size = 0x1000, scoped, tag = 'input window, operand 3, single buffered']
    #allocation10 [shape = 's32[1]{0}', space=sflag, size = 0x4, scoped, tag = 'scoped memory for tpu_custom_call.1']
    #allocation11 [shape = 'u8[16384]{0}', space=vmem, size = 0x4000, scoped, tag = 'input window, operand 4, single buffered']
    #allocation12 [shape = 'u8[16384]{0}', space=vmem, size = 0x4000, scoped, tag = 'input window, operand 5, single buffered']
    #allocation13 [shape = 's32[1]{0}', space=sflag, size = 0x4, scoped, tag = 'scoped memory for tpu_custom_call.1']
    #allocation14 [shape = 'u8[262144]{0}', space=vmem, size = 0x40000, scoped, tag = 'input window, operand 6, single buffered']
    #allocation15 [shape = 'u8[131072]{0}', space=vmem, size = 0x20000, scoped, tag = 'output window, operand 0, single buffered']
    #allocation16 [shape = 'u8[16384]{0}', space=vmem, size = 0x4000, scoped, tag = 'output window, operand 1, single buffered']
    #allocation17 [shape = 's32[1]{0}', space=sflag, size = 0x4, scoped, tag = 'scoped memory for tpu_custom_call.1']
    #allocation18 [shape = 'u8[16384]{0}', space=vmem, size = 0x4000, scoped, tag = 'output window, operand 2, single buffered']
    %16 = vsyncpa [#allocation4], 0
    %17 = vsyncpa [#allocation7], 0
    %18 = vsyncpa [#allocation10], 0
    %19 = vsyncpa [#allocation13], 0
    %20 = vsyncpa [#allocation5], 0
    %21 = vsyncpa [#allocation17], 0
    // Predicated region
    $region2: #{tpu_custom_call.1} parent=1 // pred_check
      _
    $region3: #{tpu_custom_call.1} parent=1 // pred_check_branch
      %23 = sbr.rel (0) target = $region5
    $region4: #{tpu_custom_call.1} parent=1 // pred_region
      %s25 = ssub.s32 8192, 8192
      %26 = vsyncadd [#allocation4], %s25
      %s27 = sshll.u32 [#allocation3], 4
      %s28 = int_to_ptr.vmem [resolvable:$true] %s27
      %33 = dma.hbm_to_vmem [thread:$0]  %s0, 8192, %s28, [#allocation4], 1024, 1024, 64
    $region5: #{tpu_custom_call.1} parent=1 // pred_fallthru
      _
    // Predicated region
    $region6: #{tpu_custom_call.1} parent=1 // pred_check
      _
    $region7: #{tpu_custom_call.1} parent=1 // pred_check_branch
      %35 = sbr.rel (0) target = $region9
    $region8: #{tpu_custom_call.1} parent=1 // pred_region
      %s37 = ssub.s32 16384, 16384
      %38 = vsyncadd [#allocation7], %s37
      %s39 = sshll.u32 [#allocation6], 4
      %s40 = int_to_ptr.vmem [resolvable:$true] %s39
      %45 = dma.hbm_to_vmem [thread:$0]  %s1, 16384, %s40, [#allocation7], 512, 512, 32
    $region9: #{tpu_custom_call.1} parent=1 // pred_fallthru
      _
    // Predicated region
    $region10: #{tpu_custom_call.1} parent=1 // pred_check
      _
    $region11: #{tpu_custom_call.1} parent=1 // pred_check_branch
      %47 = sbr.rel (0) target = $region13
    $region12: #{tpu_custom_call.1} parent=1 // pred_region
      %s49 = ssub.s32 32768, 32768
      %50 = vsyncadd [#allocation7], %s49
      %s51 = sshll.u32 [#allocation8], 4
      %s52 = int_to_ptr.vmem [resolvable:$true] %s51
      %57 = dma.hbm_to_vmem [thread:$0]  %s2, 32768, %s52, [#allocation7], 512, 512, 32
    $region13: #{tpu_custom_call.1} parent=1 // pred_fallthru
      _
    // Predicated region
    $region14: #{tpu_custom_call.1} parent=1 // pred_check
      _
    $region15: #{tpu_custom_call.1} parent=1 // pred_check_branch
      %59 = sbr.rel (0) target = $region17
    $region16: #{tpu_custom_call.1} parent=1 // pred_region
      %s61 = ssub.s32 128, 128
      %62 = vsyncadd [#allocation10], %s61
      %s64 = sshll.u32 [#allocation9], 4
      %s65 = int_to_ptr.vmem [resolvable:$true] %s64
      %67 = dma.hbm_to_vmem [thread:$0]  %s3, 128, %s65, [#allocation10]
    $region17: #{tpu_custom_call.1} parent=1 // pred_fallthru
      _
    // Predicated region
    $region18: #{tpu_custom_call.1} parent=1 // pred_check
      _
    $region19: #{tpu_custom_call.1} parent=1 // pred_check_branch
      %69 = sbr.rel (0) target = $region21
    $region20: #{tpu_custom_call.1} parent=1 // pred_region
      %s71 = ssub.s32 512, 512
      %72 = vsyncadd [#allocation10], %s71
      %s73 = sshll.u32 [#allocation11], 4
      %s74 = int_to_ptr.vmem [resolvable:$true] %s73
      %79 = dma.hbm_to_vmem [thread:$0]  %s4, 512, %s74, [#allocation10], 256, 256, 16
    $region21: #{tpu_custom_call.1} parent=1 // pred_fallthru
      _
    // Predicated region
    $region22: #{tpu_custom_call.1} parent=1 // pred_check
      _
    $region23: #{tpu_custom_call.1} parent=1 // pred_check_branch
      %81 = sbr.rel (0) target = $region25
    $region24: #{tpu_custom_call.1} parent=1 // pred_region
      %s83 = ssub.s32 512, 512
      %84 = vsyncadd [#allocation13], %s83
      %s85 = sshll.u32 [#allocation12], 4
      %s86 = int_to_ptr.vmem [resolvable:$true] %s85
      %91 = dma.hbm_to_vmem [thread:$0]  %s5, 512, %s86, [#allocation13], 256, 256, 16
    $region25: #{tpu_custom_call.1} parent=1 // pred_fallthru
      _
    // Predicated region
    $region26: #{tpu_custom_call.1} parent=1 // pred_check
      _
    $region27: #{tpu_custom_call.1} parent=1 // pred_check_branch
      %93 = sbr.rel (0) target = $region29
    $region28: #{tpu_custom_call.1} parent=1 // pred_region
      %s95 = ssub.s32 8192, 8192
      %96 = vsyncadd [#allocation13], %s95
      %s97 = sshll.u32 [#allocation14], 4
      %s98 = int_to_ptr.vmem [resolvable:$true] %s97
      %103 = dma.hbm_to_vmem [thread:$0]  %s6, 8192, %s98, [#allocation13], 256, 256, 16
    $region29: #{tpu_custom_call.1} parent=1 // pred_fallthru
      _
    // Predicated region
    $region30: #{tpu_custom_call.1} parent=1 // pred_check
      _
    $region31: #{tpu_custom_call.1} parent=1 // pred_check_branch
      %105 = sbr.rel (0) target = $region33
    $region32: #{tpu_custom_call.1} parent=1 // pred_region
      _
    $region33: #{tpu_custom_call.1} parent=1 // pred_fallthru
      _
    // Predicated region
    $region34: #{tpu_custom_call.1} parent=1 // pred_check
      _
    $region35: #{tpu_custom_call.1} parent=1 // pred_check_branch
      %107 = sbr.rel (0) target = $region37
    $region36: #{tpu_custom_call.1} parent=1 // pred_region
      %108 = dma.done [#allocation4], 8192
    $region37: #{tpu_custom_call.1} parent=1 // pred_fallthru
      _
    // Predicated region
    $region38: #{tpu_custom_call.1} parent=1 // pred_check
      _
    $region39: #{tpu_custom_call.1} parent=1 // pred_check_branch
      %110 = sbr.rel (0) target = $region41
    $region40: #{tpu_custom_call.1} parent=1 // pred_region
      %111 = dma.done [#allocation7], 16384
    $region41: #{tpu_custom_call.1} parent=1 // pred_fallthru
      _
    // Predicated region
    $region42: #{tpu_custom_call.1} parent=1 // pred_check
      _
    $region43: #{tpu_custom_call.1} parent=1 // pred_check_branch
      %113 = sbr.rel (0) target = $region45
    $region44: #{tpu_custom_call.1} parent=1 // pred_region
      %114 = dma.done [#allocation7], 32768
    $region45: #{tpu_custom_call.1} parent=1 // pred_fallthru
      _
    // Predicated region
    $region46: #{tpu_custom_call.1} parent=1 // pred_check
      _
    $region47: #{tpu_custom_call.1} parent=1 // pred_check_branch
      %116 = sbr.rel (0) target = $region49
    $region48: #{tpu_custom_call.1} parent=1 // pred_region
      %117 = dma.done [#allocation10], 128
    $region49: #{tpu_custom_call.1} parent=1 // pred_fallthru
      _
    // Predicated region
    $region50: #{tpu_custom_call.1} parent=1 // pred_check
      _
    $region51: #{tpu_custom_call.1} parent=1 // pred_check_branch
      %119 = sbr.rel (0) target = $region53
    $region52: #{tpu_custom_call.1} parent=1 // pred_region
      %120 = dma.done [#allocation10], 512
    $region53: #{tpu_custom_call.1} parent=1 // pred_fallthru
      _
    // Predicated region
    $region54: #{tpu_custom_call.1} parent=1 // pred_check
      _
    $region55: #{tpu_custom_call.1} parent=1 // pred_check_branch
      %122 = sbr.rel (0) target = $region57
    $region56: #{tpu_custom_call.1} parent=1 // pred_region
      %123 = dma.done [#allocation13], 512
    $region57: #{tpu_custom_call.1} parent=1 // pred_fallthru
      _
    // Predicated region
    $region58: #{tpu_custom_call.1} parent=1 // pred_check
      _
    $region59: #{tpu_custom_call.1} parent=1 // pred_check_branch
      %125 = sbr.rel (0) target = $region61
    $region60: #{tpu_custom_call.1} parent=1 // pred_region
      %126 = dma.done [#allocation13], 8192
    $region61: #{tpu_custom_call.1} parent=1 // pred_fallthru
      _
    %v127 = vld [vmem:[#allocation6] sm:$0xff]
    %v128 = vld [vmem:[#allocation6 + $0x8] sm:$0xff]
    %v129 = vld [vmem:[#allocation6 + $0x10] sm:$0xff]
    %v130 = vld [vmem:[#allocation6 + $0x18] sm:$0xff]
    %v131 = vld [vmem:[#allocation6 + $0x20] sm:$0xff]
    %v132 = vld [vmem:[#allocation6 + $0x28] sm:$0xff]
    %v133 = vld [vmem:[#allocation6 + $0x30] sm:$0xff]
    %v134 = vld [vmem:[#allocation6 + $0x38] sm:$0xff]
    %v135 = vld [vmem:[#allocation6 + $0x40] sm:$0xff]
    %v136 = vld [vmem:[#allocation6 + $0x48] sm:$0xff]
    %v137 = vld [vmem:[#allocation6 + $0x50] sm:$0xff]
    %v138 = vld [vmem:[#allocation6 + $0x58] sm:$0xff]
    %v139 = vld [vmem:[#allocation6 + $0x60] sm:$0xff]
    %v140 = vld [vmem:[#allocation6 + $0x68] sm:$0xff]
    %v141 = vld [vmem:[#allocation6 + $0x70] sm:$0xff]
    %v142 = vld [vmem:[#allocation6 + $0x78] sm:$0xff]
    %v143 = vld [vmem:[#allocation6 + $0x80] sm:$0xff]
    %v144 = vld [vmem:[#allocation6 + $0x88] sm:$0xff]
    %v145 = vld [vmem:[#allocation6 + $0x90] sm:$0xff]
    %v146 = vld [vmem:[#allocation6 + $0x98] sm:$0xff]
    %v147 = vld [vmem:[#allocation6 + $0xa0] sm:$0xff]
    %v148 = vld [vmem:[#allocation6 + $0xa8] sm:$0xff]
    %v149 = vld [vmem:[#allocation6 + $0xb0] sm:$0xff]
    %v150 = vld [vmem:[#allocation6 + $0xb8] sm:$0xff]
    %v151 = vld [vmem:[#allocation6 + $0xc0] sm:$0xff]
    %v152 = vld [vmem:[#allocation6 + $0xc8] sm:$0xff]
    %v153 = vld [vmem:[#allocation6 + $0xd0] sm:$0xff]
    %v154 = vld [vmem:[#allocation6 + $0xd8] sm:$0xff]
    %v155 = vld [vmem:[#allocation6 + $0xe0] sm:$0xff]
    %v156 = vld [vmem:[#allocation6 + $0xe8] sm:$0xff]
    %v157 = vld [vmem:[#allocation6 + $0xf0] sm:$0xff]
    %v158 = vld [vmem:[#allocation6 + $0xf8] sm:$0xff]
    %v159 = vld [vmem:[#allocation6 + $0x100] sm:$0xff]
    %v160 = vld [vmem:[#allocation6 + $0x108] sm:$0xff]
    %v161 = vld [vmem:[#allocation6 + $0x110] sm:$0xff]
    %v162 = vld [vmem:[#allocation6 + $0x118] sm:$0xff]
    %v163 = vld [vmem:[#allocation6 + $0x120] sm:$0xff]
    %v164 = vld [vmem:[#allocation6 + $0x128] sm:$0xff]
    %v165 = vld [vmem:[#allocation6 + $0x130] sm:$0xff]
    %v166 = vld [vmem:[#allocation6 + $0x138] sm:$0xff]
    %v167 = vld [vmem:[#allocation6 + $0x140] sm:$0xff]
    %v168 = vld [vmem:[#allocation6 + $0x148] sm:$0xff]
    %v169 = vld [vmem:[#allocation6 + $0x150] sm:$0xff]
    %v170 = vld [vmem:[#allocation6 + $0x158] sm:$0xff]
    %v171 = vld [vmem:[#allocation6 + $0x160] sm:$0xff]
    %v172 = vld [vmem:[#allocation6 + $0x168] sm:$0xff]
    %v173 = vld [vmem:[#allocation6 + $0x170] sm:$0xff]
    %v174 = vld [vmem:[#allocation6 + $0x178] sm:$0xff]
    %v175 = vld [vmem:[#allocation6 + $0x180] sm:$0xff]
    %v176 = vld [vmem:[#allocation6 + $0x188] sm:$0xff]
    %v177 = vld [vmem:[#allocation6 + $0x190] sm:$0xff]
    %v178 = vld [vmem:[#allocation6 + $0x198] sm:$0xff]
    %v179 = vld [vmem:[#allocation6 + $0x1a0] sm:$0xff]
    %v180 = vld [vmem:[#allocation6 + $0x1a8] sm:$0xff]
    %v181 = vld [vmem:[#allocation6 + $0x1b0] sm:$0xff]
    %v182 = vld [vmem:[#allocation6 + $0x1b8] sm:$0xff]
    %v183 = vld [vmem:[#allocation6 + $0x1c0] sm:$0xff]
    %v184 = vld [vmem:[#allocation6 + $0x1c8] sm:$0xff]
    %v185 = vld [vmem:[#allocation6 + $0x1d0] sm:$0xff]
    %v186 = vld [vmem:[#allocation6 + $0x1d8] sm:$0xff]
    %v187 = vld [vmem:[#allocation6 + $0x1e0] sm:$0xff]
    %v188 = vld [vmem:[#allocation6 + $0x1e8] sm:$0xff]
    %v189 = vld [vmem:[#allocation6 + $0x1f0] sm:$0xff]
    %v190 = vld [vmem:[#allocation6 + $0x1f8] sm:$0xff]
    %v191 = vld [vmem:[#allocation6 + $0x200] sm:$0xff]
    %v192 = vld [vmem:[#allocation6 + $0x208] sm:$0xff]
    %v193 = vld [vmem:[#allocation6 + $0x210] sm:$0xff]
    %v194 = vld [vmem:[#allocation6 + $0x218] sm:$0xff]
    %v195 = vld [vmem:[#allocation6 + $0x220] sm:$0xff]
    %v196 = vld [vmem:[#allocation6 + $0x228] sm:$0xff]
    %v197 = vld [vmem:[#allocation6 + $0x230] sm:$0xff]
    %v198 = vld [vmem:[#allocation6 + $0x238] sm:$0xff]
    %v199 = vld [vmem:[#allocation6 + $0x240] sm:$0xff]
    %v200 = vld [vmem:[#allocation6 + $0x248] sm:$0xff]
    %v201 = vld [vmem:[#allocation6 + $0x250] sm:$0xff]
    %v202 = vld [vmem:[#allocation6 + $0x258] sm:$0xff]
    %v203 = vld [vmem:[#allocation6 + $0x260] sm:$0xff]
    %v204 = vld [vmem:[#allocation6 + $0x268] sm:$0xff]
    %v205 = vld [vmem:[#allocation6 + $0x270] sm:$0xff]
    %v206 = vld [vmem:[#allocation6 + $0x278] sm:$0xff]
    %v207 = vld [vmem:[#allocation6 + $0x280] sm:$0xff]
    %v208 = vld [vmem:[#allocation6 + $0x288] sm:$0xff]
    %v209 = vld [vmem:[#allocation6 + $0x290] sm:$0xff]
    %v210 = vld [vmem:[#allocation6 + $0x298] sm:$0xff]
    %v211 = vld [vmem:[#allocation6 + $0x2a0] sm:$0xff]
    %v212 = vld [vmem:[#allocation6 + $0x2a8] sm:$0xff]
    %v213 = vld [vmem:[#allocation6 + $0x2b0] sm:$0xff]
    %v214 = vld [vmem:[#allocation6 + $0x2b8] sm:$0xff]
    %v215 = vld [vmem:[#allocation6 + $0x2c0] sm:$0xff]
    %v216 = vld [vmem:[#allocation6 + $0x2c8] sm:$0xff]
    %v217 = vld [vmem:[#allocation6 + $0x2d0] sm:$0xff]
    %v218 = vld [vmem:[#allocation6 + $0x2d8] sm:$0xff]
    %v219 = vld [vmem:[#allocation6 + $0x2e0] sm:$0xff]
    %v220 = vld [vmem:[#allocation6 + $0x2e8] sm:$0xff]
    %v221 = vld [vmem:[#allocation6 + $0x2f0] sm:$0xff]
    %v222 = vld [vmem:[#allocation6 + $0x2f8] sm:$0xff]
    %v223 = vld [vmem:[#allocation6 + $0x300] sm:$0xff]
    %v224 = vld [vmem:[#allocation6 + $0x308] sm:$0xff]
    %v225 = vld [vmem:[#allocation6 + $0x310] sm:$0xff]
    %v226 = vld [vmem:[#allocation6 + $0x318] sm:$0xff]
    %v227 = vld [vmem:[#allocation6 + $0x320] sm:$0xff]
    %v228 = vld [vmem:[#allocation6 + $0x328] sm:$0xff]
    %v229 = vld [vmem:[#allocation6 + $0x330] sm:$0xff]
    %v230 = vld [vmem:[#allocation6 + $0x338] sm:$0xff]
    %v231 = vld [vmem:[#allocation6 + $0x340] sm:$0xff]
    %v232 = vld [vmem:[#allocation6 + $0x348] sm:$0xff]
    %v233 = vld [vmem:[#allocation6 + $0x350] sm:$0xff]
    %v234 = vld [vmem:[#allocation6 + $0x358] sm:$0xff]
    %v235 = vld [vmem:[#allocation6 + $0x360] sm:$0xff]
    %v236 = vld [vmem:[#allocation6 + $0x368] sm:$0xff]
    %v237 = vld [vmem:[#allocation6 + $0x370] sm:$0xff]
    %v238 = vld [vmem:[#allocation6 + $0x378] sm:$0xff]
    %v239 = vld [vmem:[#allocation6 + $0x380] sm:$0xff]
    %v240 = vld [vmem:[#allocation6 + $0x388] sm:$0xff]
    %v241 = vld [vmem:[#allocation6 + $0x390] sm:$0xff]
    %v242 = vld [vmem:[#allocation6 + $0x398] sm:$0xff]
    %v243 = vld [vmem:[#allocation6 + $0x3a0] sm:$0xff]
    %v244 = vld [vmem:[#allocation6 + $0x3a8] sm:$0xff]
    %v245 = vld [vmem:[#allocation6 + $0x3b0] sm:$0xff]
    %v246 = vld [vmem:[#allocation6 + $0x3b8] sm:$0xff]
    %v247 = vld [vmem:[#allocation6 + $0x3c0] sm:$0xff]
    %v248 = vld [vmem:[#allocation6 + $0x3c8] sm:$0xff]
    %v249 = vld [vmem:[#allocation6 + $0x3d0] sm:$0xff]
    %v250 = vld [vmem:[#allocation6 + $0x3d8] sm:$0xff]
    %v251 = vld [vmem:[#allocation6 + $0x3e0] sm:$0xff]
    %v252 = vld [vmem:[#allocation6 + $0x3e8] sm:$0xff]
    %v253 = vld [vmem:[#allocation6 + $0x3f0] sm:$0xff]
    %v254 = vld [vmem:[#allocation6 + $0x3f8] sm:$0xff]
    %v255 = vld [vmem:[#allocation8] sm:$0xff]
    %v256 = vld [vmem:[#allocation8 + $0x8] sm:$0xff]
    %v257 = vld [vmem:[#allocation8 + $0x10] sm:$0xff]
    %v258 = vld [vmem:[#allocation8 + $0x18] sm:$0xff]
    %v259 = vld [vmem:[#allocation8 + $0x20] sm:$0xff]
    %v260 = vld [vmem:[#allocation8 + $0x28] sm:$0xff]
    %v261 = vld [vmem:[#allocation8 + $0x30] sm:$0xff]
    %v262 = vld [vmem:[#allocation8 + $0x38] sm:$0xff]
    %v263 = vld [vmem:[#allocation8 + $0x40] sm:$0xff]
    %v264 = vld [vmem:[#allocation8 + $0x48] sm:$0xff]
    %v265 = vld [vmem:[#allocation8 + $0x50] sm:$0xff]
    %v266 = vld [vmem:[#allocation8 + $0x58] sm:$0xff]
    %v267 = vld [vmem:[#allocation8 + $0x60] sm:$0xff]
    %v268 = vld [vmem:[#allocation8 + $0x68] sm:$0xff]
    %v269 = vld [vmem:[#allocation8 + $0x70] sm:$0xff]
    %v270 = vld [vmem:[#allocation8 + $0x78] sm:$0xff]
    %v271 = vld [vmem:[#allocation8 + $0x80] sm:$0xff]
    %v272 = vld [vmem:[#allocation8 + $0x88] sm:$0xff]
    %v273 = vld [vmem:[#allocation8 + $0x90] sm:$0xff]
    %v274 = vld [vmem:[#allocation8 + $0x98] sm:$0xff]
    %v275 = vld [vmem:[#allocation8 + $0xa0] sm:$0xff]
    %v276 = vld [vmem:[#allocation8 + $0xa8] sm:$0xff]
    %v277 = vld [vmem:[#allocation8 + $0xb0] sm:$0xff]
    %v278 = vld [vmem:[#allocation8 + $0xb8] sm:$0xff]
    %v279 = vld [vmem:[#allocation8 + $0xc0] sm:$0xff]
    %v280 = vld [vmem:[#allocation8 + $0xc8] sm:$0xff]
    %v281 = vld [vmem:[#allocation8 + $0xd0] sm:$0xff]
    %v282 = vld [vmem:[#allocation8 + $0xd8] sm:$0xff]
    %v283 = vld [vmem:[#allocation8 + $0xe0] sm:$0xff]
    %v284 = vld [vmem:[#allocation8 + $0xe8] sm:$0xff]
    %v285 = vld [vmem:[#allocation8 + $0xf0] sm:$0xff]
    %v286 = vld [vmem:[#allocation8 + $0xf8] sm:$0xff]
    %v287 = vld [vmem:[#allocation8 + $0x100] sm:$0xff]
    %v288 = vld [vmem:[#allocation8 + $0x108] sm:$0xff]
    %v289 = vld [vmem:[#allocation8 + $0x110] sm:$0xff]
    %v290 = vld [vmem:[#allocation8 + $0x118] sm:$0xff]
    %v291 = vld [vmem:[#allocation8 + $0x120] sm:$0xff]
    %v292 = vld [vmem:[#allocation8 + $0x128] sm:$0xff]
    %v293 = vld [vmem:[#allocation8 + $0x130] sm:$0xff]
    %v294 = vld [vmem:[#allocation8 + $0x138] sm:$0xff]
    %v295 = vld [vmem:[#allocation8 + $0x140] sm:$0xff]
    %v296 = vld [vmem:[#allocation8 + $0x148] sm:$0xff]
    %v297 = vld [vmem:[#allocation8 + $0x150] sm:$0xff]
    %v298 = vld [vmem:[#allocation8 + $0x158] sm:$0xff]
    %v299 = vld [vmem:[#allocation8 + $0x160] sm:$0xff]
    %v300 = vld [vmem:[#allocation8 + $0x168] sm:$0xff]
    %v301 = vld [vmem:[#allocation8 + $0x170] sm:$0xff]
    %v302 = vld [vmem:[#allocation8 + $0x178] sm:$0xff]
    %v303 = vld [vmem:[#allocation8 + $0x180] sm:$0xff]
    %v304 = vld [vmem:[#allocation8 + $0x188] sm:$0xff]
    %v305 = vld [vmem:[#allocation8 + $0x190] sm:$0xff]
    %v306 = vld [vmem:[#allocation8 + $0x198] sm:$0xff]
    %v307 = vld [vmem:[#allocation8 + $0x1a0] sm:$0xff]
    %v308 = vld [vmem:[#allocation8 + $0x1a8] sm:$0xff]
    %v309 = vld [vmem:[#allocation8 + $0x1b0] sm:$0xff]
    %v310 = vld [vmem:[#allocation8 + $0x1b8] sm:$0xff]
    %v311 = vld [vmem:[#allocation8 + $0x1c0] sm:$0xff]
    %v312 = vld [vmem:[#allocation8 + $0x1c8] sm:$0xff]
    %v313 = vld [vmem:[#allocation8 + $0x1d0] sm:$0xff]
    %v314 = vld [vmem:[#allocation8 + $0x1d8] sm:$0xff]
    %v315 = vld [vmem:[#allocation8 + $0x1e0] sm:$0xff]
    %v316 = vld [vmem:[#allocation8 + $0x1e8] sm:$0xff]
    %v317 = vld [vmem:[#allocation8 + $0x1f0] sm:$0xff]
    %v318 = vld [vmem:[#allocation8 + $0x1f8] sm:$0xff]
    %v319 = vld [vmem:[#allocation8 + $0x200] sm:$0xff]
    %v320 = vld [vmem:[#allocation8 + $0x208] sm:$0xff]
    %v321 = vld [vmem:[#allocation8 + $0x210] sm:$0xff]
    %v322 = vld [vmem:[#allocation8 + $0x218] sm:$0xff]
    %v323 = vld [vmem:[#allocation8 + $0x220] sm:$0xff]
    %v324 = vld [vmem:[#allocation8 + $0x228] sm:$0xff]
    %v325 = vld [vmem:[#allocation8 + $0x230] sm:$0xff]
    %v326 = vld [vmem:[#allocation8 + $0x238] sm:$0xff]
    %v327 = vld [vmem:[#allocation8 + $0x240] sm:$0xff]
    %v328 = vld [vmem:[#allocation8 + $0x248] sm:$0xff]
    %v329 = vld [vmem:[#allocation8 + $0x250] sm:$0xff]
    %v330 = vld [vmem:[#allocation8 + $0x258] sm:$0xff]
    %v331 = vld [vmem:[#allocation8 + $0x260] sm:$0xff]
    %v332 = vld [vmem:[#allocation8 + $0x268] sm:$0xff]
    %v333 = vld [vmem:[#allocation8 + $0x270] sm:$0xff]
    %v334 = vld [vmem:[#allocation8 + $0x278] sm:$0xff]
    %v335 = vld [vmem:[#allocation8 + $0x280] sm:$0xff]
    %v336 = vld [vmem:[#allocation8 + $0x288] sm:$0xff]
    %v337 = vld [vmem:[#allocation8 + $0x290] sm:$0xff]
    %v338 = vld [vmem:[#allocation8 + $0x298] sm:$0xff]
    %v339 = vld [vmem:[#allocation8 + $0x2a0] sm:$0xff]
    %v340 = vld [vmem:[#allocation8 + $0x2a8] sm:$0xff]
    %v341 = vld [vmem:[#allocation8 + $0x2b0] sm:$0xff]
    %v342 = vld [vmem:[#allocation8 + $0x2b8] sm:$0xff]
    %v343 = vld [vmem:[#allocation8 + $0x2c0] sm:$0xff]
    %v344 = vld [vmem:[#allocation8 + $0x2c8] sm:$0xff]
    %v345 = vld [vmem:[#allocation8 + $0x2d0] sm:$0xff]
    %v346 = vld [vmem:[#allocation8 + $0x2d8] sm:$0xff]
    %v347 = vld [vmem:[#allocation8 + $0x2e0] sm:$0xff]
    %v348 = vld [vmem:[#allocation8 + $0x2e8] sm:$0xff]
    %v349 = vld [vmem:[#allocation8 + $0x2f0] sm:$0xff]
    %v350 = vld [vmem:[#allocation8 + $0x2f8] sm:$0xff]
    %v351 = vld [vmem:[#allocation8 + $0x300] sm:$0xff]
    %v352 = vld [vmem:[#allocation8 + $0x308] sm:$0xff]
    %v353 = vld [vmem:[#allocation8 + $0x310] sm:$0xff]
    %v354 = vld [vmem:[#allocation8 + $0x318] sm:$0xff]
    %v355 = vld [vmem:[#allocation8 + $0x320] sm:$0xff]
    %v356 = vld [vmem:[#allocation8 + $0x328] sm:$0xff]
    %v357 = vld [vmem:[#allocation8 + $0x330] sm:$0xff]
    %v358 = vld [vmem:[#allocation8 + $0x338] sm:$0xff]
    %v359 = vld [vmem:[#allocation8 + $0x340] sm:$0xff]
    %v360 = vld [vmem:[#allocation8 + $0x348] sm:$0xff]
    %v361 = vld [vmem:[#allocation8 + $0x350] sm:$0xff]
    %v362 = vld [vmem:[#allocation8 + $0x358] sm:$0xff]
    %v363 = vld [vmem:[#allocation8 + $0x360] sm:$0xff]
    %v364 = vld [vmem:[#allocation8 + $0x368] sm:$0xff]
    %v365 = vld [vmem:[#allocation8 + $0x370] sm:$0xff]
    %v366 = vld [vmem:[#allocation8 + $0x378] sm:$0xff]
    %v367 = vld [vmem:[#allocation8 + $0x380] sm:$0xff]
    %v368 = vld [vmem:[#allocation8 + $0x388] sm:$0xff]
    %v369 = vld [vmem:[#allocation8 + $0x390] sm:$0xff]
    %v370 = vld [vmem:[#allocation8 + $0x398] sm:$0xff]
    %v371 = vld [vmem:[#allocation8 + $0x3a0] sm:$0xff]
    %v372 = vld [vmem:[#allocation8 + $0x3a8] sm:$0xff]
    %v373 = vld [vmem:[#allocation8 + $0x3b0] sm:$0xff]
    %v374 = vld [vmem:[#allocation8 + $0x3b8] sm:$0xff]
    %v375 = vld [vmem:[#allocation8 + $0x3c0] sm:$0xff]
    %v376 = vld [vmem:[#allocation8 + $0x3c8] sm:$0xff]
    %v377 = vld [vmem:[#allocation8 + $0x3d0] sm:$0xff]
    %v378 = vld [vmem:[#allocation8 + $0x3d8] sm:$0xff]
    %v379 = vld [vmem:[#allocation8 + $0x3e0] sm:$0xff]
    %v380 = vld [vmem:[#allocation8 + $0x3e8] sm:$0xff]
    %v381 = vld [vmem:[#allocation8 + $0x3f0] sm:$0xff]
    %v382 = vld [vmem:[#allocation8 + $0x3f8] sm:$0xff]
    %v383 = vld [vmem:[#allocation8 + $0x400] sm:$0xff]
    %v384 = vld [vmem:[#allocation8 + $0x408] sm:$0xff]
    %v385 = vld [vmem:[#allocation8 + $0x410] sm:$0xff]
    %v386 = vld [vmem:[#allocation8 + $0x418] sm:$0xff]
    %v387 = vld [vmem:[#allocation8 + $0x420] sm:$0xff]
    %v388 = vld [vmem:[#allocation8 + $0x428] sm:$0xff]
    %v389 = vld [vmem:[#allocation8 + $0x430] sm:$0xff]
    %v390 = vld [vmem:[#allocation8 + $0x438] sm:$0xff]
    %v391 = vld [vmem:[#allocation8 + $0x440] sm:$0xff]
    %v392 = vld [vmem:[#allocation8 + $0x448] sm:$0xff]
    %v393 = vld [vmem:[#allocation8 + $0x450] sm:$0xff]
    %v394 = vld [vmem:[#allocation8 + $0x458] sm:$0xff]
    %v395 = vld [vmem:[#allocation8 + $0x460] sm:$0xff]
    %v396 = vld [vmem:[#allocation8 + $0x468] sm:$0xff]
    %v397 = vld [vmem:[#allocation8 + $0x470] sm:$0xff]
    %v398 = vld [vmem:[#allocation8 + $0x478] sm:$0xff]
    %v399 = vld [vmem:[#allocation8 + $0x480] sm:$0xff]
    %v400 = vld [vmem:[#allocation8 + $0x488] sm:$0xff]
    %v401 = vld [vmem:[#allocation8 + $0x490] sm:$0xff]
    %v402 = vld [vmem:[#allocation8 + $0x498] sm:$0xff]
    %v403 = vld [vmem:[#allocation8 + $0x4a0] sm:$0xff]
    %v404 = vld [vmem:[#allocation8 + $0x4a8] sm:$0xff]
    %v405 = vld [vmem:[#allocation8 + $0x4b0] sm:$0xff]
    %v406 = vld [vmem:[#allocation8 + $0x4b8] sm:$0xff]
    %v407 = vld [vmem:[#allocation8 + $0x4c0] sm:$0xff]
    %v408 = vld [vmem:[#allocation8 + $0x4c8] sm:$0xff]
    %v409 = vld [vmem:[#allocation8 + $0x4d0] sm:$0xff]
    %v410 = vld [vmem:[#allocation8 + $0x4d8] sm:$0xff]
    %v411 = vld [vmem:[#allocation8 + $0x4e0] sm:$0xff]
    %v412 = vld [vmem:[#allocation8 + $0x4e8] sm:$0xff]
    %v413 = vld [vmem:[#allocation8 + $0x4f0] sm:$0xff]
    %v414 = vld [vmem:[#allocation8 + $0x4f8] sm:$0xff]
    %v415 = vld [vmem:[#allocation8 + $0x500] sm:$0xff]
    %v416 = vld [vmem:[#allocation8 + $0x508] sm:$0xff]
    %v417 = vld [vmem:[#allocation8 + $0x510] sm:$0xff]
    %v418 = vld [vmem:[#allocation8 + $0x518] sm:$0xff]
    %v419 = vld [vmem:[#allocation8 + $0x520] sm:$0xff]
    %v420 = vld [vmem:[#allocation8 + $0x528] sm:$0xff]
    %v421 = vld [vmem:[#allocation8 + $0x530] sm:$0xff]
    %v422 = vld [vmem:[#allocation8 + $0x538] sm:$0xff]
    %v423 = vld [vmem:[#allocation8 + $0x540] sm:$0xff]
    %v424 = vld [vmem:[#allocation8 + $0x548] sm:$0xff]
    %v425 = vld [vmem:[#allocation8 + $0x550] sm:$0xff]
    %v426 = vld [vmem:[#allocation8 + $0x558] sm:$0xff]
    %v427 = vld [vmem:[#allocation8 + $0x560] sm:$0xff]
    %v428 = vld [vmem:[#allocation8 + $0x568] sm:$0xff]
    %v429 = vld [vmem:[#allocation8 + $0x570] sm:$0xff]
    %v430 = vld [vmem:[#allocation8 + $0x578] sm:$0xff]
    %v431 = vld [vmem:[#allocation8 + $0x580] sm:$0xff]
    %v432 = vld [vmem:[#allocation8 + $0x588] sm:$0xff]
    %v433 = vld [vmem:[#allocation8 + $0x590] sm:$0xff]
    %v434 = vld [vmem:[#allocation8 + $0x598] sm:$0xff]
    %v435 = vld [vmem:[#allocation8 + $0x5a0] sm:$0xff]
    %v436 = vld [vmem:[#allocation8 + $0x5a8] sm:$0xff]
    %v437 = vld [vmem:[#allocation8 + $0x5b0] sm:$0xff]
    %v438 = vld [vmem:[#allocation8 + $0x5b8] sm:$0xff]
    %v439 = vld [vmem:[#allocation8 + $0x5c0] sm:$0xff]
    %v440 = vld [vmem:[#allocation8 + $0x5c8] sm:$0xff]
    %v441 = vld [vmem:[#allocation8 + $0x5d0] sm:$0xff]
    %v442 = vld [vmem:[#allocation8 + $0x5d8] sm:$0xff]
    %v443 = vld [vmem:[#allocation8 + $0x5e0] sm:$0xff]
    %v444 = vld [vmem:[#allocation8 + $0x5e8] sm:$0xff]
    %v445 = vld [vmem:[#allocation8 + $0x5f0] sm:$0xff]
    %v446 = vld [vmem:[#allocation8 + $0x5f8] sm:$0xff]
    %v447 = vld [vmem:[#allocation8 + $0x600] sm:$0xff]
    %v448 = vld [vmem:[#allocation8 + $0x608] sm:$0xff]
    %v449 = vld [vmem:[#allocation8 + $0x610] sm:$0xff]
    %v450 = vld [vmem:[#allocation8 + $0x618] sm:$0xff]
    %v451 = vld [vmem:[#allocation8 + $0x620] sm:$0xff]
    %v452 = vld [vmem:[#allocation8 + $0x628] sm:$0xff]
    %v453 = vld [vmem:[#allocation8 + $0x630] sm:$0xff]
    %v454 = vld [vmem:[#allocation8 + $0x638] sm:$0xff]
    %v455 = vld [vmem:[#allocation8 + $0x640] sm:$0xff]
    %v456 = vld [vmem:[#allocation8 + $0x648] sm:$0xff]
    %v457 = vld [vmem:[#allocation8 + $0x650] sm:$0xff]
    %v458 = vld [vmem:[#allocation8 + $0x658] sm:$0xff]
    %v459 = vld [vmem:[#allocation8 + $0x660] sm:$0xff]
    %v460 = vld [vmem:[#allocation8 + $0x668] sm:$0xff]
    %v461 = vld [vmem:[#allocation8 + $0x670] sm:$0xff]
    %v462 = vld [vmem:[#allocation8 + $0x678] sm:$0xff]
    %v463 = vld [vmem:[#allocation8 + $0x680] sm:$0xff]
    %v464 = vld [vmem:[#allocation8 + $0x688] sm:$0xff]
    %v465 = vld [vmem:[#allocation8 + $0x690] sm:$0xff]
    %v466 = vld [vmem:[#allocation8 + $0x698] sm:$0xff]
    %v467 = vld [vmem:[#allocation8 + $0x6a0] sm:$0xff]
    %v468 = vld [vmem:[#allocation8 + $0x6a8] sm:$0xff]
    %v469 = vld [vmem:[#allocation8 + $0x6b0] sm:$0xff]
    %v470 = vld [vmem:[#allocation8 + $0x6b8] sm:$0xff]
    %v471 = vld [vmem:[#allocation8 + $0x6c0] sm:$0xff]
    %v472 = vld [vmem:[#allocation8 + $0x6c8] sm:$0xff]
    %v473 = vld [vmem:[#allocation8 + $0x6d0] sm:$0xff]
    %v474 = vld [vmem:[#allocation8 + $0x6d8] sm:$0xff]
    %v475 = vld [vmem:[#allocation8 + $0x6e0] sm:$0xff]
    %v476 = vld [vmem:[#allocation8 + $0x6e8] sm:$0xff]
    %v477 = vld [vmem:[#allocation8 + $0x6f0] sm:$0xff]
    %v478 = vld [vmem:[#allocation8 + $0x6f8] sm:$0xff]
    %v479 = vld [vmem:[#allocation8 + $0x700] sm:$0xff]
    %v480 = vld [vmem:[#allocation8 + $0x708] sm:$0xff]
    %v481 = vld [vmem:[#allocation8 + $0x710] sm:$0xff]
    %v482 = vld [vmem:[#allocation8 + $0x718] sm:$0xff]
    %v483 = vld [vmem:[#allocation8 + $0x720] sm:$0xff]
    %v484 = vld [vmem:[#allocation8 + $0x728] sm:$0xff]
    %v485 = vld [vmem:[#allocation8 + $0x730] sm:$0xff]
    %v486 = vld [vmem:[#allocation8 + $0x738] sm:$0xff]
    %v487 = vld [vmem:[#allocation8 + $0x740] sm:$0xff]
    %v488 = vld [vmem:[#allocation8 + $0x748] sm:$0xff]
    %v489 = vld [vmem:[#allocation8 + $0x750] sm:$0xff]
    %v490 = vld [vmem:[#allocation8 + $0x758] sm:$0xff]
    %v491 = vld [vmem:[#allocation8 + $0x760] sm:$0xff]
    %v492 = vld [vmem:[#allocation8 + $0x768] sm:$0xff]
    %v493 = vld [vmem:[#allocation8 + $0x770] sm:$0xff]
    %v494 = vld [vmem:[#allocation8 + $0x778] sm:$0xff]
    %v495 = vld [vmem:[#allocation8 + $0x780] sm:$0xff]
    %v496 = vld [vmem:[#allocation8 + $0x788] sm:$0xff]
    %v497 = vld [vmem:[#allocation8 + $0x790] sm:$0xff]
    %v498 = vld [vmem:[#allocation8 + $0x798] sm:$0xff]
    %v499 = vld [vmem:[#allocation8 + $0x7a0] sm:$0xff]
    %v500 = vld [vmem:[#allocation8 + $0x7a8] sm:$0xff]
    %v501 = vld [vmem:[#allocation8 + $0x7b0] sm:$0xff]
    %v502 = vld [vmem:[#allocation8 + $0x7b8] sm:$0xff]
    %v503 = vld [vmem:[#allocation8 + $0x7c0] sm:$0xff]
    %v504 = vld [vmem:[#allocation8 + $0x7c8] sm:$0xff]
    %v505 = vld [vmem:[#allocation8 + $0x7d0] sm:$0xff]
    %v506 = vld [vmem:[#allocation8 + $0x7d8] sm:$0xff]
    %v507 = vld [vmem:[#allocation8 + $0x7e0] sm:$0xff]
    %v508 = vld [vmem:[#allocation8 + $0x7e8] sm:$0xff]
    %v509 = vld [vmem:[#allocation8 + $0x7f0] sm:$0xff]
    %v510 = vld [vmem:[#allocation8 + $0x7f8] sm:$0xff]
    %v511 = vld [vmem:[#allocation9] sm:$0xff]
    %v513 = vlaneseq
    %v514 = vshrl.u32 %v513, 7
    %v515 = vsub.s32 0, %v514
    %v516 = vrot.slane %v511, %v515
    %v517 = vlaneseq
    %v518 = vshrl.u32 %v517, 7
    %v519 = vsub.s32 1, %v518
    %v520 = vrot.slane %v511, %v519
    %v521 = vlaneseq
    %v522 = vshrl.u32 %v521, 7
    %v523 = vsub.s32 2, %v522
    %v524 = vrot.slane %v511, %v523
    %v525 = vlaneseq
    %v526 = vshrl.u32 %v525, 7
    %v527 = vsub.s32 3, %v526
    %v528 = vrot.slane %v511, %v527
    %v529 = vlaneseq
    %v530 = vshrl.u32 %v529, 7
    %v531 = vsub.s32 4, %v530
    %v532 = vrot.slane %v511, %v531
    %v533 = vlaneseq
    %v534 = vshrl.u32 %v533, 7
    %v535 = vsub.s32 5, %v534
    %v536 = vrot.slane %v511, %v535
    %v537 = vlaneseq
    %v538 = vshrl.u32 %v537, 7
    %v539 = vsub.s32 6, %v538
    %v540 = vrot.slane %v511, %v539
    %v541 = vlaneseq
    %v542 = vshrl.u32 %v541, 7
    %v543 = vsub.s32 7, %v542
    %v544 = vrot.slane %v511, %v543
    %v553 = vld [vmem:[#allocation11] sm:$0xff]
    %v554 = vld [vmem:[#allocation11 + $0x8] sm:$0xff]
    %v555 = vld [vmem:[#allocation12] sm:$0xff]
    %v556 = vld [vmem:[#allocation12 + $0x8] sm:$0xff]
    %s557 = scalar_lea.vmem [#allocation11], 16
    %v558 = vld [vmem:[%s557] sm:$0xff]
    %v559 = vld [vmem:[%s557 + $0x8] sm:$0xff]
    %s560 = scalar_lea.vmem [#allocation12], 16
    %v561 = vld [vmem:[%s560] sm:$0xff]
    %v562 = vld [vmem:[%s560 + $0x8] sm:$0xff]
    %v563 = vld [vmem:[#allocation3] sm:$0xff]
    %v564 = vld [vmem:[#allocation3 + $0x8] sm:$0xff]
    %v565 = vld [vmem:[#allocation3 + $0x10] sm:$0xff]
    %v566 = vld [vmem:[#allocation3 + $0x18] sm:$0xff]
    %v567 = vld [vmem:[#allocation3 + $0x20] sm:$0xff]
    %v568 = vld [vmem:[#allocation3 + $0x28] sm:$0xff]
    %v569 = vld [vmem:[#allocation3 + $0x30] sm:$0xff]
    %v570 = vld [vmem:[#allocation3 + $0x38] sm:$0xff]
    %v571 = vpack.c.bf16 %v553, %v553
    %v572 = vpack.c.bf16 %v554, %v554
    %v701 = vunpack.c.l.b16 %v127
    %v702 = vunpack.c.h.b16 %v127
    %v703 = vunpack.c.l.b16 %v128
    %v704 = vunpack.c.h.b16 %v128
    %v705 = vunpack.c.l.b16 %v129
    %v706 = vunpack.c.h.b16 %v129
    %v707 = vunpack.c.l.b16 %v130
    %v708 = vunpack.c.h.b16 %v130
    %v709 = vunpack.c.l.b16 %v131
    %v710 = vunpack.c.h.b16 %v131
    %v711 = vunpack.c.l.b16 %v132
    %v712 = vunpack.c.h.b16 %v132
    %v713 = vunpack.c.l.b16 %v133
    %v714 = vunpack.c.h.b16 %v133
    %v715 = vunpack.c.l.b16 %v134
    %v716 = vunpack.c.h.b16 %v134
    %v717 = vunpack.c.l.b16 %v135
    %v718 = vunpack.c.h.b16 %v135
    %v719 = vunpack.c.l.b16 %v136
    %v720 = vunpack.c.h.b16 %v136
    %v721 = vunpack.c.l.b16 %v137
    %v722 = vunpack.c.h.b16 %v137
    %v723 = vunpack.c.l.b16 %v138
    %v724 = vunpack.c.h.b16 %v138
    %v725 = vunpack.c.l.b16 %v139
    %v726 = vunpack.c.h.b16 %v139
    %v727 = vunpack.c.l.b16 %v140
    %v728 = vunpack.c.h.b16 %v140
    %v729 = vunpack.c.l.b16 %v141
    %v730 = vunpack.c.h.b16 %v141
    %v731 = vunpack.c.l.b16 %v142
    %v732 = vunpack.c.h.b16 %v142
    %v733 = vunpack.c.l.b16 %v143
    %v734 = vunpack.c.h.b16 %v143
    %v735 = vunpack.c.l.b16 %v144
    %v736 = vunpack.c.h.b16 %v144
    %v737 = vunpack.c.l.b16 %v145
    %v738 = vunpack.c.h.b16 %v145
    %v739 = vunpack.c.l.b16 %v146
    %v740 = vunpack.c.h.b16 %v146
    %v741 = vunpack.c.l.b16 %v147
    %v742 = vunpack.c.h.b16 %v147
    %v743 = vunpack.c.l.b16 %v148
    %v744 = vunpack.c.h.b16 %v148
    %v745 = vunpack.c.l.b16 %v149
    %v746 = vunpack.c.h.b16 %v149
    %v747 = vunpack.c.l.b16 %v150
    %v748 = vunpack.c.h.b16 %v150
    %v749 = vunpack.c.l.b16 %v151
    %v750 = vunpack.c.h.b16 %v151
    %v751 = vunpack.c.l.b16 %v152
    %v752 = vunpack.c.h.b16 %v152
    %v753 = vunpack.c.l.b16 %v153
    %v754 = vunpack.c.h.b16 %v153
    %v755 = vunpack.c.l.b16 %v154
    %v756 = vunpack.c.h.b16 %v154
    %v757 = vunpack.c.l.b16 %v155
    %v758 = vunpack.c.h.b16 %v155
    %v759 = vunpack.c.l.b16 %v156
    %v760 = vunpack.c.h.b16 %v156
    %v761 = vunpack.c.l.b16 %v157
    %v762 = vunpack.c.h.b16 %v157
    %v763 = vunpack.c.l.b16 %v158
    %v764 = vunpack.c.h.b16 %v158
    %v765 = vunpack.c.l.b16 %v159
    %v766 = vunpack.c.h.b16 %v159
    %v767 = vunpack.c.l.b16 %v160
    %v768 = vunpack.c.h.b16 %v160
    %v769 = vunpack.c.l.b16 %v161
    %v770 = vunpack.c.h.b16 %v161
    %v771 = vunpack.c.l.b16 %v162
    %v772 = vunpack.c.h.b16 %v162
    %v773 = vunpack.c.l.b16 %v163
    %v774 = vunpack.c.h.b16 %v163
    %v775 = vunpack.c.l.b16 %v164
    %v776 = vunpack.c.h.b16 %v164
    %v777 = vunpack.c.l.b16 %v165
    %v778 = vunpack.c.h.b16 %v165
    %v779 = vunpack.c.l.b16 %v166
    %v780 = vunpack.c.h.b16 %v166
    %v781 = vunpack.c.l.b16 %v167
    %v782 = vunpack.c.h.b16 %v167
    %v783 = vunpack.c.l.b16 %v168
    %v784 = vunpack.c.h.b16 %v168
    %v785 = vunpack.c.l.b16 %v169
    %v786 = vunpack.c.h.b16 %v169
    %v787 = vunpack.c.l.b16 %v170
    %v788 = vunpack.c.h.b16 %v170
    %v789 = vunpack.c.l.b16 %v171
    %v790 = vunpack.c.h.b16 %v171
    %v791 = vunpack.c.l.b16 %v172
    %v792 = vunpack.c.h.b16 %v172
    %v793 = vunpack.c.l.b16 %v173
    %v794 = vunpack.c.h.b16 %v173
    %v795 = vunpack.c.l.b16 %v174
    %v796 = vunpack.c.h.b16 %v174
    %v797 = vunpack.c.l.b16 %v175
    %v798 = vunpack.c.h.b16 %v175
    %v799 = vunpack.c.l.b16 %v176
    %v800 = vunpack.c.h.b16 %v176
    %v801 = vunpack.c.l.b16 %v177
    %v802 = vunpack.c.h.b16 %v177
    %v803 = vunpack.c.l.b16 %v178
    %v804 = vunpack.c.h.b16 %v178
    %v805 = vunpack.c.l.b16 %v179
    %v806 = vunpack.c.h.b16 %v179
    %v807 = vunpack.c.l.b16 %v180
    %v808 = vunpack.c.h.b16 %v180
    %v809 = vunpack.c.l.b16 %v181
    %v810 = vunpack.c.h.b16 %v181
    %v811 = vunpack.c.l.b16 %v182
    %v812 = vunpack.c.h.b16 %v182
    %v813 = vunpack.c.l.b16 %v183
    %v814 = vunpack.c.h.b16 %v183
    %v815 = vunpack.c.l.b16 %v184
    %v816 = vunpack.c.h.b16 %v184
    %v817 = vunpack.c.l.b16 %v185
    %v818 = vunpack.c.h.b16 %v185
    %v819 = vunpack.c.l.b16 %v186
    %v820 = vunpack.c.h.b16 %v186
    %v821 = vunpack.c.l.b16 %v187
    %v822 = vunpack.c.h.b16 %v187
    %v823 = vunpack.c.l.b16 %v188
    %v824 = vunpack.c.h.b16 %v188
    %v825 = vunpack.c.l.b16 %v189
    %v826 = vunpack.c.h.b16 %v189
    %v827 = vunpack.c.l.b16 %v190
    %v828 = vunpack.c.h.b16 %v190
    %v829 = vunpack.c.l.b16 %v191
    %v830 = vunpack.c.h.b16 %v191
    %v831 = vunpack.c.l.b16 %v192
    %v832 = vunpack.c.h.b16 %v192
    %v833 = vunpack.c.l.b16 %v193
    %v834 = vunpack.c.h.b16 %v193
    %v835 = vunpack.c.l.b16 %v194
    %v836 = vunpack.c.h.b16 %v194
    %v837 = vunpack.c.l.b16 %v195
    %v838 = vunpack.c.h.b16 %v195
    %v839 = vunpack.c.l.b16 %v196
    %v840 = vunpack.c.h.b16 %v196
    %v841 = vunpack.c.l.b16 %v197
    %v842 = vunpack.c.h.b16 %v197
    %v843 = vunpack.c.l.b16 %v198
    %v844 = vunpack.c.h.b16 %v198
    %v845 = vunpack.c.l.b16 %v199
    %v846 = vunpack.c.h.b16 %v199
    %v847 = vunpack.c.l.b16 %v200
    %v848 = vunpack.c.h.b16 %v200
    %v849 = vunpack.c.l.b16 %v201
    %v850 = vunpack.c.h.b16 %v201
    %v851 = vunpack.c.l.b16 %v202
    %v852 = vunpack.c.h.b16 %v202
    %v853 = vunpack.c.l.b16 %v203
    %v854 = vunpack.c.h.b16 %v203
    %v855 = vunpack.c.l.b16 %v204
    %v856 = vunpack.c.h.b16 %v204
    %v857 = vunpack.c.l.b16 %v205
    %v858 = vunpack.c.h.b16 %v205
    %v859 = vunpack.c.l.b16 %v206
    %v860 = vunpack.c.h.b16 %v206
    %v861 = vunpack.c.l.b16 %v207
    %v862 = vunpack.c.h.b16 %v207
    %v863 = vunpack.c.l.b16 %v208
    %v864 = vunpack.c.h.b16 %v208
    %v865 = vunpack.c.l.b16 %v209
    %v866 = vunpack.c.h.b16 %v209
    %v867 = vunpack.c.l.b16 %v210
    %v868 = vunpack.c.h.b16 %v210
    %v869 = vunpack.c.l.b16 %v211
    %v870 = vunpack.c.h.b16 %v211
    %v871 = vunpack.c.l.b16 %v212
    %v872 = vunpack.c.h.b16 %v212
    %v873 = vunpack.c.l.b16 %v213
    %v874 = vunpack.c.h.b16 %v213
    %v875 = vunpack.c.l.b16 %v214
    %v876 = vunpack.c.h.b16 %v214
    %v877 = vunpack.c.l.b16 %v215
    %v878 = vunpack.c.h.b16 %v215
    %v879 = vunpack.c.l.b16 %v216
    %v880 = vunpack.c.h.b16 %v216
    %v881 = vunpack.c.l.b16 %v217
    %v882 = vunpack.c.h.b16 %v217
    %v883 = vunpack.c.l.b16 %v218
    %v884 = vunpack.c.h.b16 %v218
    %v885 = vunpack.c.l.b16 %v219
    %v886 = vunpack.c.h.b16 %v219
    %v887 = vunpack.c.l.b16 %v220
    %v888 = vunpack.c.h.b16 %v220
    %v889 = vunpack.c.l.b16 %v221
    %v890 = vunpack.c.h.b16 %v221
    %v891 = vunpack.c.l.b16 %v222
    %v892 = vunpack.c.h.b16 %v222
    %v893 = vunpack.c.l.b16 %v223
    %v894 = vunpack.c.h.b16 %v223
    %v895 = vunpack.c.l.b16 %v224
    %v896 = vunpack.c.h.b16 %v224
    %v897 = vunpack.c.l.b16 %v225
    %v898 = vunpack.c.h.b16 %v225
    %v899 = vunpack.c.l.b16 %v226
    %v900 = vunpack.c.h.b16 %v226
    %v901 = vunpack.c.l.b16 %v227
    %v902 = vunpack.c.h.b16 %v227
    %v903 = vunpack.c.l.b16 %v228
    %v904 = vunpack.c.h.b16 %v228
    %v905 = vunpack.c.l.b16 %v229
    %v906 = vunpack.c.h.b16 %v229
    %v907 = vunpack.c.l.b16 %v230
    %v908 = vunpack.c.h.b16 %v230
    %v909 = vunpack.c.l.b16 %v231
    %v910 = vunpack.c.h.b16 %v231
    %v911 = vunpack.c.l.b16 %v232
    %v912 = vunpack.c.h.b16 %v232
    %v913 = vunpack.c.l.b16 %v233
    %v914 = vunpack.c.h.b16 %v233
    %v915 = vunpack.c.l.b16 %v234
    %v916 = vunpack.c.h.b16 %v234
    %v917 = vunpack.c.l.b16 %v235
    %v918 = vunpack.c.h.b16 %v235
    %v919 = vunpack.c.l.b16 %v236
    %v920 = vunpack.c.h.b16 %v236
    %v921 = vunpack.c.l.b16 %v237
    %v922 = vunpack.c.h.b16 %v237
    %v923 = vunpack.c.l.b16 %v238
    %v924 = vunpack.c.h.b16 %v238
    %v925 = vunpack.c.l.b16 %v239
    %v926 = vunpack.c.h.b16 %v239
    %v927 = vunpack.c.l.b16 %v240
    %v928 = vunpack.c.h.b16 %v240
    %v929 = vunpack.c.l.b16 %v241
    %v930 = vunpack.c.h.b16 %v241
    %v931 = vunpack.c.l.b16 %v242
    %v932 = vunpack.c.h.b16 %v242
    %v933 = vunpack.c.l.b16 %v243
    %v934 = vunpack.c.h.b16 %v243
    %v935 = vunpack.c.l.b16 %v244
    %v936 = vunpack.c.h.b16 %v244
    %v937 = vunpack.c.l.b16 %v245
    %v938 = vunpack.c.h.b16 %v245
    %v939 = vunpack.c.l.b16 %v246
    %v940 = vunpack.c.h.b16 %v246
    %v941 = vunpack.c.l.b16 %v247
    %v942 = vunpack.c.h.b16 %v247
    %v943 = vunpack.c.l.b16 %v248
    %v944 = vunpack.c.h.b16 %v248
    %v945 = vunpack.c.l.b16 %v249
    %v946 = vunpack.c.h.b16 %v249
    %v947 = vunpack.c.l.b16 %v250
    %v948 = vunpack.c.h.b16 %v250
    %v949 = vunpack.c.l.b16 %v251
    %v950 = vunpack.c.h.b16 %v251
    %v951 = vunpack.c.l.b16 %v252
    %v952 = vunpack.c.h.b16 %v252
    %v953 = vunpack.c.l.b16 %v253
    %v954 = vunpack.c.h.b16 %v253
    %v955 = vunpack.c.l.b16 %v254
    %v956 = vunpack.c.h.b16 %v254
    %v957 = vpack.c.b16 %v709, %v701
    %v958 = vpack.c.b16 %v710, %v702
    %v959 = vpack.c.b16 %v711, %v703
    %v960 = vpack.c.b16 %v712, %v704
    %v961 = vpack.c.b16 %v713, %v705
    %v962 = vpack.c.b16 %v714, %v706
    %v963 = vpack.c.b16 %v715, %v707
    %v964 = vpack.c.b16 %v716, %v708
    %v965 = vpack.c.b16 %v725, %v717
    %v966 = vpack.c.b16 %v726, %v718
    %v967 = vpack.c.b16 %v727, %v719
    %v968 = vpack.c.b16 %v728, %v720
    %v969 = vpack.c.b16 %v729, %v721
    %v970 = vpack.c.b16 %v730, %v722
    %v971 = vpack.c.b16 %v731, %v723
    %v972 = vpack.c.b16 %v732, %v724
    %v973 = vpack.c.b16 %v741, %v733
    %v974 = vpack.c.b16 %v742, %v734
    %v975 = vpack.c.b16 %v743, %v735
    %v976 = vpack.c.b16 %v744, %v736
    %v977 = vpack.c.b16 %v745, %v737
    %v978 = vpack.c.b16 %v746, %v738
    %v979 = vpack.c.b16 %v747, %v739
    %v980 = vpack.c.b16 %v748, %v740
    %v981 = vpack.c.b16 %v757, %v749
    %v982 = vpack.c.b16 %v758, %v750
    %v983 = vpack.c.b16 %v759, %v751
    %v984 = vpack.c.b16 %v760, %v752
    %v985 = vpack.c.b16 %v761, %v753
    %v986 = vpack.c.b16 %v762, %v754
    %v987 = vpack.c.b16 %v763, %v755
    %v988 = vpack.c.b16 %v764, %v756
    %v989 = vpack.c.b16 %v773, %v765
    %v990 = vpack.c.b16 %v774, %v766
    %v991 = vpack.c.b16 %v775, %v767
    %v992 = vpack.c.b16 %v776, %v768
    %v993 = vpack.c.b16 %v777, %v769
    %v994 = vpack.c.b16 %v778, %v770
    %v995 = vpack.c.b16 %v779, %v771
    %v996 = vpack.c.b16 %v780, %v772
    %v997 = vpack.c.b16 %v789, %v781
    %v998 = vpack.c.b16 %v790, %v782
    %v999 = vpack.c.b16 %v791, %v783
    %v1000 = vpack.c.b16 %v792, %v784
    %v1001 = vpack.c.b16 %v793, %v785
    %v1002 = vpack.c.b16 %v794, %v786
    %v1003 = vpack.c.b16 %v795, %v787
    %v1004 = vpack.c.b16 %v796, %v788
    %v1005 = vpack.c.b16 %v805, %v797
    %v1006 = vpack.c.b16 %v806, %v798
    %v1007 = vpack.c.b16 %v807, %v799
    %v1008 = vpack.c.b16 %v808, %v800
    %v1009 = vpack.c.b16 %v809, %v801
    %v1010 = vpack.c.b16 %v810, %v802
    %v1011 = vpack.c.b16 %v811, %v803
    %v1012 = vpack.c.b16 %v812, %v804
    %v1013 = vpack.c.b16 %v821, %v813
    %v1014 = vpack.c.b16 %v822, %v814
    %v1015 = vpack.c.b16 %v823, %v815
    %v1016 = vpack.c.b16 %v824, %v816
    %v1017 = vpack.c.b16 %v825, %v817
    %v1018 = vpack.c.b16 %v826, %v818
    %v1019 = vpack.c.b16 %v827, %v819
    %v1020 = vpack.c.b16 %v828, %v820
    %v1021 = vpack.c.b16 %v837, %v829
    %v1022 = vpack.c.b16 %v838, %v830
    %v1023 = vpack.c.b16 %v839, %v831
    %v1024 = vpack.c.b16 %v840, %v832
    %v1025 = vpack.c.b16 %v841, %v833
    %v1026 = vpack.c.b16 %v842, %v834
    %v1027 = vpack.c.b16 %v843, %v835
    %v1028 = vpack.c.b16 %v844, %v836
    %v1029 = vpack.c.b16 %v853, %v845
    %v1030 = vpack.c.b16 %v854, %v846
    %v1031 = vpack.c.b16 %v855, %v847
    %v1032 = vpack.c.b16 %v856, %v848
    %v1033 = vpack.c.b16 %v857, %v849
    %v1034 = vpack.c.b16 %v858, %v850
    %v1035 = vpack.c.b16 %v859, %v851
    %v1036 = vpack.c.b16 %v860, %v852
    %v1037 = vpack.c.b16 %v869, %v861
    %v1038 = vpack.c.b16 %v870, %v862
    %v1039 = vpack.c.b16 %v871, %v863
    %v1040 = vpack.c.b16 %v872, %v864
    %v1041 = vpack.c.b16 %v873, %v865
    %v1042 = vpack.c.b16 %v874, %v866
    %v1043 = vpack.c.b16 %v875, %v867
    %v1044 = vpack.c.b16 %v876, %v868
    %v1045 = vpack.c.b16 %v885, %v877
    %v1046 = vpack.c.b16 %v886, %v878
    %v1047 = vpack.c.b16 %v887, %v879
    %v1048 = vpack.c.b16 %v888, %v880
    %v1049 = vpack.c.b16 %v889, %v881
    %v1050 = vpack.c.b16 %v890, %v882
    %v1051 = vpack.c.b16 %v891, %v883
    %v1052 = vpack.c.b16 %v892, %v884
    %v1053 = vpack.c.b16 %v901, %v893
    %v1054 = vpack.c.b16 %v902, %v894
    %v1055 = vpack.c.b16 %v903, %v895
    %v1056 = vpack.c.b16 %v904, %v896
    %v1057 = vpack.c.b16 %v905, %v897
    %v1058 = vpack.c.b16 %v906, %v898
    %v1059 = vpack.c.b16 %v907, %v899
    %v1060 = vpack.c.b16 %v908, %v900
    %v1061 = vpack.c.b16 %v917, %v909
    %v1062 = vpack.c.b16 %v918, %v910
    %v1063 = vpack.c.b16 %v919, %v911
    %v1064 = vpack.c.b16 %v920, %v912
    %v1065 = vpack.c.b16 %v921, %v913
    %v1066 = vpack.c.b16 %v922, %v914
    %v1067 = vpack.c.b16 %v923, %v915
    %v1068 = vpack.c.b16 %v924, %v916
    %v1069 = vpack.c.b16 %v933, %v925
    %v1070 = vpack.c.b16 %v934, %v926
    %v1071 = vpack.c.b16 %v935, %v927
    %v1072 = vpack.c.b16 %v936, %v928
    %v1073 = vpack.c.b16 %v937, %v929
    %v1074 = vpack.c.b16 %v938, %v930
    %v1075 = vpack.c.b16 %v939, %v931
    %v1076 = vpack.c.b16 %v940, %v932
    %v1077 = vpack.c.b16 %v949, %v941
    %v1078 = vpack.c.b16 %v950, %v942
    %v1079 = vpack.c.b16 %v951, %v943
    %v1080 = vpack.c.b16 %v952, %v944
    %v1081 = vpack.c.b16 %v953, %v945
    %v1082 = vpack.c.b16 %v954, %v946
    %v1083 = vpack.c.b16 %v955, %v947
    %v1084 = vpack.c.b16 %v956, %v948
    %1213 = vmatprep.subr.bf16.mxu0 %v1014
    %1214 = vmatpush1.bf16.msra.mxu0 %v1013
    %1215 = vmatprep.subr.bf16.mxu0 %v1006
    %1216 = vmatpush1.bf16.msra.mxu0 %v1005
    %1217 = vmatprep.subr.bf16.mxu0 %v998
    %1218 = vmatpush1.bf16.msra.mxu0 %v997
    %1219 = vmatprep.subr.bf16.mxu0 %v990
    %1220 = vmatpush1.bf16.msra.mxu0 %v989
    %1221 = vmatprep.subr.bf16.mxu0 %v982
    %1222 = vmatpush1.bf16.msra.mxu0 %v981
    %1223 = vmatprep.subr.bf16.mxu0 %v974
    %1224 = vmatpush1.bf16.msra.mxu0 %v973
    %1225 = vmatprep.subr.bf16.mxu0 %v966
    %1226 = vmatpush1.bf16.msra.mxu0 %v965
    %1227 = vmatprep.subr.bf16.mxu0 %v958
    %1228 = vmatpush1.bf16.msra.mxu0 %v957
    %1229 = vmatprep.subr.bf16.mxu0 %v1078
    %1230 = vmatpush2.bf16.msra.mxu0 %v1077
    %1231 = vmatprep.subr.bf16.mxu0 %v1070
    %1232 = vmatpush2.bf16.msra.mxu0 %v1069
    %1233 = vmatprep.subr.bf16.mxu0 %v1062
    %1234 = vmatpush2.bf16.msra.mxu0 %v1061
    %1235 = vmatprep.subr.bf16.mxu0 %v1054
    %1236 = vmatpush2.bf16.msra.mxu0 %v1053
    %1237 = vmatprep.subr.bf16.mxu0 %v1046
    %1238 = vmatpush2.bf16.msra.mxu0 %v1045
    %1239 = vmatprep.subr.bf16.mxu0 %v1038
    %1240 = vmatpush2.bf16.msra.mxu0 %v1037
    %1241 = vmatprep.subr.bf16.mxu0 %v1030
    %1242 = vmatpush2.bf16.msra.mxu0 %v1029
    %1243 = vmatprep.subr.bf16.mxu0 %v1022
    %1244 = vmatpush2.bf16.msra.mxu0 %v1021
    %1245 = vmatprep.mubr.bf16.mxu0 %v572
    %1246 = vmatmul.mubr.bf16.gmra.mxu0 %v571
    %v1247 = vpop.f32.mrf.mxu0
    %v1248 = vadd.f32 0.0, %v1247
    %v1249 = vpop.f32.mrf.mxu0
    %v1250 = vadd.f32 0.0, %v1249
    %v1251 = vpop.f32.mrf.mxu0
    %v1252 = vpop.f32.mrf.mxu0
    %1253 = vdwg.mxu0
    %1254 = vmatprep.subr.bf16.mxu0 %v1016
    %1255 = vmatpush1.bf16.msra.mxu0 %v1015
    %1256 = vmatprep.subr.bf16.mxu0 %v1008
    %1257 = vmatpush1.bf16.msra.mxu0 %v1007
    %1258 = vmatprep.subr.bf16.mxu0 %v1000
    %1259 = vmatpush1.bf16.msra.mxu0 %v999
    %1260 = vmatprep.subr.bf16.mxu0 %v992
    %1261 = vmatpush1.bf16.msra.mxu0 %v991
    %1262 = vmatprep.subr.bf16.mxu0 %v984
    %1263 = vmatpush1.bf16.msra.mxu0 %v983
    %1264 = vmatprep.subr.bf16.mxu0 %v976
    %1265 = vmatpush1.bf16.msra.mxu0 %v975
    %1266 = vmatprep.subr.bf16.mxu0 %v968
    %1267 = vmatpush1.bf16.msra.mxu0 %v967
    %1268 = vmatprep.subr.bf16.mxu0 %v960
    %1269 = vmatpush1.bf16.msra.mxu0 %v959
    %1270 = vmatprep.subr.bf16.mxu0 %v1080
    %1271 = vmatpush2.bf16.msra.mxu0 %v1079
    %1272 = vmatprep.subr.bf16.mxu0 %v1072
    %1273 = vmatpush2.bf16.msra.mxu0 %v1071
    %1274 = vmatprep.subr.bf16.mxu0 %v1064
    %1275 = vmatpush2.bf16.msra.mxu0 %v1063
    %1276 = vmatprep.subr.bf16.mxu0 %v1056
    %1277 = vmatpush2.bf16.msra.mxu0 %v1055
    %1278 = vmatprep.subr.bf16.mxu0 %v1048
    %1279 = vmatpush2.bf16.msra.mxu0 %v1047
    %1280 = vmatprep.subr.bf16.mxu0 %v1040
    %1281 = vmatpush2.bf16.msra.mxu0 %v1039
    %1282 = vmatprep.subr.bf16.mxu0 %v1032
    %1283 = vmatpush2.bf16.msra.mxu0 %v1031
    %1284 = vmatprep.subr.bf16.mxu0 %v1024
    %1285 = vmatpush2.bf16.msra.mxu0 %v1023
    %1286 = vmatprep.mubr.bf16.mxu0 %v572
    %1287 = vmatmul.mubr.bf16.gmra.mxu0 %v571
    %v1288 = vpop.f32.mrf.mxu0
    %v1289 = vadd.f32 0.0, %v1288
    %v1290 = vpop.f32.mrf.mxu0
    %v1291 = vadd.f32 0.0, %v1290
    %v1292 = vpop.f32.mrf.mxu0
    %v1293 = vpop.f32.mrf.mxu0
    %1294 = vdwg.mxu0
    %1295 = vmatprep.subr.bf16.mxu0 %v1018
    %1296 = vmatpush1.bf16.msra.mxu0 %v1017
    %1297 = vmatprep.subr.bf16.mxu0 %v1010
    %1298 = vmatpush1.bf16.msra.mxu0 %v1009
    %1299 = vmatprep.subr.bf16.mxu0 %v1002
    %1300 = vmatpush1.bf16.msra.mxu0 %v1001
    %1301 = vmatprep.subr.bf16.mxu0 %v994
    %1302 = vmatpush1.bf16.msra.mxu0 %v993
    %1303 = vmatprep.subr.bf16.mxu0 %v986
    %1304 = vmatpush1.bf16.msra.mxu0 %v985
    %1305 = vmatprep.subr.bf16.mxu0 %v978
    %1306 = vmatpush1.bf16.msra.mxu0 %v977
    %1307 = vmatprep.subr.bf16.mxu0 %v970
    %1308 = vmatpush1.bf16.msra.mxu0 %v969
    %1309 = vmatprep.subr.bf16.mxu0 %v962
    %1310 = vmatpush1.bf16.msra.mxu0 %v961
    %1311 = vmatprep.subr.bf16.mxu0 %v1082
    %1312 = vmatpush2.bf16.msra.mxu0 %v1081
    %1313 = vmatprep.subr.bf16.mxu0 %v1074
    %1314 = vmatpush2.bf16.msra.mxu0 %v1073
    %1315 = vmatprep.subr.bf16.mxu0 %v1066
    %1316 = vmatpush2.bf16.msra.mxu0 %v1065
    %1317 = vmatprep.subr.bf16.mxu0 %v1058
    %1318 = vmatpush2.bf16.msra.mxu0 %v1057
    %1319 = vmatprep.subr.bf16.mxu0 %v1050
    %1320 = vmatpush2.bf16.msra.mxu0 %v1049
    %1321 = vmatprep.subr.bf16.mxu0 %v1042
    %1322 = vmatpush2.bf16.msra.mxu0 %v1041
    %1323 = vmatprep.subr.bf16.mxu0 %v1034
    %1324 = vmatpush2.bf16.msra.mxu0 %v1033
    %1325 = vmatprep.subr.bf16.mxu0 %v1026
    %1326 = vmatpush2.bf16.msra.mxu0 %v1025
    %1327 = vmatprep.mubr.bf16.mxu0 %v572
    %1328 = vmatmul.mubr.bf16.gmra.mxu0 %v571
    %v1329 = vpop.f32.mrf.mxu0
    %v1330 = vadd.f32 0.0, %v1329
    %v1331 = vpop.f32.mrf.mxu0
    %v1332 = vadd.f32 0.0, %v1331
    %v1333 = vpop.f32.mrf.mxu0
    %v1334 = vpop.f32.mrf.mxu0
    %1335 = vdwg.mxu0
    %1336 = vmatprep.subr.bf16.mxu0 %v1020
    %1337 = vmatpush1.bf16.msra.mxu0 %v1019
    %1338 = vmatprep.subr.bf16.mxu0 %v1012
    %1339 = vmatpush1.bf16.msra.mxu0 %v1011
    %1340 = vmatprep.subr.bf16.mxu0 %v1004
    %1341 = vmatpush1.bf16.msra.mxu0 %v1003
    %1342 = vmatprep.subr.bf16.mxu0 %v996
    %1343 = vmatpush1.bf16.msra.mxu0 %v995
    %1344 = vmatprep.subr.bf16.mxu0 %v988
    %1345 = vmatpush1.bf16.msra.mxu0 %v987
    %1346 = vmatprep.subr.bf16.mxu0 %v980
    %1347 = vmatpush1.bf16.msra.mxu0 %v979
    %1348 = vmatprep.subr.bf16.mxu0 %v972
    %1349 = vmatpush1.bf16.msra.mxu0 %v971
    %1350 = vmatprep.subr.bf16.mxu0 %v964
    %1351 = vmatpush1.bf16.msra.mxu0 %v963
    %1352 = vmatprep.subr.bf16.mxu0 %v1084
    %1353 = vmatpush2.bf16.msra.mxu0 %v1083
    %1354 = vmatprep.subr.bf16.mxu0 %v1076
    %1355 = vmatpush2.bf16.msra.mxu0 %v1075
    %1356 = vmatprep.subr.bf16.mxu0 %v1068
    %1357 = vmatpush2.bf16.msra.mxu0 %v1067
    %1358 = vmatprep.subr.bf16.mxu0 %v1060
    %1359 = vmatpush2.bf16.msra.mxu0 %v1059
    %1360 = vmatprep.subr.bf16.mxu0 %v1052
    %1361 = vmatpush2.bf16.msra.mxu0 %v1051
    %1362 = vmatprep.subr.bf16.mxu0 %v1044
    %1363 = vmatpush2.bf16.msra.mxu0 %v1043
    %1364 = vmatprep.subr.bf16.mxu0 %v1036
    %1365 = vmatpush2.bf16.msra.mxu0 %v1035
    %1366 = vmatprep.subr.bf16.mxu0 %v1028
    %1367 = vmatpush2.bf16.msra.mxu0 %v1027
    %1368 = vmatprep.mubr.bf16.mxu0 %v572
    %1369 = vmatmul.mubr.bf16.gmra.mxu0 %v571
    %v1370 = vpop.f32.mrf.mxu0
    %v1371 = vadd.f32 0.0, %v1370
    %v1372 = vpop.f32.mrf.mxu0
    %v1373 = vadd.f32 0.0, %v1372
    %v1374 = vpop.f32.mrf.mxu0
    %v1375 = vpop.f32.mrf.mxu0
    %1376 = vdwg.mxu0
    %v1377 = vadd.f32 %v563, %v1248
    %v1378 = vadd.f32 %v564, %v1250
    %v1379 = vadd.f32 %v565, %v1289
    %v1380 = vadd.f32 %v566, %v1291
    %v1381 = vadd.f32 %v567, %v1330
    %v1382 = vadd.f32 %v568, %v1332
    %v1383 = vadd.f32 %v569, %v1371
    %v1384 = vadd.f32 %v570, %v1373
    %v1385 = vxor.u32 %v1377, 2147483648
    %v1386 = vxor.u32 %v1378, 2147483648
    %v1387 = vxor.u32 %v1379, 2147483648
    %v1388 = vxor.u32 %v1380, 2147483648
    %v1389 = vmul.f32 %v1385, 1.442695
    %v1390 = vpow.pop %v1389
    %v1391 = vmul.f32 %v1386, 1.442695
    %v1392 = vpow.pop %v1391
    %v1393 = vmul.f32 %v1387, 1.442695
    %v1394 = vpow.pop %v1393
    %v1395 = vmul.f32 %v1388, 1.442695
    %v1396 = vpow.pop %v1395
    %v1397 = vadd.f32 %v1390, 1.0
    %v1398 = vadd.f32 %v1392, 1.0
    %v1399 = vadd.f32 %v1394, 1.0
    %v1400 = vadd.f32 %v1396, 1.0
    %v1401 = vrcp.pop %v1397
    %v1402 = vmul.f32 1.0, %v1401
    %v1403 = vrcp.pop %v1398
    %v1404 = vmul.f32 1.0, %v1403
    %v1405 = vrcp.pop %v1399
    %v1406 = vmul.f32 1.0, %v1405
    %v1407 = vrcp.pop %v1400
    %v1408 = vmul.f32 1.0, %v1407
    %v1409 = vtanh.pop %v1381
    %v1410 = vtanh.pop %v1382
    %v1411 = vxor.u32 %v1383, 2147483648
    %v1412 = vxor.u32 %v1384, 2147483648
    %v1413 = vmul.f32 %v1411, 1.442695
    %v1414 = vpow.pop %v1413
    %v1415 = vmul.f32 %v1412, 1.442695
    %v1416 = vpow.pop %v1415
    %v1417 = vadd.f32 %v1414, 1.0
    %v1418 = vadd.f32 %v1416, 1.0
    %v1419 = vrcp.pop %v1417
    %v1420 = vmul.f32 1.0, %v1419
    %v1421 = vrcp.pop %v1418
    %v1422 = vmul.f32 1.0, %v1421
    %v1423 = vmul.f32 %v1406, %v555
    %v1424 = vmul.f32 %v1408, %v556
    %v1425 = vmul.f32 %v1402, %v1409
    %v1426 = vmul.f32 %v1404, %v1410
    %v1427 = vadd.f32 %v1423, %v1425
    %v1428 = vadd.f32 %v1424, %v1426
    %v1429 = vtanh.pop %v1427
    %v1430 = vtanh.pop %v1428
    %v1431 = vmul.f32 %v1420, %v1429
    %v1432 = vmul.f32 %v1422, %v1430
    %v1433 = vpack.c.bf16 %v1431, %v1431
    %v1434 = vpack.c.bf16 %v1432, %v1432
    %v1435 = vpack.c.bf16 %v558, %v558
    %v1436 = vpack.c.bf16 %v559, %v559
    %v1693 = vunpack.c.l.b16 %v255
    %v1694 = vunpack.c.h.b16 %v255
    %v1695 = vunpack.c.l.b16 %v256
    %v1696 = vunpack.c.h.b16 %v256
    %v1697 = vunpack.c.l.b16 %v257
    %v1698 = vunpack.c.h.b16 %v257
    %v1699 = vunpack.c.l.b16 %v258
    %v1700 = vunpack.c.h.b16 %v258
    %v1701 = vunpack.c.l.b16 %v259
    %v1702 = vunpack.c.h.b16 %v259
    %v1703 = vunpack.c.l.b16 %v260
    %v1704 = vunpack.c.h.b16 %v260
    %v1705 = vunpack.c.l.b16 %v261
    %v1706 = vunpack.c.h.b16 %v261
    %v1707 = vunpack.c.l.b16 %v262
    %v1708 = vunpack.c.h.b16 %v262
    %v1709 = vunpack.c.l.b16 %v263
    %v1710 = vunpack.c.h.b16 %v263
    %v1711 = vunpack.c.l.b16 %v264
    %v1712 = vunpack.c.h.b16 %v264
    %v1713 = vunpack.c.l.b16 %v265
    %v1714 = vunpack.c.h.b16 %v265
    %v1715 = vunpack.c.l.b16 %v266
    %v1716 = vunpack.c.h.b16 %v266
    %v1717 = vunpack.c.l.b16 %v267
    %v1718 = vunpack.c.h.b16 %v267
    %v1719 = vunpack.c.l.b16 %v268
    %v1720 = vunpack.c.h.b16 %v268
    %v1721 = vunpack.c.l.b16 %v269
    %v1722 = vunpack.c.h.b16 %v269
    %v1723 = vunpack.c.l.b16 %v270
    %v1724 = vunpack.c.h.b16 %v270
    %v1725 = vunpack.c.l.b16 %v271
    %v1726 = vunpack.c.h.b16 %v271
    %v1727 = vunpack.c.l.b16 %v272
    %v1728 = vunpack.c.h.b16 %v272
    %v1729 = vunpack.c.l.b16 %v273
    %v1730 = vunpack.c.h.b16 %v273
    %v1731 = vunpack.c.l.b16 %v274
    %v1732 = vunpack.c.h.b16 %v274
    %v1733 = vunpack.c.l.b16 %v275
    %v1734 = vunpack.c.h.b16 %v275
    %v1735 = vunpack.c.l.b16 %v276
    %v1736 = vunpack.c.h.b16 %v276
    %v1737 = vunpack.c.l.b16 %v277
    %v1738 = vunpack.c.h.b16 %v277
    %v1739 = vunpack.c.l.b16 %v278
    %v1740 = vunpack.c.h.b16 %v278
    %v1741 = vunpack.c.l.b16 %v279
    %v1742 = vunpack.c.h.b16 %v279
    %v1743 = vunpack.c.l.b16 %v280
    %v1744 = vunpack.c.h.b16 %v280
    %v1745 = vunpack.c.l.b16 %v281
    %v1746 = vunpack.c.h.b16 %v281
    %v1747 = vunpack.c.l.b16 %v282
    %v1748 = vunpack.c.h.b16 %v282
    %v1749 = vunpack.c.l.b16 %v283
    %v1750 = vunpack.c.h.b16 %v283
    %v1751 = vunpack.c.l.b16 %v284
    %v1752 = vunpack.c.h.b16 %v284
    %v1753 = vunpack.c.l.b16 %v285
    %v1754 = vunpack.c.h.b16 %v285
    %v1755 = vunpack.c.l.b16 %v286
    %v1756 = vunpack.c.h.b16 %v286
    %v1757 = vunpack.c.l.b16 %v287
    %v1758 = vunpack.c.h.b16 %v287
    %v1759 = vunpack.c.l.b16 %v288
    %v1760 = vunpack.c.h.b16 %v288
    %v1761 = vunpack.c.l.b16 %v289
    %v1762 = vunpack.c.h.b16 %v289
    %v1763 = vunpack.c.l.b16 %v290
    %v1764 = vunpack.c.h.b16 %v290
    %v1765 = vunpack.c.l.b16 %v291
    %v1766 = vunpack.c.h.b16 %v291
    %v1767 = vunpack.c.l.b16 %v292
    %v1768 = vunpack.c.h.b16 %v292
    %v1769 = vunpack.c.l.b16 %v293
    %v1770 = vunpack.c.h.b16 %v293
    %v1771 = vunpack.c.l.b16 %v294
    %v1772 = vunpack.c.h.b16 %v294
    %v1773 = vunpack.c.l.b16 %v295
    %v1774 = vunpack.c.h.b16 %v295
    %v1775 = vunpack.c.l.b16 %v296
    %v1776 = vunpack.c.h.b16 %v296
    %v1777 = vunpack.c.l.b16 %v297
    %v1778 = vunpack.c.h.b16 %v297
    %v1779 = vunpack.c.l.b16 %v298
    %v1780 = vunpack.c.h.b16 %v298
    %v1781 = vunpack.c.l.b16 %v299
    %v1782 = vunpack.c.h.b16 %v299
    %v1783 = vunpack.c.l.b16 %v300
    %v1784 = vunpack.c.h.b16 %v300
    %v1785 = vunpack.c.l.b16 %v301
    %v1786 = vunpack.c.h.b16 %v301
    %v1787 = vunpack.c.l.b16 %v302
    %v1788 = vunpack.c.h.b16 %v302
    %v1789 = vunpack.c.l.b16 %v303
    %v1790 = vunpack.c.h.b16 %v303
    %v1791 = vunpack.c.l.b16 %v304
    %v1792 = vunpack.c.h.b16 %v304
    %v1793 = vunpack.c.l.b16 %v305
    %v1794 = vunpack.c.h.b16 %v305
    %v1795 = vunpack.c.l.b16 %v306
    %v1796 = vunpack.c.h.b16 %v306
    %v1797 = vunpack.c.l.b16 %v307
    %v1798 = vunpack.c.h.b16 %v307
    %v1799 = vunpack.c.l.b16 %v308
    %v1800 = vunpack.c.h.b16 %v308
    %v1801 = vunpack.c.l.b16 %v309
    %v1802 = vunpack.c.h.b16 %v309
    %v1803 = vunpack.c.l.b16 %v310
    %v1804 = vunpack.c.h.b16 %v310
    %v1805 = vunpack.c.l.b16 %v311
    %v1806 = vunpack.c.h.b16 %v311
    %v1807 = vunpack.c.l.b16 %v312
    %v1808 = vunpack.c.h.b16 %v312
    %v1809 = vunpack.c.l.b16 %v313
    %v1810 = vunpack.c.h.b16 %v313
    %v1811 = vunpack.c.l.b16 %v314
    %v1812 = vunpack.c.h.b16 %v314
    %v1813 = vunpack.c.l.b16 %v315
    %v1814 = vunpack.c.h.b16 %v315
    %v1815 = vunpack.c.l.b16 %v316
    %v1816 = vunpack.c.h.b16 %v316
    %v1817 = vunpack.c.l.b16 %v317
    %v1818 = vunpack.c.h.b16 %v317
    %v1819 = vunpack.c.l.b16 %v318
    %v1820 = vunpack.c.h.b16 %v318
    %v1821 = vunpack.c.l.b16 %v319
    %v1822 = vunpack.c.h.b16 %v319
    %v1823 = vunpack.c.l.b16 %v320
    %v1824 = vunpack.c.h.b16 %v320
    %v1825 = vunpack.c.l.b16 %v321
    %v1826 = vunpack.c.h.b16 %v321
    %v1827 = vunpack.c.l.b16 %v322
    %v1828 = vunpack.c.h.b16 %v322
    %v1829 = vunpack.c.l.b16 %v323
    %v1830 = vunpack.c.h.b16 %v323
    %v1831 = vunpack.c.l.b16 %v324
    %v1832 = vunpack.c.h.b16 %v324
    %v1833 = vunpack.c.l.b16 %v325
    %v1834 = vunpack.c.h.b16 %v325
    %v1835 = vunpack.c.l.b16 %v326
    %v1836 = vunpack.c.h.b16 %v326
    %v1837 = vunpack.c.l.b16 %v327
    %v1838 = vunpack.c.h.b16 %v327
    %v1839 = vunpack.c.l.b16 %v328
    %v1840 = vunpack.c.h.b16 %v328
    %v1841 = vunpack.c.l.b16 %v329
    %v1842 = vunpack.c.h.b16 %v329
    %v1843 = vunpack.c.l.b16 %v330
    %v1844 = vunpack.c.h.b16 %v330
    %v1845 = vunpack.c.l.b16 %v331
    %v1846 = vunpack.c.h.b16 %v331
    %v1847 = vunpack.c.l.b16 %v332
    %v1848 = vunpack.c.h.b16 %v332
    %v1849 = vunpack.c.l.b16 %v333
    %v1850 = vunpack.c.h.b16 %v333
    %v1851 = vunpack.c.l.b16 %v334
    %v1852 = vunpack.c.h.b16 %v334
    %v1853 = vunpack.c.l.b16 %v335
    %v1854 = vunpack.c.h.b16 %v335
    %v1855 = vunpack.c.l.b16 %v336
    %v1856 = vunpack.c.h.b16 %v336
    %v1857 = vunpack.c.l.b16 %v337
    %v1858 = vunpack.c.h.b16 %v337
    %v1859 = vunpack.c.l.b16 %v338
    %v1860 = vunpack.c.h.b16 %v338
    %v1861 = vunpack.c.l.b16 %v339
    %v1862 = vunpack.c.h.b16 %v339
    %v1863 = vunpack.c.l.b16 %v340
    %v1864 = vunpack.c.h.b16 %v340
    %v1865 = vunpack.c.l.b16 %v341
    %v1866 = vunpack.c.h.b16 %v341
    %v1867 = vunpack.c.l.b16 %v342
    %v1868 = vunpack.c.h.b16 %v342
    %v1869 = vunpack.c.l.b16 %v343
    %v1870 = vunpack.c.h.b16 %v343
    %v1871 = vunpack.c.l.b16 %v344
    %v1872 = vunpack.c.h.b16 %v344
    %v1873 = vunpack.c.l.b16 %v345
    %v1874 = vunpack.c.h.b16 %v345
    %v1875 = vunpack.c.l.b16 %v346
    %v1876 = vunpack.c.h.b16 %v346
    %v1877 = vunpack.c.l.b16 %v347
    %v1878 = vunpack.c.h.b16 %v347
    %v1879 = vunpack.c.l.b16 %v348
    %v1880 = vunpack.c.h.b16 %v348
    %v1881 = vunpack.c.l.b16 %v349
    %v1882 = vunpack.c.h.b16 %v349
    %v1883 = vunpack.c.l.b16 %v350
    %v1884 = vunpack.c.h.b16 %v350
    %v1885 = vunpack.c.l.b16 %v351
    %v1886 = vunpack.c.h.b16 %v351
    %v1887 = vunpack.c.l.b16 %v352
    %v1888 = vunpack.c.h.b16 %v352
    %v1889 = vunpack.c.l.b16 %v353
    %v1890 = vunpack.c.h.b16 %v353
    %v1891 = vunpack.c.l.b16 %v354
    %v1892 = vunpack.c.h.b16 %v354
    %v1893 = vunpack.c.l.b16 %v355
    %v1894 = vunpack.c.h.b16 %v355
    %v1895 = vunpack.c.l.b16 %v356
    %v1896 = vunpack.c.h.b16 %v356
    %v1897 = vunpack.c.l.b16 %v357
    %v1898 = vunpack.c.h.b16 %v357
    %v1899 = vunpack.c.l.b16 %v358
    %v1900 = vunpack.c.h.b16 %v358
    %v1901 = vunpack.c.l.b16 %v359
    %v1902 = vunpack.c.h.b16 %v359
    %v1903 = vunpack.c.l.b16 %v360
    %v1904 = vunpack.c.h.b16 %v360
    %v1905 = vunpack.c.l.b16 %v361
    %v1906 = vunpack.c.h.b16 %v361
    %v1907 = vunpack.c.l.b16 %v362
    %v1908 = vunpack.c.h.b16 %v362
    %v1909 = vunpack.c.l.b16 %v363
    %v1910 = vunpack.c.h.b16 %v363
    %v1911 = vunpack.c.l.b16 %v364
    %v1912 = vunpack.c.h.b16 %v364
    %v1913 = vunpack.c.l.b16 %v365
    %v1914 = vunpack.c.h.b16 %v365
    %v1915 = vunpack.c.l.b16 %v366
    %v1916 = vunpack.c.h.b16 %v366
    %v1917 = vunpack.c.l.b16 %v367
    %v1918 = vunpack.c.h.b16 %v367
    %v1919 = vunpack.c.l.b16 %v368
    %v1920 = vunpack.c.h.b16 %v368
    %v1921 = vunpack.c.l.b16 %v369
    %v1922 = vunpack.c.h.b16 %v369
    %v1923 = vunpack.c.l.b16 %v370
    %v1924 = vunpack.c.h.b16 %v370
    %v1925 = vunpack.c.l.b16 %v371
    %v1926 = vunpack.c.h.b16 %v371
    %v1927 = vunpack.c.l.b16 %v372
    %v1928 = vunpack.c.h.b16 %v372
    %v1929 = vunpack.c.l.b16 %v373
    %v1930 = vunpack.c.h.b16 %v373
    %v1931 = vunpack.c.l.b16 %v374
    %v1932 = vunpack.c.h.b16 %v374
    %v1933 = vunpack.c.l.b16 %v375
    %v1934 = vunpack.c.h.b16 %v375
    %v1935 = vunpack.c.l.b16 %v376
    %v1936 = vunpack.c.h.b16 %v376
    %v1937 = vunpack.c.l.b16 %v377
    %v1938 = vunpack.c.h.b16 %v377
    %v1939 = vunpack.c.l.b16 %v378
    %v1940 = vunpack.c.h.b16 %v378
    %v1941 = vunpack.c.l.b16 %v379
    %v1942 = vunpack.c.h.b16 %v379
    %v1943 = vunpack.c.l.b16 %v380
    %v1944 = vunpack.c.h.b16 %v380
    %v1945 = vunpack.c.l.b16 %v381
    %v1946 = vunpack.c.h.b16 %v381
    %v1947 = vunpack.c.l.b16 %v382
    %v1948 = vunpack.c.h.b16 %v382
    %v1949 = vunpack.c.l.b16 %v383
    %v1950 = vunpack.c.h.b16 %v383
    %v1951 = vunpack.c.l.b16 %v384
    %v1952 = vunpack.c.h.b16 %v384
    %v1953 = vunpack.c.l.b16 %v385
    %v1954 = vunpack.c.h.b16 %v385
    %v1955 = vunpack.c.l.b16 %v386
    %v1956 = vunpack.c.h.b16 %v386
    %v1957 = vunpack.c.l.b16 %v387
    %v1958 = vunpack.c.h.b16 %v387
    %v1959 = vunpack.c.l.b16 %v388
    %v1960 = vunpack.c.h.b16 %v388
    %v1961 = vunpack.c.l.b16 %v389
    %v1962 = vunpack.c.h.b16 %v389
    %v1963 = vunpack.c.l.b16 %v390
    %v1964 = vunpack.c.h.b16 %v390
    %v1965 = vunpack.c.l.b16 %v391
    %v1966 = vunpack.c.h.b16 %v391
    %v1967 = vunpack.c.l.b16 %v392
    %v1968 = vunpack.c.h.b16 %v392
    %v1969 = vunpack.c.l.b16 %v393
    %v1970 = vunpack.c.h.b16 %v393
    %v1971 = vunpack.c.l.b16 %v394
    %v1972 = vunpack.c.h.b16 %v394
    %v1973 = vunpack.c.l.b16 %v395
    %v1974 = vunpack.c.h.b16 %v395
    %v1975 = vunpack.c.l.b16 %v396
    %v1976 = vunpack.c.h.b16 %v396
    %v1977 = vunpack.c.l.b16 %v397
    %v1978 = vunpack.c.h.b16 %v397
    %v1979 = vunpack.c.l.b16 %v398
    %v1980 = vunpack.c.h.b16 %v398
    %v1981 = vunpack.c.l.b16 %v399
    %v1982 = vunpack.c.h.b16 %v399
    %v1983 = vunpack.c.l.b16 %v400
    %v1984 = vunpack.c.h.b16 %v400
    %v1985 = vunpack.c.l.b16 %v401
    %v1986 = vunpack.c.h.b16 %v401
    %v1987 = vunpack.c.l.b16 %v402
    %v1988 = vunpack.c.h.b16 %v402
    %v1989 = vunpack.c.l.b16 %v403
    %v1990 = vunpack.c.h.b16 %v403
    %v1991 = vunpack.c.l.b16 %v404
    %v1992 = vunpack.c.h.b16 %v404
    %v1993 = vunpack.c.l.b16 %v405
    %v1994 = vunpack.c.h.b16 %v405
    %v1995 = vunpack.c.l.b16 %v406
    %v1996 = vunpack.c.h.b16 %v406
    %v1997 = vunpack.c.l.b16 %v407
    %v1998 = vunpack.c.h.b16 %v407
    %v1999 = vunpack.c.l.b16 %v408
    %v2000 = vunpack.c.h.b16 %v408
    %v2001 = vunpack.c.l.b16 %v409
    %v2002 = vunpack.c.h.b16 %v409
    %v2003 = vunpack.c.l.b16 %v410
    %v2004 = vunpack.c.h.b16 %v410
    %v2005 = vunpack.c.l.b16 %v411
    %v2006 = vunpack.c.h.b16 %v411
    %v2007 = vunpack.c.l.b16 %v412
    %v2008 = vunpack.c.h.b16 %v412
    %v2009 = vunpack.c.l.b16 %v413
    %v2010 = vunpack.c.h.b16 %v413
    %v2011 = vunpack.c.l.b16 %v414
    %v2012 = vunpack.c.h.b16 %v414
    %v2013 = vunpack.c.l.b16 %v415
    %v2014 = vunpack.c.h.b16 %v415
    %v2015 = vunpack.c.l.b16 %v416
    %v2016 = vunpack.c.h.b16 %v416
    %v2017 = vunpack.c.l.b16 %v417
    %v2018 = vunpack.c.h.b16 %v417
    %v2019 = vunpack.c.l.b16 %v418
    %v2020 = vunpack.c.h.b16 %v418
    %v2021 = vunpack.c.l.b16 %v419
    %v2022 = vunpack.c.h.b16 %v419
    %v2023 = vunpack.c.l.b16 %v420
    %v2024 = vunpack.c.h.b16 %v420
    %v2025 = vunpack.c.l.b16 %v421
    %v2026 = vunpack.c.h.b16 %v421
    %v2027 = vunpack.c.l.b16 %v422
    %v2028 = vunpack.c.h.b16 %v422
    %v2029 = vunpack.c.l.b16 %v423
    %v2030 = vunpack.c.h.b16 %v423
    %v2031 = vunpack.c.l.b16 %v424
    %v2032 = vunpack.c.h.b16 %v424
    %v2033 = vunpack.c.l.b16 %v425
    %v2034 = vunpack.c.h.b16 %v425
    %v2035 = vunpack.c.l.b16 %v426
    %v2036 = vunpack.c.h.b16 %v426
    %v2037 = vunpack.c.l.b16 %v427
    %v2038 = vunpack.c.h.b16 %v427
    %v2039 = vunpack.c.l.b16 %v428
    %v2040 = vunpack.c.h.b16 %v428
    %v2041 = vunpack.c.l.b16 %v429
    %v2042 = vunpack.c.h.b16 %v429
    %v2043 = vunpack.c.l.b16 %v430
    %v2044 = vunpack.c.h.b16 %v430
    %v2045 = vunpack.c.l.b16 %v431
    %v2046 = vunpack.c.h.b16 %v431
    %v2047 = vunpack.c.l.b16 %v432
    %v2048 = vunpack.c.h.b16 %v432
    %v2049 = vunpack.c.l.b16 %v433
    %v2050 = vunpack.c.h.b16 %v433
    %v2051 = vunpack.c.l.b16 %v434
    %v2052 = vunpack.c.h.b16 %v434
    %v2053 = vunpack.c.l.b16 %v435
    %v2054 = vunpack.c.h.b16 %v435
    %v2055 = vunpack.c.l.b16 %v436
    %v2056 = vunpack.c.h.b16 %v436
    %v2057 = vunpack.c.l.b16 %v437
    %v2058 = vunpack.c.h.b16 %v437
    %v2059 = vunpack.c.l.b16 %v438
    %v2060 = vunpack.c.h.b16 %v438
    %v2061 = vunpack.c.l.b16 %v439
    %v2062 = vunpack.c.h.b16 %v439
    %v2063 = vunpack.c.l.b16 %v440
    %v2064 = vunpack.c.h.b16 %v440
    %v2065 = vunpack.c.l.b16 %v441
    %v2066 = vunpack.c.h.b16 %v441
    %v2067 = vunpack.c.l.b16 %v442
    %v2068 = vunpack.c.h.b16 %v442
    %v2069 = vunpack.c.l.b16 %v443
    %v2070 = vunpack.c.h.b16 %v443
    %v2071 = vunpack.c.l.b16 %v444
    %v2072 = vunpack.c.h.b16 %v444
    %v2073 = vunpack.c.l.b16 %v445
    %v2074 = vunpack.c.h.b16 %v445
    %v2075 = vunpack.c.l.b16 %v446
    %v2076 = vunpack.c.h.b16 %v446
    %v2077 = vunpack.c.l.b16 %v447
    %v2078 = vunpack.c.h.b16 %v447
    %v2079 = vunpack.c.l.b16 %v448
    %v2080 = vunpack.c.h.b16 %v448
    %v2081 = vunpack.c.l.b16 %v449
    %v2082 = vunpack.c.h.b16 %v449
    %v2083 = vunpack.c.l.b16 %v450
    %v2084 = vunpack.c.h.b16 %v450
    %v2085 = vunpack.c.l.b16 %v451
    %v2086 = vunpack.c.h.b16 %v451
    %v2087 = vunpack.c.l.b16 %v452
    %v2088 = vunpack.c.h.b16 %v452
    %v2089 = vunpack.c.l.b16 %v453
    %v2090 = vunpack.c.h.b16 %v453
    %v2091 = vunpack.c.l.b16 %v454
    %v2092 = vunpack.c.h.b16 %v454
    %v2093 = vunpack.c.l.b16 %v455
    %v2094 = vunpack.c.h.b16 %v455
    %v2095 = vunpack.c.l.b16 %v456
    %v2096 = vunpack.c.h.b16 %v456
    %v2097 = vunpack.c.l.b16 %v457
    %v2098 = vunpack.c.h.b16 %v457
    %v2099 = vunpack.c.l.b16 %v458
    %v2100 = vunpack.c.h.b16 %v458
    %v2101 = vunpack.c.l.b16 %v459
    %v2102 = vunpack.c.h.b16 %v459
    %v2103 = vunpack.c.l.b16 %v460
    %v2104 = vunpack.c.h.b16 %v460
    %v2105 = vunpack.c.l.b16 %v461
    %v2106 = vunpack.c.h.b16 %v461
    %v2107 = vunpack.c.l.b16 %v462
    %v2108 = vunpack.c.h.b16 %v462
    %v2109 = vunpack.c.l.b16 %v463
    %v2110 = vunpack.c.h.b16 %v463
    %v2111 = vunpack.c.l.b16 %v464
    %v2112 = vunpack.c.h.b16 %v464
    %v2113 = vunpack.c.l.b16 %v465
    %v2114 = vunpack.c.h.b16 %v465
    %v2115 = vunpack.c.l.b16 %v466
    %v2116 = vunpack.c.h.b16 %v466
    %v2117 = vunpack.c.l.b16 %v467
    %v2118 = vunpack.c.h.b16 %v467
    %v2119 = vunpack.c.l.b16 %v468
    %v2120 = vunpack.c.h.b16 %v468
    %v2121 = vunpack.c.l.b16 %v469
    %v2122 = vunpack.c.h.b16 %v469
    %v2123 = vunpack.c.l.b16 %v470
    %v2124 = vunpack.c.h.b16 %v470
    %v2125 = vunpack.c.l.b16 %v471
    %v2126 = vunpack.c.h.b16 %v471
    %v2127 = vunpack.c.l.b16 %v472
    %v2128 = vunpack.c.h.b16 %v472
    %v2129 = vunpack.c.l.b16 %v473
    %v2130 = vunpack.c.h.b16 %v473
    %v2131 = vunpack.c.l.b16 %v474
    %v2132 = vunpack.c.h.b16 %v474
    %v2133 = vunpack.c.l.b16 %v475
    %v2134 = vunpack.c.h.b16 %v475
    %v2135 = vunpack.c.l.b16 %v476
    %v2136 = vunpack.c.h.b16 %v476
    %v2137 = vunpack.c.l.b16 %v477
    %v2138 = vunpack.c.h.b16 %v477
    %v2139 = vunpack.c.l.b16 %v478
    %v2140 = vunpack.c.h.b16 %v478
    %v2141 = vunpack.c.l.b16 %v479
    %v2142 = vunpack.c.h.b16 %v479
    %v2143 = vunpack.c.l.b16 %v480
    %v2144 = vunpack.c.h.b16 %v480
    %v2145 = vunpack.c.l.b16 %v481
    %v2146 = vunpack.c.h.b16 %v481
    %v2147 = vunpack.c.l.b16 %v482
    %v2148 = vunpack.c.h.b16 %v482
    %v2149 = vunpack.c.l.b16 %v483
    %v2150 = vunpack.c.h.b16 %v483
    %v2151 = vunpack.c.l.b16 %v484
    %v2152 = vunpack.c.h.b16 %v484
    %v2153 = vunpack.c.l.b16 %v485
    %v2154 = vunpack.c.h.b16 %v485
    %v2155 = vunpack.c.l.b16 %v486
    %v2156 = vunpack.c.h.b16 %v486
    %v2157 = vunpack.c.l.b16 %v487
    %v2158 = vunpack.c.h.b16 %v487
    %v2159 = vunpack.c.l.b16 %v488
    %v2160 = vunpack.c.h.b16 %v488
    %v2161 = vunpack.c.l.b16 %v489
    %v2162 = vunpack.c.h.b16 %v489
    %v2163 = vunpack.c.l.b16 %v490
    %v2164 = vunpack.c.h.b16 %v490
    %v2165 = vunpack.c.l.b16 %v491
    %v2166 = vunpack.c.h.b16 %v491
    %v2167 = vunpack.c.l.b16 %v492
    %v2168 = vunpack.c.h.b16 %v492
    %v2169 = vunpack.c.l.b16 %v493
    %v2170 = vunpack.c.h.b16 %v493
    %v2171 = vunpack.c.l.b16 %v494
    %v2172 = vunpack.c.h.b16 %v494
    %v2173 = vunpack.c.l.b16 %v495
    %v2174 = vunpack.c.h.b16 %v495
    %v2175 = vunpack.c.l.b16 %v496
    %v2176 = vunpack.c.h.b16 %v496
    %v2177 = vunpack.c.l.b16 %v497
    %v2178 = vunpack.c.h.b16 %v497
    %v2179 = vunpack.c.l.b16 %v498
    %v2180 = vunpack.c.h.b16 %v498
    %v2181 = vunpack.c.l.b16 %v499
    %v2182 = vunpack.c.h.b16 %v499
    %v2183 = vunpack.c.l.b16 %v500
    %v2184 = vunpack.c.h.b16 %v500
    %v2185 = vunpack.c.l.b16 %v501
    %v2186 = vunpack.c.h.b16 %v501
    %v2187 = vunpack.c.l.b16 %v502
    %v2188 = vunpack.c.h.b16 %v502
    %v2189 = vunpack.c.l.b16 %v503
    %v2190 = vunpack.c.h.b16 %v503
    %v2191 = vunpack.c.l.b16 %v504
    %v2192 = vunpack.c.h.b16 %v504
    %v2193 = vunpack.c.l.b16 %v505
    %v2194 = vunpack.c.h.b16 %v505
    %v2195 = vunpack.c.l.b16 %v506
    %v2196 = vunpack.c.h.b16 %v506
    %v2197 = vunpack.c.l.b16 %v507
    %v2198 = vunpack.c.h.b16 %v507
    %v2199 = vunpack.c.l.b16 %v508
    %v2200 = vunpack.c.h.b16 %v508
    %v2201 = vunpack.c.l.b16 %v509
    %v2202 = vunpack.c.h.b16 %v509
    %v2203 = vunpack.c.l.b16 %v510
    %v2204 = vunpack.c.h.b16 %v510
    %v2205 = vpack.c.b16 %v1701, %v1693
    %v2206 = vpack.c.b16 %v1702, %v1694
    %v2207 = vpack.c.b16 %v1703, %v1695
    %v2208 = vpack.c.b16 %v1704, %v1696
    %v2209 = vpack.c.b16 %v1705, %v1697
    %v2210 = vpack.c.b16 %v1706, %v1698
    %v2211 = vpack.c.b16 %v1707, %v1699
    %v2212 = vpack.c.b16 %v1708, %v1700
    %v2213 = vpack.c.b16 %v1717, %v1709
    %v2214 = vpack.c.b16 %v1718, %v1710
    %v2215 = vpack.c.b16 %v1719, %v1711
    %v2216 = vpack.c.b16 %v1720, %v1712
    %v2217 = vpack.c.b16 %v1721, %v1713
    %v2218 = vpack.c.b16 %v1722, %v1714
    %v2219 = vpack.c.b16 %v1723, %v1715
    %v2220 = vpack.c.b16 %v1724, %v1716
    %v2221 = vpack.c.b16 %v1733, %v1725
    %v2222 = vpack.c.b16 %v1734, %v1726
    %v2223 = vpack.c.b16 %v1735, %v1727
    %v2224 = vpack.c.b16 %v1736, %v1728
    %v2225 = vpack.c.b16 %v1737, %v1729
    %v2226 = vpack.c.b16 %v1738, %v1730
    %v2227 = vpack.c.b16 %v1739, %v1731
    %v2228 = vpack.c.b16 %v1740, %v1732
    %v2229 = vpack.c.b16 %v1749, %v1741
    %v2230 = vpack.c.b16 %v1750, %v1742
    %v2231 = vpack.c.b16 %v1751, %v1743
    %v2232 = vpack.c.b16 %v1752, %v1744
    %v2233 = vpack.c.b16 %v1753, %v1745
    %v2234 = vpack.c.b16 %v1754, %v1746
    %v2235 = vpack.c.b16 %v1755, %v1747
    %v2236 = vpack.c.b16 %v1756, %v1748
    %v2237 = vpack.c.b16 %v1765, %v1757
    %v2238 = vpack.c.b16 %v1766, %v1758
    %v2239 = vpack.c.b16 %v1767, %v1759
    %v2240 = vpack.c.b16 %v1768, %v1760
    %v2241 = vpack.c.b16 %v1769, %v1761
    %v2242 = vpack.c.b16 %v1770, %v1762
    %v2243 = vpack.c.b16 %v1771, %v1763
    %v2244 = vpack.c.b16 %v1772, %v1764
    %v2245 = vpack.c.b16 %v1781, %v1773
    %v2246 = vpack.c.b16 %v1782, %v1774
    %v2247 = vpack.c.b16 %v1783, %v1775
    %v2248 = vpack.c.b16 %v1784, %v1776
    %v2249 = vpack.c.b16 %v1785, %v1777
    %v2250 = vpack.c.b16 %v1786, %v1778
    %v2251 = vpack.c.b16 %v1787, %v1779
    %v2252 = vpack.c.b16 %v1788, %v1780
    %v2253 = vpack.c.b16 %v1797, %v1789
    %v2254 = vpack.c.b16 %v1798, %v1790
    %v2255 = vpack.c.b16 %v1799, %v1791
    %v2256 = vpack.c.b16 %v1800, %v1792
    %v2257 = vpack.c.b16 %v1801, %v1793
    %v2258 = vpack.c.b16 %v1802, %v1794
    %v2259 = vpack.c.b16 %v1803, %v1795
    %v2260 = vpack.c.b16 %v1804, %v1796
    %v2261 = vpack.c.b16 %v1813, %v1805
    %v2262 = vpack.c.b16 %v1814, %v1806
    %v2263 = vpack.c.b16 %v1815, %v1807
    %v2264 = vpack.c.b16 %v1816, %v1808
    %v2265 = vpack.c.b16 %v1817, %v1809
    %v2266 = vpack.c.b16 %v1818, %v1810
    %v2267 = vpack.c.b16 %v1819, %v1811
    %v2268 = vpack.c.b16 %v1820, %v1812
    %v2269 = vpack.c.b16 %v1829, %v1821
    %v2270 = vpack.c.b16 %v1830, %v1822
    %v2271 = vpack.c.b16 %v1831, %v1823
    %v2272 = vpack.c.b16 %v1832, %v1824
    %v2273 = vpack.c.b16 %v1833, %v1825
    %v2274 = vpack.c.b16 %v1834, %v1826
    %v2275 = vpack.c.b16 %v1835, %v1827
    %v2276 = vpack.c.b16 %v1836, %v1828
    %v2277 = vpack.c.b16 %v1845, %v1837
    %v2278 = vpack.c.b16 %v1846, %v1838
    %v2279 = vpack.c.b16 %v1847, %v1839
    %v2280 = vpack.c.b16 %v1848, %v1840
    %v2281 = vpack.c.b16 %v1849, %v1841
    %v2282 = vpack.c.b16 %v1850, %v1842
    %v2283 = vpack.c.b16 %v1851, %v1843
    %v2284 = vpack.c.b16 %v1852, %v1844
    %v2285 = vpack.c.b16 %v1861, %v1853
    %v2286 = vpack.c.b16 %v1862, %v1854
    %v2287 = vpack.c.b16 %v1863, %v1855
    %v2288 = vpack.c.b16 %v1864, %v1856
    %v2289 = vpack.c.b16 %v1865, %v1857
    %v2290 = vpack.c.b16 %v1866, %v1858
    %v2291 = vpack.c.b16 %v1867, %v1859
    %v2292 = vpack.c.b16 %v1868, %v1860
    %v2293 = vpack.c.b16 %v1877, %v1869
    %v2294 = vpack.c.b16 %v1878, %v1870
    %v2295 = vpack.c.b16 %v1879, %v1871
    %v2296 = vpack.c.b16 %v1880, %v1872
    %v2297 = vpack.c.b16 %v1881, %v1873
    %v2298 = vpack.c.b16 %v1882, %v1874
    %v2299 = vpack.c.b16 %v1883, %v1875
    %v2300 = vpack.c.b16 %v1884, %v1876
    %v2301 = vpack.c.b16 %v1893, %v1885
    %v2302 = vpack.c.b16 %v1894, %v1886
    %v2303 = vpack.c.b16 %v1895, %v1887
    %v2304 = vpack.c.b16 %v1896, %v1888
    %v2305 = vpack.c.b16 %v1897, %v1889
    %v2306 = vpack.c.b16 %v1898, %v1890
    %v2307 = vpack.c.b16 %v1899, %v1891
    %v2308 = vpack.c.b16 %v1900, %v1892
    %v2309 = vpack.c.b16 %v1909, %v1901
    %v2310 = vpack.c.b16 %v1910, %v1902
    %v2311 = vpack.c.b16 %v1911, %v1903
    %v2312 = vpack.c.b16 %v1912, %v1904
    %v2313 = vpack.c.b16 %v1913, %v1905
    %v2314 = vpack.c.b16 %v1914, %v1906
    %v2315 = vpack.c.b16 %v1915, %v1907
    %v2316 = vpack.c.b16 %v1916, %v1908
    %v2317 = vpack.c.b16 %v1925, %v1917
    %v2318 = vpack.c.b16 %v1926, %v1918
    %v2319 = vpack.c.b16 %v1927, %v1919
    %v2320 = vpack.c.b16 %v1928, %v1920
    %v2321 = vpack.c.b16 %v1929, %v1921
    %v2322 = vpack.c.b16 %v1930, %v1922
    %v2323 = vpack.c.b16 %v1931, %v1923
    %v2324 = vpack.c.b16 %v1932, %v1924
    %v2325 = vpack.c.b16 %v1941, %v1933
    %v2326 = vpack.c.b16 %v1942, %v1934
    %v2327 = vpack.c.b16 %v1943, %v1935
    %v2328 = vpack.c.b16 %v1944, %v1936
    %v2329 = vpack.c.b16 %v1945, %v1937
    %v2330 = vpack.c.b16 %v1946, %v1938
    %v2331 = vpack.c.b16 %v1947, %v1939
    %v2332 = vpack.c.b16 %v1948, %v1940
    %v2333 = vpack.c.b16 %v1957, %v1949
    %v2334 = vpack.c.b16 %v1958, %v1950
    %v2335 = vpack.c.b16 %v1959, %v1951
    %v2336 = vpack.c.b16 %v1960, %v1952
    %v2337 = vpack.c.b16 %v1961, %v1953
    %v2338 = vpack.c.b16 %v1962, %v1954
    %v2339 = vpack.c.b16 %v1963, %v1955
    %v2340 = vpack.c.b16 %v1964, %v1956
    %v2341 = vpack.c.b16 %v1973, %v1965
    %v2342 = vpack.c.b16 %v1974, %v1966
    %v2343 = vpack.c.b16 %v1975, %v1967
    %v2344 = vpack.c.b16 %v1976, %v1968
    %v2345 = vpack.c.b16 %v1977, %v1969
    %v2346 = vpack.c.b16 %v1978, %v1970
    %v2347 = vpack.c.b16 %v1979, %v1971
    %v2348 = vpack.c.b16 %v1980, %v1972
    %v2349 = vpack.c.b16 %v1989, %v1981
    %v2350 = vpack.c.b16 %v1990, %v1982
    %v2351 = vpack.c.b16 %v1991, %v1983
    %v2352 = vpack.c.b16 %v1992, %v1984
    %v2353 = vpack.c.b16 %v1993, %v1985
    %v2354 = vpack.c.b16 %v1994, %v1986
    %v2355 = vpack.c.b16 %v1995, %v1987
    %v2356 = vpack.c.b16 %v1996, %v1988
    %v2357 = vpack.c.b16 %v2005, %v1997
    %v2358 = vpack.c.b16 %v2006, %v1998
    %v2359 = vpack.c.b16 %v2007, %v1999
    %v2360 = vpack.c.b16 %v2008, %v2000
    %v2361 = vpack.c.b16 %v2009, %v2001
    %v2362 = vpack.c.b16 %v2010, %v2002
    %v2363 = vpack.c.b16 %v2011, %v2003
    %v2364 = vpack.c.b16 %v2012, %v2004
    %v2365 = vpack.c.b16 %v2021, %v2013
    %v2366 = vpack.c.b16 %v2022, %v2014
    %v2367 = vpack.c.b16 %v2023, %v2015
    %v2368 = vpack.c.b16 %v2024, %v2016
    %v2369 = vpack.c.b16 %v2025, %v2017
    %v2370 = vpack.c.b16 %v2026, %v2018
    %v2371 = vpack.c.b16 %v2027, %v2019
    %v2372 = vpack.c.b16 %v2028, %v2020
    %v2373 = vpack.c.b16 %v2037, %v2029
    %v2374 = vpack.c.b16 %v2038, %v2030
    %v2375 = vpack.c.b16 %v2039, %v2031
    %v2376 = vpack.c.b16 %v2040, %v2032
    %v2377 = vpack.c.b16 %v2041, %v2033
    %v2378 = vpack.c.b16 %v2042, %v2034
    %v2379 = vpack.c.b16 %v2043, %v2035
    %v2380 = vpack.c.b16 %v2044, %v2036
    %v2381 = vpack.c.b16 %v2053, %v2045
    %v2382 = vpack.c.b16 %v2054, %v2046
    %v2383 = vpack.c.b16 %v2055, %v2047
    %v2384 = vpack.c.b16 %v2056, %v2048
    %v2385 = vpack.c.b16 %v2057, %v2049
    %v2386 = vpack.c.b16 %v2058, %v2050
    %v2387 = vpack.c.b16 %v2059, %v2051
    %v2388 = vpack.c.b16 %v2060, %v2052
    %v2389 = vpack.c.b16 %v2069, %v2061
    %v2390 = vpack.c.b16 %v2070, %v2062
    %v2391 = vpack.c.b16 %v2071, %v2063
    %v2392 = vpack.c.b16 %v2072, %v2064
    %v2393 = vpack.c.b16 %v2073, %v2065
    %v2394 = vpack.c.b16 %v2074, %v2066
    %v2395 = vpack.c.b16 %v2075, %v2067
    %v2396 = vpack.c.b16 %v2076, %v2068
    %v2397 = vpack.c.b16 %v2085, %v2077
    %v2398 = vpack.c.b16 %v2086, %v2078
    %v2399 = vpack.c.b16 %v2087, %v2079
    %v2400 = vpack.c.b16 %v2088, %v2080
    %v2401 = vpack.c.b16 %v2089, %v2081
    %v2402 = vpack.c.b16 %v2090, %v2082
    %v2403 = vpack.c.b16 %v2091, %v2083
    %v2404 = vpack.c.b16 %v2092, %v2084
    %v2405 = vpack.c.b16 %v2101, %v2093
    %v2406 = vpack.c.b16 %v2102, %v2094
    %v2407 = vpack.c.b16 %v2103, %v2095
    %v2408 = vpack.c.b16 %v2104, %v2096
    %v2409 = vpack.c.b16 %v2105, %v2097
    %v2410 = vpack.c.b16 %v2106, %v2098
    %v2411 = vpack.c.b16 %v2107, %v2099
    %v2412 = vpack.c.b16 %v2108, %v2100
    %v2413 = vpack.c.b16 %v2117, %v2109
    %v2414 = vpack.c.b16 %v2118, %v2110
    %v2415 = vpack.c.b16 %v2119, %v2111
    %v2416 = vpack.c.b16 %v2120, %v2112
    %v2417 = vpack.c.b16 %v2121, %v2113
    %v2418 = vpack.c.b16 %v2122, %v2114
    %v2419 = vpack.c.b16 %v2123, %v2115
    %v2420 = vpack.c.b16 %v2124, %v2116
    %v2421 = vpack.c.b16 %v2133, %v2125
    %v2422 = vpack.c.b16 %v2134, %v2126
    %v2423 = vpack.c.b16 %v2135, %v2127
    %v2424 = vpack.c.b16 %v2136, %v2128
    %v2425 = vpack.c.b16 %v2137, %v2129
    %v2426 = vpack.c.b16 %v2138, %v2130
    %v2427 = vpack.c.b16 %v2139, %v2131
    %v2428 = vpack.c.b16 %v2140, %v2132
    %v2429 = vpack.c.b16 %v2149, %v2141
    %v2430 = vpack.c.b16 %v2150, %v2142
    %v2431 = vpack.c.b16 %v2151, %v2143
    %v2432 = vpack.c.b16 %v2152, %v2144
    %v2433 = vpack.c.b16 %v2153, %v2145
    %v2434 = vpack.c.b16 %v2154, %v2146
    %v2435 = vpack.c.b16 %v2155, %v2147
    %v2436 = vpack.c.b16 %v2156, %v2148
    %v2437 = vpack.c.b16 %v2165, %v2157
    %v2438 = vpack.c.b16 %v2166, %v2158
    %v2439 = vpack.c.b16 %v2167, %v2159
    %v2440 = vpack.c.b16 %v2168, %v2160
    %v2441 = vpack.c.b16 %v2169, %v2161
    %v2442 = vpack.c.b16 %v2170, %v2162
    %v2443 = vpack.c.b16 %v2171, %v2163
    %v2444 = vpack.c.b16 %v2172, %v2164
    %v2445 = vpack.c.b16 %v2181, %v2173
    %v2446 = vpack.c.b16 %v2182, %v2174
    %v2447 = vpack.c.b16 %v2183, %v2175
    %v2448 = vpack.c.b16 %v2184, %v2176
    %v2449 = vpack.c.b16 %v2185, %v2177
    %v2450 = vpack.c.b16 %v2186, %v2178
    %v2451 = vpack.c.b16 %v2187, %v2179
    %v2452 = vpack.c.b16 %v2188, %v2180
    %v2453 = vpack.c.b16 %v2197, %v2189
    %v2454 = vpack.c.b16 %v2198, %v2190
    %v2455 = vpack.c.b16 %v2199, %v2191
    %v2456 = vpack.c.b16 %v2200, %v2192
    %v2457 = vpack.c.b16 %v2201, %v2193
    %v2458 = vpack.c.b16 %v2202, %v2194
    %v2459 = vpack.c.b16 %v2203, %v2195
    %v2460 = vpack.c.b16 %v2204, %v2196
    %2717 = vmatprep.subr.bf16.mxu0 %v2262
    %2718 = vmatpush1.bf16.msra.mxu0 %v2261
    %2719 = vmatprep.subr.bf16.mxu0 %v2254
    %2720 = vmatpush1.bf16.msra.mxu0 %v2253
    %2721 = vmatprep.subr.bf16.mxu0 %v2246
    %2722 = vmatpush1.bf16.msra.mxu0 %v2245
    %2723 = vmatprep.subr.bf16.mxu0 %v2238
    %2724 = vmatpush1.bf16.msra.mxu0 %v2237
    %2725 = vmatprep.subr.bf16.mxu0 %v2230
    %2726 = vmatpush1.bf16.msra.mxu0 %v2229
    %2727 = vmatprep.subr.bf16.mxu0 %v2222
    %2728 = vmatpush1.bf16.msra.mxu0 %v2221
    %2729 = vmatprep.subr.bf16.mxu0 %v2214
    %2730 = vmatpush1.bf16.msra.mxu0 %v2213
    %2731 = vmatprep.subr.bf16.mxu0 %v2206
    %2732 = vmatpush1.bf16.msra.mxu0 %v2205
    %2733 = vmatprep.subr.bf16.mxu0 %v2326
    %2734 = vmatpush2.bf16.msra.mxu0 %v2325
    %2735 = vmatprep.subr.bf16.mxu0 %v2318
    %2736 = vmatpush2.bf16.msra.mxu0 %v2317
    %2737 = vmatprep.subr.bf16.mxu0 %v2310
    %2738 = vmatpush2.bf16.msra.mxu0 %v2309
    %2739 = vmatprep.subr.bf16.mxu0 %v2302
    %2740 = vmatpush2.bf16.msra.mxu0 %v2301
    %2741 = vmatprep.subr.bf16.mxu0 %v2294
    %2742 = vmatpush2.bf16.msra.mxu0 %v2293
    %2743 = vmatprep.subr.bf16.mxu0 %v2286
    %2744 = vmatpush2.bf16.msra.mxu0 %v2285
    %2745 = vmatprep.subr.bf16.mxu0 %v2278
    %2746 = vmatpush2.bf16.msra.mxu0 %v2277
    %2747 = vmatprep.subr.bf16.mxu0 %v2270
    %2748 = vmatpush2.bf16.msra.mxu0 %v2269
    %2749 = vmatprep.mubr.bf16.mxu0 %v1434
    %2750 = vmatmul.mubr.bf16.gmra.mxu0 %v1433
    %v2751 = vpop.f32.mrf.mxu0
    %v2752 = vadd.f32 %v516, %v2751
    %v2753 = vpop.f32.mrf.mxu0
    %v2754 = vadd.f32 %v520, %v2753
    %v2755 = vpop.f32.mrf.mxu0
    %v2756 = vpop.f32.mrf.mxu0
    %2757 = vdwg.mxu0
    %2758 = vmatprep.subr.bf16.mxu0 %v2390
    %2759 = vmatpush1.bf16.msra.mxu0 %v2389
    %2760 = vmatprep.subr.bf16.mxu0 %v2382
    %2761 = vmatpush1.bf16.msra.mxu0 %v2381
    %2762 = vmatprep.subr.bf16.mxu0 %v2374
    %2763 = vmatpush1.bf16.msra.mxu0 %v2373
    %2764 = vmatprep.subr.bf16.mxu0 %v2366
    %2765 = vmatpush1.bf16.msra.mxu0 %v2365
    %2766 = vmatprep.subr.bf16.mxu0 %v2358
    %2767 = vmatpush1.bf16.msra.mxu0 %v2357
    %2768 = vmatprep.subr.bf16.mxu0 %v2350
    %2769 = vmatpush1.bf16.msra.mxu0 %v2349
    %2770 = vmatprep.subr.bf16.mxu0 %v2342
    %2771 = vmatpush1.bf16.msra.mxu0 %v2341
    %2772 = vmatprep.subr.bf16.mxu0 %v2334
    %2773 = vmatpush1.bf16.msra.mxu0 %v2333
    %2774 = vmatprep.subr.bf16.mxu0 %v2454
    %2775 = vmatpush2.bf16.msra.mxu0 %v2453
    %2776 = vmatprep.subr.bf16.mxu0 %v2446
    %2777 = vmatpush2.bf16.msra.mxu0 %v2445
    %2778 = vmatprep.subr.bf16.mxu0 %v2438
    %2779 = vmatpush2.bf16.msra.mxu0 %v2437
    %2780 = vmatprep.subr.bf16.mxu0 %v2430
    %2781 = vmatpush2.bf16.msra.mxu0 %v2429
    %2782 = vmatprep.subr.bf16.mxu0 %v2422
    %2783 = vmatpush2.bf16.msra.mxu0 %v2421
    %2784 = vmatprep.subr.bf16.mxu0 %v2414
    %2785 = vmatpush2.bf16.msra.mxu0 %v2413
    %2786 = vmatprep.subr.bf16.mxu0 %v2406
    %2787 = vmatpush2.bf16.msra.mxu0 %v2405
    %2788 = vmatprep.subr.bf16.mxu0 %v2398
    %2789 = vmatpush2.bf16.msra.mxu0 %v2397
    %2790 = vmatprep.mubr.bf16.mxu0 %v1436
    %2791 = vmatmul.mubr.bf16.gmra.mxu0 %v1435
    %v2792 = vpop.f32.mrf.mxu0
    %v2793 = vadd.f32 %v2752, %v2792
    %v2794 = vpop.f32.mrf.mxu0
    %v2795 = vadd.f32 %v2754, %v2794
    %v2796 = vpop.f32.mrf.mxu0
    %v2797 = vpop.f32.mrf.mxu0
    %2798 = vdwg.mxu0
    %2799 = vmatprep.subr.bf16.mxu0 %v2264
    %2800 = vmatpush1.bf16.msra.mxu0 %v2263
    %2801 = vmatprep.subr.bf16.mxu0 %v2256
    %2802 = vmatpush1.bf16.msra.mxu0 %v2255
    %2803 = vmatprep.subr.bf16.mxu0 %v2248
    %2804 = vmatpush1.bf16.msra.mxu0 %v2247
    %2805 = vmatprep.subr.bf16.mxu0 %v2240
    %2806 = vmatpush1.bf16.msra.mxu0 %v2239
    %2807 = vmatprep.subr.bf16.mxu0 %v2232
    %2808 = vmatpush1.bf16.msra.mxu0 %v2231
    %2809 = vmatprep.subr.bf16.mxu0 %v2224
    %2810 = vmatpush1.bf16.msra.mxu0 %v2223
    %2811 = vmatprep.subr.bf16.mxu0 %v2216
    %2812 = vmatpush1.bf16.msra.mxu0 %v2215
    %2813 = vmatprep.subr.bf16.mxu0 %v2208
    %2814 = vmatpush1.bf16.msra.mxu0 %v2207
    %2815 = vmatprep.subr.bf16.mxu0 %v2328
    %2816 = vmatpush2.bf16.msra.mxu0 %v2327
    %2817 = vmatprep.subr.bf16.mxu0 %v2320
    %2818 = vmatpush2.bf16.msra.mxu0 %v2319
    %2819 = vmatprep.subr.bf16.mxu0 %v2312
    %2820 = vmatpush2.bf16.msra.mxu0 %v2311
    %2821 = vmatprep.subr.bf16.mxu0 %v2304
    %2822 = vmatpush2.bf16.msra.mxu0 %v2303
    %2823 = vmatprep.subr.bf16.mxu0 %v2296
    %2824 = vmatpush2.bf16.msra.mxu0 %v2295
    %2825 = vmatprep.subr.bf16.mxu0 %v2288
    %2826 = vmatpush2.bf16.msra.mxu0 %v2287
    %2827 = vmatprep.subr.bf16.mxu0 %v2280
    %2828 = vmatpush2.bf16.msra.mxu0 %v2279
    %2829 = vmatprep.subr.bf16.mxu0 %v2272
    %2830 = vmatpush2.bf16.msra.mxu0 %v2271
    %2831 = vmatprep.mubr.bf16.mxu0 %v1434
    %2832 = vmatmul.mubr.bf16.gmra.mxu0 %v1433
    %v2833 = vpop.f32.mrf.mxu0
    %v2834 = vadd.f32 %v524, %v2833
    %v2835 = vpop.f32.mrf.mxu0
    %v2836 = vadd.f32 %v528, %v2835
    %v2837 = vpop.f32.mrf.mxu0
    %v2838 = vpop.f32.mrf.mxu0
    %2839 = vdwg.mxu0
    %2840 = vmatprep.subr.bf16.mxu0 %v2392
    %2841 = vmatpush1.bf16.msra.mxu0 %v2391
    %2842 = vmatprep.subr.bf16.mxu0 %v2384
    %2843 = vmatpush1.bf16.msra.mxu0 %v2383
    %2844 = vmatprep.subr.bf16.mxu0 %v2376
    %2845 = vmatpush1.bf16.msra.mxu0 %v2375
    %2846 = vmatprep.subr.bf16.mxu0 %v2368
    %2847 = vmatpush1.bf16.msra.mxu0 %v2367
    %2848 = vmatprep.subr.bf16.mxu0 %v2360
    %2849 = vmatpush1.bf16.msra.mxu0 %v2359
    %2850 = vmatprep.subr.bf16.mxu0 %v2352
    %2851 = vmatpush1.bf16.msra.mxu0 %v2351
    %2852 = vmatprep.subr.bf16.mxu0 %v2344
    %2853 = vmatpush1.bf16.msra.mxu0 %v2343
    %2854 = vmatprep.subr.bf16.mxu0 %v2336
    %2855 = vmatpush1.bf16.msra.mxu0 %v2335
    %2856 = vmatprep.subr.bf16.mxu0 %v2456
    %2857 = vmatpush2.bf16.msra.mxu0 %v2455
    %2858 = vmatprep.subr.bf16.mxu0 %v2448
    %2859 = vmatpush2.bf16.msra.mxu0 %v2447
    %2860 = vmatprep.subr.bf16.mxu0 %v2440
    %2861 = vmatpush2.bf16.msra.mxu0 %v2439
    %2862 = vmatprep.subr.bf16.mxu0 %v2432
    %2863 = vmatpush2.bf16.msra.mxu0 %v2431
    %2864 = vmatprep.subr.bf16.mxu0 %v2424
    %2865 = vmatpush2.bf16.msra.mxu0 %v2423
    %2866 = vmatprep.subr.bf16.mxu0 %v2416
    %2867 = vmatpush2.bf16.msra.mxu0 %v2415
    %2868 = vmatprep.subr.bf16.mxu0 %v2408
    %2869 = vmatpush2.bf16.msra.mxu0 %v2407
    %2870 = vmatprep.subr.bf16.mxu0 %v2400
    %2871 = vmatpush2.bf16.msra.mxu0 %v2399
    %2872 = vmatprep.mubr.bf16.mxu0 %v1436
    %2873 = vmatmul.mubr.bf16.gmra.mxu0 %v1435
    %v2874 = vpop.f32.mrf.mxu0
    %v2875 = vadd.f32 %v2834, %v2874
    %v2876 = vpop.f32.mrf.mxu0
    %v2877 = vadd.f32 %v2836, %v2876
    %v2878 = vpop.f32.mrf.mxu0
    %v2879 = vpop.f32.mrf.mxu0
    %2880 = vdwg.mxu0
    %2881 = vmatprep.subr.bf16.mxu0 %v2266
    %2882 = vmatpush1.bf16.msra.mxu0 %v2265
    %2883 = vmatprep.subr.bf16.mxu0 %v2258
    %2884 = vmatpush1.bf16.msra.mxu0 %v2257
    %2885 = vmatprep.subr.bf16.mxu0 %v2250
    %2886 = vmatpush1.bf16.msra.mxu0 %v2249
    %2887 = vmatprep.subr.bf16.mxu0 %v2242
    %2888 = vmatpush1.bf16.msra.mxu0 %v2241
    %2889 = vmatprep.subr.bf16.mxu0 %v2234
    %2890 = vmatpush1.bf16.msra.mxu0 %v2233
    %2891 = vmatprep.subr.bf16.mxu0 %v2226
    %2892 = vmatpush1.bf16.msra.mxu0 %v2225
    %2893 = vmatprep.subr.bf16.mxu0 %v2218
    %2894 = vmatpush1.bf16.msra.mxu0 %v2217
    %2895 = vmatprep.subr.bf16.mxu0 %v2210
    %2896 = vmatpush1.bf16.msra.mxu0 %v2209
    %2897 = vmatprep.subr.bf16.mxu0 %v2330
    %2898 = vmatpush2.bf16.msra.mxu0 %v2329
    %2899 = vmatprep.subr.bf16.mxu0 %v2322
    %2900 = vmatpush2.bf16.msra.mxu0 %v2321
    %2901 = vmatprep.subr.bf16.mxu0 %v2314
    %2902 = vmatpush2.bf16.msra.mxu0 %v2313
    %2903 = vmatprep.subr.bf16.mxu0 %v2306
    %2904 = vmatpush2.bf16.msra.mxu0 %v2305
    %2905 = vmatprep.subr.bf16.mxu0 %v2298
    %2906 = vmatpush2.bf16.msra.mxu0 %v2297
    %2907 = vmatprep.subr.bf16.mxu0 %v2290
    %2908 = vmatpush2.bf16.msra.mxu0 %v2289
    %2909 = vmatprep.subr.bf16.mxu0 %v2282
    %2910 = vmatpush2.bf16.msra.mxu0 %v2281
    %2911 = vmatprep.subr.bf16.mxu0 %v2274
    %2912 = vmatpush2.bf16.msra.mxu0 %v2273
    %2913 = vmatprep.mubr.bf16.mxu0 %v1434
    %2914 = vmatmul.mubr.bf16.gmra.mxu0 %v1433
    %v2915 = vpop.f32.mrf.mxu0
    %v2916 = vadd.f32 %v532, %v2915
    %v2917 = vpop.f32.mrf.mxu0
    %v2918 = vadd.f32 %v536, %v2917
    %v2919 = vpop.f32.mrf.mxu0
    %v2920 = vpop.f32.mrf.mxu0
    %2921 = vdwg.mxu0
    %2922 = vmatprep.subr.bf16.mxu0 %v2394
    %2923 = vmatpush1.bf16.msra.mxu0 %v2393
    %2924 = vmatprep.subr.bf16.mxu0 %v2386
    %2925 = vmatpush1.bf16.msra.mxu0 %v2385
    %2926 = vmatprep.subr.bf16.mxu0 %v2378
    %2927 = vmatpush1.bf16.msra.mxu0 %v2377
    %2928 = vmatprep.subr.bf16.mxu0 %v2370
    %2929 = vmatpush1.bf16.msra.mxu0 %v2369
    %2930 = vmatprep.subr.bf16.mxu0 %v2362
    %2931 = vmatpush1.bf16.msra.mxu0 %v2361
    %2932 = vmatprep.subr.bf16.mxu0 %v2354
    %2933 = vmatpush1.bf16.msra.mxu0 %v2353
    %2934 = vmatprep.subr.bf16.mxu0 %v2346
    %2935 = vmatpush1.bf16.msra.mxu0 %v2345
    %2936 = vmatprep.subr.bf16.mxu0 %v2338
    %2937 = vmatpush1.bf16.msra.mxu0 %v2337
    %2938 = vmatprep.subr.bf16.mxu0 %v2458
    %2939 = vmatpush2.bf16.msra.mxu0 %v2457
    %2940 = vmatprep.subr.bf16.mxu0 %v2450
    %2941 = vmatpush2.bf16.msra.mxu0 %v2449
    %2942 = vmatprep.subr.bf16.mxu0 %v2442
    %2943 = vmatpush2.bf16.msra.mxu0 %v2441
    %2944 = vmatprep.subr.bf16.mxu0 %v2434
    %2945 = vmatpush2.bf16.msra.mxu0 %v2433
    %2946 = vmatprep.subr.bf16.mxu0 %v2426
    %2947 = vmatpush2.bf16.msra.mxu0 %v2425
    %2948 = vmatprep.subr.bf16.mxu0 %v2418
    %2949 = vmatpush2.bf16.msra.mxu0 %v2417
    %2950 = vmatprep.subr.bf16.mxu0 %v2410
    %2951 = vmatpush2.bf16.msra.mxu0 %v2409
    %2952 = vmatprep.subr.bf16.mxu0 %v2402
    %2953 = vmatpush2.bf16.msra.mxu0 %v2401
    %2954 = vmatprep.mubr.bf16.mxu0 %v1436
    %2955 = vmatmul.mubr.bf16.gmra.mxu0 %v1435
    %v2956 = vpop.f32.mrf.mxu0
    %v2957 = vadd.f32 %v2916, %v2956
    %v2958 = vpop.f32.mrf.mxu0
    %v2959 = vadd.f32 %v2918, %v2958
    %v2960 = vpop.f32.mrf.mxu0
    %v2961 = vpop.f32.mrf.mxu0
    %2962 = vdwg.mxu0
    %2963 = vmatprep.subr.bf16.mxu0 %v2268
    %2964 = vmatpush1.bf16.msra.mxu0 %v2267
    %2965 = vmatprep.subr.bf16.mxu0 %v2260
    %2966 = vmatpush1.bf16.msra.mxu0 %v2259
    %2967 = vmatprep.subr.bf16.mxu0 %v2252
    %2968 = vmatpush1.bf16.msra.mxu0 %v2251
    %2969 = vmatprep.subr.bf16.mxu0 %v2244
    %2970 = vmatpush1.bf16.msra.mxu0 %v2243
    %2971 = vmatprep.subr.bf16.mxu0 %v2236
    %2972 = vmatpush1.bf16.msra.mxu0 %v2235
    %2973 = vmatprep.subr.bf16.mxu0 %v2228
    %2974 = vmatpush1.bf16.msra.mxu0 %v2227
    %2975 = vmatprep.subr.bf16.mxu0 %v2220
    %2976 = vmatpush1.bf16.msra.mxu0 %v2219
    %2977 = vmatprep.subr.bf16.mxu0 %v2212
    %2978 = vmatpush1.bf16.msra.mxu0 %v2211
    %2979 = vmatprep.subr.bf16.mxu0 %v2332
    %2980 = vmatpush2.bf16.msra.mxu0 %v2331
    %2981 = vmatprep.subr.bf16.mxu0 %v2324
    %2982 = vmatpush2.bf16.msra.mxu0 %v2323
    %2983 = vmatprep.subr.bf16.mxu0 %v2316
    %2984 = vmatpush2.bf16.msra.mxu0 %v2315
    %2985 = vmatprep.subr.bf16.mxu0 %v2308
    %2986 = vmatpush2.bf16.msra.mxu0 %v2307
    %2987 = vmatprep.subr.bf16.mxu0 %v2300
    %2988 = vmatpush2.bf16.msra.mxu0 %v2299
    %2989 = vmatprep.subr.bf16.mxu0 %v2292
    %2990 = vmatpush2.bf16.msra.mxu0 %v2291
    %2991 = vmatprep.subr.bf16.mxu0 %v2284
    %2992 = vmatpush2.bf16.msra.mxu0 %v2283
    %2993 = vmatprep.subr.bf16.mxu0 %v2276
    %2994 = vmatpush2.bf16.msra.mxu0 %v2275
    %2995 = vmatprep.mubr.bf16.mxu0 %v1434
    %2996 = vmatmul.mubr.bf16.gmra.mxu0 %v1433
    %v2997 = vpop.f32.mrf.mxu0
    %v2998 = vadd.f32 %v540, %v2997
    %v2999 = vpop.f32.mrf.mxu0
    %v3000 = vadd.f32 %v544, %v2999
    %v3001 = vpop.f32.mrf.mxu0
    %v3002 = vpop.f32.mrf.mxu0
    %3003 = vdwg.mxu0
    %3004 = vmatprep.subr.bf16.mxu0 %v2396
    %3005 = vmatpush1.bf16.msra.mxu0 %v2395
    %3006 = vmatprep.subr.bf16.mxu0 %v2388
    %3007 = vmatpush1.bf16.msra.mxu0 %v2387
    %3008 = vmatprep.subr.bf16.mxu0 %v2380
    %3009 = vmatpush1.bf16.msra.mxu0 %v2379
    %3010 = vmatprep.subr.bf16.mxu0 %v2372
    %3011 = vmatpush1.bf16.msra.mxu0 %v2371
    %3012 = vmatprep.subr.bf16.mxu0 %v2364
    %3013 = vmatpush1.bf16.msra.mxu0 %v2363
    %3014 = vmatprep.subr.bf16.mxu0 %v2356
    %3015 = vmatpush1.bf16.msra.mxu0 %v2355
    %3016 = vmatprep.subr.bf16.mxu0 %v2348
    %3017 = vmatpush1.bf16.msra.mxu0 %v2347
    %3018 = vmatprep.subr.bf16.mxu0 %v2340
    %3019 = vmatpush1.bf16.msra.mxu0 %v2339
    %3020 = vmatprep.subr.bf16.mxu0 %v2460
    %3021 = vmatpush2.bf16.msra.mxu0 %v2459
    %3022 = vmatprep.subr.bf16.mxu0 %v2452
    %3023 = vmatpush2.bf16.msra.mxu0 %v2451
    %3024 = vmatprep.subr.bf16.mxu0 %v2444
    %3025 = vmatpush2.bf16.msra.mxu0 %v2443
    %3026 = vmatprep.subr.bf16.mxu0 %v2436
    %3027 = vmatpush2.bf16.msra.mxu0 %v2435
    %3028 = vmatprep.subr.bf16.mxu0 %v2428
    %3029 = vmatpush2.bf16.msra.mxu0 %v2427
    %3030 = vmatprep.subr.bf16.mxu0 %v2420
    %3031 = vmatpush2.bf16.msra.mxu0 %v2419
    %3032 = vmatprep.subr.bf16.mxu0 %v2412
    %3033 = vmatpush2.bf16.msra.mxu0 %v2411
    %3034 = vmatprep.subr.bf16.mxu0 %v2404
    %3035 = vmatpush2.bf16.msra.mxu0 %v2403
    %3036 = vmatprep.mubr.bf16.mxu0 %v1436
    %3037 = vmatmul.mubr.bf16.gmra.mxu0 %v1435
    %v3038 = vpop.f32.mrf.mxu0
    %v3039 = vadd.f32 %v2998, %v3038
    %v3040 = vpop.f32.mrf.mxu0
    %v3041 = vadd.f32 %v3000, %v3040
    %v3042 = vpop.f32.mrf.mxu0
    %v3043 = vpop.f32.mrf.mxu0
    %3044 = vdwg.mxu0
    %v3045 = vxor.u32 %v2793, 2147483648
    %v3046 = vxor.u32 %v2795, 2147483648
    %v3047 = vxor.u32 %v2875, 2147483648
    %v3048 = vxor.u32 %v2877, 2147483648
    %v3049 = vmul.f32 %v3045, 1.442695
    %v3050 = vpow.pop %v3049
    %v3051 = vmul.f32 %v3046, 1.442695
    %v3052 = vpow.pop %v3051
    %v3053 = vmul.f32 %v3047, 1.442695
    %v3054 = vpow.pop %v3053
    %v3055 = vmul.f32 %v3048, 1.442695
    %v3056 = vpow.pop %v3055
    %v3057 = vadd.f32 %v3050, 1.0
    %v3058 = vadd.f32 %v3052, 1.0
    %v3059 = vadd.f32 %v3054, 1.0
    %v3060 = vadd.f32 %v3056, 1.0
    %v3061 = vrcp.pop %v3057
    %v3062 = vmul.f32 1.0, %v3061
    %v3063 = vrcp.pop %v3058
    %v3064 = vmul.f32 1.0, %v3063
    %v3065 = vrcp.pop %v3059
    %v3066 = vmul.f32 1.0, %v3065
    %v3067 = vrcp.pop %v3060
    %v3068 = vmul.f32 1.0, %v3067
    %v3069 = vtanh.pop %v2957
    %v3070 = vtanh.pop %v2959
    %v3071 = vxor.u32 %v3039, 2147483648
    %v3072 = vxor.u32 %v3041, 2147483648
    %v3073 = vmul.f32 %v3071, 1.442695
    %v3074 = vpow.pop %v3073
    %v3075 = vmul.f32 %v3072, 1.442695
    %v3076 = vpow.pop %v3075
    %v3077 = vadd.f32 %v3074, 1.0
    %v3078 = vadd.f32 %v3076, 1.0
    %v3079 = vrcp.pop %v3077
    %v3080 = vmul.f32 1.0, %v3079
    %v3081 = vrcp.pop %v3078
    %v3082 = vmul.f32 1.0, %v3081
    %v3083 = vmul.f32 %v3066, %v561
    %v3084 = vmul.f32 %v3068, %v562
    %v3085 = vmul.f32 %v3062, %v3069
    %v3086 = vmul.f32 %v3064, %v3070
    %v3087 = vadd.f32 %v3083, %v3085
    %v3088 = vadd.f32 %v3084, %v3086
    %v3089 = vtanh.pop %v3087
    %v3090 = vtanh.pop %v3088
    %v3091 = vmul.f32 %v3080, %v3089
    %v3092 = vmul.f32 %v3082, %v3090
    %s3093 = smul.u32 0, 2
    %s3094 = smul.addr %s3093, 8
    %s3095 = scalar_lea.vmem [#allocation2], %s3094
    %3096 = vst [vmem:[%s3095] sm:$0xff] %v3091
    %3097 = vst [vmem:[%s3095 + $0x8] sm:$0xff] %v3092
    %s3098 = scalar_lea.vmem [#allocation3], 64
    %v3099 = vld [vmem:[%s3098] sm:$0xff]
    %v3100 = vld [vmem:[%s3098 + $0x8] sm:$0xff]
    %v3101 = vld [vmem:[%s3098 + $0x10] sm:$0xff]
    %v3102 = vld [vmem:[%s3098 + $0x18] sm:$0xff]
    %v3103 = vld [vmem:[%s3098 + $0x20] sm:$0xff]
    %v3104 = vld [vmem:[%s3098 + $0x28] sm:$0xff]
    %v3105 = vld [vmem:[%s3098 + $0x30] sm:$0xff]
    %v3106 = vld [vmem:[%s3098 + $0x38] sm:$0xff]
    %3107 = vmatprep.subr.bf16.mxu0 %v1014
    %3108 = vmatpush1.bf16.msra.mxu0 %v1013
    %3109 = vmatprep.subr.bf16.mxu0 %v1006
    %3110 = vmatpush1.bf16.msra.mxu0 %v1005
    %3111 = vmatprep.subr.bf16.mxu0 %v998
    %3112 = vmatpush1.bf16.msra.mxu0 %v997
    %3113 = vmatprep.subr.bf16.mxu0 %v990
    %3114 = vmatpush1.bf16.msra.mxu0 %v989
    %3115 = vmatprep.subr.bf16.mxu0 %v982
    %3116 = vmatpush1.bf16.msra.mxu0 %v981
    %3117 = vmatprep.subr.bf16.mxu0 %v974
    %3118 = vmatpush1.bf16.msra.mxu0 %v973
    %3119 = vmatprep.subr.bf16.mxu0 %v966
    %3120 = vmatpush1.bf16.msra.mxu0 %v965
    %3121 = vmatprep.subr.bf16.mxu0 %v958
    %3122 = vmatpush1.bf16.msra.mxu0 %v957
    %3123 = vmatprep.subr.bf16.mxu0 %v1078
    %3124 = vmatpush2.bf16.msra.mxu0 %v1077
    %3125 = vmatprep.subr.bf16.mxu0 %v1070
    %3126 = vmatpush2.bf16.msra.mxu0 %v1069
    %3127 = vmatprep.subr.bf16.mxu0 %v1062
    %3128 = vmatpush2.bf16.msra.mxu0 %v1061
    %3129 = vmatprep.subr.bf16.mxu0 %v1054
    %3130 = vmatpush2.bf16.msra.mxu0 %v1053
    %3131 = vmatprep.subr.bf16.mxu0 %v1046
    %3132 = vmatpush2.bf16.msra.mxu0 %v1045
    %3133 = vmatprep.subr.bf16.mxu0 %v1038
    %3134 = vmatpush2.bf16.msra.mxu0 %v1037
    %3135 = vmatprep.subr.bf16.mxu0 %v1030
    %3136 = vmatpush2.bf16.msra.mxu0 %v1029
    %3137 = vmatprep.subr.bf16.mxu0 %v1022
    %3138 = vmatpush2.bf16.msra.mxu0 %v1021
    %3139 = vmatprep.mubr.bf16.mxu0 %v1434
    %3140 = vmatmul.mubr.bf16.gmra.mxu0 %v1433
    %v3141 = vpop.f32.mrf.mxu0
    %v3142 = vadd.f32 0.0, %v3141
    %v3143 = vpop.f32.mrf.mxu0
    %v3144 = vadd.f32 0.0, %v3143
    %v3145 = vpop.f32.mrf.mxu0
    %v3146 = vpop.f32.mrf.mxu0
    %3147 = vdwg.mxu0
    %3148 = vmatprep.subr.bf16.mxu0 %v1016
    %3149 = vmatpush1.bf16.msra.mxu0 %v1015
    %3150 = vmatprep.subr.bf16.mxu0 %v1008
    %3151 = vmatpush1.bf16.msra.mxu0 %v1007
    %3152 = vmatprep.subr.bf16.mxu0 %v1000
    %3153 = vmatpush1.bf16.msra.mxu0 %v999
    %3154 = vmatprep.subr.bf16.mxu0 %v992
    %3155 = vmatpush1.bf16.msra.mxu0 %v991
    %3156 = vmatprep.subr.bf16.mxu0 %v984
    %3157 = vmatpush1.bf16.msra.mxu0 %v983
    %3158 = vmatprep.subr.bf16.mxu0 %v976
    %3159 = vmatpush1.bf16.msra.mxu0 %v975
    %3160 = vmatprep.subr.bf16.mxu0 %v968
    %3161 = vmatpush1.bf16.msra.mxu0 %v967
    %3162 = vmatprep.subr.bf16.mxu0 %v960
    %3163 = vmatpush1.bf16.msra.mxu0 %v959
    %3164 = vmatprep.subr.bf16.mxu0 %v1080
    %3165 = vmatpush2.bf16.msra.mxu0 %v1079
    %3166 = vmatprep.subr.bf16.mxu0 %v1072
    %3167 = vmatpush2.bf16.msra.mxu0 %v1071
    %3168 = vmatprep.subr.bf16.mxu0 %v1064
    %3169 = vmatpush2.bf16.msra.mxu0 %v1063
    %3170 = vmatprep.subr.bf16.mxu0 %v1056
    %3171 = vmatpush2.bf16.msra.mxu0 %v1055
    %3172 = vmatprep.subr.bf16.mxu0 %v1048
    %3173 = vmatpush2.bf16.msra.mxu0 %v1047
    %3174 = vmatprep.subr.bf16.mxu0 %v1040
    %3175 = vmatpush2.bf16.msra.mxu0 %v1039
    %3176 = vmatprep.subr.bf16.mxu0 %v1032
    %3177 = vmatpush2.bf16.msra.mxu0 %v1031
    %3178 = vmatprep.subr.bf16.mxu0 %v1024
    %3179 = vmatpush2.bf16.msra.mxu0 %v1023
    %3180 = vmatprep.mubr.bf16.mxu0 %v1434
    %3181 = vmatmul.mubr.bf16.gmra.mxu0 %v1433
    %v3182 = vpop.f32.mrf.mxu0
    %v3183 = vadd.f32 0.0, %v3182
    %v3184 = vpop.f32.mrf.mxu0
    %v3185 = vadd.f32 0.0, %v3184
    %v3186 = vpop.f32.mrf.mxu0
    %v3187 = vpop.f32.mrf.mxu0
    %3188 = vdwg.mxu0
    %3189 = vmatprep.subr.bf16.mxu0 %v1018
    %3190 = vmatpush1.bf16.msra.mxu0 %v1017
    %3191 = vmatprep.subr.bf16.mxu0 %v1010
    %3192 = vmatpush1.bf16.msra.mxu0 %v1009
    %3193 = vmatprep.subr.bf16.mxu0 %v1002
    %3194 = vmatpush1.bf16.msra.mxu0 %v1001
    %3195 = vmatprep.subr.bf16.mxu0 %v994
    %3196 = vmatpush1.bf16.msra.mxu0 %v993
    %3197 = vmatprep.subr.bf16.mxu0 %v986
    %3198 = vmatpush1.bf16.msra.mxu0 %v985
    %3199 = vmatprep.subr.bf16.mxu0 %v978
    %3200 = vmatpush1.bf16.msra.mxu0 %v977
    %3201 = vmatprep.subr.bf16.mxu0 %v970
    %3202 = vmatpush1.bf16.msra.mxu0 %v969
    %3203 = vmatprep.subr.bf16.mxu0 %v962
    %3204 = vmatpush1.bf16.msra.mxu0 %v961
    %3205 = vmatprep.subr.bf16.mxu0 %v1082
    %3206 = vmatpush2.bf16.msra.mxu0 %v1081
    %3207 = vmatprep.subr.bf16.mxu0 %v1074
    %3208 = vmatpush2.bf16.msra.mxu0 %v1073
    %3209 = vmatprep.subr.bf16.mxu0 %v1066
    %3210 = vmatpush2.bf16.msra.mxu0 %v1065
    %3211 = vmatprep.subr.bf16.mxu0 %v1058
    %3212 = vmatpush2.bf16.msra.mxu0 %v1057
    %3213 = vmatprep.subr.bf16.mxu0 %v1050
    %3214 = vmatpush2.bf16.msra.mxu0 %v1049
    %3215 = vmatprep.subr.bf16.mxu0 %v1042
    %3216 = vmatpush2.bf16.msra.mxu0 %v1041
    %3217 = vmatprep.subr.bf16.mxu0 %v1034
    %3218 = vmatpush2.bf16.msra.mxu0 %v1033
    %3219 = vmatprep.subr.bf16.mxu0 %v1026
    %3220 = vmatpush2.bf16.msra.mxu0 %v1025
    %3221 = vmatprep.mubr.bf16.mxu0 %v1434
    %3222 = vmatmul.mubr.bf16.gmra.mxu0 %v1433
    %v3223 = vpop.f32.mrf.mxu0
    %v3224 = vadd.f32 0.0, %v3223
    %v3225 = vpop.f32.mrf.mxu0
    %v3226 = vadd.f32 0.0, %v3225
    %v3227 = vpop.f32.mrf.mxu0
    %v3228 = vpop.f32.mrf.mxu0
    %3229 = vdwg.mxu0
    %3230 = vmatprep.subr.bf16.mxu0 %v1020
    %3231 = vmatpush1.bf16.msra.mxu0 %v1019
    %3232 = vmatprep.subr.bf16.mxu0 %v1012
    %3233 = vmatpush1.bf16.msra.mxu0 %v1011
    %3234 = vmatprep.subr.bf16.mxu0 %v1004
    %3235 = vmatpush1.bf16.msra.mxu0 %v1003
    %3236 = vmatprep.subr.bf16.mxu0 %v996
    %3237 = vmatpush1.bf16.msra.mxu0 %v995
    %3238 = vmatprep.subr.bf16.mxu0 %v988
    %3239 = vmatpush1.bf16.msra.mxu0 %v987
    %3240 = vmatprep.subr.bf16.mxu0 %v980
    %3241 = vmatpush1.bf16.msra.mxu0 %v979
    %3242 = vmatprep.subr.bf16.mxu0 %v972
    %3243 = vmatpush1.bf16.msra.mxu0 %v971
    %3244 = vmatprep.subr.bf16.mxu0 %v964
    %3245 = vmatpush1.bf16.msra.mxu0 %v963
    %3246 = vmatprep.subr.bf16.mxu0 %v1084
    %3247 = vmatpush2.bf16.msra.mxu0 %v1083
    %3248 = vmatprep.subr.bf16.mxu0 %v1076
    %3249 = vmatpush2.bf16.msra.mxu0 %v1075
    %3250 = vmatprep.subr.bf16.mxu0 %v1068
    %3251 = vmatpush2.bf16.msra.mxu0 %v1067
    %3252 = vmatprep.subr.bf16.mxu0 %v1060
    %3253 = vmatpush2.bf16.msra.mxu0 %v1059
    %3254 = vmatprep.subr.bf16.mxu0 %v1052
    %3255 = vmatpush2.bf16.msra.mxu0 %v1051
    %3256 = vmatprep.subr.bf16.mxu0 %v1044
    %3257 = vmatpush2.bf16.msra.mxu0 %v1043
    %3258 = vmatprep.subr.bf16.mxu0 %v1036
    %3259 = vmatpush2.bf16.msra.mxu0 %v1035
    %3260 = vmatprep.subr.bf16.mxu0 %v1028
    %3261 = vmatpush2.bf16.msra.mxu0 %v1027
    %3262 = vmatprep.mubr.bf16.mxu0 %v1434
    %3263 = vmatmul.mubr.bf16.gmra.mxu0 %v1433
    %v3264 = vpop.f32.mrf.mxu0
    %v3265 = vadd.f32 0.0, %v3264
    %v3266 = vpop.f32.mrf.mxu0
    %v3267 = vadd.f32 0.0, %v3266
    %v3268 = vpop.f32.mrf.mxu0
    %v3269 = vpop.f32.mrf.mxu0
    %3270 = vdwg.mxu0
    %v3271 = vadd.f32 %v3099, %v3142
    %v3272 = vadd.f32 %v3100, %v3144
    %v3273 = vadd.f32 %v3101, %v3183
    %v3274 = vadd.f32 %v3102, %v3185
    %v3275 = vadd.f32 %v3103, %v3224
    %v3276 = vadd.f32 %v3104, %v3226
    %v3277 = vadd.f32 %v3105, %v3265
    %v3278 = vadd.f32 %v3106, %v3267
    %v3279 = vxor.u32 %v3271, 2147483648
    %v3280 = vxor.u32 %v3272, 2147483648
    %v3281 = vxor.u32 %v3273, 2147483648
    %v3282 = vxor.u32 %v3274, 2147483648
    %v3283 = vmul.f32 %v3279, 1.442695
    %v3284 = vpow.pop %v3283
    %v3285 = vmul.f32 %v3280, 1.442695
    %v3286 = vpow.pop %v3285
    %v3287 = vmul.f32 %v3281, 1.442695
    %v3288 = vpow.pop %v3287
    %v3289 = vmul.f32 %v3282, 1.442695
    %v3290 = vpow.pop %v3289
    %v3291 = vadd.f32 %v3284, 1.0
    %v3292 = vadd.f32 %v3286, 1.0
    %v3293 = vadd.f32 %v3288, 1.0
    %v3294 = vadd.f32 %v3290, 1.0
    %v3295 = vrcp.pop %v3291
    %v3296 = vmul.f32 1.0, %v3295
    %v3297 = vrcp.pop %v3292
    %v3298 = vmul.f32 1.0, %v3297
    %v3299 = vrcp.pop %v3293
    %v3300 = vmul.f32 1.0, %v3299
    %v3301 = vrcp.pop %v3294
    %v3302 = vmul.f32 1.0, %v3301
    %v3303 = vtanh.pop %v3275
    %v3304 = vtanh.pop %v3276
    %v3305 = vxor.u32 %v3277, 2147483648
    %v3306 = vxor.u32 %v3278, 2147483648
    %v3307 = vmul.f32 %v3305, 1.442695
    %v3308 = vpow.pop %v3307
    %v3309 = vmul.f32 %v3306, 1.442695
    %v3310 = vpow.pop %v3309
    %v3311 = vadd.f32 %v3308, 1.0
    %v3312 = vadd.f32 %v3310, 1.0
    %v3313 = vrcp.pop %v3311
    %v3314 = vmul.f32 1.0, %v3313
    %v3315 = vrcp.pop %v3312
    %v3316 = vmul.f32 1.0, %v3315
    %v3317 = vmul.f32 %v3300, %v1427
    %v3318 = vmul.f32 %v3302, %v1428
    %v3319 = vmul.f32 %v3296, %v3303
    %v3320 = vmul.f32 %v3298, %v3304
    %v3321 = vadd.f32 %v3317, %v3319
    %v3322 = vadd.f32 %v3318, %v3320
    %v3323 = vtanh.pop %v3321
    %v3324 = vtanh.pop %v3322
    %v3325 = vmul.f32 %v3314, %v3323
    %v3326 = vmul.f32 %v3316, %v3324
    %v3327 = vpack.c.bf16 %v3325, %v3325
    %v3328 = vpack.c.bf16 %v3326, %v3326
    %v3329 = vpack.c.bf16 %v3091, %v3091
    %v3330 = vpack.c.bf16 %v3092, %v3092
    %3331 = vmatprep.subr.bf16.mxu0 %v2262
    %3332 = vmatpush1.bf16.msra.mxu0 %v2261
    %3333 = vmatprep.subr.bf16.mxu0 %v2254
    %3334 = vmatpush1.bf16.msra.mxu0 %v2253
    %3335 = vmatprep.subr.bf16.mxu0 %v2246
    %3336 = vmatpush1.bf16.msra.mxu0 %v2245
    %3337 = vmatprep.subr.bf16.mxu0 %v2238
    %3338 = vmatpush1.bf16.msra.mxu0 %v2237
    %3339 = vmatprep.subr.bf16.mxu0 %v2230
    %3340 = vmatpush1.bf16.msra.mxu0 %v2229
    %3341 = vmatprep.subr.bf16.mxu0 %v2222
    %3342 = vmatpush1.bf16.msra.mxu0 %v2221
    %3343 = vmatprep.subr.bf16.mxu0 %v2214
    %3344 = vmatpush1.bf16.msra.mxu0 %v2213
    %3345 = vmatprep.subr.bf16.mxu0 %v2206
    %3346 = vmatpush1.bf16.msra.mxu0 %v2205
    %3347 = vmatprep.subr.bf16.mxu0 %v2326
    %3348 = vmatpush2.bf16.msra.mxu0 %v2325
    %3349 = vmatprep.subr.bf16.mxu0 %v2318
    %3350 = vmatpush2.bf16.msra.mxu0 %v2317
    %3351 = vmatprep.subr.bf16.mxu0 %v2310
    %3352 = vmatpush2.bf16.msra.mxu0 %v2309
    %3353 = vmatprep.subr.bf16.mxu0 %v2302
    %3354 = vmatpush2.bf16.msra.mxu0 %v2301
    %3355 = vmatprep.subr.bf16.mxu0 %v2294
    %3356 = vmatpush2.bf16.msra.mxu0 %v2293
    %3357 = vmatprep.subr.bf16.mxu0 %v2286
    %3358 = vmatpush2.bf16.msra.mxu0 %v2285
    %3359 = vmatprep.subr.bf16.mxu0 %v2278
    %3360 = vmatpush2.bf16.msra.mxu0 %v2277
    %3361 = vmatprep.subr.bf16.mxu0 %v2270
    %3362 = vmatpush2.bf16.msra.mxu0 %v2269
    %3363 = vmatprep.mubr.bf16.mxu0 %v3328
    %3364 = vmatmul.mubr.bf16.gmra.mxu0 %v3327
    %v3365 = vpop.f32.mrf.mxu0
    %v3366 = vadd.f32 %v516, %v3365
    %v3367 = vpop.f32.mrf.mxu0
    %v3368 = vadd.f32 %v520, %v3367
    %v3369 = vpop.f32.mrf.mxu0
    %v3370 = vpop.f32.mrf.mxu0
    %3371 = vdwg.mxu0
    %3372 = vmatprep.subr.bf16.mxu0 %v2390
    %3373 = vmatpush1.bf16.msra.mxu0 %v2389
    %3374 = vmatprep.subr.bf16.mxu0 %v2382
    %3375 = vmatpush1.bf16.msra.mxu0 %v2381
    %3376 = vmatprep.subr.bf16.mxu0 %v2374
    %3377 = vmatpush1.bf16.msra.mxu0 %v2373
    %3378 = vmatprep.subr.bf16.mxu0 %v2366
    %3379 = vmatpush1.bf16.msra.mxu0 %v2365
    %3380 = vmatprep.subr.bf16.mxu0 %v2358
    %3381 = vmatpush1.bf16.msra.mxu0 %v2357
    %3382 = vmatprep.subr.bf16.mxu0 %v2350
    %3383 = vmatpush1.bf16.msra.mxu0 %v2349
    %3384 = vmatprep.subr.bf16.mxu0 %v2342
    %3385 = vmatpush1.bf16.msra.mxu0 %v2341
    %3386 = vmatprep.subr.bf16.mxu0 %v2334
    %3387 = vmatpush1.bf16.msra.mxu0 %v2333
    %3388 = vmatprep.subr.bf16.mxu0 %v2454
    %3389 = vmatpush2.bf16.msra.mxu0 %v2453
    %3390 = vmatprep.subr.bf16.mxu0 %v2446
    %3391 = vmatpush2.bf16.msra.mxu0 %v2445
    %3392 = vmatprep.subr.bf16.mxu0 %v2438
    %3393 = vmatpush2.bf16.msra.mxu0 %v2437
    %3394 = vmatprep.subr.bf16.mxu0 %v2430
    %3395 = vmatpush2.bf16.msra.mxu0 %v2429
    %3396 = vmatprep.subr.bf16.mxu0 %v2422
    %3397 = vmatpush2.bf16.msra.mxu0 %v2421
    %3398 = vmatprep.subr.bf16.mxu0 %v2414
    %3399 = vmatpush2.bf16.msra.mxu0 %v2413
    %3400 = vmatprep.subr.bf16.mxu0 %v2406
    %3401 = vmatpush2.bf16.msra.mxu0 %v2405
    %3402 = vmatprep.subr.bf16.mxu0 %v2398
    %3403 = vmatpush2.bf16.msra.mxu0 %v2397
    %3404 = vmatprep.mubr.bf16.mxu0 %v3330
    %3405 = vmatmul.mubr.bf16.gmra.mxu0 %v3329
    %v3406 = vpop.f32.mrf.mxu0
    %v3407 = vadd.f32 %v3366, %v3406
    %v3408 = vpop.f32.mrf.mxu0
    %v3409 = vadd.f32 %v3368, %v3408
    %v3410 = vpop.f32.mrf.mxu0
    %v3411 = vpop.f32.mrf.mxu0
    %3412 = vdwg.mxu0
    %3413 = vmatprep.subr.bf16.mxu0 %v2264
    %3414 = vmatpush1.bf16.msra.mxu0 %v2263
    %3415 = vmatprep.subr.bf16.mxu0 %v2256
    %3416 = vmatpush1.bf16.msra.mxu0 %v2255
    %3417 = vmatprep.subr.bf16.mxu0 %v2248
    %3418 = vmatpush1.bf16.msra.mxu0 %v2247
    %3419 = vmatprep.subr.bf16.mxu0 %v2240
    %3420 = vmatpush1.bf16.msra.mxu0 %v2239
    %3421 = vmatprep.subr.bf16.mxu0 %v2232
    %3422 = vmatpush1.bf16.msra.mxu0 %v2231
    %3423 = vmatprep.subr.bf16.mxu0 %v2224
    %3424 = vmatpush1.bf16.msra.mxu0 %v2223
    %3425 = vmatprep.subr.bf16.mxu0 %v2216
    %3426 = vmatpush1.bf16.msra.mxu0 %v2215
    %3427 = vmatprep.subr.bf16.mxu0 %v2208
    %3428 = vmatpush1.bf16.msra.mxu0 %v2207
    %3429 = vmatprep.subr.bf16.mxu0 %v2328
    %3430 = vmatpush2.bf16.msra.mxu0 %v2327
    %3431 = vmatprep.subr.bf16.mxu0 %v2320
    %3432 = vmatpush2.bf16.msra.mxu0 %v2319
    %3433 = vmatprep.subr.bf16.mxu0 %v2312
    %3434 = vmatpush2.bf16.msra.mxu0 %v2311
    %3435 = vmatprep.subr.bf16.mxu0 %v2304
    %3436 = vmatpush2.bf16.msra.mxu0 %v2303
    %3437 = vmatprep.subr.bf16.mxu0 %v2296
    %3438 = vmatpush2.bf16.msra.mxu0 %v2295
    %3439 = vmatprep.subr.bf16.mxu0 %v2288
    %3440 = vmatpush2.bf16.msra.mxu0 %v2287
    %3441 = vmatprep.subr.bf16.mxu0 %v2280
    %3442 = vmatpush2.bf16.msra.mxu0 %v2279
    %3443 = vmatprep.subr.bf16.mxu0 %v2272
    %3444 = vmatpush2.bf16.msra.mxu0 %v2271
    %3445 = vmatprep.mubr.bf16.mxu0 %v3328
    %3446 = vmatmul.mubr.bf16.gmra.mxu0 %v3327
    %v3447 = vpop.f32.mrf.mxu0
    %v3448 = vadd.f32 %v524, %v3447
    %v3449 = vpop.f32.mrf.mxu0
    %v3450 = vadd.f32 %v528, %v3449
    %v3451 = vpop.f32.mrf.mxu0
    %v3452 = vpop.f32.mrf.mxu0
    %3453 = vdwg.mxu0
    %3454 = vmatprep.subr.bf16.mxu0 %v2392
    %3455 = vmatpush1.bf16.msra.mxu0 %v2391
    %3456 = vmatprep.subr.bf16.mxu0 %v2384
    %3457 = vmatpush1.bf16.msra.mxu0 %v2383
    %3458 = vmatprep.subr.bf16.mxu0 %v2376
    %3459 = vmatpush1.bf16.msra.mxu0 %v2375
    %3460 = vmatprep.subr.bf16.mxu0 %v2368
    %3461 = vmatpush1.bf16.msra.mxu0 %v2367
    %3462 = vmatprep.subr.bf16.mxu0 %v2360
    %3463 = vmatpush1.bf16.msra.mxu0 %v2359
    %3464 = vmatprep.subr.bf16.mxu0 %v2352
    %3465 = vmatpush1.bf16.msra.mxu0 %v2351
    %3466 = vmatprep.subr.bf16.mxu0 %v2344
    %3467 = vmatpush1.bf16.msra.mxu0 %v2343
    %3468 = vmatprep.subr.bf16.mxu0 %v2336
    %3469 = vmatpush1.bf16.msra.mxu0 %v2335
    %3470 = vmatprep.subr.bf16.mxu0 %v2456
    %3471 = vmatpush2.bf16.msra.mxu0 %v2455
    %3472 = vmatprep.subr.bf16.mxu0 %v2448
    %3473 = vmatpush2.bf16.msra.mxu0 %v2447
    %3474 = vmatprep.subr.bf16.mxu0 %v2440
    %3475 = vmatpush2.bf16.msra.mxu0 %v2439
    %3476 = vmatprep.subr.bf16.mxu0 %v2432
    %3477 = vmatpush2.bf16.msra.mxu0 %v2431
    %3478 = vmatprep.subr.bf16.mxu0 %v2424
    %3479 = vmatpush2.bf16.msra.mxu0 %v2423
    %3480 = vmatprep.subr.bf16.mxu0 %v2416
    %3481 = vmatpush2.bf16.msra.mxu0 %v2415
    %3482 = vmatprep.subr.bf16.mxu0 %v2408
    %3483 = vmatpush2.bf16.msra.mxu0 %v2407
    %3484 = vmatprep.subr.bf16.mxu0 %v2400
    %3485 = vmatpush2.bf16.msra.mxu0 %v2399
    %3486 = vmatprep.mubr.bf16.mxu0 %v3330
    %3487 = vmatmul.mubr.bf16.gmra.mxu0 %v3329
    %v3488 = vpop.f32.mrf.mxu0
    %v3489 = vadd.f32 %v3448, %v3488
    %v3490 = vpop.f32.mrf.mxu0
    %v3491 = vadd.f32 %v3450, %v3490
    %v3492 = vpop.f32.mrf.mxu0
    %v3493 = vpop.f32.mrf.mxu0
    %3494 = vdwg.mxu0
    %3495 = vmatprep.subr.bf16.mxu0 %v2266
    %3496 = vmatpush1.bf16.msra.mxu0 %v2265
    %3497 = vmatprep.subr.bf16.mxu0 %v2258
    %3498 = vmatpush1.bf16.msra.mxu0 %v2257
    %3499 = vmatprep.subr.bf16.mxu0 %v2250
    %3500 = vmatpush1.bf16.msra.mxu0 %v2249
    %3501 = vmatprep.subr.bf16.mxu0 %v2242
    %3502 = vmatpush1.bf16.msra.mxu0 %v2241
    %3503 = vmatprep.subr.bf16.mxu0 %v2234
    %3504 = vmatpush1.bf16.msra.mxu0 %v2233
    %3505 = vmatprep.subr.bf16.mxu0 %v2226
    %3506 = vmatpush1.bf16.msra.mxu0 %v2225
    %3507 = vmatprep.subr.bf16.mxu0 %v2218
    %3508 = vmatpush1.bf16.msra.mxu0 %v2217
    %3509 = vmatprep.subr.bf16.mxu0 %v2210
    %3510 = vmatpush1.bf16.msra.mxu0 %v2209
    %3511 = vmatprep.subr.bf16.mxu0 %v2330
    %3512 = vmatpush2.bf16.msra.mxu0 %v2329
    %3513 = vmatprep.subr.bf16.mxu0 %v2322
    %3514 = vmatpush2.bf16.msra.mxu0 %v2321
    %3515 = vmatprep.subr.bf16.mxu0 %v2314
    %3516 = vmatpush2.bf16.msra.mxu0 %v2313
    %3517 = vmatprep.subr.bf16.mxu0 %v2306
    %3518 = vmatpush2.bf16.msra.mxu0 %v2305
    %3519 = vmatprep.subr.bf16.mxu0 %v2298
    %3520 = vmatpush2.bf16.msra.mxu0 %v2297
    %3521 = vmatprep.subr.bf16.mxu0 %v2290
    %3522 = vmatpush2.bf16.msra.mxu0 %v2289
    %3523 = vmatprep.subr.bf16.mxu0 %v2282
    %3524 = vmatpush2.bf16.msra.mxu0 %v2281
    %3525 = vmatprep.subr.bf16.mxu0 %v2274
    %3526 = vmatpush2.bf16.msra.mxu0 %v2273
    %3527 = vmatprep.mubr.bf16.mxu0 %v3328
    %3528 = vmatmul.mubr.bf16.gmra.mxu0 %v3327
    %v3529 = vpop.f32.mrf.mxu0
    %v3530 = vadd.f32 %v532, %v3529
    %v3531 = vpop.f32.mrf.mxu0
    %v3532 = vadd.f32 %v536, %v3531
    %v3533 = vpop.f32.mrf.mxu0
    %v3534 = vpop.f32.mrf.mxu0
    %3535 = vdwg.mxu0
    %3536 = vmatprep.subr.bf16.mxu0 %v2394
    %3537 = vmatpush1.bf16.msra.mxu0 %v2393
    %3538 = vmatprep.subr.bf16.mxu0 %v2386
    %3539 = vmatpush1.bf16.msra.mxu0 %v2385
    %3540 = vmatprep.subr.bf16.mxu0 %v2378
    %3541 = vmatpush1.bf16.msra.mxu0 %v2377
    %3542 = vmatprep.subr.bf16.mxu0 %v2370
    %3543 = vmatpush1.bf16.msra.mxu0 %v2369
    %3544 = vmatprep.subr.bf16.mxu0 %v2362
    %3545 = vmatpush1.bf16.msra.mxu0 %v2361
    %3546 = vmatprep.subr.bf16.mxu0 %v2354
    %3547 = vmatpush1.bf16.msra.mxu0 %v2353
    %3548 = vmatprep.subr.bf16.mxu0 %v2346
    %3549 = vmatpush1.bf16.msra.mxu0 %v2345
    %3550 = vmatprep.subr.bf16.mxu0 %v2338
    %3551 = vmatpush1.bf16.msra.mxu0 %v2337
    %3552 = vmatprep.subr.bf16.mxu0 %v2458
    %3553 = vmatpush2.bf16.msra.mxu0 %v2457
    %3554 = vmatprep.subr.bf16.mxu0 %v2450
    %3555 = vmatpush2.bf16.msra.mxu0 %v2449
    %3556 = vmatprep.subr.bf16.mxu0 %v2442
    %3557 = vmatpush2.bf16.msra.mxu0 %v2441
    %3558 = vmatprep.subr.bf16.mxu0 %v2434
    %3559 = vmatpush2.bf16.msra.mxu0 %v2433
    %3560 = vmatprep.subr.bf16.mxu0 %v2426
    %3561 = vmatpush2.bf16.msra.mxu0 %v2425
    %3562 = vmatprep.subr.bf16.mxu0 %v2418
    %3563 = vmatpush2.bf16.msra.mxu0 %v2417
    %3564 = vmatprep.subr.bf16.mxu0 %v2410
    %3565 = vmatpush2.bf16.msra.mxu0 %v2409
    %3566 = vmatprep.subr.bf16.mxu0 %v2402
    %3567 = vmatpush2.bf16.msra.mxu0 %v2401
    %3568 = vmatprep.mubr.bf16.mxu0 %v3330
    %3569 = vmatmul.mubr.bf16.gmra.mxu0 %v3329
    %v3570 = vpop.f32.mrf.mxu0
    %v3571 = vadd.f32 %v3530, %v3570
    %v3572 = vpop.f32.mrf.mxu0
    %v3573 = vadd.f32 %v3532, %v3572
    %v3574 = vpop.f32.mrf.mxu0
    %v3575 = vpop.f32.mrf.mxu0
    %3576 = vdwg.mxu0
    %3577 = vmatprep.subr.bf16.mxu0 %v2268
    %3578 = vmatpush1.bf16.msra.mxu0 %v2267
    %3579 = vmatprep.subr.bf16.mxu0 %v2260
    %3580 = vmatpush1.bf16.msra.mxu0 %v2259
    %3581 = vmatprep.subr.bf16.mxu0 %v2252
    %3582 = vmatpush1.bf16.msra.mxu0 %v2251
    %3583 = vmatprep.subr.bf16.mxu0 %v2244
    %3584 = vmatpush1.bf16.msra.mxu0 %v2243
    %3585 = vmatprep.subr.bf16.mxu0 %v2236
    %3586 = vmatpush1.bf16.msra.mxu0 %v2235
    %3587 = vmatprep.subr.bf16.mxu0 %v2228
    %3588 = vmatpush1.bf16.msra.mxu0 %v2227
    %3589 = vmatprep.subr.bf16.mxu0 %v2220
    %3590 = vmatpush1.bf16.msra.mxu0 %v2219
    %3591 = vmatprep.subr.bf16.mxu0 %v2212
    %3592 = vmatpush1.bf16.msra.mxu0 %v2211
    %3593 = vmatprep.subr.bf16.mxu0 %v2332
    %3594 = vmatpush2.bf16.msra.mxu0 %v2331
    %3595 = vmatprep.subr.bf16.mxu0 %v2324
    %3596 = vmatpush2.bf16.msra.mxu0 %v2323
    %3597 = vmatprep.subr.bf16.mxu0 %v2316
    %3598 = vmatpush2.bf16.msra.mxu0 %v2315
    %3599 = vmatprep.subr.bf16.mxu0 %v2308
    %3600 = vmatpush2.bf16.msra.mxu0 %v2307
    %3601 = vmatprep.subr.bf16.mxu0 %v2300
    %3602 = vmatpush2.bf16.msra.mxu0 %v2299
    %3603 = vmatprep.subr.bf16.mxu0 %v2292
    %3604 = vmatpush2.bf16.msra.mxu0 %v2291
    %3605 = vmatprep.subr.bf16.mxu0 %v2284
    %3606 = vmatpush2.bf16.msra.mxu0 %v2283
    %3607 = vmatprep.subr.bf16.mxu0 %v2276
    %3608 = vmatpush2.bf16.msra.mxu0 %v2275
    %3609 = vmatprep.mubr.bf16.mxu0 %v3328
    %3610 = vmatmul.mubr.bf16.gmra.mxu0 %v3327
    %v3611 = vpop.f32.mrf.mxu0
    %v3612 = vadd.f32 %v540, %v3611
    %v3613 = vpop.f32.mrf.mxu0
    %v3614 = vadd.f32 %v544, %v3613
    %v3615 = vpop.f32.mrf.mxu0
    %v3616 = vpop.f32.mrf.mxu0
    %3617 = vdwg.mxu0
    %3618 = vmatprep.subr.bf16.mxu0 %v2396
    %3619 = vmatpush1.bf16.msra.mxu0 %v2395
    %3620 = vmatprep.subr.bf16.mxu0 %v2388
    %3621 = vmatpush1.bf16.msra.mxu0 %v2387
    %3622 = vmatprep.subr.bf16.mxu0 %v2380
    %3623 = vmatpush1.bf16.msra.mxu0 %v2379
    %3624 = vmatprep.subr.bf16.mxu0 %v2372
    %3625 = vmatpush1.bf16.msra.mxu0 %v2371
    %3626 = vmatprep.subr.bf16.mxu0 %v2364
    %3627 = vmatpush1.bf16.msra.mxu0 %v2363
    %3628 = vmatprep.subr.bf16.mxu0 %v2356
    %3629 = vmatpush1.bf16.msra.mxu0 %v2355
    %3630 = vmatprep.subr.bf16.mxu0 %v2348
    %3631 = vmatpush1.bf16.msra.mxu0 %v2347
    %3632 = vmatprep.subr.bf16.mxu0 %v2340
    %3633 = vmatpush1.bf16.msra.mxu0 %v2339
    %3634 = vmatprep.subr.bf16.mxu0 %v2460
    %3635 = vmatpush2.bf16.msra.mxu0 %v2459
    %3636 = vmatprep.subr.bf16.mxu0 %v2452
    %3637 = vmatpush2.bf16.msra.mxu0 %v2451
    %3638 = vmatprep.subr.bf16.mxu0 %v2444
    %3639 = vmatpush2.bf16.msra.mxu0 %v2443
    %3640 = vmatprep.subr.bf16.mxu0 %v2436
    %3641 = vmatpush2.bf16.msra.mxu0 %v2435
    %3642 = vmatprep.subr.bf16.mxu0 %v2428
    %3643 = vmatpush2.bf16.msra.mxu0 %v2427
    %3644 = vmatprep.subr.bf16.mxu0 %v2420
    %3645 = vmatpush2.bf16.msra.mxu0 %v2419
    %3646 = vmatprep.subr.bf16.mxu0 %v2412
    %3647 = vmatpush2.bf16.msra.mxu0 %v2411
    %3648 = vmatprep.subr.bf16.mxu0 %v2404
    %3649 = vmatpush2.bf16.msra.mxu0 %v2403
    %3650 = vmatprep.mubr.bf16.mxu0 %v3330
    %3651 = vmatmul.mubr.bf16.gmra.mxu0 %v3329
    %v3652 = vpop.f32.mrf.mxu0
    %v3653 = vadd.f32 %v3612, %v3652
    %v3654 = vpop.f32.mrf.mxu0
    %v3655 = vadd.f32 %v3614, %v3654
    %v3656 = vpop.f32.mrf.mxu0
    %v3657 = vpop.f32.mrf.mxu0
    %3658 = vdwg.mxu0
    %v3659 = vxor.u32 %v3407, 2147483648
    %v3660 = vxor.u32 %v3409, 2147483648
    %v3661 = vxor.u32 %v3489, 2147483648
    %v3662 = vxor.u32 %v3491, 2147483648
    %v3663 = vmul.f32 %v3659, 1.442695
    %v3664 = vpow.pop %v3663
    %v3665 = vmul.f32 %v3660, 1.442695
    %v3666 = vpow.pop %v3665
    %v3667 = vmul.f32 %v3661, 1.442695
    %v3668 = vpow.pop %v3667
    %v3669 = vmul.f32 %v3662, 1.442695
    %v3670 = vpow.pop %v3669
    %v3671 = vadd.f32 %v3664, 1.0
    %v3672 = vadd.f32 %v3666, 1.0
    %v3673 = vadd.f32 %v3668, 1.0
    %v3674 = vadd.f32 %v3670, 1.0
    %v3675 = vrcp.pop %v3671
    %v3676 = vmul.f32 1.0, %v3675
    %v3677 = vrcp.pop %v3672
    %v3678 = vmul.f32 1.0, %v3677
    %v3679 = vrcp.pop %v3673
    %v3680 = vmul.f32 1.0, %v3679
    %v3681 = vrcp.pop %v3674
    %v3682 = vmul.f32 1.0, %v3681
    %v3683 = vtanh.pop %v3571
    %v3684 = vtanh.pop %v3573
    %v3685 = vxor.u32 %v3653, 2147483648
    %v3686 = vxor.u32 %v3655, 2147483648
    %v3687 = vmul.f32 %v3685, 1.442695
    %v3688 = vpow.pop %v3687
    %v3689 = vmul.f32 %v3686, 1.442695
    %v3690 = vpow.pop %v3689
    %v3691 = vadd.f32 %v3688, 1.0
    %v3692 = vadd.f32 %v3690, 1.0
    %v3693 = vrcp.pop %v3691
    %v3694 = vmul.f32 1.0, %v3693
    %v3695 = vrcp.pop %v3692
    %v3696 = vmul.f32 1.0, %v3695
    %v3697 = vmul.f32 %v3680, %v3087
    %v3698 = vmul.f32 %v3682, %v3088
    %v3699 = vmul.f32 %v3676, %v3683
    %v3700 = vmul.f32 %v3678, %v3684
    %v3701 = vadd.f32 %v3697, %v3699
    %v3702 = vadd.f32 %v3698, %v3700
    %v3703 = vtanh.pop %v3701
    %v3704 = vtanh.pop %v3702
    %v3705 = vmul.f32 %v3694, %v3703
    %v3706 = vmul.f32 %v3696, %v3704
    %s3707 = smul.u32 1, 2
    %s3708 = smul.addr %s3707, 8
    %s3709 = scalar_lea.vmem [#allocation2], %s3708
    %3710 = vst [vmem:[%s3709] sm:$0xff] %v3705
    %3711 = vst [vmem:[%s3709 + $0x8] sm:$0xff] %v3706
    %s3712 = scalar_lea.vmem [#allocation3], 128
    %v3713 = vld [vmem:[%s3712] sm:$0xff]
    %v3714 = vld [vmem:[%s3712 + $0x8] sm:$0xff]
    %v3715 = vld [vmem:[%s3712 + $0x10] sm:$0xff]
    %v3716 = vld [vmem:[%s3712 + $0x18] sm:$0xff]
    %v3717 = vld [vmem:[%s3712 + $0x20] sm:$0xff]
    %v3718 = vld [vmem:[%s3712 + $0x28] sm:$0xff]
    %v3719 = vld [vmem:[%s3712 + $0x30] sm:$0xff]
    %v3720 = vld [vmem:[%s3712 + $0x38] sm:$0xff]
    %3721 = vmatprep.subr.bf16.mxu0 %v1014
    %3722 = vmatpush1.bf16.msra.mxu0 %v1013
    %3723 = vmatprep.subr.bf16.mxu0 %v1006
    %3724 = vmatpush1.bf16.msra.mxu0 %v1005
    %3725 = vmatprep.subr.bf16.mxu0 %v998
    %3726 = vmatpush1.bf16.msra.mxu0 %v997
    %3727 = vmatprep.subr.bf16.mxu0 %v990
    %3728 = vmatpush1.bf16.msra.mxu0 %v989
    %3729 = vmatprep.subr.bf16.mxu0 %v982
    %3730 = vmatpush1.bf16.msra.mxu0 %v981
    %3731 = vmatprep.subr.bf16.mxu0 %v974
    %3732 = vmatpush1.bf16.msra.mxu0 %v973
    %3733 = vmatprep.subr.bf16.mxu0 %v966
    %3734 = vmatpush1.bf16.msra.mxu0 %v965
    %3735 = vmatprep.subr.bf16.mxu0 %v958
    %3736 = vmatpush1.bf16.msra.mxu0 %v957
    %3737 = vmatprep.subr.bf16.mxu0 %v1078
    %3738 = vmatpush2.bf16.msra.mxu0 %v1077
    %3739 = vmatprep.subr.bf16.mxu0 %v1070
    %3740 = vmatpush2.bf16.msra.mxu0 %v1069
    %3741 = vmatprep.subr.bf16.mxu0 %v1062
    %3742 = vmatpush2.bf16.msra.mxu0 %v1061
    %3743 = vmatprep.subr.bf16.mxu0 %v1054
    %3744 = vmatpush2.bf16.msra.mxu0 %v1053
    %3745 = vmatprep.subr.bf16.mxu0 %v1046
    %3746 = vmatpush2.bf16.msra.mxu0 %v1045
    %3747 = vmatprep.subr.bf16.mxu0 %v1038
    %3748 = vmatpush2.bf16.msra.mxu0 %v1037
    %3749 = vmatprep.subr.bf16.mxu0 %v1030
    %3750 = vmatpush2.bf16.msra.mxu0 %v1029
    %3751 = vmatprep.subr.bf16.mxu0 %v1022
    %3752 = vmatpush2.bf16.msra.mxu0 %v1021
    %3753 = vmatprep.mubr.bf16.mxu0 %v3328
    %3754 = vmatmul.mubr.bf16.gmra.mxu0 %v3327
    %v3755 = vpop.f32.mrf.mxu0
    %v3756 = vadd.f32 0.0, %v3755
    %v3757 = vpop.f32.mrf.mxu0
    %v3758 = vadd.f32 0.0, %v3757
    %v3759 = vpop.f32.mrf.mxu0
    %v3760 = vpop.f32.mrf.mxu0
    %3761 = vdwg.mxu0
    %3762 = vmatprep.subr.bf16.mxu0 %v1016
    %3763 = vmatpush1.bf16.msra.mxu0 %v1015
    %3764 = vmatprep.subr.bf16.mxu0 %v1008
    %3765 = vmatpush1.bf16.msra.mxu0 %v1007
    %3766 = vmatprep.subr.bf16.mxu0 %v1000
    %3767 = vmatpush1.bf16.msra.mxu0 %v999
    %3768 = vmatprep.subr.bf16.mxu0 %v992
    %3769 = vmatpush1.bf16.msra.mxu0 %v991
    %3770 = vmatprep.subr.bf16.mxu0 %v984
    %3771 = vmatpush1.bf16.msra.mxu0 %v983
    %3772 = vmatprep.subr.bf16.mxu0 %v976
    %3773 = vmatpush1.bf16.msra.mxu0 %v975
    %3774 = vmatprep.subr.bf16.mxu0 %v968
    %3775 = vmatpush1.bf16.msra.mxu0 %v967
    %3776 = vmatprep.subr.bf16.mxu0 %v960
    %3777 = vmatpush1.bf16.msra.mxu0 %v959
    %3778 = vmatprep.subr.bf16.mxu0 %v1080
    %3779 = vmatpush2.bf16.msra.mxu0 %v1079
    %3780 = vmatprep.subr.bf16.mxu0 %v1072
    %3781 = vmatpush2.bf16.msra.mxu0 %v1071
    %3782 = vmatprep.subr.bf16.mxu0 %v1064
    %3783 = vmatpush2.bf16.msra.mxu0 %v1063
    %3784 = vmatprep.subr.bf16.mxu0 %v1056
    %3785 = vmatpush2.bf16.msra.mxu0 %v1055
    %3786 = vmatprep.subr.bf16.mxu0 %v1048
    %3787 = vmatpush2.bf16.msra.mxu0 %v1047
    %3788 = vmatprep.subr.bf16.mxu0 %v1040
    %3789 = vmatpush2.bf16.msra.mxu0 %v1039
    %3790 = vmatprep.subr.bf16.mxu0 %v1032
    %3791 = vmatpush2.bf16.msra.mxu0 %v1031
    %3792 = vmatprep.subr.bf16.mxu0 %v1024
    %3793 = vmatpush2.bf16.msra.mxu0 %v1023
    %3794 = vmatprep.mubr.bf16.mxu0 %v3328
    %3795 = vmatmul.mubr.bf16.gmra.mxu0 %v3327
    %v3796 = vpop.f32.mrf.mxu0
    %v3797 = vadd.f32 0.0, %v3796
    %v3798 = vpop.f32.mrf.mxu0
    %v3799 = vadd.f32 0.0, %v3798
    %v3800 = vpop.f32.mrf.mxu0
    %v3801 = vpop.f32.mrf.mxu0
    %3802 = vdwg.mxu0
    %3803 = vmatprep.subr.bf16.mxu0 %v1018
    %3804 = vmatpush1.bf16.msra.mxu0 %v1017
    %3805 = vmatprep.subr.bf16.mxu0 %v1010
    %3806 = vmatpush1.bf16.msra.mxu0 %v1009
    %3807 = vmatprep.subr.bf16.mxu0 %v1002
    %3808 = vmatpush1.bf16.msra.mxu0 %v1001
    %3809 = vmatprep.subr.bf16.mxu0 %v994
    %3810 = vmatpush1.bf16.msra.mxu0 %v993
    %3811 = vmatprep.subr.bf16.mxu0 %v986
    %3812 = vmatpush1.bf16.msra.mxu0 %v985
    %3813 = vmatprep.subr.bf16.mxu0 %v978
    %3814 = vmatpush1.bf16.msra.mxu0 %v977
    %3815 = vmatprep.subr.bf16.mxu0 %v970
    %3816 = vmatpush1.bf16.msra.mxu0 %v969
    %3817 = vmatprep.subr.bf16.mxu0 %v962
    %3818 = vmatpush1.bf16.msra.mxu0 %v961
    %3819 = vmatprep.subr.bf16.mxu0 %v1082
    %3820 = vmatpush2.bf16.msra.mxu0 %v1081
    %3821 = vmatprep.subr.bf16.mxu0 %v1074
    %3822 = vmatpush2.bf16.msra.mxu0 %v1073
    %3823 = vmatprep.subr.bf16.mxu0 %v1066
    %3824 = vmatpush2.bf16.msra.mxu0 %v1065
    %3825 = vmatprep.subr.bf16.mxu0 %v1058
    %3826 = vmatpush2.bf16.msra.mxu0 %v1057
    %3827 = vmatprep.subr.bf16.mxu0 %v1050
    %3828 = vmatpush2.bf16.msra.mxu0 %v1049
    %3829 = vmatprep.subr.bf16.mxu0 %v1042
    %3830 = vmatpush2.bf16.msra.mxu0 %v1041
    %3831 = vmatprep.subr.bf16.mxu0 %v1034
    %3832 = vmatpush2.bf16.msra.mxu0 %v1033
    %3833 = vmatprep.subr.bf16.mxu0 %v1026
    %3834 = vmatpush2.bf16.msra.mxu0 %v1025
    %3835 = vmatprep.mubr.bf16.mxu0 %v3328
    %3836 = vmatmul.mubr.bf16.gmra.mxu0 %v3327
    %v3837 = vpop.f32.mrf.mxu0
    %v3838 = vadd.f32 0.0, %v3837
    %v3839 = vpop.f32.mrf.mxu0
    %v3840 = vadd.f32 0.0, %v3839
    %v3841 = vpop.f32.mrf.mxu0
    %v3842 = vpop.f32.mrf.mxu0
    %3843 = vdwg.mxu0
    %3844 = vmatprep.subr.bf16.mxu0 %v1020
    %3845 = vmatpush1.bf16.msra.mxu0 %v1019
    %3846 = vmatprep.subr.bf16.mxu0 %v1012
    %3847 = vmatpush1.bf16.msra.mxu0 %v1011
    %3848 = vmatprep.subr.bf16.mxu0 %v1004
    %3849 = vmatpush1.bf16.msra.mxu0 %v1003
    %3850 = vmatprep.subr.bf16.mxu0 %v996
    %3851 = vmatpush1.bf16.msra.mxu0 %v995
    %3852 = vmatprep.subr.bf16.mxu0 %v988
    %3853 = vmatpush1.bf16.msra.mxu0 %v987
    %3854 = vmatprep.subr.bf16.mxu0 %v980
    %3855 = vmatpush1.bf16.msra.mxu0 %v979
    %3856 = vmatprep.subr.bf16.mxu0 %v972
    %3857 = vmatpush1.bf16.msra.mxu0 %v971
    %3858 = vmatprep.subr.bf16.mxu0 %v964
    %3859 = vmatpush1.bf16.msra.mxu0 %v963
    %3860 = vmatprep.subr.bf16.mxu0 %v1084
    %3861 = vmatpush2.bf16.msra.mxu0 %v1083
    %3862 = vmatprep.subr.bf16.mxu0 %v1076
    %3863 = vmatpush2.bf16.msra.mxu0 %v1075
    %3864 = vmatprep.subr.bf16.mxu0 %v1068
    %3865 = vmatpush2.bf16.msra.mxu0 %v1067
    %3866 = vmatprep.subr.bf16.mxu0 %v1060
    %3867 = vmatpush2.bf16.msra.mxu0 %v1059
    %3868 = vmatprep.subr.bf16.mxu0 %v1052
    %3869 = vmatpush2.bf16.msra.mxu0 %v1051
    %3870 = vmatprep.subr.bf16.mxu0 %v1044
    %3871 = vmatpush2.bf16.msra.mxu0 %v1043
    %3872 = vmatprep.subr.bf16.mxu0 %v1036
    %3873 = vmatpush2.bf16.msra.mxu0 %v1035
    %3874 = vmatprep.subr.bf16.mxu0 %v1028
    %3875 = vmatpush2.bf16.msra.mxu0 %v1027
    %3876 = vmatprep.mubr.bf16.mxu0 %v3328
    %3877 = vmatmul.mubr.bf16.gmra.mxu0 %v3327
    %v3878 = vpop.f32.mrf.mxu0
    %v3879 = vadd.f32 0.0, %v3878
    %v3880 = vpop.f32.mrf.mxu0
    %v3881 = vadd.f32 0.0, %v3880
    %v3882 = vpop.f32.mrf.mxu0
    %v3883 = vpop.f32.mrf.mxu0
    %3884 = vdwg.mxu0
    %v3885 = vadd.f32 %v3713, %v3756
    %v3886 = vadd.f32 %v3714, %v3758
    %v3887 = vadd.f32 %v3715, %v3797
    %v3888 = vadd.f32 %v3716, %v3799
    %v3889 = vadd.f32 %v3717, %v3838
    %v3890 = vadd.f32 %v3718, %v3840
    %v3891 = vadd.f32 %v3719, %v3879
    %v3892 = vadd.f32 %v3720, %v3881
    %v3893 = vxor.u32 %v3885, 2147483648
    %v3894 = vxor.u32 %v3886, 2147483648
    %v3895 = vxor.u32 %v3887, 2147483648
    %v3896 = vxor.u32 %v3888, 2147483648
    %v3897 = vmul.f32 %v3893, 1.442695
    %v3898 = vpow.pop %v3897
    %v3899 = vmul.f32 %v3894, 1.442695
    %v3900 = vpow.pop %v3899
    %v3901 = vmul.f32 %v3895, 1.442695
    %v3902 = vpow.pop %v3901
    %v3903 = vmul.f32 %v3896, 1.442695
    %v3904 = vpow.pop %v3903
    %v3905 = vadd.f32 %v3898, 1.0
    %v3906 = vadd.f32 %v3900, 1.0
    %v3907 = vadd.f32 %v3902, 1.0
    %v3908 = vadd.f32 %v3904, 1.0
    %v3909 = vrcp.pop %v3905
    %v3910 = vmul.f32 1.0, %v3909
    %v3911 = vrcp.pop %v3906
    %v3912 = vmul.f32 1.0, %v3911
    %v3913 = vrcp.pop %v3907
    %v3914 = vmul.f32 1.0, %v3913
    %v3915 = vrcp.pop %v3908
    %v3916 = vmul.f32 1.0, %v3915
    %v3917 = vtanh.pop %v3889
    %v3918 = vtanh.pop %v3890
    %v3919 = vxor.u32 %v3891, 2147483648
    %v3920 = vxor.u32 %v3892, 2147483648
    %v3921 = vmul.f32 %v3919, 1.442695
    %v3922 = vpow.pop %v3921
    %v3923 = vmul.f32 %v3920, 1.442695
    %v3924 = vpow.pop %v3923
    %v3925 = vadd.f32 %v3922, 1.0
    %v3926 = vadd.f32 %v3924, 1.0
    %v3927 = vrcp.pop %v3925
    %v3928 = vmul.f32 1.0, %v3927
    %v3929 = vrcp.pop %v3926
    %v3930 = vmul.f32 1.0, %v3929
    %v3931 = vmul.f32 %v3914, %v3321
    %v3932 = vmul.f32 %v3916, %v3322
    %v3933 = vmul.f32 %v3910, %v3917
    %v3934 = vmul.f32 %v3912, %v3918
    %v3935 = vadd.f32 %v3931, %v3933
    %v3936 = vadd.f32 %v3932, %v3934
    %v3937 = vtanh.pop %v3935
    %v3938 = vtanh.pop %v3936
    %v3939 = vmul.f32 %v3928, %v3937
    %v3940 = vmul.f32 %v3930, %v3938
    %v3941 = vpack.c.bf16 %v3939, %v3939
    %v3942 = vpack.c.bf16 %v3940, %v3940
    %v3943 = vpack.c.bf16 %v3705, %v3705
    %v3944 = vpack.c.bf16 %v3706, %v3706
    %3945 = vmatprep.subr.bf16.mxu0 %v2262
    %3946 = vmatpush1.bf16.msra.mxu0 %v2261
    %3947 = vmatprep.subr.bf16.mxu0 %v2254
    %3948 = vmatpush1.bf16.msra.mxu0 %v2253
    %3949 = vmatprep.subr.bf16.mxu0 %v2246
    %3950 = vmatpush1.bf16.msra.mxu0 %v2245
    %3951 = vmatprep.subr.bf16.mxu0 %v2238
    %3952 = vmatpush1.bf16.msra.mxu0 %v2237
    %3953 = vmatprep.subr.bf16.mxu0 %v2230
    %3954 = vmatpush1.bf16.msra.mxu0 %v2229
    %3955 = vmatprep.subr.bf16.mxu0 %v2222
    %3956 = vmatpush1.bf16.msra.mxu0 %v2221
    %3957 = vmatprep.subr.bf16.mxu0 %v2214
    %3958 = vmatpush1.bf16.msra.mxu0 %v2213
    %3959 = vmatprep.subr.bf16.mxu0 %v2206
    %3960 = vmatpush1.bf16.msra.mxu0 %v2205
    %3961 = vmatprep.subr.bf16.mxu0 %v2326
    %3962 = vmatpush2.bf16.msra.mxu0 %v2325
    %3963 = vmatprep.subr.bf16.mxu0 %v2318
    %3964 = vmatpush2.bf16.msra.mxu0 %v2317
    %3965 = vmatprep.subr.bf16.mxu0 %v2310
    %3966 = vmatpush2.bf16.msra.mxu0 %v2309
    %3967 = vmatprep.subr.bf16.mxu0 %v2302
    %3968 = vmatpush2.bf16.msra.mxu0 %v2301
    %3969 = vmatprep.subr.bf16.mxu0 %v2294
    %3970 = vmatpush2.bf16.msra.mxu0 %v2293
    %3971 = vmatprep.subr.bf16.mxu0 %v2286
    %3972 = vmatpush2.bf16.msra.mxu0 %v2285
    %3973 = vmatprep.subr.bf16.mxu0 %v2278
    %3974 = vmatpush2.bf16.msra.mxu0 %v2277
    %3975 = vmatprep.subr.bf16.mxu0 %v2270
    %3976 = vmatpush2.bf16.msra.mxu0 %v2269
    %3977 = vmatprep.mubr.bf16.mxu0 %v3942
    %3978 = vmatmul.mubr.bf16.gmra.mxu0 %v3941
    %v3979 = vpop.f32.mrf.mxu0
    %v3980 = vadd.f32 %v516, %v3979
    %v3981 = vpop.f32.mrf.mxu0
    %v3982 = vadd.f32 %v520, %v3981
    %v3983 = vpop.f32.mrf.mxu0
    %v3984 = vpop.f32.mrf.mxu0
    %3985 = vdwg.mxu0
    %3986 = vmatprep.subr.bf16.mxu0 %v2390
    %3987 = vmatpush1.bf16.msra.mxu0 %v2389
    %3988 = vmatprep.subr.bf16.mxu0 %v2382
    %3989 = vmatpush1.bf16.msra.mxu0 %v2381
    %3990 = vmatprep.subr.bf16.mxu0 %v2374
    %3991 = vmatpush1.bf16.msra.mxu0 %v2373
    %3992 = vmatprep.subr.bf16.mxu0 %v2366
    %3993 = vmatpush1.bf16.msra.mxu0 %v2365
    %3994 = vmatprep.subr.bf16.mxu0 %v2358
    %3995 = vmatpush1.bf16.msra.mxu0 %v2357
    %3996 = vmatprep.subr.bf16.mxu0 %v2350
    %3997 = vmatpush1.bf16.msra.mxu0 %v2349
    %3998 = vmatprep.subr.bf16.mxu0 %v2342
    %3999 = vmatpush1.bf16.msra.mxu0 %v2341
    %4000 = vmatprep.subr.bf16.mxu0 %v2334
    %4001 = vmatpush1.bf16.msra.mxu0 %v2333
    %4002 = vmatprep.subr.bf16.mxu0 %v2454
    %4003 = vmatpush2.bf16.msra.mxu0 %v2453
    %4004 = vmatprep.subr.bf16.mxu0 %v2446
    %4005 = vmatpush2.bf16.msra.mxu0 %v2445
    %4006 = vmatprep.subr.bf16.mxu0 %v2438
    %4007 = vmatpush2.bf16.msra.mxu0 %v2437
    %4008 = vmatprep.subr.bf16.mxu0 %v2430
    %4009 = vmatpush2.bf16.msra.mxu0 %v2429
    %4010 = vmatprep.subr.bf16.mxu0 %v2422
    %4011 = vmatpush2.bf16.msra.mxu0 %v2421
    %4012 = vmatprep.subr.bf16.mxu0 %v2414
    %4013 = vmatpush2.bf16.msra.mxu0 %v2413
    %4014 = vmatprep.subr.bf16.mxu0 %v2406
    %4015 = vmatpush2.bf16.msra.mxu0 %v2405
    %4016 = vmatprep.subr.bf16.mxu0 %v2398
    %4017 = vmatpush2.bf16.msra.mxu0 %v2397
    %4018 = vmatprep.mubr.bf16.mxu0 %v3944
    %4019 = vmatmul.mubr.bf16.gmra.mxu0 %v3943
    %v4020 = vpop.f32.mrf.mxu0
    %v4021 = vadd.f32 %v3980, %v4020
    %v4022 = vpop.f32.mrf.mxu0
    %v4023 = vadd.f32 %v3982, %v4022
    %v4024 = vpop.f32.mrf.mxu0
    %v4025 = vpop.f32.mrf.mxu0
    %4026 = vdwg.mxu0
    %4027 = vmatprep.subr.bf16.mxu0 %v2264
    %4028 = vmatpush1.bf16.msra.mxu0 %v2263
    %4029 = vmatprep.subr.bf16.mxu0 %v2256
    %4030 = vmatpush1.bf16.msra.mxu0 %v2255
    %4031 = vmatprep.subr.bf16.mxu0 %v2248
    %4032 = vmatpush1.bf16.msra.mxu0 %v2247
    %4033 = vmatprep.subr.bf16.mxu0 %v2240
    %4034 = vmatpush1.bf16.msra.mxu0 %v2239
    %4035 = vmatprep.subr.bf16.mxu0 %v2232
    %4036 = vmatpush1.bf16.msra.mxu0 %v2231
    %4037 = vmatprep.subr.bf16.mxu0 %v2224
    %4038 = vmatpush1.bf16.msra.mxu0 %v2223
    %4039 = vmatprep.subr.bf16.mxu0 %v2216
    %4040 = vmatpush1.bf16.msra.mxu0 %v2215
    %4041 = vmatprep.subr.bf16.mxu0 %v2208
    %4042 = vmatpush1.bf16.msra.mxu0 %v2207
    %4043 = vmatprep.subr.bf16.mxu0 %v2328
    %4044 = vmatpush2.bf16.msra.mxu0 %v2327
    %4045 = vmatprep.subr.bf16.mxu0 %v2320
    %4046 = vmatpush2.bf16.msra.mxu0 %v2319
    %4047 = vmatprep.subr.bf16.mxu0 %v2312
    %4048 = vmatpush2.bf16.msra.mxu0 %v2311
    %4049 = vmatprep.subr.bf16.mxu0 %v2304
    %4050 = vmatpush2.bf16.msra.mxu0 %v2303
    %4051 = vmatprep.subr.bf16.mxu0 %v2296
    %4052 = vmatpush2.bf16.msra.mxu0 %v2295
    %4053 = vmatprep.subr.bf16.mxu0 %v2288
    %4054 = vmatpush2.bf16.msra.mxu0 %v2287
    %4055 = vmatprep.subr.bf16.mxu0 %v2280
    %4056 = vmatpush2.bf16.msra.mxu0 %v2279
    %4057 = vmatprep.subr.bf16.mxu0 %v2272
    %4058 = vmatpush2.bf16.msra.mxu0 %v2271
    %4059 = vmatprep.mubr.bf16.mxu0 %v3942
    %4060 = vmatmul.mubr.bf16.gmra.mxu0 %v3941
    %v4061 = vpop.f32.mrf.mxu0
    %v4062 = vadd.f32 %v524, %v4061
    %v4063 = vpop.f32.mrf.mxu0
    %v4064 = vadd.f32 %v528, %v4063
    %v4065 = vpop.f32.mrf.mxu0
    %v4066 = vpop.f32.mrf.mxu0
    %4067 = vdwg.mxu0
    %4068 = vmatprep.subr.bf16.mxu0 %v2392
    %4069 = vmatpush1.bf16.msra.mxu0 %v2391
    %4070 = vmatprep.subr.bf16.mxu0 %v2384
    %4071 = vmatpush1.bf16.msra.mxu0 %v2383
    %4072 = vmatprep.subr.bf16.mxu0 %v2376
    %4073 = vmatpush1.bf16.msra.mxu0 %v2375
    %4074 = vmatprep.subr.bf16.mxu0 %v2368
    %4075 = vmatpush1.bf16.msra.mxu0 %v2367
    %4076 = vmatprep.subr.bf16.mxu0 %v2360
    %4077 = vmatpush1.bf16.msra.mxu0 %v2359
    %4078 = vmatprep.subr.bf16.mxu0 %v2352
    %4079 = vmatpush1.bf16.msra.mxu0 %v2351
    %4080 = vmatprep.subr.bf16.mxu0 %v2344
    %4081 = vmatpush1.bf16.msra.mxu0 %v2343
    %4082 = vmatprep.subr.bf16.mxu0 %v2336
    %4083 = vmatpush1.bf16.msra.mxu0 %v2335
    %4084 = vmatprep.subr.bf16.mxu0 %v2456
    %4085 = vmatpush2.bf16.msra.mxu0 %v2455
    %4086 = vmatprep.subr.bf16.mxu0 %v2448
    %4087 = vmatpush2.bf16.msra.mxu0 %v2447
    %4088 = vmatprep.subr.bf16.mxu0 %v2440
    %4089 = vmatpush2.bf16.msra.mxu0 %v2439
    %4090 = vmatprep.subr.bf16.mxu0 %v2432
    %4091 = vmatpush2.bf16.msra.mxu0 %v2431
    %4092 = vmatprep.subr.bf16.mxu0 %v2424
    %4093 = vmatpush2.bf16.msra.mxu0 %v2423
    %4094 = vmatprep.subr.bf16.mxu0 %v2416
    %4095 = vmatpush2.bf16.msra.mxu0 %v2415
    %4096 = vmatprep.subr.bf16.mxu0 %v2408
    %4097 = vmatpush2.bf16.msra.mxu0 %v2407
    %4098 = vmatprep.subr.bf16.mxu0 %v2400
    %4099 = vmatpush2.bf16.msra.mxu0 %v2399
    %4100 = vmatprep.mubr.bf16.mxu0 %v3944
    %4101 = vmatmul.mubr.bf16.gmra.mxu0 %v3943
    %v4102 = vpop.f32.mrf.mxu0
    %v4103 = vadd.f32 %v4062, %v4102
    %v4104 = vpop.f32.mrf.mxu0
    %v4105 = vadd.f32 %v4064, %v4104
    %v4106 = vpop.f32.mrf.mxu0
    %v4107 = vpop.f32.mrf.mxu0
    %4108 = vdwg.mxu0
    %4109 = vmatprep.subr.bf16.mxu0 %v2266
    %4110 = vmatpush1.bf16.msra.mxu0 %v2265
    %4111 = vmatprep.subr.bf16.mxu0 %v2258
    %4112 = vmatpush1.bf16.msra.mxu0 %v2257
    %4113 = vmatprep.subr.bf16.mxu0 %v2250
    %4114 = vmatpush1.bf16.msra.mxu0 %v2249
    %4115 = vmatprep.subr.bf16.mxu0 %v2242
    %4116 = vmatpush1.bf16.msra.mxu0 %v2241
    %4117 = vmatprep.subr.bf16.mxu0 %v2234
    %4118 = vmatpush1.bf16.msra.mxu0 %v2233
    %4119 = vmatprep.subr.bf16.mxu0 %v2226
    %4120 = vmatpush1.bf16.msra.mxu0 %v2225
    %4121 = vmatprep.subr.bf16.mxu0 %v2218
    %4122 = vmatpush1.bf16.msra.mxu0 %v2217
    %4123 = vmatprep.subr.bf16.mxu0 %v2210
    %4124 = vmatpush1.bf16.msra.mxu0 %v2209
    %4125 = vmatprep.subr.bf16.mxu0 %v2330
    %4126 = vmatpush2.bf16.msra.mxu0 %v2329
    %4127 = vmatprep.subr.bf16.mxu0 %v2322
    %4128 = vmatpush2.bf16.msra.mxu0 %v2321
    %4129 = vmatprep.subr.bf16.mxu0 %v2314
    %4130 = vmatpush2.bf16.msra.mxu0 %v2313
    %4131 = vmatprep.subr.bf16.mxu0 %v2306
    %4132 = vmatpush2.bf16.msra.mxu0 %v2305
    %4133 = vmatprep.subr.bf16.mxu0 %v2298
    %4134 = vmatpush2.bf16.msra.mxu0 %v2297
    %4135 = vmatprep.subr.bf16.mxu0 %v2290
    %4136 = vmatpush2.bf16.msra.mxu0 %v2289
    %4137 = vmatprep.subr.bf16.mxu0 %v2282
    %4138 = vmatpush2.bf16.msra.mxu0 %v2281
    %4139 = vmatprep.subr.bf16.mxu0 %v2274
    %4140 = vmatpush2.bf16.msra.mxu0 %v2273
    %4141 = vmatprep.mubr.bf16.mxu0 %v3942
    %4142 = vmatmul.mubr.bf16.gmra.mxu0 %v3941
    %v4143 = vpop.f32.mrf.mxu0
    %v4144 = vadd.f32 %v532, %v4143
    %v4145 = vpop.f32.mrf.mxu0
    %v4146 = vadd.f32 %v536, %v4145
    %v4147 = vpop.f32.mrf.mxu0
    %v4148 = vpop.f32.mrf.mxu0
    %4149 = vdwg.mxu0
    %4150 = vmatprep.subr.bf16.mxu0 %v2394
    %4151 = vmatpush1.bf16.msra.mxu0 %v2393
    %4152 = vmatprep.subr.bf16.mxu0 %v2386
    %4153 = vmatpush1.bf16.msra.mxu0 %v2385
    %4154 = vmatprep.subr.bf16.mxu0 %v2378
    %4155 = vmatpush1.bf16.msra.mxu0 %v2377
    %4156 = vmatprep.subr.bf16.mxu0 %v2370
    %4157 = vmatpush1.bf16.msra.mxu0 %v2369
    %4158 = vmatprep.subr.bf16.mxu0 %v2362
    %4159 = vmatpush1.bf16.msra.mxu0 %v2361
    %4160 = vmatprep.subr.bf16.mxu0 %v2354
    %4161 = vmatpush1.bf16.msra.mxu0 %v2353
    %4162 = vmatprep.subr.bf16.mxu0 %v2346
    %4163 = vmatpush1.bf16.msra.mxu0 %v2345
    %4164 = vmatprep.subr.bf16.mxu0 %v2338
    %4165 = vmatpush1.bf16.msra.mxu0 %v2337
    %4166 = vmatprep.subr.bf16.mxu0 %v2458
    %4167 = vmatpush2.bf16.msra.mxu0 %v2457
    %4168 = vmatprep.subr.bf16.mxu0 %v2450
    %4169 = vmatpush2.bf16.msra.mxu0 %v2449
    %4170 = vmatprep.subr.bf16.mxu0 %v2442
    %4171 = vmatpush2.bf16.msra.mxu0 %v2441
    %4172 = vmatprep.subr.bf16.mxu0 %v2434
    %4173 = vmatpush2.bf16.msra.mxu0 %v2433
    %4174 = vmatprep.subr.bf16.mxu0 %v2426
    %4175 = vmatpush2.bf16.msra.mxu0 %v2425
    %4176 = vmatprep.subr.bf16.mxu0 %v2418
    %4177 = vmatpush2.bf16.msra.mxu0 %v2417
    %4178 = vmatprep.subr.bf16.mxu0 %v2410
    %4179 = vmatpush2.bf16.msra.mxu0 %v2409
    %4180 = vmatprep.subr.bf16.mxu0 %v2402
    %4181 = vmatpush2.bf16.msra.mxu0 %v2401
    %4182 = vmatprep.mubr.bf16.mxu0 %v3944
    %4183 = vmatmul.mubr.bf16.gmra.mxu0 %v3943
    %v4184 = vpop.f32.mrf.mxu0
    %v4185 = vadd.f32 %v4144, %v4184
    %v4186 = vpop.f32.mrf.mxu0
    %v4187 = vadd.f32 %v4146, %v4186
    %v4188 = vpop.f32.mrf.mxu0
    %v4189 = vpop.f32.mrf.mxu0
    %4190 = vdwg.mxu0
    %4191 = vmatprep.subr.bf16.mxu0 %v2268
    %4192 = vmatpush1.bf16.msra.mxu0 %v2267
    %4193 = vmatprep.subr.bf16.mxu0 %v2260
    %4194 = vmatpush1.bf16.msra.mxu0 %v2259
    %4195 = vmatprep.subr.bf16.mxu0 %v2252
    %4196 = vmatpush1.bf16.msra.mxu0 %v2251
    %4197 = vmatprep.subr.bf16.mxu0 %v2244
    %4198 = vmatpush1.bf16.msra.mxu0 %v2243
    %4199 = vmatprep.subr.bf16.mxu0 %v2236
    %4200 = vmatpush1.bf16.msra.mxu0 %v2235
    %4201 = vmatprep.subr.bf16.mxu0 %v2228
    %4202 = vmatpush1.bf16.msra.mxu0 %v2227
    %4203 = vmatprep.subr.bf16.mxu0 %v2220
    %4204 = vmatpush1.bf16.msra.mxu0 %v2219
    %4205 = vmatprep.subr.bf16.mxu0 %v2212
    %4206 = vmatpush1.bf16.msra.mxu0 %v2211
    %4207 = vmatprep.subr.bf16.mxu0 %v2332
    %4208 = vmatpush2.bf16.msra.mxu0 %v2331
    %4209 = vmatprep.subr.bf16.mxu0 %v2324
    %4210 = vmatpush2.bf16.msra.mxu0 %v2323
    %4211 = vmatprep.subr.bf16.mxu0 %v2316
    %4212 = vmatpush2.bf16.msra.mxu0 %v2315
    %4213 = vmatprep.subr.bf16.mxu0 %v2308
    %4214 = vmatpush2.bf16.msra.mxu0 %v2307
    %4215 = vmatprep.subr.bf16.mxu0 %v2300
    %4216 = vmatpush2.bf16.msra.mxu0 %v2299
    %4217 = vmatprep.subr.bf16.mxu0 %v2292
    %4218 = vmatpush2.bf16.msra.mxu0 %v2291
    %4219 = vmatprep.subr.bf16.mxu0 %v2284
    %4220 = vmatpush2.bf16.msra.mxu0 %v2283
    %4221 = vmatprep.subr.bf16.mxu0 %v2276
    %4222 = vmatpush2.bf16.msra.mxu0 %v2275
    %4223 = vmatprep.mubr.bf16.mxu0 %v3942
    %4224 = vmatmul.mubr.bf16.gmra.mxu0 %v3941
    %v4225 = vpop.f32.mrf.mxu0
    %v4226 = vadd.f32 %v540, %v4225
    %v4227 = vpop.f32.mrf.mxu0
    %v4228 = vadd.f32 %v544, %v4227
    %v4229 = vpop.f32.mrf.mxu0
    %v4230 = vpop.f32.mrf.mxu0
    %4231 = vdwg.mxu0
    %4232 = vmatprep.subr.bf16.mxu0 %v2396
    %4233 = vmatpush1.bf16.msra.mxu0 %v2395
    %4234 = vmatprep.subr.bf16.mxu0 %v2388
    %4235 = vmatpush1.bf16.msra.mxu0 %v2387
    %4236 = vmatprep.subr.bf16.mxu0 %v2380
    %4237 = vmatpush1.bf16.msra.mxu0 %v2379
    %4238 = vmatprep.subr.bf16.mxu0 %v2372
    %4239 = vmatpush1.bf16.msra.mxu0 %v2371
    %4240 = vmatprep.subr.bf16.mxu0 %v2364
    %4241 = vmatpush1.bf16.msra.mxu0 %v2363
    %4242 = vmatprep.subr.bf16.mxu0 %v2356
    %4243 = vmatpush1.bf16.msra.mxu0 %v2355
    %4244 = vmatprep.subr.bf16.mxu0 %v2348
    %4245 = vmatpush1.bf16.msra.mxu0 %v2347
    %4246 = vmatprep.subr.bf16.mxu0 %v2340
    %4247 = vmatpush1.bf16.msra.mxu0 %v2339
    %4248 = vmatprep.subr.bf16.mxu0 %v2460
    %4249 = vmatpush2.bf16.msra.mxu0 %v2459
    %4250 = vmatprep.subr.bf16.mxu0 %v2452
    %4251 = vmatpush2.bf16.msra.mxu0 %v2451
    %4252 = vmatprep.subr.bf16.mxu0 %v2444
    %4253 = vmatpush2.bf16.msra.mxu0 %v2443
    %4254 = vmatprep.subr.bf16.mxu0 %v2436
    %4255 = vmatpush2.bf16.msra.mxu0 %v2435
    %4256 = vmatprep.subr.bf16.mxu0 %v2428
    %4257 = vmatpush2.bf16.msra.mxu0 %v2427
    %4258 = vmatprep.subr.bf16.mxu0 %v2420
    %4259 = vmatpush2.bf16.msra.mxu0 %v2419
    %4260 = vmatprep.subr.bf16.mxu0 %v2412
    %4261 = vmatpush2.bf16.msra.mxu0 %v2411
    %4262 = vmatprep.subr.bf16.mxu0 %v2404
    %4263 = vmatpush2.bf16.msra.mxu0 %v2403
    %4264 = vmatprep.mubr.bf16.mxu0 %v3944
    %4265 = vmatmul.mubr.bf16.gmra.mxu0 %v3943
    %v4266 = vpop.f32.mrf.mxu0
    %v4267 = vadd.f32 %v4226, %v4266
    %v4268 = vpop.f32.mrf.mxu0
    %v4269 = vadd.f32 %v4228, %v4268
    %v4270 = vpop.f32.mrf.mxu0
    %v4271 = vpop.f32.mrf.mxu0
    %4272 = vdwg.mxu0
    %v4273 = vxor.u32 %v4021, 2147483648
    %v4274 = vxor.u32 %v4023, 2147483648
    %v4275 = vxor.u32 %v4103, 2147483648
    %v4276 = vxor.u32 %v4105, 2147483648
    %v4277 = vmul.f32 %v4273, 1.442695
    %v4278 = vpow.pop %v4277
    %v4279 = vmul.f32 %v4274, 1.442695
    %v4280 = vpow.pop %v4279
    %v4281 = vmul.f32 %v4275, 1.442695
    %v4282 = vpow.pop %v4281
    %v4283 = vmul.f32 %v4276, 1.442695
    %v4284 = vpow.pop %v4283
    %v4285 = vadd.f32 %v4278, 1.0
    %v4286 = vadd.f32 %v4280, 1.0
    %v4287 = vadd.f32 %v4282, 1.0
    %v4288 = vadd.f32 %v4284, 1.0
    %v4289 = vrcp.pop %v4285
    %v4290 = vmul.f32 1.0, %v4289
    %v4291 = vrcp.pop %v4286
    %v4292 = vmul.f32 1.0, %v4291
    %v4293 = vrcp.pop %v4287
    %v4294 = vmul.f32 1.0, %v4293
    %v4295 = vrcp.pop %v4288
    %v4296 = vmul.f32 1.0, %v4295
    %v4297 = vtanh.pop %v4185
    %v4298 = vtanh.pop %v4187
    %v4299 = vxor.u32 %v4267, 2147483648
    %v4300 = vxor.u32 %v4269, 2147483648
    %v4301 = vmul.f32 %v4299, 1.442695
    %v4302 = vpow.pop %v4301
    %v4303 = vmul.f32 %v4300, 1.442695
    %v4304 = vpow.pop %v4303
    %v4305 = vadd.f32 %v4302, 1.0
    %v4306 = vadd.f32 %v4304, 1.0
    %v4307 = vrcp.pop %v4305
    %v4308 = vmul.f32 1.0, %v4307
    %v4309 = vrcp.pop %v4306
    %v4310 = vmul.f32 1.0, %v4309
    %v4311 = vmul.f32 %v4294, %v3701
    %v4312 = vmul.f32 %v4296, %v3702
    %v4313 = vmul.f32 %v4290, %v4297
    %v4314 = vmul.f32 %v4292, %v4298
    %v4315 = vadd.f32 %v4311, %v4313
    %v4316 = vadd.f32 %v4312, %v4314
    %v4317 = vtanh.pop %v4315
    %v4318 = vtanh.pop %v4316
    %v4319 = vmul.f32 %v4308, %v4317
    %v4320 = vmul.f32 %v4310, %v4318
    %s4321 = smul.u32 2, 2
    %s4322 = smul.addr %s4321, 8
    %s4323 = scalar_lea.vmem [#allocation2], %s4322
    %4324 = vst [vmem:[%s4323] sm:$0xff] %v4319
    %4325 = vst [vmem:[%s4323 + $0x8] sm:$0xff] %v4320
    %s4326 = scalar_lea.vmem [#allocation3], 192
    %v4327 = vld [vmem:[%s4326] sm:$0xff]
    %v4328 = vld [vmem:[%s4326 + $0x8] sm:$0xff]
    %v4329 = vld [vmem:[%s4326 + $0x10] sm:$0xff]
    %v4330 = vld [vmem:[%s4326 + $0x18] sm:$0xff]
    %v4331 = vld [vmem:[%s4326 + $0x20] sm:$0xff]
    %v4332 = vld [vmem:[%s4326 + $0x28] sm:$0xff]
    %v4333 = vld [vmem:[%s4326 + $0x30] sm:$0xff]
    %v4334 = vld [vmem:[%s4326 + $0x38] sm:$0xff]
    %4335 = vmatprep.subr.bf16.mxu0 %v1014
    %4336 = vmatpush1.bf16.msra.mxu0 %v1013
    %4337 = vmatprep.subr.bf16.mxu0 %v1006
    %4338 = vmatpush1.bf16.msra.mxu0 %v1005
    %4339 = vmatprep.subr.bf16.mxu0 %v998
    %4340 = vmatpush1.bf16.msra.mxu0 %v997
    %4341 = vmatprep.subr.bf16.mxu0 %v990
    %4342 = vmatpush1.bf16.msra.mxu0 %v989
    %4343 = vmatprep.subr.bf16.mxu0 %v982
    %4344 = vmatpush1.bf16.msra.mxu0 %v981
    %4345 = vmatprep.subr.bf16.mxu0 %v974
    %4346 = vmatpush1.bf16.msra.mxu0 %v973
    %4347 = vmatprep.subr.bf16.mxu0 %v966
    %4348 = vmatpush1.bf16.msra.mxu0 %v965
    %4349 = vmatprep.subr.bf16.mxu0 %v958
    %4350 = vmatpush1.bf16.msra.mxu0 %v957
    %4351 = vmatprep.subr.bf16.mxu0 %v1078
    %4352 = vmatpush2.bf16.msra.mxu0 %v1077
    %4353 = vmatprep.subr.bf16.mxu0 %v1070
    %4354 = vmatpush2.bf16.msra.mxu0 %v1069
    %4355 = vmatprep.subr.bf16.mxu0 %v1062
    %4356 = vmatpush2.bf16.msra.mxu0 %v1061
    %4357 = vmatprep.subr.bf16.mxu0 %v1054
    %4358 = vmatpush2.bf16.msra.mxu0 %v1053
    %4359 = vmatprep.subr.bf16.mxu0 %v1046
    %4360 = vmatpush2.bf16.msra.mxu0 %v1045
    %4361 = vmatprep.subr.bf16.mxu0 %v1038
    %4362 = vmatpush2.bf16.msra.mxu0 %v1037
    %4363 = vmatprep.subr.bf16.mxu0 %v1030
    %4364 = vmatpush2.bf16.msra.mxu0 %v1029
    %4365 = vmatprep.subr.bf16.mxu0 %v1022
    %4366 = vmatpush2.bf16.msra.mxu0 %v1021
    %4367 = vmatprep.mubr.bf16.mxu0 %v3942
    %4368 = vmatmul.mubr.bf16.gmra.mxu0 %v3941
    %v4369 = vpop.f32.mrf.mxu0
    %v4370 = vadd.f32 0.0, %v4369
    %v4371 = vpop.f32.mrf.mxu0
    %v4372 = vadd.f32 0.0, %v4371
    %v4373 = vpop.f32.mrf.mxu0
    %v4374 = vpop.f32.mrf.mxu0
    %4375 = vdwg.mxu0
    %4376 = vmatprep.subr.bf16.mxu0 %v1016
    %4377 = vmatpush1.bf16.msra.mxu0 %v1015
    %4378 = vmatprep.subr.bf16.mxu0 %v1008
    %4379 = vmatpush1.bf16.msra.mxu0 %v1007
    %4380 = vmatprep.subr.bf16.mxu0 %v1000
    %4381 = vmatpush1.bf16.msra.mxu0 %v999
    %4382 = vmatprep.subr.bf16.mxu0 %v992
    %4383 = vmatpush1.bf16.msra.mxu0 %v991
    %4384 = vmatprep.subr.bf16.mxu0 %v984
    %4385 = vmatpush1.bf16.msra.mxu0 %v983
    %4386 = vmatprep.subr.bf16.mxu0 %v976
    %4387 = vmatpush1.bf16.msra.mxu0 %v975
    %4388 = vmatprep.subr.bf16.mxu0 %v968
    %4389 = vmatpush1.bf16.msra.mxu0 %v967
    %4390 = vmatprep.subr.bf16.mxu0 %v960
    %4391 = vmatpush1.bf16.msra.mxu0 %v959
    %4392 = vmatprep.subr.bf16.mxu0 %v1080
    %4393 = vmatpush2.bf16.msra.mxu0 %v1079
    %4394 = vmatprep.subr.bf16.mxu0 %v1072
    %4395 = vmatpush2.bf16.msra.mxu0 %v1071
    %4396 = vmatprep.subr.bf16.mxu0 %v1064
    %4397 = vmatpush2.bf16.msra.mxu0 %v1063
    %4398 = vmatprep.subr.bf16.mxu0 %v1056
    %4399 = vmatpush2.bf16.msra.mxu0 %v1055
    %4400 = vmatprep.subr.bf16.mxu0 %v1048
    %4401 = vmatpush2.bf16.msra.mxu0 %v1047
    %4402 = vmatprep.subr.bf16.mxu0 %v1040
    %4403 = vmatpush2.bf16.msra.mxu0 %v1039
    %4404 = vmatprep.subr.bf16.mxu0 %v1032
    %4405 = vmatpush2.bf16.msra.mxu0 %v1031
    %4406 = vmatprep.subr.bf16.mxu0 %v1024
    %4407 = vmatpush2.bf16.msra.mxu0 %v1023
    %4408 = vmatprep.mubr.bf16.mxu0 %v3942
    %4409 = vmatmul.mubr.bf16.gmra.mxu0 %v3941
    %v4410 = vpop.f32.mrf.mxu0
    %v4411 = vadd.f32 0.0, %v4410
    %v4412 = vpop.f32.mrf.mxu0
    %v4413 = vadd.f32 0.0, %v4412
    %v4414 = vpop.f32.mrf.mxu0
    %v4415 = vpop.f32.mrf.mxu0
    %4416 = vdwg.mxu0
    %4417 = vmatprep.subr.bf16.mxu0 %v1018
    %4418 = vmatpush1.bf16.msra.mxu0 %v1017
    %4419 = vmatprep.subr.bf16.mxu0 %v1010
    %4420 = vmatpush1.bf16.msra.mxu0 %v1009
    %4421 = vmatprep.subr.bf16.mxu0 %v1002
    %4422 = vmatpush1.bf16.msra.mxu0 %v1001
    %4423 = vmatprep.subr.bf16.mxu0 %v994
    %4424 = vmatpush1.bf16.msra.mxu0 %v993
    %4425 = vmatprep.subr.bf16.mxu0 %v986
    %4426 = vmatpush1.bf16.msra.mxu0 %v985
    %4427 = vmatprep.subr.bf16.mxu0 %v978
    %4428 = vmatpush1.bf16.msra.mxu0 %v977
    %4429 = vmatprep.subr.bf16.mxu0 %v970
    %4430 = vmatpush1.bf16.msra.mxu0 %v969
    %4431 = vmatprep.subr.bf16.mxu0 %v962
    %4432 = vmatpush1.bf16.msra.mxu0 %v961
    %4433 = vmatprep.subr.bf16.mxu0 %v1082
    %4434 = vmatpush2.bf16.msra.mxu0 %v1081
    %4435 = vmatprep.subr.bf16.mxu0 %v1074
    %4436 = vmatpush2.bf16.msra.mxu0 %v1073
    %4437 = vmatprep.subr.bf16.mxu0 %v1066
    %4438 = vmatpush2.bf16.msra.mxu0 %v1065
    %4439 = vmatprep.subr.bf16.mxu0 %v1058
    %4440 = vmatpush2.bf16.msra.mxu0 %v1057
    %4441 = vmatprep.subr.bf16.mxu0 %v1050
    %4442 = vmatpush2.bf16.msra.mxu0 %v1049
    %4443 = vmatprep.subr.bf16.mxu0 %v1042
    %4444 = vmatpush2.bf16.msra.mxu0 %v1041
    %4445 = vmatprep.subr.bf16.mxu0 %v1034
    %4446 = vmatpush2.bf16.msra.mxu0 %v1033
    %4447 = vmatprep.subr.bf16.mxu0 %v1026
    %4448 = vmatpush2.bf16.msra.mxu0 %v1025
    %4449 = vmatprep.mubr.bf16.mxu0 %v3942
    %4450 = vmatmul.mubr.bf16.gmra.mxu0 %v3941
    %v4451 = vpop.f32.mrf.mxu0
    %v4452 = vadd.f32 0.0, %v4451
    %v4453 = vpop.f32.mrf.mxu0
    %v4454 = vadd.f32 0.0, %v4453
    %v4455 = vpop.f32.mrf.mxu0
    %v4456 = vpop.f32.mrf.mxu0
    %4457 = vdwg.mxu0
    %4458 = vmatprep.subr.bf16.mxu0 %v1020
    %4459 = vmatpush1.bf16.msra.mxu0 %v1019
    %4460 = vmatprep.subr.bf16.mxu0 %v1012
    %4461 = vmatpush1.bf16.msra.mxu0 %v1011
    %4462 = vmatprep.subr.bf16.mxu0 %v1004
    %4463 = vmatpush1.bf16.msra.mxu0 %v1003
    %4464 = vmatprep.subr.bf16.mxu0 %v996
    %4465 = vmatpush1.bf16.msra.mxu0 %v995
    %4466 = vmatprep.subr.bf16.mxu0 %v988
    %4467 = vmatpush1.bf16.msra.mxu0 %v987
    %4468 = vmatprep.subr.bf16.mxu0 %v980
    %4469 = vmatpush1.bf16.msra.mxu0 %v979
    %4470 = vmatprep.subr.bf16.mxu0 %v972
    %4471 = vmatpush1.bf16.msra.mxu0 %v971
    %4472 = vmatprep.subr.bf16.mxu0 %v964
    %4473 = vmatpush1.bf16.msra.mxu0 %v963
    %4474 = vmatprep.subr.bf16.mxu0 %v1084
    %4475 = vmatpush2.bf16.msra.mxu0 %v1083
    %4476 = vmatprep.subr.bf16.mxu0 %v1076
    %4477 = vmatpush2.bf16.msra.mxu0 %v1075
    %4478 = vmatprep.subr.bf16.mxu0 %v1068
    %4479 = vmatpush2.bf16.msra.mxu0 %v1067
    %4480 = vmatprep.subr.bf16.mxu0 %v1060
    %4481 = vmatpush2.bf16.msra.mxu0 %v1059
    %4482 = vmatprep.subr.bf16.mxu0 %v1052
    %4483 = vmatpush2.bf16.msra.mxu0 %v1051
    %4484 = vmatprep.subr.bf16.mxu0 %v1044
    %4485 = vmatpush2.bf16.msra.mxu0 %v1043
    %4486 = vmatprep.subr.bf16.mxu0 %v1036
    %4487 = vmatpush2.bf16.msra.mxu0 %v1035
    %4488 = vmatprep.subr.bf16.mxu0 %v1028
    %4489 = vmatpush2.bf16.msra.mxu0 %v1027
    %4490 = vmatprep.mubr.bf16.mxu0 %v3942
    %4491 = vmatmul.mubr.bf16.gmra.mxu0 %v3941
    %v4492 = vpop.f32.mrf.mxu0
    %v4493 = vadd.f32 0.0, %v4492
    %v4494 = vpop.f32.mrf.mxu0
    %v4495 = vadd.f32 0.0, %v4494
    %v4496 = vpop.f32.mrf.mxu0
    %v4497 = vpop.f32.mrf.mxu0
    %4498 = vdwg.mxu0
    %v4499 = vadd.f32 %v4327, %v4370
    %v4500 = vadd.f32 %v4328, %v4372
    %v4501 = vadd.f32 %v4329, %v4411
    %v4502 = vadd.f32 %v4330, %v4413
    %v4503 = vadd.f32 %v4331, %v4452
    %v4504 = vadd.f32 %v4332, %v4454
    %v4505 = vadd.f32 %v4333, %v4493
    %v4506 = vadd.f32 %v4334, %v4495
    %v4507 = vxor.u32 %v4499, 2147483648
    %v4508 = vxor.u32 %v4500, 2147483648
    %v4509 = vxor.u32 %v4501, 2147483648
    %v4510 = vxor.u32 %v4502, 2147483648
    %v4511 = vmul.f32 %v4507, 1.442695
    %v4512 = vpow.pop %v4511
    %v4513 = vmul.f32 %v4508, 1.442695
    %v4514 = vpow.pop %v4513
    %v4515 = vmul.f32 %v4509, 1.442695
    %v4516 = vpow.pop %v4515
    %v4517 = vmul.f32 %v4510, 1.442695
    %v4518 = vpow.pop %v4517
    %v4519 = vadd.f32 %v4512, 1.0
    %v4520 = vadd.f32 %v4514, 1.0
    %v4521 = vadd.f32 %v4516, 1.0
    %v4522 = vadd.f32 %v4518, 1.0
    %v4523 = vrcp.pop %v4519
    %v4524 = vmul.f32 1.0, %v4523
    %v4525 = vrcp.pop %v4520
    %v4526 = vmul.f32 1.0, %v4525
    %v4527 = vrcp.pop %v4521
    %v4528 = vmul.f32 1.0, %v4527
    %v4529 = vrcp.pop %v4522
    %v4530 = vmul.f32 1.0, %v4529
    %v4531 = vtanh.pop %v4503
    %v4532 = vtanh.pop %v4504
    %v4533 = vxor.u32 %v4505, 2147483648
    %v4534 = vxor.u32 %v4506, 2147483648
    %v4535 = vmul.f32 %v4533, 1.442695
    %v4536 = vpow.pop %v4535
    %v4537 = vmul.f32 %v4534, 1.442695
    %v4538 = vpow.pop %v4537
    %v4539 = vadd.f32 %v4536, 1.0
    %v4540 = vadd.f32 %v4538, 1.0
    %v4541 = vrcp.pop %v4539
    %v4542 = vmul.f32 1.0, %v4541
    %v4543 = vrcp.pop %v4540
    %v4544 = vmul.f32 1.0, %v4543
    %v4545 = vmul.f32 %v4528, %v3935
    %v4546 = vmul.f32 %v4530, %v3936
    %v4547 = vmul.f32 %v4524, %v4531
    %v4548 = vmul.f32 %v4526, %v4532
    %v4549 = vadd.f32 %v4545, %v4547
    %v4550 = vadd.f32 %v4546, %v4548
    %v4551 = vtanh.pop %v4549
    %v4552 = vtanh.pop %v4550
    %v4553 = vmul.f32 %v4542, %v4551
    %v4554 = vmul.f32 %v4544, %v4552
    %v4555 = vpack.c.bf16 %v4553, %v4553
    %v4556 = vpack.c.bf16 %v4554, %v4554
    %v4557 = vpack.c.bf16 %v4319, %v4319
    %v4558 = vpack.c.bf16 %v4320, %v4320
    %4559 = vmatprep.subr.bf16.mxu0 %v2262
    %4560 = vmatpush1.bf16.msra.mxu0 %v2261
    %4561 = vmatprep.subr.bf16.mxu0 %v2254
    %4562 = vmatpush1.bf16.msra.mxu0 %v2253
    %4563 = vmatprep.subr.bf16.mxu0 %v2246
    %4564 = vmatpush1.bf16.msra.mxu0 %v2245
    %4565 = vmatprep.subr.bf16.mxu0 %v2238
    %4566 = vmatpush1.bf16.msra.mxu0 %v2237
    %4567 = vmatprep.subr.bf16.mxu0 %v2230
    %4568 = vmatpush1.bf16.msra.mxu0 %v2229
    %4569 = vmatprep.subr.bf16.mxu0 %v2222
    %4570 = vmatpush1.bf16.msra.mxu0 %v2221
    %4571 = vmatprep.subr.bf16.mxu0 %v2214
    %4572 = vmatpush1.bf16.msra.mxu0 %v2213
    %4573 = vmatprep.subr.bf16.mxu0 %v2206
    %4574 = vmatpush1.bf16.msra.mxu0 %v2205
    %4575 = vmatprep.subr.bf16.mxu0 %v2326
    %4576 = vmatpush2.bf16.msra.mxu0 %v2325
    %4577 = vmatprep.subr.bf16.mxu0 %v2318
    %4578 = vmatpush2.bf16.msra.mxu0 %v2317
    %4579 = vmatprep.subr.bf16.mxu0 %v2310
    %4580 = vmatpush2.bf16.msra.mxu0 %v2309
    %4581 = vmatprep.subr.bf16.mxu0 %v2302
    %4582 = vmatpush2.bf16.msra.mxu0 %v2301
    %4583 = vmatprep.subr.bf16.mxu0 %v2294
    %4584 = vmatpush2.bf16.msra.mxu0 %v2293
    %4585 = vmatprep.subr.bf16.mxu0 %v2286
    %4586 = vmatpush2.bf16.msra.mxu0 %v2285
    %4587 = vmatprep.subr.bf16.mxu0 %v2278
    %4588 = vmatpush2.bf16.msra.mxu0 %v2277
    %4589 = vmatprep.subr.bf16.mxu0 %v2270
    %4590 = vmatpush2.bf16.msra.mxu0 %v2269
    %4591 = vmatprep.mubr.bf16.mxu0 %v4556
    %4592 = vmatmul.mubr.bf16.gmra.mxu0 %v4555
    %v4593 = vpop.f32.mrf.mxu0
    %v4594 = vadd.f32 %v516, %v4593
    %v4595 = vpop.f32.mrf.mxu0
    %v4596 = vadd.f32 %v520, %v4595
    %v4597 = vpop.f32.mrf.mxu0
    %v4598 = vpop.f32.mrf.mxu0
    %4599 = vdwg.mxu0
    %4600 = vmatprep.subr.bf16.mxu0 %v2390
    %4601 = vmatpush1.bf16.msra.mxu0 %v2389
    %4602 = vmatprep.subr.bf16.mxu0 %v2382
    %4603 = vmatpush1.bf16.msra.mxu0 %v2381
    %4604 = vmatprep.subr.bf16.mxu0 %v2374
    %4605 = vmatpush1.bf16.msra.mxu0 %v2373
    %4606 = vmatprep.subr.bf16.mxu0 %v2366
    %4607 = vmatpush1.bf16.msra.mxu0 %v2365
    %4608 = vmatprep.subr.bf16.mxu0 %v2358
    %4609 = vmatpush1.bf16.msra.mxu0 %v2357
    %4610 = vmatprep.subr.bf16.mxu0 %v2350
    %4611 = vmatpush1.bf16.msra.mxu0 %v2349
    %4612 = vmatprep.subr.bf16.mxu0 %v2342
    %4613 = vmatpush1.bf16.msra.mxu0 %v2341
    %4614 = vmatprep.subr.bf16.mxu0 %v2334
    %4615 = vmatpush1.bf16.msra.mxu0 %v2333
    %4616 = vmatprep.subr.bf16.mxu0 %v2454
    %4617 = vmatpush2.bf16.msra.mxu0 %v2453
    %4618 = vmatprep.subr.bf16.mxu0 %v2446
    %4619 = vmatpush2.bf16.msra.mxu0 %v2445
    %4620 = vmatprep.subr.bf16.mxu0 %v2438
    %4621 = vmatpush2.bf16.msra.mxu0 %v2437
    %4622 = vmatprep.subr.bf16.mxu0 %v2430
    %4623 = vmatpush2.bf16.msra.mxu0 %v2429
    %4624 = vmatprep.subr.bf16.mxu0 %v2422
    %4625 = vmatpush2.bf16.msra.mxu0 %v2421
    %4626 = vmatprep.subr.bf16.mxu0 %v2414
    %4627 = vmatpush2.bf16.msra.mxu0 %v2413
    %4628 = vmatprep.subr.bf16.mxu0 %v2406
    %4629 = vmatpush2.bf16.msra.mxu0 %v2405
    %4630 = vmatprep.subr.bf16.mxu0 %v2398
    %4631 = vmatpush2.bf16.msra.mxu0 %v2397
    %4632 = vmatprep.mubr.bf16.mxu0 %v4558
    %4633 = vmatmul.mubr.bf16.gmra.mxu0 %v4557
    %v4634 = vpop.f32.mrf.mxu0
    %v4635 = vadd.f32 %v4594, %v4634
    %v4636 = vpop.f32.mrf.mxu0
    %v4637 = vadd.f32 %v4596, %v4636
    %v4638 = vpop.f32.mrf.mxu0
    %v4639 = vpop.f32.mrf.mxu0
    %4640 = vdwg.mxu0
    %4641 = vmatprep.subr.bf16.mxu0 %v2264
    %4642 = vmatpush1.bf16.msra.mxu0 %v2263
    %4643 = vmatprep.subr.bf16.mxu0 %v2256
    %4644 = vmatpush1.bf16.msra.mxu0 %v2255
    %4645 = vmatprep.subr.bf16.mxu0 %v2248
    %4646 = vmatpush1.bf16.msra.mxu0 %v2247
    %4647 = vmatprep.subr.bf16.mxu0 %v2240
    %4648 = vmatpush1.bf16.msra.mxu0 %v2239
    %4649 = vmatprep.subr.bf16.mxu0 %v2232
    %4650 = vmatpush1.bf16.msra.mxu0 %v2231
    %4651 = vmatprep.subr.bf16.mxu0 %v2224
    %4652 = vmatpush1.bf16.msra.mxu0 %v2223
    %4653 = vmatprep.subr.bf16.mxu0 %v2216
    %4654 = vmatpush1.bf16.msra.mxu0 %v2215
    %4655 = vmatprep.subr.bf16.mxu0 %v2208
    %4656 = vmatpush1.bf16.msra.mxu0 %v2207
    %4657 = vmatprep.subr.bf16.mxu0 %v2328
    %4658 = vmatpush2.bf16.msra.mxu0 %v2327
    %4659 = vmatprep.subr.bf16.mxu0 %v2320
    %4660 = vmatpush2.bf16.msra.mxu0 %v2319
    %4661 = vmatprep.subr.bf16.mxu0 %v2312
    %4662 = vmatpush2.bf16.msra.mxu0 %v2311
    %4663 = vmatprep.subr.bf16.mxu0 %v2304
    %4664 = vmatpush2.bf16.msra.mxu0 %v2303
    %4665 = vmatprep.subr.bf16.mxu0 %v2296
    %4666 = vmatpush2.bf16.msra.mxu0 %v2295
    %4667 = vmatprep.subr.bf16.mxu0 %v2288
    %4668 = vmatpush2.bf16.msra.mxu0 %v2287
    %4669 = vmatprep.subr.bf16.mxu0 %v2280
    %4670 = vmatpush2.bf16.msra.mxu0 %v2279
    %4671 = vmatprep.subr.bf16.mxu0 %v2272
    %4672 = vmatpush2.bf16.msra.mxu0 %v2271
    %4673 = vmatprep.mubr.bf16.mxu0 %v4556
    %4674 = vmatmul.mubr.bf16.gmra.mxu0 %v4555
    %v4675 = vpop.f32.mrf.mxu0
    %v4676 = vadd.f32 %v524, %v4675
    %v4677 = vpop.f32.mrf.mxu0
    %v4678 = vadd.f32 %v528, %v4677
    %v4679 = vpop.f32.mrf.mxu0
    %v4680 = vpop.f32.mrf.mxu0
    %4681 = vdwg.mxu0
    %4682 = vmatprep.subr.bf16.mxu0 %v2392
    %4683 = vmatpush1.bf16.msra.mxu0 %v2391
    %4684 = vmatprep.subr.bf16.mxu0 %v2384
    %4685 = vmatpush1.bf16.msra.mxu0 %v2383
    %4686 = vmatprep.subr.bf16.mxu0 %v2376
    %4687 = vmatpush1.bf16.msra.mxu0 %v2375
    %4688 = vmatprep.subr.bf16.mxu0 %v2368
    %4689 = vmatpush1.bf16.msra.mxu0 %v2367
    %4690 = vmatprep.subr.bf16.mxu0 %v2360
    %4691 = vmatpush1.bf16.msra.mxu0 %v2359
    %4692 = vmatprep.subr.bf16.mxu0 %v2352
    %4693 = vmatpush1.bf16.msra.mxu0 %v2351
    %4694 = vmatprep.subr.bf16.mxu0 %v2344
    %4695 = vmatpush1.bf16.msra.mxu0 %v2343
    %4696 = vmatprep.subr.bf16.mxu0 %v2336
    %4697 = vmatpush1.bf16.msra.mxu0 %v2335
    %4698 = vmatprep.subr.bf16.mxu0 %v2456
    %4699 = vmatpush2.bf16.msra.mxu0 %v2455
    %4700 = vmatprep.subr.bf16.mxu0 %v2448
    %4701 = vmatpush2.bf16.msra.mxu0 %v2447
    %4702 = vmatprep.subr.bf16.mxu0 %v2440
    %4703 = vmatpush2.bf16.msra.mxu0 %v2439
    %4704 = vmatprep.subr.bf16.mxu0 %v2432
    %4705 = vmatpush2.bf16.msra.mxu0 %v2431
    %4706 = vmatprep.subr.bf16.mxu0 %v2424
    %4707 = vmatpush2.bf16.msra.mxu0 %v2423
    %4708 = vmatprep.subr.bf16.mxu0 %v2416
    %4709 = vmatpush2.bf16.msra.mxu0 %v2415
    %4710 = vmatprep.subr.bf16.mxu0 %v2408
    %4711 = vmatpush2.bf16.msra.mxu0 %v2407
    %4712 = vmatprep.subr.bf16.mxu0 %v2400
    %4713 = vmatpush2.bf16.msra.mxu0 %v2399
    %4714 = vmatprep.mubr.bf16.mxu0 %v4558
    %4715 = vmatmul.mubr.bf16.gmra.mxu0 %v4557
    %v4716 = vpop.f32.mrf.mxu0
    %v4717 = vadd.f32 %v4676, %v4716
    %v4718 = vpop.f32.mrf.mxu0
    %v4719 = vadd.f32 %v4678, %v4718
    %v4720 = vpop.f32.mrf.mxu0
    %v4721 = vpop.f32.mrf.mxu0
    %4722 = vdwg.mxu0
    %4723 = vmatprep.subr.bf16.mxu0 %v2266
    %4724 = vmatpush1.bf16.msra.mxu0 %v2265
    %4725 = vmatprep.subr.bf16.mxu0 %v2258
    %4726 = vmatpush1.bf16.msra.mxu0 %v2257
    %4727 = vmatprep.subr.bf16.mxu0 %v2250
    %4728 = vmatpush1.bf16.msra.mxu0 %v2249
    %4729 = vmatprep.subr.bf16.mxu0 %v2242
    %4730 = vmatpush1.bf16.msra.mxu0 %v2241
    %4731 = vmatprep.subr.bf16.mxu0 %v2234
    %4732 = vmatpush1.bf16.msra.mxu0 %v2233
    %4733 = vmatprep.subr.bf16.mxu0 %v2226
    %4734 = vmatpush1.bf16.msra.mxu0 %v2225
    %4735 = vmatprep.subr.bf16.mxu0 %v2218
    %4736 = vmatpush1.bf16.msra.mxu0 %v2217
    %4737 = vmatprep.subr.bf16.mxu0 %v2210
    %4738 = vmatpush1.bf16.msra.mxu0 %v2209
    %4739 = vmatprep.subr.bf16.mxu0 %v2330
    %4740 = vmatpush2.bf16.msra.mxu0 %v2329
    %4741 = vmatprep.subr.bf16.mxu0 %v2322
    %4742 = vmatpush2.bf16.msra.mxu0 %v2321
    %4743 = vmatprep.subr.bf16.mxu0 %v2314
    %4744 = vmatpush2.bf16.msra.mxu0 %v2313
    %4745 = vmatprep.subr.bf16.mxu0 %v2306
    %4746 = vmatpush2.bf16.msra.mxu0 %v2305
    %4747 = vmatprep.subr.bf16.mxu0 %v2298
    %4748 = vmatpush2.bf16.msra.mxu0 %v2297
    %4749 = vmatprep.subr.bf16.mxu0 %v2290
    %4750 = vmatpush2.bf16.msra.mxu0 %v2289
    %4751 = vmatprep.subr.bf16.mxu0 %v2282
    %4752 = vmatpush2.bf16.msra.mxu0 %v2281
    %4753 = vmatprep.subr.bf16.mxu0 %v2274
    %4754 = vmatpush2.bf16.msra.mxu0 %v2273
    %4755 = vmatprep.mubr.bf16.mxu0 %v4556
    %4756 = vmatmul.mubr.bf16.gmra.mxu0 %v4555
    %v4757 = vpop.f32.mrf.mxu0
    %v4758 = vadd.f32 %v532, %v4757
    %v4759 = vpop.f32.mrf.mxu0
    %v4760 = vadd.f32 %v536, %v4759
    %v4761 = vpop.f32.mrf.mxu0
    %v4762 = vpop.f32.mrf.mxu0
    %4763 = vdwg.mxu0
    %4764 = vmatprep.subr.bf16.mxu0 %v2394
    %4765 = vmatpush1.bf16.msra.mxu0 %v2393
    %4766 = vmatprep.subr.bf16.mxu0 %v2386
    %4767 = vmatpush1.bf16.msra.mxu0 %v2385
    %4768 = vmatprep.subr.bf16.mxu0 %v2378
    %4769 = vmatpush1.bf16.msra.mxu0 %v2377
    %4770 = vmatprep.subr.bf16.mxu0 %v2370
    %4771 = vmatpush1.bf16.msra.mxu0 %v2369
    %4772 = vmatprep.subr.bf16.mxu0 %v2362
    %4773 = vmatpush1.bf16.msra.mxu0 %v2361
    %4774 = vmatprep.subr.bf16.mxu0 %v2354
    %4775 = vmatpush1.bf16.msra.mxu0 %v2353
    %4776 = vmatprep.subr.bf16.mxu0 %v2346
    %4777 = vmatpush1.bf16.msra.mxu0 %v2345
    %4778 = vmatprep.subr.bf16.mxu0 %v2338
    %4779 = vmatpush1.bf16.msra.mxu0 %v2337
    %4780 = vmatprep.subr.bf16.mxu0 %v2458
    %4781 = vmatpush2.bf16.msra.mxu0 %v2457
    %4782 = vmatprep.subr.bf16.mxu0 %v2450
    %4783 = vmatpush2.bf16.msra.mxu0 %v2449
    %4784 = vmatprep.subr.bf16.mxu0 %v2442
    %4785 = vmatpush2.bf16.msra.mxu0 %v2441
    %4786 = vmatprep.subr.bf16.mxu0 %v2434
    %4787 = vmatpush2.bf16.msra.mxu0 %v2433
    %4788 = vmatprep.subr.bf16.mxu0 %v2426
    %4789 = vmatpush2.bf16.msra.mxu0 %v2425
    %4790 = vmatprep.subr.bf16.mxu0 %v2418
    %4791 = vmatpush2.bf16.msra.mxu0 %v2417
    %4792 = vmatprep.subr.bf16.mxu0 %v2410
    %4793 = vmatpush2.bf16.msra.mxu0 %v2409
    %4794 = vmatprep.subr.bf16.mxu0 %v2402
    %4795 = vmatpush2.bf16.msra.mxu0 %v2401
    %4796 = vmatprep.mubr.bf16.mxu0 %v4558
    %4797 = vmatmul.mubr.bf16.gmra.mxu0 %v4557
    %v4798 = vpop.f32.mrf.mxu0
    %v4799 = vadd.f32 %v4758, %v4798
    %v4800 = vpop.f32.mrf.mxu0
    %v4801 = vadd.f32 %v4760, %v4800
    %v4802 = vpop.f32.mrf.mxu0
    %v4803 = vpop.f32.mrf.mxu0
    %4804 = vdwg.mxu0
    %4805 = vmatprep.subr.bf16.mxu0 %v2268
    %4806 = vmatpush1.bf16.msra.mxu0 %v2267
    %4807 = vmatprep.subr.bf16.mxu0 %v2260
    %4808 = vmatpush1.bf16.msra.mxu0 %v2259
    %4809 = vmatprep.subr.bf16.mxu0 %v2252
    %4810 = vmatpush1.bf16.msra.mxu0 %v2251
    %4811 = vmatprep.subr.bf16.mxu0 %v2244
    %4812 = vmatpush1.bf16.msra.mxu0 %v2243
    %4813 = vmatprep.subr.bf16.mxu0 %v2236
    %4814 = vmatpush1.bf16.msra.mxu0 %v2235
    %4815 = vmatprep.subr.bf16.mxu0 %v2228
    %4816 = vmatpush1.bf16.msra.mxu0 %v2227
    %4817 = vmatprep.subr.bf16.mxu0 %v2220
    %4818 = vmatpush1.bf16.msra.mxu0 %v2219
    %4819 = vmatprep.subr.bf16.mxu0 %v2212
    %4820 = vmatpush1.bf16.msra.mxu0 %v2211
    %4821 = vmatprep.subr.bf16.mxu0 %v2332
    %4822 = vmatpush2.bf16.msra.mxu0 %v2331
    %4823 = vmatprep.subr.bf16.mxu0 %v2324
    %4824 = vmatpush2.bf16.msra.mxu0 %v2323
    %4825 = vmatprep.subr.bf16.mxu0 %v2316
    %4826 = vmatpush2.bf16.msra.mxu0 %v2315
    %4827 = vmatprep.subr.bf16.mxu0 %v2308
    %4828 = vmatpush2.bf16.msra.mxu0 %v2307
    %4829 = vmatprep.subr.bf16.mxu0 %v2300
    %4830 = vmatpush2.bf16.msra.mxu0 %v2299
    %4831 = vmatprep.subr.bf16.mxu0 %v2292
    %4832 = vmatpush2.bf16.msra.mxu0 %v2291
    %4833 = vmatprep.subr.bf16.mxu0 %v2284
    %4834 = vmatpush2.bf16.msra.mxu0 %v2283
    %4835 = vmatprep.subr.bf16.mxu0 %v2276
    %4836 = vmatpush2.bf16.msra.mxu0 %v2275
    %4837 = vmatprep.mubr.bf16.mxu0 %v4556
    %4838 = vmatmul.mubr.bf16.gmra.mxu0 %v4555
    %v4839 = vpop.f32.mrf.mxu0
    %v4840 = vadd.f32 %v540, %v4839
    %v4841 = vpop.f32.mrf.mxu0
    %v4842 = vadd.f32 %v544, %v4841
    %v4843 = vpop.f32.mrf.mxu0
    %v4844 = vpop.f32.mrf.mxu0
    %4845 = vdwg.mxu0
    %4846 = vmatprep.subr.bf16.mxu0 %v2396
    %4847 = vmatpush1.bf16.msra.mxu0 %v2395
    %4848 = vmatprep.subr.bf16.mxu0 %v2388
    %4849 = vmatpush1.bf16.msra.mxu0 %v2387
    %4850 = vmatprep.subr.bf16.mxu0 %v2380
    %4851 = vmatpush1.bf16.msra.mxu0 %v2379
    %4852 = vmatprep.subr.bf16.mxu0 %v2372
    %4853 = vmatpush1.bf16.msra.mxu0 %v2371
    %4854 = vmatprep.subr.bf16.mxu0 %v2364
    %4855 = vmatpush1.bf16.msra.mxu0 %v2363
    %4856 = vmatprep.subr.bf16.mxu0 %v2356
    %4857 = vmatpush1.bf16.msra.mxu0 %v2355
    %4858 = vmatprep.subr.bf16.mxu0 %v2348
    %4859 = vmatpush1.bf16.msra.mxu0 %v2347
    %4860 = vmatprep.subr.bf16.mxu0 %v2340
    %4861 = vmatpush1.bf16.msra.mxu0 %v2339
    %4862 = vmatprep.subr.bf16.mxu0 %v2460
    %4863 = vmatpush2.bf16.msra.mxu0 %v2459
    %4864 = vmatprep.subr.bf16.mxu0 %v2452
    %4865 = vmatpush2.bf16.msra.mxu0 %v2451
    %4866 = vmatprep.subr.bf16.mxu0 %v2444
    %4867 = vmatpush2.bf16.msra.mxu0 %v2443
    %4868 = vmatprep.subr.bf16.mxu0 %v2436
    %4869 = vmatpush2.bf16.msra.mxu0 %v2435
    %4870 = vmatprep.subr.bf16.mxu0 %v2428
    %4871 = vmatpush2.bf16.msra.mxu0 %v2427
    %4872 = vmatprep.subr.bf16.mxu0 %v2420
    %4873 = vmatpush2.bf16.msra.mxu0 %v2419
    %4874 = vmatprep.subr.bf16.mxu0 %v2412
    %4875 = vmatpush2.bf16.msra.mxu0 %v2411
    %4876 = vmatprep.subr.bf16.mxu0 %v2404
    %4877 = vmatpush2.bf16.msra.mxu0 %v2403
    %4878 = vmatprep.mubr.bf16.mxu0 %v4558
    %4879 = vmatmul.mubr.bf16.gmra.mxu0 %v4557
    %v4880 = vpop.f32.mrf.mxu0
    %v4881 = vadd.f32 %v4840, %v4880
    %v4882 = vpop.f32.mrf.mxu0
    %v4883 = vadd.f32 %v4842, %v4882
    %v4884 = vpop.f32.mrf.mxu0
    %v4885 = vpop.f32.mrf.mxu0
    %4886 = vdwg.mxu0
    %v4887 = vxor.u32 %v4635, 2147483648
    %v4888 = vxor.u32 %v4637, 2147483648
    %v4889 = vxor.u32 %v4717, 2147483648
    %v4890 = vxor.u32 %v4719, 2147483648
    %v4891 = vmul.f32 %v4887, 1.442695
    %v4892 = vpow.pop %v4891
    %v4893 = vmul.f32 %v4888, 1.442695
    %v4894 = vpow.pop %v4893
    %v4895 = vmul.f32 %v4889, 1.442695
    %v4896 = vpow.pop %v4895
    %v4897 = vmul.f32 %v4890, 1.442695
    %v4898 = vpow.pop %v4897
    %v4899 = vadd.f32 %v4892, 1.0
    %v4900 = vadd.f32 %v4894, 1.0
    %v4901 = vadd.f32 %v4896, 1.0
    %v4902 = vadd.f32 %v4898, 1.0
    %v4903 = vrcp.pop %v4899
    %v4904 = vmul.f32 1.0, %v4903
    %v4905 = vrcp.pop %v4900
    %v4906 = vmul.f32 1.0, %v4905
    %v4907 = vrcp.pop %v4901
    %v4908 = vmul.f32 1.0, %v4907
    %v4909 = vrcp.pop %v4902
    %v4910 = vmul.f32 1.0, %v4909
    %v4911 = vtanh.pop %v4799
    %v4912 = vtanh.pop %v4801
    %v4913 = vxor.u32 %v4881, 2147483648
    %v4914 = vxor.u32 %v4883, 2147483648
    %v4915 = vmul.f32 %v4913, 1.442695
    %v4916 = vpow.pop %v4915
    %v4917 = vmul.f32 %v4914, 1.442695
    %v4918 = vpow.pop %v4917
    %v4919 = vadd.f32 %v4916, 1.0
    %v4920 = vadd.f32 %v4918, 1.0
    %v4921 = vrcp.pop %v4919
    %v4922 = vmul.f32 1.0, %v4921
    %v4923 = vrcp.pop %v4920
    %v4924 = vmul.f32 1.0, %v4923
    %v4925 = vmul.f32 %v4908, %v4315
    %v4926 = vmul.f32 %v4910, %v4316
    %v4927 = vmul.f32 %v4904, %v4911
    %v4928 = vmul.f32 %v4906, %v4912
    %v4929 = vadd.f32 %v4925, %v4927
    %v4930 = vadd.f32 %v4926, %v4928
    %v4931 = vtanh.pop %v4929
    %v4932 = vtanh.pop %v4930
    %v4933 = vmul.f32 %v4922, %v4931
    %v4934 = vmul.f32 %v4924, %v4932
    %s4935 = smul.u32 3, 2
    %s4936 = smul.addr %s4935, 8
    %s4937 = scalar_lea.vmem [#allocation2], %s4936
    %4938 = vst [vmem:[%s4937] sm:$0xff] %v4933
    %4939 = vst [vmem:[%s4937 + $0x8] sm:$0xff] %v4934
    %s4940 = scalar_lea.vmem [#allocation3], 256
    %v4941 = vld [vmem:[%s4940] sm:$0xff]
    %v4942 = vld [vmem:[%s4940 + $0x8] sm:$0xff]
    %v4943 = vld [vmem:[%s4940 + $0x10] sm:$0xff]
    %v4944 = vld [vmem:[%s4940 + $0x18] sm:$0xff]
    %v4945 = vld [vmem:[%s4940 + $0x20] sm:$0xff]
    %v4946 = vld [vmem:[%s4940 + $0x28] sm:$0xff]
    %v4947 = vld [vmem:[%s4940 + $0x30] sm:$0xff]
    %v4948 = vld [vmem:[%s4940 + $0x38] sm:$0xff]
    %4949 = vmatprep.subr.bf16.mxu0 %v1014
    %4950 = vmatpush1.bf16.msra.mxu0 %v1013
    %4951 = vmatprep.subr.bf16.mxu0 %v1006
    %4952 = vmatpush1.bf16.msra.mxu0 %v1005
    %4953 = vmatprep.subr.bf16.mxu0 %v998
    %4954 = vmatpush1.bf16.msra.mxu0 %v997
    %4955 = vmatprep.subr.bf16.mxu0 %v990
    %4956 = vmatpush1.bf16.msra.mxu0 %v989
    %4957 = vmatprep.subr.bf16.mxu0 %v982
    %4958 = vmatpush1.bf16.msra.mxu0 %v981
    %4959 = vmatprep.subr.bf16.mxu0 %v974
    %4960 = vmatpush1.bf16.msra.mxu0 %v973
    %4961 = vmatprep.subr.bf16.mxu0 %v966
    %4962 = vmatpush1.bf16.msra.mxu0 %v965
    %4963 = vmatprep.subr.bf16.mxu0 %v958
    %4964 = vmatpush1.bf16.msra.mxu0 %v957
    %4965 = vmatprep.subr.bf16.mxu0 %v1078
    %4966 = vmatpush2.bf16.msra.mxu0 %v1077
    %4967 = vmatprep.subr.bf16.mxu0 %v1070
    %4968 = vmatpush2.bf16.msra.mxu0 %v1069
    %4969 = vmatprep.subr.bf16.mxu0 %v1062
    %4970 = vmatpush2.bf16.msra.mxu0 %v1061
    %4971 = vmatprep.subr.bf16.mxu0 %v1054
    %4972 = vmatpush2.bf16.msra.mxu0 %v1053
    %4973 = vmatprep.subr.bf16.mxu0 %v1046
    %4974 = vmatpush2.bf16.msra.mxu0 %v1045
    %4975 = vmatprep.subr.bf16.mxu0 %v1038
    %4976 = vmatpush2.bf16.msra.mxu0 %v1037
    %4977 = vmatprep.subr.bf16.mxu0 %v1030
    %4978 = vmatpush2.bf16.msra.mxu0 %v1029
    %4979 = vmatprep.subr.bf16.mxu0 %v1022
    %4980 = vmatpush2.bf16.msra.mxu0 %v1021
    %4981 = vmatprep.mubr.bf16.mxu0 %v4556
    %4982 = vmatmul.mubr.bf16.gmra.mxu0 %v4555
    %v4983 = vpop.f32.mrf.mxu0
    %v4984 = vadd.f32 0.0, %v4983
    %v4985 = vpop.f32.mrf.mxu0
    %v4986 = vadd.f32 0.0, %v4985
    %v4987 = vpop.f32.mrf.mxu0
    %v4988 = vpop.f32.mrf.mxu0
    %4989 = vdwg.mxu0
    %4990 = vmatprep.subr.bf16.mxu0 %v1016
    %4991 = vmatpush1.bf16.msra.mxu0 %v1015
    %4992 = vmatprep.subr.bf16.mxu0 %v1008
    %4993 = vmatpush1.bf16.msra.mxu0 %v1007
    %4994 = vmatprep.subr.bf16.mxu0 %v1000
    %4995 = vmatpush1.bf16.msra.mxu0 %v999
    %4996 = vmatprep.subr.bf16.mxu0 %v992
    %4997 = vmatpush1.bf16.msra.mxu0 %v991
    %4998 = vmatprep.subr.bf16.mxu0 %v984
    %4999 = vmatpush1.bf16.msra.mxu0 %v983
    %5000 = vmatprep.subr.bf16.mxu0 %v976
    %5001 = vmatpush1.bf16.msra.mxu0 %v975
    %5002 = vmatprep.subr.bf16.mxu0 %v968
    %5003 = vmatpush1.bf16.msra.mxu0 %v967
    %5004 = vmatprep.subr.bf16.mxu0 %v960
    %5005 = vmatpush1.bf16.msra.mxu0 %v959
    %5006 = vmatprep.subr.bf16.mxu0 %v1080
    %5007 = vmatpush2.bf16.msra.mxu0 %v1079
    %5008 = vmatprep.subr.bf16.mxu0 %v1072
    %5009 = vmatpush2.bf16.msra.mxu0 %v1071
    %5010 = vmatprep.subr.bf16.mxu0 %v1064
    %5011 = vmatpush2.bf16.msra.mxu0 %v1063
    %5012 = vmatprep.subr.bf16.mxu0 %v1056
    %5013 = vmatpush2.bf16.msra.mxu0 %v1055
    %5014 = vmatprep.subr.bf16.mxu0 %v1048
    %5015 = vmatpush2.bf16.msra.mxu0 %v1047
    %5016 = vmatprep.subr.bf16.mxu0 %v1040
    %5017 = vmatpush2.bf16.msra.mxu0 %v1039
    %5018 = vmatprep.subr.bf16.mxu0 %v1032
    %5019 = vmatpush2.bf16.msra.mxu0 %v1031
    %5020 = vmatprep.subr.bf16.mxu0 %v1024
    %5021 = vmatpush2.bf16.msra.mxu0 %v1023
    %5022 = vmatprep.mubr.bf16.mxu0 %v4556
    %5023 = vmatmul.mubr.bf16.gmra.mxu0 %v4555
    %v5024 = vpop.f32.mrf.mxu0
    %v5025 = vadd.f32 0.0, %v5024
    %v5026 = vpop.f32.mrf.mxu0
    %v5027 = vadd.f32 0.0, %v5026
    %v5028 = vpop.f32.mrf.mxu0
    %v5029 = vpop.f32.mrf.mxu0
    %5030 = vdwg.mxu0
    %5031 = vmatprep.subr.bf16.mxu0 %v1018
    %5032 = vmatpush1.bf16.msra.mxu0 %v1017
    %5033 = vmatprep.subr.bf16.mxu0 %v1010
    %5034 = vmatpush1.bf16.msra.mxu0 %v1009
    %5035 = vmatprep.subr.bf16.mxu0 %v1002
    %5036 = vmatpush1.bf16.msra.mxu0 %v1001
    %5037 = vmatprep.subr.bf16.mxu0 %v994
    %5038 = vmatpush1.bf16.msra.mxu0 %v993
    %5039 = vmatprep.subr.bf16.mxu0 %v986
    %5040 = vmatpush1.bf16.msra.mxu0 %v985
    %5041 = vmatprep.subr.bf16.mxu0 %v978
    %5042 = vmatpush1.bf16.msra.mxu0 %v977
    %5043 = vmatprep.subr.bf16.mxu0 %v970
    %5044 = vmatpush1.bf16.msra.mxu0 %v969
    %5045 = vmatprep.subr.bf16.mxu0 %v962
    %5046 = vmatpush1.bf16.msra.mxu0 %v961
    %5047 = vmatprep.subr.bf16.mxu0 %v1082
    %5048 = vmatpush2.bf16.msra.mxu0 %v1081
    %5049 = vmatprep.subr.bf16.mxu0 %v1074
    %5050 = vmatpush2.bf16.msra.mxu0 %v1073
    %5051 = vmatprep.subr.bf16.mxu0 %v1066
    %5052 = vmatpush2.bf16.msra.mxu0 %v1065
    %5053 = vmatprep.subr.bf16.mxu0 %v1058
    %5054 = vmatpush2.bf16.msra.mxu0 %v1057
    %5055 = vmatprep.subr.bf16.mxu0 %v1050
    %5056 = vmatpush2.bf16.msra.mxu0 %v1049
    %5057 = vmatprep.subr.bf16.mxu0 %v1042
    %5058 = vmatpush2.bf16.msra.mxu0 %v1041
    %5059 = vmatprep.subr.bf16.mxu0 %v1034
    %5060 = vmatpush2.bf16.msra.mxu0 %v1033
    %5061 = vmatprep.subr.bf16.mxu0 %v1026
    %5062 = vmatpush2.bf16.msra.mxu0 %v1025
    %5063 = vmatprep.mubr.bf16.mxu0 %v4556
    %5064 = vmatmul.mubr.bf16.gmra.mxu0 %v4555
    %v5065 = vpop.f32.mrf.mxu0
    %v5066 = vadd.f32 0.0, %v5065
    %v5067 = vpop.f32.mrf.mxu0
    %v5068 = vadd.f32 0.0, %v5067
    %v5069 = vpop.f32.mrf.mxu0
    %v5070 = vpop.f32.mrf.mxu0
    %5071 = vdwg.mxu0
    %5072 = vmatprep.subr.bf16.mxu0 %v1020
    %5073 = vmatpush1.bf16.msra.mxu0 %v1019
    %5074 = vmatprep.subr.bf16.mxu0 %v1012
    %5075 = vmatpush1.bf16.msra.mxu0 %v1011
    %5076 = vmatprep.subr.bf16.mxu0 %v1004
    %5077 = vmatpush1.bf16.msra.mxu0 %v1003
    %5078 = vmatprep.subr.bf16.mxu0 %v996
    %5079 = vmatpush1.bf16.msra.mxu0 %v995
    %5080 = vmatprep.subr.bf16.mxu0 %v988
    %5081 = vmatpush1.bf16.msra.mxu0 %v987
    %5082 = vmatprep.subr.bf16.mxu0 %v980
    %5083 = vmatpush1.bf16.msra.mxu0 %v979
    %5084 = vmatprep.subr.bf16.mxu0 %v972
    %5085 = vmatpush1.bf16.msra.mxu0 %v971
    %5086 = vmatprep.subr.bf16.mxu0 %v964
    %5087 = vmatpush1.bf16.msra.mxu0 %v963
    %5088 = vmatprep.subr.bf16.mxu0 %v1084
    %5089 = vmatpush2.bf16.msra.mxu0 %v1083
    %5090 = vmatprep.subr.bf16.mxu0 %v1076
    %5091 = vmatpush2.bf16.msra.mxu0 %v1075
    %5092 = vmatprep.subr.bf16.mxu0 %v1068
    %5093 = vmatpush2.bf16.msra.mxu0 %v1067
    %5094 = vmatprep.subr.bf16.mxu0 %v1060
    %5095 = vmatpush2.bf16.msra.mxu0 %v1059
    %5096 = vmatprep.subr.bf16.mxu0 %v1052
    %5097 = vmatpush2.bf16.msra.mxu0 %v1051
    %5098 = vmatprep.subr.bf16.mxu0 %v1044
    %5099 = vmatpush2.bf16.msra.mxu0 %v1043
    %5100 = vmatprep.subr.bf16.mxu0 %v1036
    %5101 = vmatpush2.bf16.msra.mxu0 %v1035
    %5102 = vmatprep.subr.bf16.mxu0 %v1028
    %5103 = vmatpush2.bf16.msra.mxu0 %v1027
    %5104 = vmatprep.mubr.bf16.mxu0 %v4556
    %5105 = vmatmul.mubr.bf16.gmra.mxu0 %v4555
    %v5106 = vpop.f32.mrf.mxu0
    %v5107 = vadd.f32 0.0, %v5106
    %v5108 = vpop.f32.mrf.mxu0
    %v5109 = vadd.f32 0.0, %v5108
    %v5110 = vpop.f32.mrf.mxu0
    %v5111 = vpop.f32.mrf.mxu0
    %5112 = vdwg.mxu0
    %v5113 = vadd.f32 %v4941, %v4984
    %v5114 = vadd.f32 %v4942, %v4986
    %v5115 = vadd.f32 %v4943, %v5025
    %v5116 = vadd.f32 %v4944, %v5027
    %v5117 = vadd.f32 %v4945, %v5066
    %v5118 = vadd.f32 %v4946, %v5068
    %v5119 = vadd.f32 %v4947, %v5107
    %v5120 = vadd.f32 %v4948, %v5109
    %v5121 = vxor.u32 %v5113, 2147483648
    %v5122 = vxor.u32 %v5114, 2147483648
    %v5123 = vxor.u32 %v5115, 2147483648
    %v5124 = vxor.u32 %v5116, 2147483648
    %v5125 = vmul.f32 %v5121, 1.442695
    %v5126 = vpow.pop %v5125
    %v5127 = vmul.f32 %v5122, 1.442695
    %v5128 = vpow.pop %v5127
    %v5129 = vmul.f32 %v5123, 1.442695
    %v5130 = vpow.pop %v5129
    %v5131 = vmul.f32 %v5124, 1.442695
    %v5132 = vpow.pop %v5131
    %v5133 = vadd.f32 %v5126, 1.0
    %v5134 = vadd.f32 %v5128, 1.0
    %v5135 = vadd.f32 %v5130, 1.0
    %v5136 = vadd.f32 %v5132, 1.0
    %v5137 = vrcp.pop %v5133
    %v5138 = vmul.f32 1.0, %v5137
    %v5139 = vrcp.pop %v5134
    %v5140 = vmul.f32 1.0, %v5139
    %v5141 = vrcp.pop %v5135
    %v5142 = vmul.f32 1.0, %v5141
    %v5143 = vrcp.pop %v5136
    %v5144 = vmul.f32 1.0, %v5143
    %v5145 = vtanh.pop %v5117
    %v5146 = vtanh.pop %v5118
    %v5147 = vxor.u32 %v5119, 2147483648
    %v5148 = vxor.u32 %v5120, 2147483648
    %v5149 = vmul.f32 %v5147, 1.442695
    %v5150 = vpow.pop %v5149
    %v5151 = vmul.f32 %v5148, 1.442695
    %v5152 = vpow.pop %v5151
    %v5153 = vadd.f32 %v5150, 1.0
    %v5154 = vadd.f32 %v5152, 1.0
    %v5155 = vrcp.pop %v5153
    %v5156 = vmul.f32 1.0, %v5155
    %v5157 = vrcp.pop %v5154
    %v5158 = vmul.f32 1.0, %v5157
    %v5159 = vmul.f32 %v5142, %v4549
    %v5160 = vmul.f32 %v5144, %v4550
    %v5161 = vmul.f32 %v5138, %v5145
    %v5162 = vmul.f32 %v5140, %v5146
    %v5163 = vadd.f32 %v5159, %v5161
    %v5164 = vadd.f32 %v5160, %v5162
    %v5165 = vtanh.pop %v5163
    %v5166 = vtanh.pop %v5164
    %v5167 = vmul.f32 %v5156, %v5165
    %v5168 = vmul.f32 %v5158, %v5166
    %v5169 = vpack.c.bf16 %v5167, %v5167
    %v5170 = vpack.c.bf16 %v5168, %v5168
    %v5171 = vpack.c.bf16 %v4933, %v4933
    %v5172 = vpack.c.bf16 %v4934, %v4934
    %5173 = vmatprep.subr.bf16.mxu0 %v2262
    %5174 = vmatpush1.bf16.msra.mxu0 %v2261
    %5175 = vmatprep.subr.bf16.mxu0 %v2254
    %5176 = vmatpush1.bf16.msra.mxu0 %v2253
    %5177 = vmatprep.subr.bf16.mxu0 %v2246
    %5178 = vmatpush1.bf16.msra.mxu0 %v2245
    %5179 = vmatprep.subr.bf16.mxu0 %v2238
    %5180 = vmatpush1.bf16.msra.mxu0 %v2237
    %5181 = vmatprep.subr.bf16.mxu0 %v2230
    %5182 = vmatpush1.bf16.msra.mxu0 %v2229
    %5183 = vmatprep.subr.bf16.mxu0 %v2222
    %5184 = vmatpush1.bf16.msra.mxu0 %v2221
    %5185 = vmatprep.subr.bf16.mxu0 %v2214
    %5186 = vmatpush1.bf16.msra.mxu0 %v2213
    %5187 = vmatprep.subr.bf16.mxu0 %v2206
    %5188 = vmatpush1.bf16.msra.mxu0 %v2205
    %5189 = vmatprep.subr.bf16.mxu0 %v2326
    %5190 = vmatpush2.bf16.msra.mxu0 %v2325
    %5191 = vmatprep.subr.bf16.mxu0 %v2318
    %5192 = vmatpush2.bf16.msra.mxu0 %v2317
    %5193 = vmatprep.subr.bf16.mxu0 %v2310
    %5194 = vmatpush2.bf16.msra.mxu0 %v2309
    %5195 = vmatprep.subr.bf16.mxu0 %v2302
    %5196 = vmatpush2.bf16.msra.mxu0 %v2301
    %5197 = vmatprep.subr.bf16.mxu0 %v2294
    %5198 = vmatpush2.bf16.msra.mxu0 %v2293
    %5199 = vmatprep.subr.bf16.mxu0 %v2286
    %5200 = vmatpush2.bf16.msra.mxu0 %v2285
    %5201 = vmatprep.subr.bf16.mxu0 %v2278
    %5202 = vmatpush2.bf16.msra.mxu0 %v2277
    %5203 = vmatprep.subr.bf16.mxu0 %v2270
    %5204 = vmatpush2.bf16.msra.mxu0 %v2269
    %5205 = vmatprep.mubr.bf16.mxu0 %v5170
    %5206 = vmatmul.mubr.bf16.gmra.mxu0 %v5169
    %v5207 = vpop.f32.mrf.mxu0
    %v5208 = vadd.f32 %v516, %v5207
    %v5209 = vpop.f32.mrf.mxu0
    %v5210 = vadd.f32 %v520, %v5209
    %v5211 = vpop.f32.mrf.mxu0
    %v5212 = vpop.f32.mrf.mxu0
    %5213 = vdwg.mxu0
    %5214 = vmatprep.subr.bf16.mxu0 %v2390
    %5215 = vmatpush1.bf16.msra.mxu0 %v2389
    %5216 = vmatprep.subr.bf16.mxu0 %v2382
    %5217 = vmatpush1.bf16.msra.mxu0 %v2381
    %5218 = vmatprep.subr.bf16.mxu0 %v2374
    %5219 = vmatpush1.bf16.msra.mxu0 %v2373
    %5220 = vmatprep.subr.bf16.mxu0 %v2366
    %5221 = vmatpush1.bf16.msra.mxu0 %v2365
    %5222 = vmatprep.subr.bf16.mxu0 %v2358
    %5223 = vmatpush1.bf16.msra.mxu0 %v2357
    %5224 = vmatprep.subr.bf16.mxu0 %v2350
    %5225 = vmatpush1.bf16.msra.mxu0 %v2349
    %5226 = vmatprep.subr.bf16.mxu0 %v2342
    %5227 = vmatpush1.bf16.msra.mxu0 %v2341
    %5228 = vmatprep.subr.bf16.mxu0 %v2334
    %5229 = vmatpush1.bf16.msra.mxu0 %v2333
    %5230 = vmatprep.subr.bf16.mxu0 %v2454
    %5231 = vmatpush2.bf16.msra.mxu0 %v2453
    %5232 = vmatprep.subr.bf16.mxu0 %v2446
    %5233 = vmatpush2.bf16.msra.mxu0 %v2445
    %5234 = vmatprep.subr.bf16.mxu0 %v2438
    %5235 = vmatpush2.bf16.msra.mxu0 %v2437
    %5236 = vmatprep.subr.bf16.mxu0 %v2430
    %5237 = vmatpush2.bf16.msra.mxu0 %v2429
    %5238 = vmatprep.subr.bf16.mxu0 %v2422
    %5239 = vmatpush2.bf16.msra.mxu0 %v2421
    %5240 = vmatprep.subr.bf16.mxu0 %v2414
    %5241 = vmatpush2.bf16.msra.mxu0 %v2413
    %5242 = vmatprep.subr.bf16.mxu0 %v2406
    %5243 = vmatpush2.bf16.msra.mxu0 %v2405
    %5244 = vmatprep.subr.bf16.mxu0 %v2398
    %5245 = vmatpush2.bf16.msra.mxu0 %v2397
    %5246 = vmatprep.mubr.bf16.mxu0 %v5172
    %5247 = vmatmul.mubr.bf16.gmra.mxu0 %v5171
    %v5248 = vpop.f32.mrf.mxu0
    %v5249 = vadd.f32 %v5208, %v5248
    %v5250 = vpop.f32.mrf.mxu0
    %v5251 = vadd.f32 %v5210, %v5250
    %v5252 = vpop.f32.mrf.mxu0
    %v5253 = vpop.f32.mrf.mxu0
    %5254 = vdwg.mxu0
    %5255 = vmatprep.subr.bf16.mxu0 %v2264
    %5256 = vmatpush1.bf16.msra.mxu0 %v2263
    %5257 = vmatprep.subr.bf16.mxu0 %v2256
    %5258 = vmatpush1.bf16.msra.mxu0 %v2255
    %5259 = vmatprep.subr.bf16.mxu0 %v2248
    %5260 = vmatpush1.bf16.msra.mxu0 %v2247
    %5261 = vmatprep.subr.bf16.mxu0 %v2240
    %5262 = vmatpush1.bf16.msra.mxu0 %v2239
    %5263 = vmatprep.subr.bf16.mxu0 %v2232
    %5264 = vmatpush1.bf16.msra.mxu0 %v2231
    %5265 = vmatprep.subr.bf16.mxu0 %v2224
    %5266 = vmatpush1.bf16.msra.mxu0 %v2223
    %5267 = vmatprep.subr.bf16.mxu0 %v2216
    %5268 = vmatpush1.bf16.msra.mxu0 %v2215
    %5269 = vmatprep.subr.bf16.mxu0 %v2208
    %5270 = vmatpush1.bf16.msra.mxu0 %v2207
    %5271 = vmatprep.subr.bf16.mxu0 %v2328
    %5272 = vmatpush2.bf16.msra.mxu0 %v2327
    %5273 = vmatprep.subr.bf16.mxu0 %v2320
    %5274 = vmatpush2.bf16.msra.mxu0 %v2319
    %5275 = vmatprep.subr.bf16.mxu0 %v2312
    %5276 = vmatpush2.bf16.msra.mxu0 %v2311
    %5277 = vmatprep.subr.bf16.mxu0 %v2304
    %5278 = vmatpush2.bf16.msra.mxu0 %v2303
    %5279 = vmatprep.subr.bf16.mxu0 %v2296
    %5280 = vmatpush2.bf16.msra.mxu0 %v2295
    %5281 = vmatprep.subr.bf16.mxu0 %v2288
    %5282 = vmatpush2.bf16.msra.mxu0 %v2287
    %5283 = vmatprep.subr.bf16.mxu0 %v2280
    %5284 = vmatpush2.bf16.msra.mxu0 %v2279
    %5285 = vmatprep.subr.bf16.mxu0 %v2272
    %5286 = vmatpush2.bf16.msra.mxu0 %v2271
    %5287 = vmatprep.mubr.bf16.mxu0 %v5170
    %5288 = vmatmul.mubr.bf16.gmra.mxu0 %v5169
    %v5289 = vpop.f32.mrf.mxu0
    %v5290 = vadd.f32 %v524, %v5289
    %v5291 = vpop.f32.mrf.mxu0
    %v5292 = vadd.f32 %v528, %v5291
    %v5293 = vpop.f32.mrf.mxu0
    %v5294 = vpop.f32.mrf.mxu0
    %5295 = vdwg.mxu0
    %5296 = vmatprep.subr.bf16.mxu0 %v2392
    %5297 = vmatpush1.bf16.msra.mxu0 %v2391
    %5298 = vmatprep.subr.bf16.mxu0 %v2384
    %5299 = vmatpush1.bf16.msra.mxu0 %v2383
    %5300 = vmatprep.subr.bf16.mxu0 %v2376
    %5301 = vmatpush1.bf16.msra.mxu0 %v2375
    %5302 = vmatprep.subr.bf16.mxu0 %v2368
    %5303 = vmatpush1.bf16.msra.mxu0 %v2367
    %5304 = vmatprep.subr.bf16.mxu0 %v2360
    %5305 = vmatpush1.bf16.msra.mxu0 %v2359
    %5306 = vmatprep.subr.bf16.mxu0 %v2352
    %5307 = vmatpush1.bf16.msra.mxu0 %v2351
    %5308 = vmatprep.subr.bf16.mxu0 %v2344
    %5309 = vmatpush1.bf16.msra.mxu0 %v2343
    %5310 = vmatprep.subr.bf16.mxu0 %v2336
    %5311 = vmatpush1.bf16.msra.mxu0 %v2335
    %5312 = vmatprep.subr.bf16.mxu0 %v2456
    %5313 = vmatpush2.bf16.msra.mxu0 %v2455
    %5314 = vmatprep.subr.bf16.mxu0 %v2448
    %5315 = vmatpush2.bf16.msra.mxu0 %v2447
    %5316 = vmatprep.subr.bf16.mxu0 %v2440
    %5317 = vmatpush2.bf16.msra.mxu0 %v2439
    %5318 = vmatprep.subr.bf16.mxu0 %v2432
    %5319 = vmatpush2.bf16.msra.mxu0 %v2431
    %5320 = vmatprep.subr.bf16.mxu0 %v2424
    %5321 = vmatpush2.bf16.msra.mxu0 %v2423
    %5322 = vmatprep.subr.bf16.mxu0 %v2416
    %5323 = vmatpush2.bf16.msra.mxu0 %v2415
    %5324 = vmatprep.subr.bf16.mxu0 %v2408
    %5325 = vmatpush2.bf16.msra.mxu0 %v2407
    %5326 = vmatprep.subr.bf16.mxu0 %v2400
    %5327 = vmatpush2.bf16.msra.mxu0 %v2399
    %5328 = vmatprep.mubr.bf16.mxu0 %v5172
    %5329 = vmatmul.mubr.bf16.gmra.mxu0 %v5171
    %v5330 = vpop.f32.mrf.mxu0
    %v5331 = vadd.f32 %v5290, %v5330
    %v5332 = vpop.f32.mrf.mxu0
    %v5333 = vadd.f32 %v5292, %v5332
    %v5334 = vpop.f32.mrf.mxu0
    %v5335 = vpop.f32.mrf.mxu0
    %5336 = vdwg.mxu0
    %5337 = vmatprep.subr.bf16.mxu0 %v2266
    %5338 = vmatpush1.bf16.msra.mxu0 %v2265
    %5339 = vmatprep.subr.bf16.mxu0 %v2258
    %5340 = vmatpush1.bf16.msra.mxu0 %v2257
    %5341 = vmatprep.subr.bf16.mxu0 %v2250
    %5342 = vmatpush1.bf16.msra.mxu0 %v2249
    %5343 = vmatprep.subr.bf16.mxu0 %v2242
    %5344 = vmatpush1.bf16.msra.mxu0 %v2241
    %5345 = vmatprep.subr.bf16.mxu0 %v2234
    %5346 = vmatpush1.bf16.msra.mxu0 %v2233
    %5347 = vmatprep.subr.bf16.mxu0 %v2226
    %5348 = vmatpush1.bf16.msra.mxu0 %v2225
    %5349 = vmatprep.subr.bf16.mxu0 %v2218
    %5350 = vmatpush1.bf16.msra.mxu0 %v2217
    %5351 = vmatprep.subr.bf16.mxu0 %v2210
    %5352 = vmatpush1.bf16.msra.mxu0 %v2209
    %5353 = vmatprep.subr.bf16.mxu0 %v2330
    %5354 = vmatpush2.bf16.msra.mxu0 %v2329
    %5355 = vmatprep.subr.bf16.mxu0 %v2322
    %5356 = vmatpush2.bf16.msra.mxu0 %v2321
    %5357 = vmatprep.subr.bf16.mxu0 %v2314
    %5358 = vmatpush2.bf16.msra.mxu0 %v2313
    %5359 = vmatprep.subr.bf16.mxu0 %v2306
    %5360 = vmatpush2.bf16.msra.mxu0 %v2305
    %5361 = vmatprep.subr.bf16.mxu0 %v2298
    %5362 = vmatpush2.bf16.msra.mxu0 %v2297
    %5363 = vmatprep.subr.bf16.mxu0 %v2290
    %5364 = vmatpush2.bf16.msra.mxu0 %v2289
    %5365 = vmatprep.subr.bf16.mxu0 %v2282
    %5366 = vmatpush2.bf16.msra.mxu0 %v2281
    %5367 = vmatprep.subr.bf16.mxu0 %v2274
    %5368 = vmatpush2.bf16.msra.mxu0 %v2273
    %5369 = vmatprep.mubr.bf16.mxu0 %v5170
    %5370 = vmatmul.mubr.bf16.gmra.mxu0 %v5169
    %v5371 = vpop.f32.mrf.mxu0
    %v5372 = vadd.f32 %v532, %v5371
    %v5373 = vpop.f32.mrf.mxu0
    %v5374 = vadd.f32 %v536, %v5373
    %v5375 = vpop.f32.mrf.mxu0
    %v5376 = vpop.f32.mrf.mxu0
    %5377 = vdwg.mxu0
    %5378 = vmatprep.subr.bf16.mxu0 %v2394
    %5379 = vmatpush1.bf16.msra.mxu0 %v2393
    %5380 = vmatprep.subr.bf16.mxu0 %v2386
    %5381 = vmatpush1.bf16.msra.mxu0 %v2385
    %5382 = vmatprep.subr.bf16.mxu0 %v2378
    %5383 = vmatpush1.bf16.msra.mxu0 %v2377
    %5384 = vmatprep.subr.bf16.mxu0 %v2370
    %5385 = vmatpush1.bf16.msra.mxu0 %v2369
    %5386 = vmatprep.subr.bf16.mxu0 %v2362
    %5387 = vmatpush1.bf16.msra.mxu0 %v2361
    %5388 = vmatprep.subr.bf16.mxu0 %v2354
    %5389 = vmatpush1.bf16.msra.mxu0 %v2353
    %5390 = vmatprep.subr.bf16.mxu0 %v2346
    %5391 = vmatpush1.bf16.msra.mxu0 %v2345
    %5392 = vmatprep.subr.bf16.mxu0 %v2338
    %5393 = vmatpush1.bf16.msra.mxu0 %v2337
    %5394 = vmatprep.subr.bf16.mxu0 %v2458
    %5395 = vmatpush2.bf16.msra.mxu0 %v2457
    %5396 = vmatprep.subr.bf16.mxu0 %v2450
    %5397 = vmatpush2.bf16.msra.mxu0 %v2449
    %5398 = vmatprep.subr.bf16.mxu0 %v2442
    %5399 = vmatpush2.bf16.msra.mxu0 %v2441
    %5400 = vmatprep.subr.bf16.mxu0 %v2434
    %5401 = vmatpush2.bf16.msra.mxu0 %v2433
    %5402 = vmatprep.subr.bf16.mxu0 %v2426
    %5403 = vmatpush2.bf16.msra.mxu0 %v2425
    %5404 = vmatprep.subr.bf16.mxu0 %v2418
    %5405 = vmatpush2.bf16.msra.mxu0 %v2417
    %5406 = vmatprep.subr.bf16.mxu0 %v2410
    %5407 = vmatpush2.bf16.msra.mxu0 %v2409
    %5408 = vmatprep.subr.bf16.mxu0 %v2402
    %5409 = vmatpush2.bf16.msra.mxu0 %v2401
    %5410 = vmatprep.mubr.bf16.mxu0 %v5172
    %5411 = vmatmul.mubr.bf16.gmra.mxu0 %v5171
    %v5412 = vpop.f32.mrf.mxu0
    %v5413 = vadd.f32 %v5372, %v5412
    %v5414 = vpop.f32.mrf.mxu0
    %v5415 = vadd.f32 %v5374, %v5414
    %v5416 = vpop.f32.mrf.mxu0
    %v5417 = vpop.f32.mrf.mxu0
    %5418 = vdwg.mxu0
    %5419 = vmatprep.subr.bf16.mxu0 %v2268
    %5420 = vmatpush1.bf16.msra.mxu0 %v2267
    %5421 = vmatprep.subr.bf16.mxu0 %v2260
    %5422 = vmatpush1.bf16.msra.mxu0 %v2259
    %5423 = vmatprep.subr.bf16.mxu0 %v2252
    %5424 = vmatpush1.bf16.msra.mxu0 %v2251
    %5425 = vmatprep.subr.bf16.mxu0 %v2244
    %5426 = vmatpush1.bf16.msra.mxu0 %v2243
    %5427 = vmatprep.subr.bf16.mxu0 %v2236
    %5428 = vmatpush1.bf16.msra.mxu0 %v2235
    %5429 = vmatprep.subr.bf16.mxu0 %v2228
    %5430 = vmatpush1.bf16.msra.mxu0 %v2227
    %5431 = vmatprep.subr.bf16.mxu0 %v2220
    %5432 = vmatpush1.bf16.msra.mxu0 %v2219
    %5433 = vmatprep.subr.bf16.mxu0 %v2212
    %5434 = vmatpush1.bf16.msra.mxu0 %v2211
    %5435 = vmatprep.subr.bf16.mxu0 %v2332
    %5436 = vmatpush2.bf16.msra.mxu0 %v2331
    %5437 = vmatprep.subr.bf16.mxu0 %v2324
    %5438 = vmatpush2.bf16.msra.mxu0 %v2323
    %5439 = vmatprep.subr.bf16.mxu0 %v2316
    %5440 = vmatpush2.bf16.msra.mxu0 %v2315
    %5441 = vmatprep.subr.bf16.mxu0 %v2308
    %5442 = vmatpush2.bf16.msra.mxu0 %v2307
    %5443 = vmatprep.subr.bf16.mxu0 %v2300
    %5444 = vmatpush2.bf16.msra.mxu0 %v2299
    %5445 = vmatprep.subr.bf16.mxu0 %v2292
    %5446 = vmatpush2.bf16.msra.mxu0 %v2291
    %5447 = vmatprep.subr.bf16.mxu0 %v2284
    %5448 = vmatpush2.bf16.msra.mxu0 %v2283
    %5449 = vmatprep.subr.bf16.mxu0 %v2276
    %5450 = vmatpush2.bf16.msra.mxu0 %v2275
    %5451 = vmatprep.mubr.bf16.mxu0 %v5170
    %5452 = vmatmul.mubr.bf16.gmra.mxu0 %v5169
    %v5453 = vpop.f32.mrf.mxu0
    %v5454 = vadd.f32 %v540, %v5453
    %v5455 = vpop.f32.mrf.mxu0
    %v5456 = vadd.f32 %v544, %v5455
    %v5457 = vpop.f32.mrf.mxu0
    %v5458 = vpop.f32.mrf.mxu0
    %5459 = vdwg.mxu0
    %5460 = vmatprep.subr.bf16.mxu0 %v2396
    %5461 = vmatpush1.bf16.msra.mxu0 %v2395
    %5462 = vmatprep.subr.bf16.mxu0 %v2388
    %5463 = vmatpush1.bf16.msra.mxu0 %v2387
    %5464 = vmatprep.subr.bf16.mxu0 %v2380
    %5465 = vmatpush1.bf16.msra.mxu0 %v2379
    %5466 = vmatprep.subr.bf16.mxu0 %v2372
    %5467 = vmatpush1.bf16.msra.mxu0 %v2371
    %5468 = vmatprep.subr.bf16.mxu0 %v2364
    %5469 = vmatpush1.bf16.msra.mxu0 %v2363
    %5470 = vmatprep.subr.bf16.mxu0 %v2356
    %5471 = vmatpush1.bf16.msra.mxu0 %v2355
    %5472 = vmatprep.subr.bf16.mxu0 %v2348
    %5473 = vmatpush1.bf16.msra.mxu0 %v2347
    %5474 = vmatprep.subr.bf16.mxu0 %v2340
    %5475 = vmatpush1.bf16.msra.mxu0 %v2339
    %5476 = vmatprep.subr.bf16.mxu0 %v2460
    %5477 = vmatpush2.bf16.msra.mxu0 %v2459
    %5478 = vmatprep.subr.bf16.mxu0 %v2452
    %5479 = vmatpush2.bf16.msra.mxu0 %v2451
    %5480 = vmatprep.subr.bf16.mxu0 %v2444
    %5481 = vmatpush2.bf16.msra.mxu0 %v2443
    %5482 = vmatprep.subr.bf16.mxu0 %v2436
    %5483 = vmatpush2.bf16.msra.mxu0 %v2435
    %5484 = vmatprep.subr.bf16.mxu0 %v2428
    %5485 = vmatpush2.bf16.msra.mxu0 %v2427
    %5486 = vmatprep.subr.bf16.mxu0 %v2420
    %5487 = vmatpush2.bf16.msra.mxu0 %v2419
    %5488 = vmatprep.subr.bf16.mxu0 %v2412
    %5489 = vmatpush2.bf16.msra.mxu0 %v2411
    %5490 = vmatprep.subr.bf16.mxu0 %v2404
    %5491 = vmatpush2.bf16.msra.mxu0 %v2403
    %5492 = vmatprep.mubr.bf16.mxu0 %v5172
    %5493 = vmatmul.mubr.bf16.gmra.mxu0 %v5171
    %v5494 = vpop.f32.mrf.mxu0
    %v5495 = vadd.f32 %v5454, %v5494
    %v5496 = vpop.f32.mrf.mxu0
    %v5497 = vadd.f32 %v5456, %v5496
    %v5498 = vpop.f32.mrf.mxu0
    %v5499 = vpop.f32.mrf.mxu0
    %5500 = vdwg.mxu0
    %v5501 = vxor.u32 %v5249, 2147483648
    %v5502 = vxor.u32 %v5251, 2147483648
    %v5503 = vxor.u32 %v5331, 2147483648
    %v5504 = vxor.u32 %v5333, 2147483648
    %v5505 = vmul.f32 %v5501, 1.442695
    %v5506 = vpow.pop %v5505
    %v5507 = vmul.f32 %v5502, 1.442695
    %v5508 = vpow.pop %v5507
    %v5509 = vmul.f32 %v5503, 1.442695
    %v5510 = vpow.pop %v5509
    %v5511 = vmul.f32 %v5504, 1.442695
    %v5512 = vpow.pop %v5511
    %v5513 = vadd.f32 %v5506, 1.0
    %v5514 = vadd.f32 %v5508, 1.0
    %v5515 = vadd.f32 %v5510, 1.0
    %v5516 = vadd.f32 %v5512, 1.0
    %v5517 = vrcp.pop %v5513
    %v5518 = vmul.f32 1.0, %v5517
    %v5519 = vrcp.pop %v5514
    %v5520 = vmul.f32 1.0, %v5519
    %v5521 = vrcp.pop %v5515
    %v5522 = vmul.f32 1.0, %v5521
    %v5523 = vrcp.pop %v5516
    %v5524 = vmul.f32 1.0, %v5523
    %v5525 = vtanh.pop %v5413
    %v5526 = vtanh.pop %v5415
    %v5527 = vxor.u32 %v5495, 2147483648
    %v5528 = vxor.u32 %v5497, 2147483648
    %v5529 = vmul.f32 %v5527, 1.442695
    %v5530 = vpow.pop %v5529
    %v5531 = vmul.f32 %v5528, 1.442695
    %v5532 = vpow.pop %v5531
    %v5533 = vadd.f32 %v5530, 1.0
    %v5534 = vadd.f32 %v5532, 1.0
    %v5535 = vrcp.pop %v5533
    %v5536 = vmul.f32 1.0, %v5535
    %v5537 = vrcp.pop %v5534
    %v5538 = vmul.f32 1.0, %v5537
    %v5539 = vmul.f32 %v5522, %v4929
    %v5540 = vmul.f32 %v5524, %v4930
    %v5541 = vmul.f32 %v5518, %v5525
    %v5542 = vmul.f32 %v5520, %v5526
    %v5543 = vadd.f32 %v5539, %v5541
    %v5544 = vadd.f32 %v5540, %v5542
    %v5545 = vtanh.pop %v5543
    %v5546 = vtanh.pop %v5544
    %v5547 = vmul.f32 %v5536, %v5545
    %v5548 = vmul.f32 %v5538, %v5546
    %s5549 = smul.u32 4, 2
    %s5550 = smul.addr %s5549, 8
    %s5551 = scalar_lea.vmem [#allocation2], %s5550
    %5552 = vst [vmem:[%s5551] sm:$0xff] %v5547
    %5553 = vst [vmem:[%s5551 + $0x8] sm:$0xff] %v5548
    %s5554 = scalar_lea.vmem [#allocation3], 320
    %v5555 = vld [vmem:[%s5554] sm:$0xff]
    %v5556 = vld [vmem:[%s5554 + $0x8] sm:$0xff]
    %v5557 = vld [vmem:[%s5554 + $0x10] sm:$0xff]
    %v5558 = vld [vmem:[%s5554 + $0x18] sm:$0xff]
    %v5559 = vld [vmem:[%s5554 + $0x20] sm:$0xff]
    %v5560 = vld [vmem:[%s5554 + $0x28] sm:$0xff]
    %v5561 = vld [vmem:[%s5554 + $0x30] sm:$0xff]
    %v5562 = vld [vmem:[%s5554 + $0x38] sm:$0xff]
    %5563 = vmatprep.subr.bf16.mxu0 %v1014
    %5564 = vmatpush1.bf16.msra.mxu0 %v1013
    %5565 = vmatprep.subr.bf16.mxu0 %v1006
    %5566 = vmatpush1.bf16.msra.mxu0 %v1005
    %5567 = vmatprep.subr.bf16.mxu0 %v998
    %5568 = vmatpush1.bf16.msra.mxu0 %v997
    %5569 = vmatprep.subr.bf16.mxu0 %v990
    %5570 = vmatpush1.bf16.msra.mxu0 %v989
    %5571 = vmatprep.subr.bf16.mxu0 %v982
    %5572 = vmatpush1.bf16.msra.mxu0 %v981
    %5573 = vmatprep.subr.bf16.mxu0 %v974
    %5574 = vmatpush1.bf16.msra.mxu0 %v973
    %5575 = vmatprep.subr.bf16.mxu0 %v966
    %5576 = vmatpush1.bf16.msra.mxu0 %v965
    %5577 = vmatprep.subr.bf16.mxu0 %v958
    %5578 = vmatpush1.bf16.msra.mxu0 %v957
    %5579 = vmatprep.subr.bf16.mxu0 %v1078
    %5580 = vmatpush2.bf16.msra.mxu0 %v1077
    %5581 = vmatprep.subr.bf16.mxu0 %v1070
    %5582 = vmatpush2.bf16.msra.mxu0 %v1069
    %5583 = vmatprep.subr.bf16.mxu0 %v1062
    %5584 = vmatpush2.bf16.msra.mxu0 %v1061
    %5585 = vmatprep.subr.bf16.mxu0 %v1054
    %5586 = vmatpush2.bf16.msra.mxu0 %v1053
    %5587 = vmatprep.subr.bf16.mxu0 %v1046
    %5588 = vmatpush2.bf16.msra.mxu0 %v1045
    %5589 = vmatprep.subr.bf16.mxu0 %v1038
    %5590 = vmatpush2.bf16.msra.mxu0 %v1037
    %5591 = vmatprep.subr.bf16.mxu0 %v1030
    %5592 = vmatpush2.bf16.msra.mxu0 %v1029
    %5593 = vmatprep.subr.bf16.mxu0 %v1022
    %5594 = vmatpush2.bf16.msra.mxu0 %v1021
    %5595 = vmatprep.mubr.bf16.mxu0 %v5170
    %5596 = vmatmul.mubr.bf16.gmra.mxu0 %v5169
    %v5597 = vpop.f32.mrf.mxu0
    %v5598 = vadd.f32 0.0, %v5597
    %v5599 = vpop.f32.mrf.mxu0
    %v5600 = vadd.f32 0.0, %v5599
    %v5601 = vpop.f32.mrf.mxu0
    %v5602 = vpop.f32.mrf.mxu0
    %5603 = vdwg.mxu0
    %5604 = vmatprep.subr.bf16.mxu0 %v1016
    %5605 = vmatpush1.bf16.msra.mxu0 %v1015
    %5606 = vmatprep.subr.bf16.mxu0 %v1008
    %5607 = vmatpush1.bf16.msra.mxu0 %v1007
    %5608 = vmatprep.subr.bf16.mxu0 %v1000
    %5609 = vmatpush1.bf16.msra.mxu0 %v999
    %5610 = vmatprep.subr.bf16.mxu0 %v992
    %5611 = vmatpush1.bf16.msra.mxu0 %v991
    %5612 = vmatprep.subr.bf16.mxu0 %v984
    %5613 = vmatpush1.bf16.msra.mxu0 %v983
    %5614 = vmatprep.subr.bf16.mxu0 %v976
    %5615 = vmatpush1.bf16.msra.mxu0 %v975
    %5616 = vmatprep.subr.bf16.mxu0 %v968
    %5617 = vmatpush1.bf16.msra.mxu0 %v967
    %5618 = vmatprep.subr.bf16.mxu0 %v960
    %5619 = vmatpush1.bf16.msra.mxu0 %v959
    %5620 = vmatprep.subr.bf16.mxu0 %v1080
    %5621 = vmatpush2.bf16.msra.mxu0 %v1079
    %5622 = vmatprep.subr.bf16.mxu0 %v1072
    %5623 = vmatpush2.bf16.msra.mxu0 %v1071
    %5624 = vmatprep.subr.bf16.mxu0 %v1064
    %5625 = vmatpush2.bf16.msra.mxu0 %v1063
    %5626 = vmatprep.subr.bf16.mxu0 %v1056
    %5627 = vmatpush2.bf16.msra.mxu0 %v1055
    %5628 = vmatprep.subr.bf16.mxu0 %v1048
    %5629 = vmatpush2.bf16.msra.mxu0 %v1047
    %5630 = vmatprep.subr.bf16.mxu0 %v1040
    %5631 = vmatpush2.bf16.msra.mxu0 %v1039
    %5632 = vmatprep.subr.bf16.mxu0 %v1032
    %5633 = vmatpush2.bf16.msra.mxu0 %v1031
    %5634 = vmatprep.subr.bf16.mxu0 %v1024
    %5635 = vmatpush2.bf16.msra.mxu0 %v1023
    %5636 = vmatprep.mubr.bf16.mxu0 %v5170
    %5637 = vmatmul.mubr.bf16.gmra.mxu0 %v5169
    %v5638 = vpop.f32.mrf.mxu0
    %v5639 = vadd.f32 0.0, %v5638
    %v5640 = vpop.f32.mrf.mxu0
    %v5641 = vadd.f32 0.0, %v5640
    %v5642 = vpop.f32.mrf.mxu0
    %v5643 = vpop.f32.mrf.mxu0
    %5644 = vdwg.mxu0
    %5645 = vmatprep.subr.bf16.mxu0 %v1018
    %5646 = vmatpush1.bf16.msra.mxu0 %v1017
    %5647 = vmatprep.subr.bf16.mxu0 %v1010
    %5648 = vmatpush1.bf16.msra.mxu0 %v1009
    %5649 = vmatprep.subr.bf16.mxu0 %v1002
    %5650 = vmatpush1.bf16.msra.mxu0 %v1001
    %5651 = vmatprep.subr.bf16.mxu0 %v994
    %5652 = vmatpush1.bf16.msra.mxu0 %v993
    %5653 = vmatprep.subr.bf16.mxu0 %v986
    %5654 = vmatpush1.bf16.msra.mxu0 %v985
    %5655 = vmatprep.subr.bf16.mxu0 %v978
    %5656 = vmatpush1.bf16.msra.mxu0 %v977
    %5657 = vmatprep.subr.bf16.mxu0 %v970
    %5658 = vmatpush1.bf16.msra.mxu0 %v969
    %5659 = vmatprep.subr.bf16.mxu0 %v962
    %5660 = vmatpush1.bf16.msra.mxu0 %v961
    %5661 = vmatprep.subr.bf16.mxu0 %v1082
    %5662 = vmatpush2.bf16.msra.mxu0 %v1081
    %5663 = vmatprep.subr.bf16.mxu0 %v1074
    %5664 = vmatpush2.bf16.msra.mxu0 %v1073
    %5665 = vmatprep.subr.bf16.mxu0 %v1066
    %5666 = vmatpush2.bf16.msra.mxu0 %v1065
    %5667 = vmatprep.subr.bf16.mxu0 %v1058
    %5668 = vmatpush2.bf16.msra.mxu0 %v1057
    %5669 = vmatprep.subr.bf16.mxu0 %v1050
    %5670 = vmatpush2.bf16.msra.mxu0 %v1049
    %5671 = vmatprep.subr.bf16.mxu0 %v1042
    %5672 = vmatpush2.bf16.msra.mxu0 %v1041
    %5673 = vmatprep.subr.bf16.mxu0 %v1034
    %5674 = vmatpush2.bf16.msra.mxu0 %v1033
    %5675 = vmatprep.subr.bf16.mxu0 %v1026
    %5676 = vmatpush2.bf16.msra.mxu0 %v1025
    %5677 = vmatprep.mubr.bf16.mxu0 %v5170
    %5678 = vmatmul.mubr.bf16.gmra.mxu0 %v5169
    %v5679 = vpop.f32.mrf.mxu0
    %v5680 = vadd.f32 0.0, %v5679
    %v5681 = vpop.f32.mrf.mxu0
    %v5682 = vadd.f32 0.0, %v5681
    %v5683 = vpop.f32.mrf.mxu0
    %v5684 = vpop.f32.mrf.mxu0
    %5685 = vdwg.mxu0
    %5686 = vmatprep.subr.bf16.mxu0 %v1020
    %5687 = vmatpush1.bf16.msra.mxu0 %v1019
    %5688 = vmatprep.subr.bf16.mxu0 %v1012
    %5689 = vmatpush1.bf16.msra.mxu0 %v1011
    %5690 = vmatprep.subr.bf16.mxu0 %v1004
    %5691 = vmatpush1.bf16.msra.mxu0 %v1003
    %5692 = vmatprep.subr.bf16.mxu0 %v996
    %5693 = vmatpush1.bf16.msra.mxu0 %v995
    %5694 = vmatprep.subr.bf16.mxu0 %v988
    %5695 = vmatpush1.bf16.msra.mxu0 %v987
    %5696 = vmatprep.subr.bf16.mxu0 %v980
    %5697 = vmatpush1.bf16.msra.mxu0 %v979
    %5698 = vmatprep.subr.bf16.mxu0 %v972
    %5699 = vmatpush1.bf16.msra.mxu0 %v971
    %5700 = vmatprep.subr.bf16.mxu0 %v964
    %5701 = vmatpush1.bf16.msra.mxu0 %v963
    %5702 = vmatprep.subr.bf16.mxu0 %v1084
    %5703 = vmatpush2.bf16.msra.mxu0 %v1083
    %5704 = vmatprep.subr.bf16.mxu0 %v1076
    %5705 = vmatpush2.bf16.msra.mxu0 %v1075
    %5706 = vmatprep.subr.bf16.mxu0 %v1068
    %5707 = vmatpush2.bf16.msra.mxu0 %v1067
    %5708 = vmatprep.subr.bf16.mxu0 %v1060
    %5709 = vmatpush2.bf16.msra.mxu0 %v1059
    %5710 = vmatprep.subr.bf16.mxu0 %v1052
    %5711 = vmatpush2.bf16.msra.mxu0 %v1051
    %5712 = vmatprep.subr.bf16.mxu0 %v1044
    %5713 = vmatpush2.bf16.msra.mxu0 %v1043
    %5714 = vmatprep.subr.bf16.mxu0 %v1036
    %5715 = vmatpush2.bf16.msra.mxu0 %v1035
    %5716 = vmatprep.subr.bf16.mxu0 %v1028
    %5717 = vmatpush2.bf16.msra.mxu0 %v1027
    %5718 = vmatprep.mubr.bf16.mxu0 %v5170
    %5719 = vmatmul.mubr.bf16.gmra.mxu0 %v5169
    %v5720 = vpop.f32.mrf.mxu0
    %v5721 = vadd.f32 0.0, %v5720
    %v5722 = vpop.f32.mrf.mxu0
    %v5723 = vadd.f32 0.0, %v5722
    %v5724 = vpop.f32.mrf.mxu0
    %v5725 = vpop.f32.mrf.mxu0
    %5726 = vdwg.mxu0
    %v5727 = vadd.f32 %v5555, %v5598
    %v5728 = vadd.f32 %v5556, %v5600
    %v5729 = vadd.f32 %v5557, %v5639
    %v5730 = vadd.f32 %v5558, %v5641
    %v5731 = vadd.f32 %v5559, %v5680
    %v5732 = vadd.f32 %v5560, %v5682
    %v5733 = vadd.f32 %v5561, %v5721
    %v5734 = vadd.f32 %v5562, %v5723
    %v5735 = vxor.u32 %v5727, 2147483648
    %v5736 = vxor.u32 %v5728, 2147483648
    %v5737 = vxor.u32 %v5729, 2147483648
    %v5738 = vxor.u32 %v5730, 2147483648
    %v5739 = vmul.f32 %v5735, 1.442695
    %v5740 = vpow.pop %v5739
    %v5741 = vmul.f32 %v5736, 1.442695
    %v5742 = vpow.pop %v5741
    %v5743 = vmul.f32 %v5737, 1.442695
    %v5744 = vpow.pop %v5743
    %v5745 = vmul.f32 %v5738, 1.442695
    %v5746 = vpow.pop %v5745
    %v5747 = vadd.f32 %v5740, 1.0
    %v5748 = vadd.f32 %v5742, 1.0
    %v5749 = vadd.f32 %v5744, 1.0
    %v5750 = vadd.f32 %v5746, 1.0
    %v5751 = vrcp.pop %v5747
    %v5752 = vmul.f32 1.0, %v5751
    %v5753 = vrcp.pop %v5748
    %v5754 = vmul.f32 1.0, %v5753
    %v5755 = vrcp.pop %v5749
    %v5756 = vmul.f32 1.0, %v5755
    %v5757 = vrcp.pop %v5750
    %v5758 = vmul.f32 1.0, %v5757
    %v5759 = vtanh.pop %v5731
    %v5760 = vtanh.pop %v5732
    %v5761 = vxor.u32 %v5733, 2147483648
    %v5762 = vxor.u32 %v5734, 2147483648
    %v5763 = vmul.f32 %v5761, 1.442695
    %v5764 = vpow.pop %v5763
    %v5765 = vmul.f32 %v5762, 1.442695
    %v5766 = vpow.pop %v5765
    %v5767 = vadd.f32 %v5764, 1.0
    %v5768 = vadd.f32 %v5766, 1.0
    %v5769 = vrcp.pop %v5767
    %v5770 = vmul.f32 1.0, %v5769
    %v5771 = vrcp.pop %v5768
    %v5772 = vmul.f32 1.0, %v5771
    %v5773 = vmul.f32 %v5756, %v5163
    %v5774 = vmul.f32 %v5758, %v5164
    %v5775 = vmul.f32 %v5752, %v5759
    %v5776 = vmul.f32 %v5754, %v5760
    %v5777 = vadd.f32 %v5773, %v5775
    %v5778 = vadd.f32 %v5774, %v5776
    %v5779 = vtanh.pop %v5777
    %v5780 = vtanh.pop %v5778
    %v5781 = vmul.f32 %v5770, %v5779
    %v5782 = vmul.f32 %v5772, %v5780
    %v5783 = vpack.c.bf16 %v5781, %v5781
    %v5784 = vpack.c.bf16 %v5782, %v5782
    %v5785 = vpack.c.bf16 %v5547, %v5547
    %v5786 = vpack.c.bf16 %v5548, %v5548
    %5787 = vmatprep.subr.bf16.mxu0 %v2262
    %5788 = vmatpush1.bf16.msra.mxu0 %v2261
    %5789 = vmatprep.subr.bf16.mxu0 %v2254
    %5790 = vmatpush1.bf16.msra.mxu0 %v2253
    %5791 = vmatprep.subr.bf16.mxu0 %v2246
    %5792 = vmatpush1.bf16.msra.mxu0 %v2245
    %5793 = vmatprep.subr.bf16.mxu0 %v2238
    %5794 = vmatpush1.bf16.msra.mxu0 %v2237
    %5795 = vmatprep.subr.bf16.mxu0 %v2230
    %5796 = vmatpush1.bf16.msra.mxu0 %v2229
    %5797 = vmatprep.subr.bf16.mxu0 %v2222
    %5798 = vmatpush1.bf16.msra.mxu0 %v2221
    %5799 = vmatprep.subr.bf16.mxu0 %v2214
    %5800 = vmatpush1.bf16.msra.mxu0 %v2213
    %5801 = vmatprep.subr.bf16.mxu0 %v2206
    %5802 = vmatpush1.bf16.msra.mxu0 %v2205
    %5803 = vmatprep.subr.bf16.mxu0 %v2326
    %5804 = vmatpush2.bf16.msra.mxu0 %v2325
    %5805 = vmatprep.subr.bf16.mxu0 %v2318
    %5806 = vmatpush2.bf16.msra.mxu0 %v2317
    %5807 = vmatprep.subr.bf16.mxu0 %v2310
    %5808 = vmatpush2.bf16.msra.mxu0 %v2309
    %5809 = vmatprep.subr.bf16.mxu0 %v2302
    %5810 = vmatpush2.bf16.msra.mxu0 %v2301
    %5811 = vmatprep.subr.bf16.mxu0 %v2294
    %5812 = vmatpush2.bf16.msra.mxu0 %v2293
    %5813 = vmatprep.subr.bf16.mxu0 %v2286
    %5814 = vmatpush2.bf16.msra.mxu0 %v2285
    %5815 = vmatprep.subr.bf16.mxu0 %v2278
    %5816 = vmatpush2.bf16.msra.mxu0 %v2277
    %5817 = vmatprep.subr.bf16.mxu0 %v2270
    %5818 = vmatpush2.bf16.msra.mxu0 %v2269
    %5819 = vmatprep.mubr.bf16.mxu0 %v5784
    %5820 = vmatmul.mubr.bf16.gmra.mxu0 %v5783
    %v5821 = vpop.f32.mrf.mxu0
    %v5822 = vadd.f32 %v516, %v5821
    %v5823 = vpop.f32.mrf.mxu0
    %v5824 = vadd.f32 %v520, %v5823
    %v5825 = vpop.f32.mrf.mxu0
    %v5826 = vpop.f32.mrf.mxu0
    %5827 = vdwg.mxu0
    %5828 = vmatprep.subr.bf16.mxu0 %v2390
    %5829 = vmatpush1.bf16.msra.mxu0 %v2389
    %5830 = vmatprep.subr.bf16.mxu0 %v2382
    %5831 = vmatpush1.bf16.msra.mxu0 %v2381
    %5832 = vmatprep.subr.bf16.mxu0 %v2374
    %5833 = vmatpush1.bf16.msra.mxu0 %v2373
    %5834 = vmatprep.subr.bf16.mxu0 %v2366
    %5835 = vmatpush1.bf16.msra.mxu0 %v2365
    %5836 = vmatprep.subr.bf16.mxu0 %v2358
    %5837 = vmatpush1.bf16.msra.mxu0 %v2357
    %5838 = vmatprep.subr.bf16.mxu0 %v2350
    %5839 = vmatpush1.bf16.msra.mxu0 %v2349
    %5840 = vmatprep.subr.bf16.mxu0 %v2342
    %5841 = vmatpush1.bf16.msra.mxu0 %v2341
    %5842 = vmatprep.subr.bf16.mxu0 %v2334
    %5843 = vmatpush1.bf16.msra.mxu0 %v2333
    %5844 = vmatprep.subr.bf16.mxu0 %v2454
    %5845 = vmatpush2.bf16.msra.mxu0 %v2453
    %5846 = vmatprep.subr.bf16.mxu0 %v2446
    %5847 = vmatpush2.bf16.msra.mxu0 %v2445
    %5848 = vmatprep.subr.bf16.mxu0 %v2438
    %5849 = vmatpush2.bf16.msra.mxu0 %v2437
    %5850 = vmatprep.subr.bf16.mxu0 %v2430
    %5851 = vmatpush2.bf16.msra.mxu0 %v2429
    %5852 = vmatprep.subr.bf16.mxu0 %v2422
    %5853 = vmatpush2.bf16.msra.mxu0 %v2421
    %5854 = vmatprep.subr.bf16.mxu0 %v2414
    %5855 = vmatpush2.bf16.msra.mxu0 %v2413
    %5856 = vmatprep.subr.bf16.mxu0 %v2406
    %5857 = vmatpush2.bf16.msra.mxu0 %v2405
    %5858 = vmatprep.subr.bf16.mxu0 %v2398
    %5859 = vmatpush2.bf16.msra.mxu0 %v2397
    %5860 = vmatprep.mubr.bf16.mxu0 %v5786
    %5861 = vmatmul.mubr.bf16.gmra.mxu0 %v5785
    %v5862 = vpop.f32.mrf.mxu0
    %v5863 = vadd.f32 %v5822, %v5862
    %v5864 = vpop.f32.mrf.mxu0
    %v5865 = vadd.f32 %v5824, %v5864
    %v5866 = vpop.f32.mrf.mxu0
    %v5867 = vpop.f32.mrf.mxu0
    %5868 = vdwg.mxu0
    %5869 = vmatprep.subr.bf16.mxu0 %v2264
    %5870 = vmatpush1.bf16.msra.mxu0 %v2263
    %5871 = vmatprep.subr.bf16.mxu0 %v2256
    %5872 = vmatpush1.bf16.msra.mxu0 %v2255
    %5873 = vmatprep.subr.bf16.mxu0 %v2248
    %5874 = vmatpush1.bf16.msra.mxu0 %v2247
    %5875 = vmatprep.subr.bf16.mxu0 %v2240
    %5876 = vmatpush1.bf16.msra.mxu0 %v2239
    %5877 = vmatprep.subr.bf16.mxu0 %v2232
    %5878 = vmatpush1.bf16.msra.mxu0 %v2231
    %5879 = vmatprep.subr.bf16.mxu0 %v2224
    %5880 = vmatpush1.bf16.msra.mxu0 %v2223
    %5881 = vmatprep.subr.bf16.mxu0 %v2216
    %5882 = vmatpush1.bf16.msra.mxu0 %v2215
    %5883 = vmatprep.subr.bf16.mxu0 %v2208
    %5884 = vmatpush1.bf16.msra.mxu0 %v2207
    %5885 = vmatprep.subr.bf16.mxu0 %v2328
    %5886 = vmatpush2.bf16.msra.mxu0 %v2327
    %5887 = vmatprep.subr.bf16.mxu0 %v2320
    %5888 = vmatpush2.bf16.msra.mxu0 %v2319
    %5889 = vmatprep.subr.bf16.mxu0 %v2312
    %5890 = vmatpush2.bf16.msra.mxu0 %v2311
    %5891 = vmatprep.subr.bf16.mxu0 %v2304
    %5892 = vmatpush2.bf16.msra.mxu0 %v2303
    %5893 = vmatprep.subr.bf16.mxu0 %v2296
    %5894 = vmatpush2.bf16.msra.mxu0 %v2295
    %5895 = vmatprep.subr.bf16.mxu0 %v2288
    %5896 = vmatpush2.bf16.msra.mxu0 %v2287
    %5897 = vmatprep.subr.bf16.mxu0 %v2280
    %5898 = vmatpush2.bf16.msra.mxu0 %v2279
    %5899 = vmatprep.subr.bf16.mxu0 %v2272
    %5900 = vmatpush2.bf16.msra.mxu0 %v2271
    %5901 = vmatprep.mubr.bf16.mxu0 %v5784
    %5902 = vmatmul.mubr.bf16.gmra.mxu0 %v5783
    %v5903 = vpop.f32.mrf.mxu0
    %v5904 = vadd.f32 %v524, %v5903
    %v5905 = vpop.f32.mrf.mxu0
    %v5906 = vadd.f32 %v528, %v5905
    %v5907 = vpop.f32.mrf.mxu0
    %v5908 = vpop.f32.mrf.mxu0
    %5909 = vdwg.mxu0
    %5910 = vmatprep.subr.bf16.mxu0 %v2392
    %5911 = vmatpush1.bf16.msra.mxu0 %v2391
    %5912 = vmatprep.subr.bf16.mxu0 %v2384
    %5913 = vmatpush1.bf16.msra.mxu0 %v2383
    %5914 = vmatprep.subr.bf16.mxu0 %v2376
    %5915 = vmatpush1.bf16.msra.mxu0 %v2375
    %5916 = vmatprep.subr.bf16.mxu0 %v2368
    %5917 = vmatpush1.bf16.msra.mxu0 %v2367
    %5918 = vmatprep.subr.bf16.mxu0 %v2360
    %5919 = vmatpush1.bf16.msra.mxu0 %v2359
    %5920 = vmatprep.subr.bf16.mxu0 %v2352
    %5921 = vmatpush1.bf16.msra.mxu0 %v2351
    %5922 = vmatprep.subr.bf16.mxu0 %v2344
    %5923 = vmatpush1.bf16.msra.mxu0 %v2343
    %5924 = vmatprep.subr.bf16.mxu0 %v2336
    %5925 = vmatpush1.bf16.msra.mxu0 %v2335
    %5926 = vmatprep.subr.bf16.mxu0 %v2456
    %5927 = vmatpush2.bf16.msra.mxu0 %v2455
    %5928 = vmatprep.subr.bf16.mxu0 %v2448
    %5929 = vmatpush2.bf16.msra.mxu0 %v2447
    %5930 = vmatprep.subr.bf16.mxu0 %v2440
    %5931 = vmatpush2.bf16.msra.mxu0 %v2439
    %5932 = vmatprep.subr.bf16.mxu0 %v2432
    %5933 = vmatpush2.bf16.msra.mxu0 %v2431
    %5934 = vmatprep.subr.bf16.mxu0 %v2424
    %5935 = vmatpush2.bf16.msra.mxu0 %v2423
    %5936 = vmatprep.subr.bf16.mxu0 %v2416
    %5937 = vmatpush2.bf16.msra.mxu0 %v2415
    %5938 = vmatprep.subr.bf16.mxu0 %v2408
    %5939 = vmatpush2.bf16.msra.mxu0 %v2407
    %5940 = vmatprep.subr.bf16.mxu0 %v2400
    %5941 = vmatpush2.bf16.msra.mxu0 %v2399
    %5942 = vmatprep.mubr.bf16.mxu0 %v5786
    %5943 = vmatmul.mubr.bf16.gmra.mxu0 %v5785
    %v5944 = vpop.f32.mrf.mxu0
    %v5945 = vadd.f32 %v5904, %v5944
    %v5946 = vpop.f32.mrf.mxu0
    %v5947 = vadd.f32 %v5906, %v5946
    %v5948 = vpop.f32.mrf.mxu0
    %v5949 = vpop.f32.mrf.mxu0
    %5950 = vdwg.mxu0
    %5951 = vmatprep.subr.bf16.mxu0 %v2266
    %5952 = vmatpush1.bf16.msra.mxu0 %v2265
    %5953 = vmatprep.subr.bf16.mxu0 %v2258
    %5954 = vmatpush1.bf16.msra.mxu0 %v2257
    %5955 = vmatprep.subr.bf16.mxu0 %v2250
    %5956 = vmatpush1.bf16.msra.mxu0 %v2249
    %5957 = vmatprep.subr.bf16.mxu0 %v2242
    %5958 = vmatpush1.bf16.msra.mxu0 %v2241
    %5959 = vmatprep.subr.bf16.mxu0 %v2234
    %5960 = vmatpush1.bf16.msra.mxu0 %v2233
    %5961 = vmatprep.subr.bf16.mxu0 %v2226
    %5962 = vmatpush1.bf16.msra.mxu0 %v2225
    %5963 = vmatprep.subr.bf16.mxu0 %v2218
    %5964 = vmatpush1.bf16.msra.mxu0 %v2217
    %5965 = vmatprep.subr.bf16.mxu0 %v2210
    %5966 = vmatpush1.bf16.msra.mxu0 %v2209
    %5967 = vmatprep.subr.bf16.mxu0 %v2330
    %5968 = vmatpush2.bf16.msra.mxu0 %v2329
    %5969 = vmatprep.subr.bf16.mxu0 %v2322
    %5970 = vmatpush2.bf16.msra.mxu0 %v2321
    %5971 = vmatprep.subr.bf16.mxu0 %v2314
    %5972 = vmatpush2.bf16.msra.mxu0 %v2313
    %5973 = vmatprep.subr.bf16.mxu0 %v2306
    %5974 = vmatpush2.bf16.msra.mxu0 %v2305
    %5975 = vmatprep.subr.bf16.mxu0 %v2298
    %5976 = vmatpush2.bf16.msra.mxu0 %v2297
    %5977 = vmatprep.subr.bf16.mxu0 %v2290
    %5978 = vmatpush2.bf16.msra.mxu0 %v2289
    %5979 = vmatprep.subr.bf16.mxu0 %v2282
    %5980 = vmatpush2.bf16.msra.mxu0 %v2281
    %5981 = vmatprep.subr.bf16.mxu0 %v2274
    %5982 = vmatpush2.bf16.msra.mxu0 %v2273
    %5983 = vmatprep.mubr.bf16.mxu0 %v5784
    %5984 = vmatmul.mubr.bf16.gmra.mxu0 %v5783
    %v5985 = vpop.f32.mrf.mxu0
    %v5986 = vadd.f32 %v532, %v5985
    %v5987 = vpop.f32.mrf.mxu0
    %v5988 = vadd.f32 %v536, %v5987
    %v5989 = vpop.f32.mrf.mxu0
    %v5990 = vpop.f32.mrf.mxu0
    %5991 = vdwg.mxu0
    %5992 = vmatprep.subr.bf16.mxu0 %v2394
    %5993 = vmatpush1.bf16.msra.mxu0 %v2393
    %5994 = vmatprep.subr.bf16.mxu0 %v2386
    %5995 = vmatpush1.bf16.msra.mxu0 %v2385
    %5996 = vmatprep.subr.bf16.mxu0 %v2378
    %5997 = vmatpush1.bf16.msra.mxu0 %v2377
    %5998 = vmatprep.subr.bf16.mxu0 %v2370
    %5999 = vmatpush1.bf16.msra.mxu0 %v2369
    %6000 = vmatprep.subr.bf16.mxu0 %v2362
    %6001 = vmatpush1.bf16.msra.mxu0 %v2361
    %6002 = vmatprep.subr.bf16.mxu0 %v2354
    %6003 = vmatpush1.bf16.msra.mxu0 %v2353
    %6004 = vmatprep.subr.bf16.mxu0 %v2346
    %6005 = vmatpush1.bf16.msra.mxu0 %v2345
    %6006 = vmatprep.subr.bf16.mxu0 %v2338
    %6007 = vmatpush1.bf16.msra.mxu0 %v2337
    %6008 = vmatprep.subr.bf16.mxu0 %v2458
    %6009 = vmatpush2.bf16.msra.mxu0 %v2457
    %6010 = vmatprep.subr.bf16.mxu0 %v2450
    %6011 = vmatpush2.bf16.msra.mxu0 %v2449
    %6012 = vmatprep.subr.bf16.mxu0 %v2442
    %6013 = vmatpush2.bf16.msra.mxu0 %v2441
    %6014 = vmatprep.subr.bf16.mxu0 %v2434
    %6015 = vmatpush2.bf16.msra.mxu0 %v2433
    %6016 = vmatprep.subr.bf16.mxu0 %v2426
    %6017 = vmatpush2.bf16.msra.mxu0 %v2425
    %6018 = vmatprep.subr.bf16.mxu0 %v2418
    %6019 = vmatpush2.bf16.msra.mxu0 %v2417
    %6020 = vmatprep.subr.bf16.mxu0 %v2410
    %6021 = vmatpush2.bf16.msra.mxu0 %v2409
    %6022 = vmatprep.subr.bf16.mxu0 %v2402
    %6023 = vmatpush2.bf16.msra.mxu0 %v2401
    %6024 = vmatprep.mubr.bf16.mxu0 %v5786
    %6025 = vmatmul.mubr.bf16.gmra.mxu0 %v5785
    %v6026 = vpop.f32.mrf.mxu0
    %v6027 = vadd.f32 %v5986, %v6026
    %v6028 = vpop.f32.mrf.mxu0
    %v6029 = vadd.f32 %v5988, %v6028
    %v6030 = vpop.f32.mrf.mxu0
    %v6031 = vpop.f32.mrf.mxu0
    %6032 = vdwg.mxu0
    %6033 = vmatprep.subr.bf16.mxu0 %v2268
    %6034 = vmatpush1.bf16.msra.mxu0 %v2267
    %6035 = vmatprep.subr.bf16.mxu0 %v2260
    %6036 = vmatpush1.bf16.msra.mxu0 %v2259
    %6037 = vmatprep.subr.bf16.mxu0 %v2252
    %6038 = vmatpush1.bf16.msra.mxu0 %v2251
    %6039 = vmatprep.subr.bf16.mxu0 %v2244
    %6040 = vmatpush1.bf16.msra.mxu0 %v2243
    %6041 = vmatprep.subr.bf16.mxu0 %v2236
    %6042 = vmatpush1.bf16.msra.mxu0 %v2235
    %6043 = vmatprep.subr.bf16.mxu0 %v2228
    %6044 = vmatpush1.bf16.msra.mxu0 %v2227
    %6045 = vmatprep.subr.bf16.mxu0 %v2220
    %6046 = vmatpush1.bf16.msra.mxu0 %v2219
    %6047 = vmatprep.subr.bf16.mxu0 %v2212
    %6048 = vmatpush1.bf16.msra.mxu0 %v2211
    %6049 = vmatprep.subr.bf16.mxu0 %v2332
    %6050 = vmatpush2.bf16.msra.mxu0 %v2331
    %6051 = vmatprep.subr.bf16.mxu0 %v2324
    %6052 = vmatpush2.bf16.msra.mxu0 %v2323
    %6053 = vmatprep.subr.bf16.mxu0 %v2316
    %6054 = vmatpush2.bf16.msra.mxu0 %v2315
    %6055 = vmatprep.subr.bf16.mxu0 %v2308
    %6056 = vmatpush2.bf16.msra.mxu0 %v2307
    %6057 = vmatprep.subr.bf16.mxu0 %v2300
    %6058 = vmatpush2.bf16.msra.mxu0 %v2299
    %6059 = vmatprep.subr.bf16.mxu0 %v2292
    %6060 = vmatpush2.bf16.msra.mxu0 %v2291
    %6061 = vmatprep.subr.bf16.mxu0 %v2284
    %6062 = vmatpush2.bf16.msra.mxu0 %v2283
    %6063 = vmatprep.subr.bf16.mxu0 %v2276
    %6064 = vmatpush2.bf16.msra.mxu0 %v2275
    %6065 = vmatprep.mubr.bf16.mxu0 %v5784
    %6066 = vmatmul.mubr.bf16.gmra.mxu0 %v5783
    %v6067 = vpop.f32.mrf.mxu0
    %v6068 = vadd.f32 %v540, %v6067
    %v6069 = vpop.f32.mrf.mxu0
    %v6070 = vadd.f32 %v544, %v6069
    %v6071 = vpop.f32.mrf.mxu0
    %v6072 = vpop.f32.mrf.mxu0
    %6073 = vdwg.mxu0
    %6074 = vmatprep.subr.bf16.mxu0 %v2396
    %6075 = vmatpush1.bf16.msra.mxu0 %v2395
    %6076 = vmatprep.subr.bf16.mxu0 %v2388
    %6077 = vmatpush1.bf16.msra.mxu0 %v2387
    %6078 = vmatprep.subr.bf16.mxu0 %v2380
    %6079 = vmatpush1.bf16.msra.mxu0 %v2379
    %6080 = vmatprep.subr.bf16.mxu0 %v2372
    %6081 = vmatpush1.bf16.msra.mxu0 %v2371
    %6082 = vmatprep.subr.bf16.mxu0 %v2364
    %6083 = vmatpush1.bf16.msra.mxu0 %v2363
    %6084 = vmatprep.subr.bf16.mxu0 %v2356
    %6085 = vmatpush1.bf16.msra.mxu0 %v2355
    %6086 = vmatprep.subr.bf16.mxu0 %v2348
    %6087 = vmatpush1.bf16.msra.mxu0 %v2347
    %6088 = vmatprep.subr.bf16.mxu0 %v2340
    %6089 = vmatpush1.bf16.msra.mxu0 %v2339
    %6090 = vmatprep.subr.bf16.mxu0 %v2460
    %6091 = vmatpush2.bf16.msra.mxu0 %v2459
    %6092 = vmatprep.subr.bf16.mxu0 %v2452
    %6093 = vmatpush2.bf16.msra.mxu0 %v2451
    %6094 = vmatprep.subr.bf16.mxu0 %v2444
    %6095 = vmatpush2.bf16.msra.mxu0 %v2443
    %6096 = vmatprep.subr.bf16.mxu0 %v2436
    %6097 = vmatpush2.bf16.msra.mxu0 %v2435
    %6098 = vmatprep.subr.bf16.mxu0 %v2428
    %6099 = vmatpush2.bf16.msra.mxu0 %v2427
    %6100 = vmatprep.subr.bf16.mxu0 %v2420
    %6101 = vmatpush2.bf16.msra.mxu0 %v2419
    %6102 = vmatprep.subr.bf16.mxu0 %v2412
    %6103 = vmatpush2.bf16.msra.mxu0 %v2411
    %6104 = vmatprep.subr.bf16.mxu0 %v2404
    %6105 = vmatpush2.bf16.msra.mxu0 %v2403
    %6106 = vmatprep.mubr.bf16.mxu0 %v5786
    %6107 = vmatmul.mubr.bf16.gmra.mxu0 %v5785
    %v6108 = vpop.f32.mrf.mxu0
    %v6109 = vadd.f32 %v6068, %v6108
    %v6110 = vpop.f32.mrf.mxu0
    %v6111 = vadd.f32 %v6070, %v6110
    %v6112 = vpop.f32.mrf.mxu0
    %v6113 = vpop.f32.mrf.mxu0
    %6114 = vdwg.mxu0
    %v6115 = vxor.u32 %v5863, 2147483648
    %v6116 = vxor.u32 %v5865, 2147483648
    %v6117 = vxor.u32 %v5945, 2147483648
    %v6118 = vxor.u32 %v5947, 2147483648
    %v6119 = vmul.f32 %v6115, 1.442695
    %v6120 = vpow.pop %v6119
    %v6121 = vmul.f32 %v6116, 1.442695
    %v6122 = vpow.pop %v6121
    %v6123 = vmul.f32 %v6117, 1.442695
    %v6124 = vpow.pop %v6123
    %v6125 = vmul.f32 %v6118, 1.442695
    %v6126 = vpow.pop %v6125
    %v6127 = vadd.f32 %v6120, 1.0
    %v6128 = vadd.f32 %v6122, 1.0
    %v6129 = vadd.f32 %v6124, 1.0
    %v6130 = vadd.f32 %v6126, 1.0
    %v6131 = vrcp.pop %v6127
    %v6132 = vmul.f32 1.0, %v6131
    %v6133 = vrcp.pop %v6128
    %v6134 = vmul.f32 1.0, %v6133
    %v6135 = vrcp.pop %v6129
    %v6136 = vmul.f32 1.0, %v6135
    %v6137 = vrcp.pop %v6130
    %v6138 = vmul.f32 1.0, %v6137
    %v6139 = vtanh.pop %v6027
    %v6140 = vtanh.pop %v6029
    %v6141 = vxor.u32 %v6109, 2147483648
    %v6142 = vxor.u32 %v6111, 2147483648
    %v6143 = vmul.f32 %v6141, 1.442695
    %v6144 = vpow.pop %v6143
    %v6145 = vmul.f32 %v6142, 1.442695
    %v6146 = vpow.pop %v6145
    %v6147 = vadd.f32 %v6144, 1.0
    %v6148 = vadd.f32 %v6146, 1.0
    %v6149 = vrcp.pop %v6147
    %v6150 = vmul.f32 1.0, %v6149
    %v6151 = vrcp.pop %v6148
    %v6152 = vmul.f32 1.0, %v6151
    %v6153 = vmul.f32 %v6136, %v5543
    %v6154 = vmul.f32 %v6138, %v5544
    %v6155 = vmul.f32 %v6132, %v6139
    %v6156 = vmul.f32 %v6134, %v6140
    %v6157 = vadd.f32 %v6153, %v6155
    %v6158 = vadd.f32 %v6154, %v6156
    %v6159 = vtanh.pop %v6157
    %v6160 = vtanh.pop %v6158
    %v6161 = vmul.f32 %v6150, %v6159
    %v6162 = vmul.f32 %v6152, %v6160
    %s6163 = smul.u32 5, 2
    %s6164 = smul.addr %s6163, 8
    %s6165 = scalar_lea.vmem [#allocation2], %s6164
    %6166 = vst [vmem:[%s6165] sm:$0xff] %v6161
    %6167 = vst [vmem:[%s6165 + $0x8] sm:$0xff] %v6162
    %s6168 = scalar_lea.vmem [#allocation3], 384
    %v6169 = vld [vmem:[%s6168] sm:$0xff]
    %v6170 = vld [vmem:[%s6168 + $0x8] sm:$0xff]
    %v6171 = vld [vmem:[%s6168 + $0x10] sm:$0xff]
    %v6172 = vld [vmem:[%s6168 + $0x18] sm:$0xff]
    %v6173 = vld [vmem:[%s6168 + $0x20] sm:$0xff]
    %v6174 = vld [vmem:[%s6168 + $0x28] sm:$0xff]
    %v6175 = vld [vmem:[%s6168 + $0x30] sm:$0xff]
    %v6176 = vld [vmem:[%s6168 + $0x38] sm:$0xff]
    %6177 = vmatprep.subr.bf16.mxu0 %v1014
    %6178 = vmatpush1.bf16.msra.mxu0 %v1013
    %6179 = vmatprep.subr.bf16.mxu0 %v1006
    %6180 = vmatpush1.bf16.msra.mxu0 %v1005
    %6181 = vmatprep.subr.bf16.mxu0 %v998
    %6182 = vmatpush1.bf16.msra.mxu0 %v997
    %6183 = vmatprep.subr.bf16.mxu0 %v990
    %6184 = vmatpush1.bf16.msra.mxu0 %v989
    %6185 = vmatprep.subr.bf16.mxu0 %v982
    %6186 = vmatpush1.bf16.msra.mxu0 %v981
    %6187 = vmatprep.subr.bf16.mxu0 %v974
    %6188 = vmatpush1.bf16.msra.mxu0 %v973
    %6189 = vmatprep.subr.bf16.mxu0 %v966
    %6190 = vmatpush1.bf16.msra.mxu0 %v965
    %6191 = vmatprep.subr.bf16.mxu0 %v958
    %6192 = vmatpush1.bf16.msra.mxu0 %v957
    %6193 = vmatprep.subr.bf16.mxu0 %v1078
    %6194 = vmatpush2.bf16.msra.mxu0 %v1077
    %6195 = vmatprep.subr.bf16.mxu0 %v1070
    %6196 = vmatpush2.bf16.msra.mxu0 %v1069
    %6197 = vmatprep.subr.bf16.mxu0 %v1062
    %6198 = vmatpush2.bf16.msra.mxu0 %v1061
    %6199 = vmatprep.subr.bf16.mxu0 %v1054
    %6200 = vmatpush2.bf16.msra.mxu0 %v1053
    %6201 = vmatprep.subr.bf16.mxu0 %v1046
    %6202 = vmatpush2.bf16.msra.mxu0 %v1045
    %6203 = vmatprep.subr.bf16.mxu0 %v1038
    %6204 = vmatpush2.bf16.msra.mxu0 %v1037
    %6205 = vmatprep.subr.bf16.mxu0 %v1030
    %6206 = vmatpush2.bf16.msra.mxu0 %v1029
    %6207 = vmatprep.subr.bf16.mxu0 %v1022
    %6208 = vmatpush2.bf16.msra.mxu0 %v1021
    %6209 = vmatprep.mubr.bf16.mxu0 %v5784
    %6210 = vmatmul.mubr.bf16.gmra.mxu0 %v5783
    %v6211 = vpop.f32.mrf.mxu0
    %v6212 = vadd.f32 0.0, %v6211
    %v6213 = vpop.f32.mrf.mxu0
    %v6214 = vadd.f32 0.0, %v6213
    %v6215 = vpop.f32.mrf.mxu0
    %v6216 = vpop.f32.mrf.mxu0
    %6217 = vdwg.mxu0
    %6218 = vmatprep.subr.bf16.mxu0 %v1016
    %6219 = vmatpush1.bf16.msra.mxu0 %v1015
    %6220 = vmatprep.subr.bf16.mxu0 %v1008
    %6221 = vmatpush1.bf16.msra.mxu0 %v1007
    %6222 = vmatprep.subr.bf16.mxu0 %v1000
    %6223 = vmatpush1.bf16.msra.mxu0 %v999
    %6224 = vmatprep.subr.bf16.mxu0 %v992
    %6225 = vmatpush1.bf16.msra.mxu0 %v991
    %6226 = vmatprep.subr.bf16.mxu0 %v984
    %6227 = vmatpush1.bf16.msra.mxu0 %v983
    %6228 = vmatprep.subr.bf16.mxu0 %v976
    %6229 = vmatpush1.bf16.msra.mxu0 %v975
    %6230 = vmatprep.subr.bf16.mxu0 %v968
    %6231 = vmatpush1.bf16.msra.mxu0 %v967
    %6232 = vmatprep.subr.bf16.mxu0 %v960
    %6233 = vmatpush1.bf16.msra.mxu0 %v959
    %6234 = vmatprep.subr.bf16.mxu0 %v1080
    %6235 = vmatpush2.bf16.msra.mxu0 %v1079
    %6236 = vmatprep.subr.bf16.mxu0 %v1072
    %6237 = vmatpush2.bf16.msra.mxu0 %v1071
    %6238 = vmatprep.subr.bf16.mxu0 %v1064
    %6239 = vmatpush2.bf16.msra.mxu0 %v1063
    %6240 = vmatprep.subr.bf16.mxu0 %v1056
    %6241 = vmatpush2.bf16.msra.mxu0 %v1055
    %6242 = vmatprep.subr.bf16.mxu0 %v1048
    %6243 = vmatpush2.bf16.msra.mxu0 %v1047
    %6244 = vmatprep.subr.bf16.mxu0 %v1040
    %6245 = vmatpush2.bf16.msra.mxu0 %v1039
    %6246 = vmatprep.subr.bf16.mxu0 %v1032
    %6247 = vmatpush2.bf16.msra.mxu0 %v1031
    %6248 = vmatprep.subr.bf16.mxu0 %v1024
    %6249 = vmatpush2.bf16.msra.mxu0 %v1023
    %6250 = vmatprep.mubr.bf16.mxu0 %v5784
    %6251 = vmatmul.mubr.bf16.gmra.mxu0 %v5783
    %v6252 = vpop.f32.mrf.mxu0
    %v6253 = vadd.f32 0.0, %v6252
    %v6254 = vpop.f32.mrf.mxu0
    %v6255 = vadd.f32 0.0, %v6254
    %v6256 = vpop.f32.mrf.mxu0
    %v6257 = vpop.f32.mrf.mxu0
    %6258 = vdwg.mxu0
    %6259 = vmatprep.subr.bf16.mxu0 %v1018
    %6260 = vmatpush1.bf16.msra.mxu0 %v1017
    %6261 = vmatprep.subr.bf16.mxu0 %v1010
    %6262 = vmatpush1.bf16.msra.mxu0 %v1009
    %6263 = vmatprep.subr.bf16.mxu0 %v1002
    %6264 = vmatpush1.bf16.msra.mxu0 %v1001
    %6265 = vmatprep.subr.bf16.mxu0 %v994
    %6266 = vmatpush1.bf16.msra.mxu0 %v993
    %6267 = vmatprep.subr.bf16.mxu0 %v986
    %6268 = vmatpush1.bf16.msra.mxu0 %v985
    %6269 = vmatprep.subr.bf16.mxu0 %v978
    %6270 = vmatpush1.bf16.msra.mxu0 %v977
    %6271 = vmatprep.subr.bf16.mxu0 %v970
    %6272 = vmatpush1.bf16.msra.mxu0 %v969
    %6273 = vmatprep.subr.bf16.mxu0 %v962
    %6274 = vmatpush1.bf16.msra.mxu0 %v961
    %6275 = vmatprep.subr.bf16.mxu0 %v1082
    %6276 = vmatpush2.bf16.msra.mxu0 %v1081
    %6277 = vmatprep.subr.bf16.mxu0 %v1074
    %6278 = vmatpush2.bf16.msra.mxu0 %v1073
    %6279 = vmatprep.subr.bf16.mxu0 %v1066
    %6280 = vmatpush2.bf16.msra.mxu0 %v1065
    %6281 = vmatprep.subr.bf16.mxu0 %v1058
    %6282 = vmatpush2.bf16.msra.mxu0 %v1057
    %6283 = vmatprep.subr.bf16.mxu0 %v1050
    %6284 = vmatpush2.bf16.msra.mxu0 %v1049
    %6285 = vmatprep.subr.bf16.mxu0 %v1042
    %6286 = vmatpush2.bf16.msra.mxu0 %v1041
    %6287 = vmatprep.subr.bf16.mxu0 %v1034
    %6288 = vmatpush2.bf16.msra.mxu0 %v1033
    %6289 = vmatprep.subr.bf16.mxu0 %v1026
    %6290 = vmatpush2.bf16.msra.mxu0 %v1025
    %6291 = vmatprep.mubr.bf16.mxu0 %v5784
    %6292 = vmatmul.mubr.bf16.gmra.mxu0 %v5783
    %v6293 = vpop.f32.mrf.mxu0
    %v6294 = vadd.f32 0.0, %v6293
    %v6295 = vpop.f32.mrf.mxu0
    %v6296 = vadd.f32 0.0, %v6295
    %v6297 = vpop.f32.mrf.mxu0
    %v6298 = vpop.f32.mrf.mxu0
    %6299 = vdwg.mxu0
    %6300 = vmatprep.subr.bf16.mxu0 %v1020
    %6301 = vmatpush1.bf16.msra.mxu0 %v1019
    %6302 = vmatprep.subr.bf16.mxu0 %v1012
    %6303 = vmatpush1.bf16.msra.mxu0 %v1011
    %6304 = vmatprep.subr.bf16.mxu0 %v1004
    %6305 = vmatpush1.bf16.msra.mxu0 %v1003
    %6306 = vmatprep.subr.bf16.mxu0 %v996
    %6307 = vmatpush1.bf16.msra.mxu0 %v995
    %6308 = vmatprep.subr.bf16.mxu0 %v988
    %6309 = vmatpush1.bf16.msra.mxu0 %v987
    %6310 = vmatprep.subr.bf16.mxu0 %v980
    %6311 = vmatpush1.bf16.msra.mxu0 %v979
    %6312 = vmatprep.subr.bf16.mxu0 %v972
    %6313 = vmatpush1.bf16.msra.mxu0 %v971
    %6314 = vmatprep.subr.bf16.mxu0 %v964
    %6315 = vmatpush1.bf16.msra.mxu0 %v963
    %6316 = vmatprep.subr.bf16.mxu0 %v1084
    %6317 = vmatpush2.bf16.msra.mxu0 %v1083
    %6318 = vmatprep.subr.bf16.mxu0 %v1076
    %6319 = vmatpush2.bf16.msra.mxu0 %v1075
    %6320 = vmatprep.subr.bf16.mxu0 %v1068
    %6321 = vmatpush2.bf16.msra.mxu0 %v1067
    %6322 = vmatprep.subr.bf16.mxu0 %v1060
    %6323 = vmatpush2.bf16.msra.mxu0 %v1059
    %6324 = vmatprep.subr.bf16.mxu0 %v1052
    %6325 = vmatpush2.bf16.msra.mxu0 %v1051
    %6326 = vmatprep.subr.bf16.mxu0 %v1044
    %6327 = vmatpush2.bf16.msra.mxu0 %v1043
    %6328 = vmatprep.subr.bf16.mxu0 %v1036
    %6329 = vmatpush2.bf16.msra.mxu0 %v1035
    %6330 = vmatprep.subr.bf16.mxu0 %v1028
    %6331 = vmatpush2.bf16.msra.mxu0 %v1027
    %6332 = vmatprep.mubr.bf16.mxu0 %v5784
    %6333 = vmatmul.mubr.bf16.gmra.mxu0 %v5783
    %v6334 = vpop.f32.mrf.mxu0
    %v6335 = vadd.f32 0.0, %v6334
    %v6336 = vpop.f32.mrf.mxu0
    %v6337 = vadd.f32 0.0, %v6336
    %v6338 = vpop.f32.mrf.mxu0
    %v6339 = vpop.f32.mrf.mxu0
    %6340 = vdwg.mxu0
    %v6341 = vadd.f32 %v6169, %v6212
    %v6342 = vadd.f32 %v6170, %v6214
    %v6343 = vadd.f32 %v6171, %v6253
    %v6344 = vadd.f32 %v6172, %v6255
    %v6345 = vadd.f32 %v6173, %v6294
    %v6346 = vadd.f32 %v6174, %v6296
    %v6347 = vadd.f32 %v6175, %v6335
    %v6348 = vadd.f32 %v6176, %v6337
    %v6349 = vxor.u32 %v6341, 2147483648
    %v6350 = vxor.u32 %v6342, 2147483648
    %v6351 = vxor.u32 %v6343, 2147483648
    %v6352 = vxor.u32 %v6344, 2147483648
    %v6353 = vmul.f32 %v6349, 1.442695
    %v6354 = vpow.pop %v6353
    %v6355 = vmul.f32 %v6350, 1.442695
    %v6356 = vpow.pop %v6355
    %v6357 = vmul.f32 %v6351, 1.442695
    %v6358 = vpow.pop %v6357
    %v6359 = vmul.f32 %v6352, 1.442695
    %v6360 = vpow.pop %v6359
    %v6361 = vadd.f32 %v6354, 1.0
    %v6362 = vadd.f32 %v6356, 1.0
    %v6363 = vadd.f32 %v6358, 1.0
    %v6364 = vadd.f32 %v6360, 1.0
    %v6365 = vrcp.pop %v6361
    %v6366 = vmul.f32 1.0, %v6365
    %v6367 = vrcp.pop %v6362
    %v6368 = vmul.f32 1.0, %v6367
    %v6369 = vrcp.pop %v6363
    %v6370 = vmul.f32 1.0, %v6369
    %v6371 = vrcp.pop %v6364
    %v6372 = vmul.f32 1.0, %v6371
    %v6373 = vtanh.pop %v6345
    %v6374 = vtanh.pop %v6346
    %v6375 = vxor.u32 %v6347, 2147483648
    %v6376 = vxor.u32 %v6348, 2147483648
    %v6377 = vmul.f32 %v6375, 1.442695
    %v6378 = vpow.pop %v6377
    %v6379 = vmul.f32 %v6376, 1.442695
    %v6380 = vpow.pop %v6379
    %v6381 = vadd.f32 %v6378, 1.0
    %v6382 = vadd.f32 %v6380, 1.0
    %v6383 = vrcp.pop %v6381
    %v6384 = vmul.f32 1.0, %v6383
    %v6385 = vrcp.pop %v6382
    %v6386 = vmul.f32 1.0, %v6385
    %v6387 = vmul.f32 %v6370, %v5777
    %v6388 = vmul.f32 %v6372, %v5778
    %v6389 = vmul.f32 %v6366, %v6373
    %v6390 = vmul.f32 %v6368, %v6374
    %v6391 = vadd.f32 %v6387, %v6389
    %v6392 = vadd.f32 %v6388, %v6390
    %v6393 = vtanh.pop %v6391
    %v6394 = vtanh.pop %v6392
    %v6395 = vmul.f32 %v6384, %v6393
    %v6396 = vmul.f32 %v6386, %v6394
    %v6397 = vpack.c.bf16 %v6395, %v6395
    %v6398 = vpack.c.bf16 %v6396, %v6396
    %v6399 = vpack.c.bf16 %v6161, %v6161
    %v6400 = vpack.c.bf16 %v6162, %v6162
    %6401 = vmatprep.subr.bf16.mxu0 %v2262
    %6402 = vmatpush1.bf16.msra.mxu0 %v2261
    %6403 = vmatprep.subr.bf16.mxu0 %v2254
    %6404 = vmatpush1.bf16.msra.mxu0 %v2253
    %6405 = vmatprep.subr.bf16.mxu0 %v2246
    %6406 = vmatpush1.bf16.msra.mxu0 %v2245
    %6407 = vmatprep.subr.bf16.mxu0 %v2238
    %6408 = vmatpush1.bf16.msra.mxu0 %v2237
    %6409 = vmatprep.subr.bf16.mxu0 %v2230
    %6410 = vmatpush1.bf16.msra.mxu0 %v2229
    %6411 = vmatprep.subr.bf16.mxu0 %v2222
    %6412 = vmatpush1.bf16.msra.mxu0 %v2221
    %6413 = vmatprep.subr.bf16.mxu0 %v2214
    %6414 = vmatpush1.bf16.msra.mxu0 %v2213
    %6415 = vmatprep.subr.bf16.mxu0 %v2206
    %6416 = vmatpush1.bf16.msra.mxu0 %v2205
    %6417 = vmatprep.subr.bf16.mxu0 %v2326
    %6418 = vmatpush2.bf16.msra.mxu0 %v2325
    %6419 = vmatprep.subr.bf16.mxu0 %v2318
    %6420 = vmatpush2.bf16.msra.mxu0 %v2317
    %6421 = vmatprep.subr.bf16.mxu0 %v2310
    %6422 = vmatpush2.bf16.msra.mxu0 %v2309
    %6423 = vmatprep.subr.bf16.mxu0 %v2302
    %6424 = vmatpush2.bf16.msra.mxu0 %v2301
    %6425 = vmatprep.subr.bf16.mxu0 %v2294
    %6426 = vmatpush2.bf16.msra.mxu0 %v2293
    %6427 = vmatprep.subr.bf16.mxu0 %v2286
    %6428 = vmatpush2.bf16.msra.mxu0 %v2285
    %6429 = vmatprep.subr.bf16.mxu0 %v2278
    %6430 = vmatpush2.bf16.msra.mxu0 %v2277
    %6431 = vmatprep.subr.bf16.mxu0 %v2270
    %6432 = vmatpush2.bf16.msra.mxu0 %v2269
    %6433 = vmatprep.mubr.bf16.mxu0 %v6398
    %6434 = vmatmul.mubr.bf16.gmra.mxu0 %v6397
    %v6435 = vpop.f32.mrf.mxu0
    %v6436 = vadd.f32 %v516, %v6435
    %v6437 = vpop.f32.mrf.mxu0
    %v6438 = vadd.f32 %v520, %v6437
    %v6439 = vpop.f32.mrf.mxu0
    %v6440 = vpop.f32.mrf.mxu0
    %6441 = vdwg.mxu0
    %6442 = vmatprep.subr.bf16.mxu0 %v2390
    %6443 = vmatpush1.bf16.msra.mxu0 %v2389
    %6444 = vmatprep.subr.bf16.mxu0 %v2382
    %6445 = vmatpush1.bf16.msra.mxu0 %v2381
    %6446 = vmatprep.subr.bf16.mxu0 %v2374
    %6447 = vmatpush1.bf16.msra.mxu0 %v2373
    %6448 = vmatprep.subr.bf16.mxu0 %v2366
    %6449 = vmatpush1.bf16.msra.mxu0 %v2365
    %6450 = vmatprep.subr.bf16.mxu0 %v2358
    %6451 = vmatpush1.bf16.msra.mxu0 %v2357
    %6452 = vmatprep.subr.bf16.mxu0 %v2350
    %6453 = vmatpush1.bf16.msra.mxu0 %v2349
    %6454 = vmatprep.subr.bf16.mxu0 %v2342
    %6455 = vmatpush1.bf16.msra.mxu0 %v2341
    %6456 = vmatprep.subr.bf16.mxu0 %v2334
    %6457 = vmatpush1.bf16.msra.mxu0 %v2333
    %6458 = vmatprep.subr.bf16.mxu0 %v2454
    %6459 = vmatpush2.bf16.msra.mxu0 %v2453
    %6460 = vmatprep.subr.bf16.mxu0 %v2446
    %6461 = vmatpush2.bf16.msra.mxu0 %v2445
    %6462 = vmatprep.subr.bf16.mxu0 %v2438
    %6463 = vmatpush2.bf16.msra.mxu0 %v2437
    %6464 = vmatprep.subr.bf16.mxu0 %v2430
    %6465 = vmatpush2.bf16.msra.mxu0 %v2429
    %6466 = vmatprep.subr.bf16.mxu0 %v2422
    %6467 = vmatpush2.bf16.msra.mxu0 %v2421
    %6468 = vmatprep.subr.bf16.mxu0 %v2414
    %6469 = vmatpush2.bf16.msra.mxu0 %v2413
    %6470 = vmatprep.subr.bf16.mxu0 %v2406
    %6471 = vmatpush2.bf16.msra.mxu0 %v2405
    %6472 = vmatprep.subr.bf16.mxu0 %v2398
    %6473 = vmatpush2.bf16.msra.mxu0 %v2397
    %6474 = vmatprep.mubr.bf16.mxu0 %v6400
    %6475 = vmatmul.mubr.bf16.gmra.mxu0 %v6399
    %v6476 = vpop.f32.mrf.mxu0
    %v6477 = vadd.f32 %v6436, %v6476
    %v6478 = vpop.f32.mrf.mxu0
    %v6479 = vadd.f32 %v6438, %v6478
    %v6480 = vpop.f32.mrf.mxu0
    %v6481 = vpop.f32.mrf.mxu0
    %6482 = vdwg.mxu0
    %6483 = vmatprep.subr.bf16.mxu0 %v2264
    %6484 = vmatpush1.bf16.msra.mxu0 %v2263
    %6485 = vmatprep.subr.bf16.mxu0 %v2256
    %6486 = vmatpush1.bf16.msra.mxu0 %v2255
    %6487 = vmatprep.subr.bf16.mxu0 %v2248
    %6488 = vmatpush1.bf16.msra.mxu0 %v2247
    %6489 = vmatprep.subr.bf16.mxu0 %v2240
    %6490 = vmatpush1.bf16.msra.mxu0 %v2239
    %6491 = vmatprep.subr.bf16.mxu0 %v2232
    %6492 = vmatpush1.bf16.msra.mxu0 %v2231
    %6493 = vmatprep.subr.bf16.mxu0 %v2224
    %6494 = vmatpush1.bf16.msra.mxu0 %v2223
    %6495 = vmatprep.subr.bf16.mxu0 %v2216
    %6496 = vmatpush1.bf16.msra.mxu0 %v2215
    %6497 = vmatprep.subr.bf16.mxu0 %v2208
    %6498 = vmatpush1.bf16.msra.mxu0 %v2207
    %6499 = vmatprep.subr.bf16.mxu0 %v2328
    %6500 = vmatpush2.bf16.msra.mxu0 %v2327
    %6501 = vmatprep.subr.bf16.mxu0 %v2320
    %6502 = vmatpush2.bf16.msra.mxu0 %v2319
    %6503 = vmatprep.subr.bf16.mxu0 %v2312
    %6504 = vmatpush2.bf16.msra.mxu0 %v2311
    %6505 = vmatprep.subr.bf16.mxu0 %v2304
    %6506 = vmatpush2.bf16.msra.mxu0 %v2303
    %6507 = vmatprep.subr.bf16.mxu0 %v2296
    %6508 = vmatpush2.bf16.msra.mxu0 %v2295
    %6509 = vmatprep.subr.bf16.mxu0 %v2288
    %6510 = vmatpush2.bf16.msra.mxu0 %v2287
    %6511 = vmatprep.subr.bf16.mxu0 %v2280
    %6512 = vmatpush2.bf16.msra.mxu0 %v2279
    %6513 = vmatprep.subr.bf16.mxu0 %v2272
    %6514 = vmatpush2.bf16.msra.mxu0 %v2271
    %6515 = vmatprep.mubr.bf16.mxu0 %v6398
    %6516 = vmatmul.mubr.bf16.gmra.mxu0 %v6397
    %v6517 = vpop.f32.mrf.mxu0
    %v6518 = vadd.f32 %v524, %v6517
    %v6519 = vpop.f32.mrf.mxu0
    %v6520 = vadd.f32 %v528, %v6519
    %v6521 = vpop.f32.mrf.mxu0
    %v6522 = vpop.f32.mrf.mxu0
    %6523 = vdwg.mxu0
    %6524 = vmatprep.subr.bf16.mxu0 %v2392
    %6525 = vmatpush1.bf16.msra.mxu0 %v2391
    %6526 = vmatprep.subr.bf16.mxu0 %v2384
    %6527 = vmatpush1.bf16.msra.mxu0 %v2383
    %6528 = vmatprep.subr.bf16.mxu0 %v2376
    %6529 = vmatpush1.bf16.msra.mxu0 %v2375
    %6530 = vmatprep.subr.bf16.mxu0 %v2368
    %6531 = vmatpush1.bf16.msra.mxu0 %v2367
    %6532 = vmatprep.subr.bf16.mxu0 %v2360
    %6533 = vmatpush1.bf16.msra.mxu0 %v2359
    %6534 = vmatprep.subr.bf16.mxu0 %v2352
    %6535 = vmatpush1.bf16.msra.mxu0 %v2351
    %6536 = vmatprep.subr.bf16.mxu0 %v2344
    %6537 = vmatpush1.bf16.msra.mxu0 %v2343
    %6538 = vmatprep.subr.bf16.mxu0 %v2336
    %6539 = vmatpush1.bf16.msra.mxu0 %v2335
    %6540 = vmatprep.subr.bf16.mxu0 %v2456
    %6541 = vmatpush2.bf16.msra.mxu0 %v2455
    %6542 = vmatprep.subr.bf16.mxu0 %v2448
    %6543 = vmatpush2.bf16.msra.mxu0 %v2447
    %6544 = vmatprep.subr.bf16.mxu0 %v2440
    %6545 = vmatpush2.bf16.msra.mxu0 %v2439
    %6546 = vmatprep.subr.bf16.mxu0 %v2432
    %6547 = vmatpush2.bf16.msra.mxu0 %v2431
    %6548 = vmatprep.subr.bf16.mxu0 %v2424
    %6549 = vmatpush2.bf16.msra.mxu0 %v2423
    %6550 = vmatprep.subr.bf16.mxu0 %v2416
    %6551 = vmatpush2.bf16.msra.mxu0 %v2415
    %6552 = vmatprep.subr.bf16.mxu0 %v2408
    %6553 = vmatpush2.bf16.msra.mxu0 %v2407
    %6554 = vmatprep.subr.bf16.mxu0 %v2400
    %6555 = vmatpush2.bf16.msra.mxu0 %v2399
    %6556 = vmatprep.mubr.bf16.mxu0 %v6400
    %6557 = vmatmul.mubr.bf16.gmra.mxu0 %v6399
    %v6558 = vpop.f32.mrf.mxu0
    %v6559 = vadd.f32 %v6518, %v6558
    %v6560 = vpop.f32.mrf.mxu0
    %v6561 = vadd.f32 %v6520, %v6560
    %v6562 = vpop.f32.mrf.mxu0
    %v6563 = vpop.f32.mrf.mxu0
    %6564 = vdwg.mxu0
    %6565 = vmatprep.subr.bf16.mxu0 %v2266
    %6566 = vmatpush1.bf16.msra.mxu0 %v2265
    %6567 = vmatprep.subr.bf16.mxu0 %v2258
    %6568 = vmatpush1.bf16.msra.mxu0 %v2257
    %6569 = vmatprep.subr.bf16.mxu0 %v2250
    %6570 = vmatpush1.bf16.msra.mxu0 %v2249
    %6571 = vmatprep.subr.bf16.mxu0 %v2242
    %6572 = vmatpush1.bf16.msra.mxu0 %v2241
    %6573 = vmatprep.subr.bf16.mxu0 %v2234
    %6574 = vmatpush1.bf16.msra.mxu0 %v2233
    %6575 = vmatprep.subr.bf16.mxu0 %v2226
    %6576 = vmatpush1.bf16.msra.mxu0 %v2225
    %6577 = vmatprep.subr.bf16.mxu0 %v2218
    %6578 = vmatpush1.bf16.msra.mxu0 %v2217
    %6579 = vmatprep.subr.bf16.mxu0 %v2210
    %6580 = vmatpush1.bf16.msra.mxu0 %v2209
    %6581 = vmatprep.subr.bf16.mxu0 %v2330
    %6582 = vmatpush2.bf16.msra.mxu0 %v2329
    %6583 = vmatprep.subr.bf16.mxu0 %v2322
    %6584 = vmatpush2.bf16.msra.mxu0 %v2321
    %6585 = vmatprep.subr.bf16.mxu0 %v2314
    %6586 = vmatpush2.bf16.msra.mxu0 %v2313
    %6587 = vmatprep.subr.bf16.mxu0 %v2306
    %6588 = vmatpush2.bf16.msra.mxu0 %v2305
    %6589 = vmatprep.subr.bf16.mxu0 %v2298
    %6590 = vmatpush2.bf16.msra.mxu0 %v2297
    %6591 = vmatprep.subr.bf16.mxu0 %v2290
    %6592 = vmatpush2.bf16.msra.mxu0 %v2289
    %6593 = vmatprep.subr.bf16.mxu0 %v2282
    %6594 = vmatpush2.bf16.msra.mxu0 %v2281
    %6595 = vmatprep.subr.bf16.mxu0 %v2274
    %6596 = vmatpush2.bf16.msra.mxu0 %v2273
    %6597 = vmatprep.mubr.bf16.mxu0 %v6398
    %6598 = vmatmul.mubr.bf16.gmra.mxu0 %v6397
    %v6599 = vpop.f32.mrf.mxu0
    %v6600 = vadd.f32 %v532, %v6599
    %v6601 = vpop.f32.mrf.mxu0
    %v6602 = vadd.f32 %v536, %v6601
    %v6603 = vpop.f32.mrf.mxu0
    %v6604 = vpop.f32.mrf.mxu0
    %6605 = vdwg.mxu0
    %6606 = vmatprep.subr.bf16.mxu0 %v2394
    %6607 = vmatpush1.bf16.msra.mxu0 %v2393
    %6608 = vmatprep.subr.bf16.mxu0 %v2386
    %6609 = vmatpush1.bf16.msra.mxu0 %v2385
    %6610 = vmatprep.subr.bf16.mxu0 %v2378
    %6611 = vmatpush1.bf16.msra.mxu0 %v2377
    %6612 = vmatprep.subr.bf16.mxu0 %v2370
    %6613 = vmatpush1.bf16.msra.mxu0 %v2369
    %6614 = vmatprep.subr.bf16.mxu0 %v2362
    %6615 = vmatpush1.bf16.msra.mxu0 %v2361
    %6616 = vmatprep.subr.bf16.mxu0 %v2354
    %6617 = vmatpush1.bf16.msra.mxu0 %v2353
    %6618 = vmatprep.subr.bf16.mxu0 %v2346
    %6619 = vmatpush1.bf16.msra.mxu0 %v2345
    %6620 = vmatprep.subr.bf16.mxu0 %v2338
    %6621 = vmatpush1.bf16.msra.mxu0 %v2337
    %6622 = vmatprep.subr.bf16.mxu0 %v2458
    %6623 = vmatpush2.bf16.msra.mxu0 %v2457
    %6624 = vmatprep.subr.bf16.mxu0 %v2450
    %6625 = vmatpush2.bf16.msra.mxu0 %v2449
    %6626 = vmatprep.subr.bf16.mxu0 %v2442
    %6627 = vmatpush2.bf16.msra.mxu0 %v2441
    %6628 = vmatprep.subr.bf16.mxu0 %v2434
    %6629 = vmatpush2.bf16.msra.mxu0 %v2433
    %6630 = vmatprep.subr.bf16.mxu0 %v2426
    %6631 = vmatpush2.bf16.msra.mxu0 %v2425
    %6632 = vmatprep.subr.bf16.mxu0 %v2418
    %6633 = vmatpush2.bf16.msra.mxu0 %v2417
    %6634 = vmatprep.subr.bf16.mxu0 %v2410
    %6635 = vmatpush2.bf16.msra.mxu0 %v2409
    %6636 = vmatprep.subr.bf16.mxu0 %v2402
    %6637 = vmatpush2.bf16.msra.mxu0 %v2401
    %6638 = vmatprep.mubr.bf16.mxu0 %v6400
    %6639 = vmatmul.mubr.bf16.gmra.mxu0 %v6399
    %v6640 = vpop.f32.mrf.mxu0
    %v6641 = vadd.f32 %v6600, %v6640
    %v6642 = vpop.f32.mrf.mxu0
    %v6643 = vadd.f32 %v6602, %v6642
    %v6644 = vpop.f32.mrf.mxu0
    %v6645 = vpop.f32.mrf.mxu0
    %6646 = vdwg.mxu0
    %6647 = vmatprep.subr.bf16.mxu0 %v2268
    %6648 = vmatpush1.bf16.msra.mxu0 %v2267
    %6649 = vmatprep.subr.bf16.mxu0 %v2260
    %6650 = vmatpush1.bf16.msra.mxu0 %v2259
    %6651 = vmatprep.subr.bf16.mxu0 %v2252
    %6652 = vmatpush1.bf16.msra.mxu0 %v2251
    %6653 = vmatprep.subr.bf16.mxu0 %v2244
    %6654 = vmatpush1.bf16.msra.mxu0 %v2243
    %6655 = vmatprep.subr.bf16.mxu0 %v2236
    %6656 = vmatpush1.bf16.msra.mxu0 %v2235
    %6657 = vmatprep.subr.bf16.mxu0 %v2228
    %6658 = vmatpush1.bf16.msra.mxu0 %v2227
    %6659 = vmatprep.subr.bf16.mxu0 %v2220
    %6660 = vmatpush1.bf16.msra.mxu0 %v2219
    %6661 = vmatprep.subr.bf16.mxu0 %v2212
    %6662 = vmatpush1.bf16.msra.mxu0 %v2211
    %6663 = vmatprep.subr.bf16.mxu0 %v2332
    %6664 = vmatpush2.bf16.msra.mxu0 %v2331
    %6665 = vmatprep.subr.bf16.mxu0 %v2324
    %6666 = vmatpush2.bf16.msra.mxu0 %v2323
    %6667 = vmatprep.subr.bf16.mxu0 %v2316
    %6668 = vmatpush2.bf16.msra.mxu0 %v2315
    %6669 = vmatprep.subr.bf16.mxu0 %v2308
    %6670 = vmatpush2.bf16.msra.mxu0 %v2307
    %6671 = vmatprep.subr.bf16.mxu0 %v2300
    %6672 = vmatpush2.bf16.msra.mxu0 %v2299
    %6673 = vmatprep.subr.bf16.mxu0 %v2292
    %6674 = vmatpush2.bf16.msra.mxu0 %v2291
    %6675 = vmatprep.subr.bf16.mxu0 %v2284
    %6676 = vmatpush2.bf16.msra.mxu0 %v2283
    %6677 = vmatprep.subr.bf16.mxu0 %v2276
    %6678 = vmatpush2.bf16.msra.mxu0 %v2275
    %6679 = vmatprep.mubr.bf16.mxu0 %v6398
    %6680 = vmatmul.mubr.bf16.gmra.mxu0 %v6397
    %v6681 = vpop.f32.mrf.mxu0
    %v6682 = vadd.f32 %v540, %v6681
    %v6683 = vpop.f32.mrf.mxu0
    %v6684 = vadd.f32 %v544, %v6683
    %v6685 = vpop.f32.mrf.mxu0
    %v6686 = vpop.f32.mrf.mxu0
    %6687 = vdwg.mxu0
    %6688 = vmatprep.subr.bf16.mxu0 %v2396
    %6689 = vmatpush1.bf16.msra.mxu0 %v2395
    %6690 = vmatprep.subr.bf16.mxu0 %v2388
    %6691 = vmatpush1.bf16.msra.mxu0 %v2387
    %6692 = vmatprep.subr.bf16.mxu0 %v2380
    %6693 = vmatpush1.bf16.msra.mxu0 %v2379
    %6694 = vmatprep.subr.bf16.mxu0 %v2372
    %6695 = vmatpush1.bf16.msra.mxu0 %v2371
    %6696 = vmatprep.subr.bf16.mxu0 %v2364
    %6697 = vmatpush1.bf16.msra.mxu0 %v2363
    %6698 = vmatprep.subr.bf16.mxu0 %v2356
    %6699 = vmatpush1.bf16.msra.mxu0 %v2355
    %6700 = vmatprep.subr.bf16.mxu0 %v2348
    %6701 = vmatpush1.bf16.msra.mxu0 %v2347
    %6702 = vmatprep.subr.bf16.mxu0 %v2340
    %6703 = vmatpush1.bf16.msra.mxu0 %v2339
    %6704 = vmatprep.subr.bf16.mxu0 %v2460
    %6705 = vmatpush2.bf16.msra.mxu0 %v2459
    %6706 = vmatprep.subr.bf16.mxu0 %v2452
    %6707 = vmatpush2.bf16.msra.mxu0 %v2451
    %6708 = vmatprep.subr.bf16.mxu0 %v2444
    %6709 = vmatpush2.bf16.msra.mxu0 %v2443
    %6710 = vmatprep.subr.bf16.mxu0 %v2436
    %6711 = vmatpush2.bf16.msra.mxu0 %v2435
    %6712 = vmatprep.subr.bf16.mxu0 %v2428
    %6713 = vmatpush2.bf16.msra.mxu0 %v2427
    %6714 = vmatprep.subr.bf16.mxu0 %v2420
    %6715 = vmatpush2.bf16.msra.mxu0 %v2419
    %6716 = vmatprep.subr.bf16.mxu0 %v2412
    %6717 = vmatpush2.bf16.msra.mxu0 %v2411
    %6718 = vmatprep.subr.bf16.mxu0 %v2404
    %6719 = vmatpush2.bf16.msra.mxu0 %v2403
    %6720 = vmatprep.mubr.bf16.mxu0 %v6400
    %6721 = vmatmul.mubr.bf16.gmra.mxu0 %v6399
    %v6722 = vpop.f32.mrf.mxu0
    %v6723 = vadd.f32 %v6682, %v6722
    %v6724 = vpop.f32.mrf.mxu0
    %v6725 = vadd.f32 %v6684, %v6724
    %v6726 = vpop.f32.mrf.mxu0
    %v6727 = vpop.f32.mrf.mxu0
    %6728 = vdwg.mxu0
    %v6729 = vxor.u32 %v6477, 2147483648
    %v6730 = vxor.u32 %v6479, 2147483648
    %v6731 = vxor.u32 %v6559, 2147483648
    %v6732 = vxor.u32 %v6561, 2147483648
    %v6733 = vmul.f32 %v6729, 1.442695
    %v6734 = vpow.pop %v6733
    %v6735 = vmul.f32 %v6730, 1.442695
    %v6736 = vpow.pop %v6735
    %v6737 = vmul.f32 %v6731, 1.442695
    %v6738 = vpow.pop %v6737
    %v6739 = vmul.f32 %v6732, 1.442695
    %v6740 = vpow.pop %v6739
    %v6741 = vadd.f32 %v6734, 1.0
    %v6742 = vadd.f32 %v6736, 1.0
    %v6743 = vadd.f32 %v6738, 1.0
    %v6744 = vadd.f32 %v6740, 1.0
    %v6745 = vrcp.pop %v6741
    %v6746 = vmul.f32 1.0, %v6745
    %v6747 = vrcp.pop %v6742
    %v6748 = vmul.f32 1.0, %v6747
    %v6749 = vrcp.pop %v6743
    %v6750 = vmul.f32 1.0, %v6749
    %v6751 = vrcp.pop %v6744
    %v6752 = vmul.f32 1.0, %v6751
    %v6753 = vtanh.pop %v6641
    %v6754 = vtanh.pop %v6643
    %v6755 = vxor.u32 %v6723, 2147483648
    %v6756 = vxor.u32 %v6725, 2147483648
    %v6757 = vmul.f32 %v6755, 1.442695
    %v6758 = vpow.pop %v6757
    %v6759 = vmul.f32 %v6756, 1.442695
    %v6760 = vpow.pop %v6759
    %v6761 = vadd.f32 %v6758, 1.0
    %v6762 = vadd.f32 %v6760, 1.0
    %v6763 = vrcp.pop %v6761
    %v6764 = vmul.f32 1.0, %v6763
    %v6765 = vrcp.pop %v6762
    %v6766 = vmul.f32 1.0, %v6765
    %v6767 = vmul.f32 %v6750, %v6157
    %v6768 = vmul.f32 %v6752, %v6158
    %v6769 = vmul.f32 %v6746, %v6753
    %v6770 = vmul.f32 %v6748, %v6754
    %v6771 = vadd.f32 %v6767, %v6769
    %v6772 = vadd.f32 %v6768, %v6770
    %v6773 = vtanh.pop %v6771
    %v6774 = vtanh.pop %v6772
    %v6775 = vmul.f32 %v6764, %v6773
    %v6776 = vmul.f32 %v6766, %v6774
    %s6777 = smul.u32 6, 2
    %s6778 = smul.addr %s6777, 8
    %s6779 = scalar_lea.vmem [#allocation2], %s6778
    %6780 = vst [vmem:[%s6779] sm:$0xff] %v6775
    %6781 = vst [vmem:[%s6779 + $0x8] sm:$0xff] %v6776
    %s6782 = scalar_lea.vmem [#allocation3], 448
    %v6783 = vld [vmem:[%s6782] sm:$0xff]
    %v6784 = vld [vmem:[%s6782 + $0x8] sm:$0xff]
    %v6785 = vld [vmem:[%s6782 + $0x10] sm:$0xff]
    %v6786 = vld [vmem:[%s6782 + $0x18] sm:$0xff]
    %v6787 = vld [vmem:[%s6782 + $0x20] sm:$0xff]
    %v6788 = vld [vmem:[%s6782 + $0x28] sm:$0xff]
    %v6789 = vld [vmem:[%s6782 + $0x30] sm:$0xff]
    %v6790 = vld [vmem:[%s6782 + $0x38] sm:$0xff]
    %6791 = vmatprep.subr.bf16.mxu0 %v1014
    %6792 = vmatpush1.bf16.msra.mxu0 %v1013
    %6793 = vmatprep.subr.bf16.mxu0 %v1006
    %6794 = vmatpush1.bf16.msra.mxu0 %v1005
    %6795 = vmatprep.subr.bf16.mxu0 %v998
    %6796 = vmatpush1.bf16.msra.mxu0 %v997
    %6797 = vmatprep.subr.bf16.mxu0 %v990
    %6798 = vmatpush1.bf16.msra.mxu0 %v989
    %6799 = vmatprep.subr.bf16.mxu0 %v982
    %6800 = vmatpush1.bf16.msra.mxu0 %v981
    %6801 = vmatprep.subr.bf16.mxu0 %v974
    %6802 = vmatpush1.bf16.msra.mxu0 %v973
    %6803 = vmatprep.subr.bf16.mxu0 %v966
    %6804 = vmatpush1.bf16.msra.mxu0 %v965
    %6805 = vmatprep.subr.bf16.mxu0 %v958
    %6806 = vmatpush1.bf16.msra.mxu0 %v957
    %6807 = vmatprep.subr.bf16.mxu0 %v1078
    %6808 = vmatpush2.bf16.msra.mxu0 %v1077
    %6809 = vmatprep.subr.bf16.mxu0 %v1070
    %6810 = vmatpush2.bf16.msra.mxu0 %v1069
    %6811 = vmatprep.subr.bf16.mxu0 %v1062
    %6812 = vmatpush2.bf16.msra.mxu0 %v1061
    %6813 = vmatprep.subr.bf16.mxu0 %v1054
    %6814 = vmatpush2.bf16.msra.mxu0 %v1053
    %6815 = vmatprep.subr.bf16.mxu0 %v1046
    %6816 = vmatpush2.bf16.msra.mxu0 %v1045
    %6817 = vmatprep.subr.bf16.mxu0 %v1038
    %6818 = vmatpush2.bf16.msra.mxu0 %v1037
    %6819 = vmatprep.subr.bf16.mxu0 %v1030
    %6820 = vmatpush2.bf16.msra.mxu0 %v1029
    %6821 = vmatprep.subr.bf16.mxu0 %v1022
    %6822 = vmatpush2.bf16.msra.mxu0 %v1021
    %6823 = vmatprep.mubr.bf16.mxu0 %v6398
    %6824 = vmatmul.mubr.bf16.gmra.mxu0 %v6397
    %v6825 = vpop.f32.mrf.mxu0
    %v6826 = vadd.f32 0.0, %v6825
    %v6827 = vpop.f32.mrf.mxu0
    %v6828 = vadd.f32 0.0, %v6827
    %v6829 = vpop.f32.mrf.mxu0
    %v6830 = vpop.f32.mrf.mxu0
    %6831 = vdwg.mxu0
    %6832 = vmatprep.subr.bf16.mxu0 %v1016
    %6833 = vmatpush1.bf16.msra.mxu0 %v1015
    %6834 = vmatprep.subr.bf16.mxu0 %v1008
    %6835 = vmatpush1.bf16.msra.mxu0 %v1007
    %6836 = vmatprep.subr.bf16.mxu0 %v1000
    %6837 = vmatpush1.bf16.msra.mxu0 %v999
    %6838 = vmatprep.subr.bf16.mxu0 %v992
    %6839 = vmatpush1.bf16.msra.mxu0 %v991
    %6840 = vmatprep.subr.bf16.mxu0 %v984
    %6841 = vmatpush1.bf16.msra.mxu0 %v983
    %6842 = vmatprep.subr.bf16.mxu0 %v976
    %6843 = vmatpush1.bf16.msra.mxu0 %v975
    %6844 = vmatprep.subr.bf16.mxu0 %v968
    %6845 = vmatpush1.bf16.msra.mxu0 %v967
    %6846 = vmatprep.subr.bf16.mxu0 %v960
    %6847 = vmatpush1.bf16.msra.mxu0 %v959
    %6848 = vmatprep.subr.bf16.mxu0 %v1080
    %6849 = vmatpush2.bf16.msra.mxu0 %v1079
    %6850 = vmatprep.subr.bf16.mxu0 %v1072
    %6851 = vmatpush2.bf16.msra.mxu0 %v1071
    %6852 = vmatprep.subr.bf16.mxu0 %v1064
    %6853 = vmatpush2.bf16.msra.mxu0 %v1063
    %6854 = vmatprep.subr.bf16.mxu0 %v1056
    %6855 = vmatpush2.bf16.msra.mxu0 %v1055
    %6856 = vmatprep.subr.bf16.mxu0 %v1048
    %6857 = vmatpush2.bf16.msra.mxu0 %v1047
    %6858 = vmatprep.subr.bf16.mxu0 %v1040
    %6859 = vmatpush2.bf16.msra.mxu0 %v1039
    %6860 = vmatprep.subr.bf16.mxu0 %v1032
    %6861 = vmatpush2.bf16.msra.mxu0 %v1031
    %6862 = vmatprep.subr.bf16.mxu0 %v1024
    %6863 = vmatpush2.bf16.msra.mxu0 %v1023
    %6864 = vmatprep.mubr.bf16.mxu0 %v6398
    %6865 = vmatmul.mubr.bf16.gmra.mxu0 %v6397
    %v6866 = vpop.f32.mrf.mxu0
    %v6867 = vadd.f32 0.0, %v6866
    %v6868 = vpop.f32.mrf.mxu0
    %v6869 = vadd.f32 0.0, %v6868
    %v6870 = vpop.f32.mrf.mxu0
    %v6871 = vpop.f32.mrf.mxu0
    %6872 = vdwg.mxu0
    %6873 = vmatprep.subr.bf16.mxu0 %v1018
    %6874 = vmatpush1.bf16.msra.mxu0 %v1017
    %6875 = vmatprep.subr.bf16.mxu0 %v1010
    %6876 = vmatpush1.bf16.msra.mxu0 %v1009
    %6877 = vmatprep.subr.bf16.mxu0 %v1002
    %6878 = vmatpush1.bf16.msra.mxu0 %v1001
    %6879 = vmatprep.subr.bf16.mxu0 %v994
    %6880 = vmatpush1.bf16.msra.mxu0 %v993
    %6881 = vmatprep.subr.bf16.mxu0 %v986
    %6882 = vmatpush1.bf16.msra.mxu0 %v985
    %6883 = vmatprep.subr.bf16.mxu0 %v978
    %6884 = vmatpush1.bf16.msra.mxu0 %v977
    %6885 = vmatprep.subr.bf16.mxu0 %v970
    %6886 = vmatpush1.bf16.msra.mxu0 %v969
    %6887 = vmatprep.subr.bf16.mxu0 %v962
    %6888 = vmatpush1.bf16.msra.mxu0 %v961
    %6889 = vmatprep.subr.bf16.mxu0 %v1082
    %6890 = vmatpush2.bf16.msra.mxu0 %v1081
    %6891 = vmatprep.subr.bf16.mxu0 %v1074
    %6892 = vmatpush2.bf16.msra.mxu0 %v1073
    %6893 = vmatprep.subr.bf16.mxu0 %v1066
    %6894 = vmatpush2.bf16.msra.mxu0 %v1065
    %6895 = vmatprep.subr.bf16.mxu0 %v1058
    %6896 = vmatpush2.bf16.msra.mxu0 %v1057
    %6897 = vmatprep.subr.bf16.mxu0 %v1050
    %6898 = vmatpush2.bf16.msra.mxu0 %v1049
    %6899 = vmatprep.subr.bf16.mxu0 %v1042
    %6900 = vmatpush2.bf16.msra.mxu0 %v1041
    %6901 = vmatprep.subr.bf16.mxu0 %v1034
    %6902 = vmatpush2.bf16.msra.mxu0 %v1033
    %6903 = vmatprep.subr.bf16.mxu0 %v1026
    %6904 = vmatpush2.bf16.msra.mxu0 %v1025
    %6905 = vmatprep.mubr.bf16.mxu0 %v6398
    %6906 = vmatmul.mubr.bf16.gmra.mxu0 %v6397
    %v6907 = vpop.f32.mrf.mxu0
    %v6908 = vadd.f32 0.0, %v6907
    %v6909 = vpop.f32.mrf.mxu0
    %v6910 = vadd.f32 0.0, %v6909
    %v6911 = vpop.f32.mrf.mxu0
    %v6912 = vpop.f32.mrf.mxu0
    %6913 = vdwg.mxu0
    %6914 = vmatprep.subr.bf16.mxu0 %v1020
    %6915 = vmatpush1.bf16.msra.mxu0 %v1019
    %6916 = vmatprep.subr.bf16.mxu0 %v1012
    %6917 = vmatpush1.bf16.msra.mxu0 %v1011
    %6918 = vmatprep.subr.bf16.mxu0 %v1004
    %6919 = vmatpush1.bf16.msra.mxu0 %v1003
    %6920 = vmatprep.subr.bf16.mxu0 %v996
    %6921 = vmatpush1.bf16.msra.mxu0 %v995
    %6922 = vmatprep.subr.bf16.mxu0 %v988
    %6923 = vmatpush1.bf16.msra.mxu0 %v987
    %6924 = vmatprep.subr.bf16.mxu0 %v980
    %6925 = vmatpush1.bf16.msra.mxu0 %v979
    %6926 = vmatprep.subr.bf16.mxu0 %v972
    %6927 = vmatpush1.bf16.msra.mxu0 %v971
    %6928 = vmatprep.subr.bf16.mxu0 %v964
    %6929 = vmatpush1.bf16.msra.mxu0 %v963
    %6930 = vmatprep.subr.bf16.mxu0 %v1084
    %6931 = vmatpush2.bf16.msra.mxu0 %v1083
    %6932 = vmatprep.subr.bf16.mxu0 %v1076
    %6933 = vmatpush2.bf16.msra.mxu0 %v1075
    %6934 = vmatprep.subr.bf16.mxu0 %v1068
    %6935 = vmatpush2.bf16.msra.mxu0 %v1067
    %6936 = vmatprep.subr.bf16.mxu0 %v1060
    %6937 = vmatpush2.bf16.msra.mxu0 %v1059
    %6938 = vmatprep.subr.bf16.mxu0 %v1052
    %6939 = vmatpush2.bf16.msra.mxu0 %v1051
    %6940 = vmatprep.subr.bf16.mxu0 %v1044
    %6941 = vmatpush2.bf16.msra.mxu0 %v1043
    %6942 = vmatprep.subr.bf16.mxu0 %v1036
    %6943 = vmatpush2.bf16.msra.mxu0 %v1035
    %6944 = vmatprep.subr.bf16.mxu0 %v1028
    %6945 = vmatpush2.bf16.msra.mxu0 %v1027
    %6946 = vmatprep.mubr.bf16.mxu0 %v6398
    %6947 = vmatmul.mubr.bf16.gmra.mxu0 %v6397
    %v6948 = vpop.f32.mrf.mxu0
    %v6949 = vadd.f32 0.0, %v6948
    %v6950 = vpop.f32.mrf.mxu0
    %v6951 = vadd.f32 0.0, %v6950
    %v6952 = vpop.f32.mrf.mxu0
    %v6953 = vpop.f32.mrf.mxu0
    %6954 = vdwg.mxu0
    %v6955 = vadd.f32 %v6783, %v6826
    %v6956 = vadd.f32 %v6784, %v6828
    %v6957 = vadd.f32 %v6785, %v6867
    %v6958 = vadd.f32 %v6786, %v6869
    %v6959 = vadd.f32 %v6787, %v6908
    %v6960 = vadd.f32 %v6788, %v6910
    %v6961 = vadd.f32 %v6789, %v6949
    %v6962 = vadd.f32 %v6790, %v6951
    %v6963 = vxor.u32 %v6955, 2147483648
    %v6964 = vxor.u32 %v6956, 2147483648
    %v6965 = vxor.u32 %v6957, 2147483648
    %v6966 = vxor.u32 %v6958, 2147483648
    %v6967 = vmul.f32 %v6963, 1.442695
    %v6968 = vpow.pop %v6967
    %v6969 = vmul.f32 %v6964, 1.442695
    %v6970 = vpow.pop %v6969
    %v6971 = vmul.f32 %v6965, 1.442695
    %v6972 = vpow.pop %v6971
    %v6973 = vmul.f32 %v6966, 1.442695
    %v6974 = vpow.pop %v6973
    %v6975 = vadd.f32 %v6968, 1.0
    %v6976 = vadd.f32 %v6970, 1.0
    %v6977 = vadd.f32 %v6972, 1.0
    %v6978 = vadd.f32 %v6974, 1.0
    %v6979 = vrcp.pop %v6975
    %v6980 = vmul.f32 1.0, %v6979
    %v6981 = vrcp.pop %v6976
    %v6982 = vmul.f32 1.0, %v6981
    %v6983 = vrcp.pop %v6977
    %v6984 = vmul.f32 1.0, %v6983
    %v6985 = vrcp.pop %v6978
    %v6986 = vmul.f32 1.0, %v6985
    %v6987 = vtanh.pop %v6959
    %v6988 = vtanh.pop %v6960
    %v6989 = vxor.u32 %v6961, 2147483648
    %v6990 = vxor.u32 %v6962, 2147483648
    %v6991 = vmul.f32 %v6989, 1.442695
    %v6992 = vpow.pop %v6991
    %v6993 = vmul.f32 %v6990, 1.442695
    %v6994 = vpow.pop %v6993
    %v6995 = vadd.f32 %v6992, 1.0
    %v6996 = vadd.f32 %v6994, 1.0
    %v6997 = vrcp.pop %v6995
    %v6998 = vmul.f32 1.0, %v6997
    %v6999 = vrcp.pop %v6996
    %v7000 = vmul.f32 1.0, %v6999
    %v7001 = vmul.f32 %v6984, %v6391
    %v7002 = vmul.f32 %v6986, %v6392
    %v7003 = vmul.f32 %v6980, %v6987
    %v7004 = vmul.f32 %v6982, %v6988
    %v7005 = vadd.f32 %v7001, %v7003
    %v7006 = vadd.f32 %v7002, %v7004
    %v7007 = vtanh.pop %v7005
    %v7008 = vtanh.pop %v7006
    %v7009 = vmul.f32 %v6998, %v7007
    %v7010 = vmul.f32 %v7000, %v7008
    %v7011 = vpack.c.bf16 %v7009, %v7009
    %v7012 = vpack.c.bf16 %v7010, %v7010
    %v7013 = vpack.c.bf16 %v6775, %v6775
    %v7014 = vpack.c.bf16 %v6776, %v6776
    %7015 = vmatprep.subr.bf16.mxu0 %v2262
    %7016 = vmatpush1.bf16.msra.mxu0 %v2261
    %7017 = vmatprep.subr.bf16.mxu0 %v2254
    %7018 = vmatpush1.bf16.msra.mxu0 %v2253
    %7019 = vmatprep.subr.bf16.mxu0 %v2246
    %7020 = vmatpush1.bf16.msra.mxu0 %v2245
    %7021 = vmatprep.subr.bf16.mxu0 %v2238
    %7022 = vmatpush1.bf16.msra.mxu0 %v2237
    %7023 = vmatprep.subr.bf16.mxu0 %v2230
    %7024 = vmatpush1.bf16.msra.mxu0 %v2229
    %7025 = vmatprep.subr.bf16.mxu0 %v2222
    %7026 = vmatpush1.bf16.msra.mxu0 %v2221
    %7027 = vmatprep.subr.bf16.mxu0 %v2214
    %7028 = vmatpush1.bf16.msra.mxu0 %v2213
    %7029 = vmatprep.subr.bf16.mxu0 %v2206
    %7030 = vmatpush1.bf16.msra.mxu0 %v2205
    %7031 = vmatprep.subr.bf16.mxu0 %v2326
    %7032 = vmatpush2.bf16.msra.mxu0 %v2325
    %7033 = vmatprep.subr.bf16.mxu0 %v2318
    %7034 = vmatpush2.bf16.msra.mxu0 %v2317
    %7035 = vmatprep.subr.bf16.mxu0 %v2310
    %7036 = vmatpush2.bf16.msra.mxu0 %v2309
    %7037 = vmatprep.subr.bf16.mxu0 %v2302
    %7038 = vmatpush2.bf16.msra.mxu0 %v2301
    %7039 = vmatprep.subr.bf16.mxu0 %v2294
    %7040 = vmatpush2.bf16.msra.mxu0 %v2293
    %7041 = vmatprep.subr.bf16.mxu0 %v2286
    %7042 = vmatpush2.bf16.msra.mxu0 %v2285
    %7043 = vmatprep.subr.bf16.mxu0 %v2278
    %7044 = vmatpush2.bf16.msra.mxu0 %v2277
    %7045 = vmatprep.subr.bf16.mxu0 %v2270
    %7046 = vmatpush2.bf16.msra.mxu0 %v2269
    %7047 = vmatprep.mubr.bf16.mxu0 %v7012
    %7048 = vmatmul.mubr.bf16.gmra.mxu0 %v7011
    %v7049 = vpop.f32.mrf.mxu0
    %v7050 = vadd.f32 %v516, %v7049
    %v7051 = vpop.f32.mrf.mxu0
    %v7052 = vadd.f32 %v520, %v7051
    %v7053 = vpop.f32.mrf.mxu0
    %v7054 = vpop.f32.mrf.mxu0
    %7055 = vdwg.mxu0
    %7056 = vmatprep.subr.bf16.mxu0 %v2390
    %7057 = vmatpush1.bf16.msra.mxu0 %v2389
    %7058 = vmatprep.subr.bf16.mxu0 %v2382
    %7059 = vmatpush1.bf16.msra.mxu0 %v2381
    %7060 = vmatprep.subr.bf16.mxu0 %v2374
    %7061 = vmatpush1.bf16.msra.mxu0 %v2373
    %7062 = vmatprep.subr.bf16.mxu0 %v2366
    %7063 = vmatpush1.bf16.msra.mxu0 %v2365
    %7064 = vmatprep.subr.bf16.mxu0 %v2358
    %7065 = vmatpush1.bf16.msra.mxu0 %v2357
    %7066 = vmatprep.subr.bf16.mxu0 %v2350
    %7067 = vmatpush1.bf16.msra.mxu0 %v2349
    %7068 = vmatprep.subr.bf16.mxu0 %v2342
    %7069 = vmatpush1.bf16.msra.mxu0 %v2341
    %7070 = vmatprep.subr.bf16.mxu0 %v2334
    %7071 = vmatpush1.bf16.msra.mxu0 %v2333
    %7072 = vmatprep.subr.bf16.mxu0 %v2454
    %7073 = vmatpush2.bf16.msra.mxu0 %v2453
    %7074 = vmatprep.subr.bf16.mxu0 %v2446
    %7075 = vmatpush2.bf16.msra.mxu0 %v2445
    %7076 = vmatprep.subr.bf16.mxu0 %v2438
    %7077 = vmatpush2.bf16.msra.mxu0 %v2437
    %7078 = vmatprep.subr.bf16.mxu0 %v2430
    %7079 = vmatpush2.bf16.msra.mxu0 %v2429
    %7080 = vmatprep.subr.bf16.mxu0 %v2422
    %7081 = vmatpush2.bf16.msra.mxu0 %v2421
    %7082 = vmatprep.subr.bf16.mxu0 %v2414
    %7083 = vmatpush2.bf16.msra.mxu0 %v2413
    %7084 = vmatprep.subr.bf16.mxu0 %v2406
    %7085 = vmatpush2.bf16.msra.mxu0 %v2405
    %7086 = vmatprep.subr.bf16.mxu0 %v2398
    %7087 = vmatpush2.bf16.msra.mxu0 %v2397
    %7088 = vmatprep.mubr.bf16.mxu0 %v7014
    %7089 = vmatmul.mubr.bf16.gmra.mxu0 %v7013
    %v7090 = vpop.f32.mrf.mxu0
    %v7091 = vadd.f32 %v7050, %v7090
    %v7092 = vpop.f32.mrf.mxu0
    %v7093 = vadd.f32 %v7052, %v7092
    %v7094 = vpop.f32.mrf.mxu0
    %v7095 = vpop.f32.mrf.mxu0
    %7096 = vdwg.mxu0
    %7097 = vmatprep.subr.bf16.mxu0 %v2264
    %7098 = vmatpush1.bf16.msra.mxu0 %v2263
    %7099 = vmatprep.subr.bf16.mxu0 %v2256
    %7100 = vmatpush1.bf16.msra.mxu0 %v2255
    %7101 = vmatprep.subr.bf16.mxu0 %v2248
    %7102 = vmatpush1.bf16.msra.mxu0 %v2247
    %7103 = vmatprep.subr.bf16.mxu0 %v2240
    %7104 = vmatpush1.bf16.msra.mxu0 %v2239
    %7105 = vmatprep.subr.bf16.mxu0 %v2232
    %7106 = vmatpush1.bf16.msra.mxu0 %v2231
    %7107 = vmatprep.subr.bf16.mxu0 %v2224
    %7108 = vmatpush1.bf16.msra.mxu0 %v2223
    %7109 = vmatprep.subr.bf16.mxu0 %v2216
    %7110 = vmatpush1.bf16.msra.mxu0 %v2215
    %7111 = vmatprep.subr.bf16.mxu0 %v2208
    %7112 = vmatpush1.bf16.msra.mxu0 %v2207
    %7113 = vmatprep.subr.bf16.mxu0 %v2328
    %7114 = vmatpush2.bf16.msra.mxu0 %v2327
    %7115 = vmatprep.subr.bf16.mxu0 %v2320
    %7116 = vmatpush2.bf16.msra.mxu0 %v2319
    %7117 = vmatprep.subr.bf16.mxu0 %v2312
    %7118 = vmatpush2.bf16.msra.mxu0 %v2311
    %7119 = vmatprep.subr.bf16.mxu0 %v2304
    %7120 = vmatpush2.bf16.msra.mxu0 %v2303
    %7121 = vmatprep.subr.bf16.mxu0 %v2296
    %7122 = vmatpush2.bf16.msra.mxu0 %v2295
    %7123 = vmatprep.subr.bf16.mxu0 %v2288
    %7124 = vmatpush2.bf16.msra.mxu0 %v2287
    %7125 = vmatprep.subr.bf16.mxu0 %v2280
    %7126 = vmatpush2.bf16.msra.mxu0 %v2279
    %7127 = vmatprep.subr.bf16.mxu0 %v2272
    %7128 = vmatpush2.bf16.msra.mxu0 %v2271
    %7129 = vmatprep.mubr.bf16.mxu0 %v7012
    %7130 = vmatmul.mubr.bf16.gmra.mxu0 %v7011
    %v7131 = vpop.f32.mrf.mxu0
    %v7132 = vadd.f32 %v524, %v7131
    %v7133 = vpop.f32.mrf.mxu0
    %v7134 = vadd.f32 %v528, %v7133
    %v7135 = vpop.f32.mrf.mxu0
    %v7136 = vpop.f32.mrf.mxu0
    %7137 = vdwg.mxu0
    %7138 = vmatprep.subr.bf16.mxu0 %v2392
    %7139 = vmatpush1.bf16.msra.mxu0 %v2391
    %7140 = vmatprep.subr.bf16.mxu0 %v2384
    %7141 = vmatpush1.bf16.msra.mxu0 %v2383
    %7142 = vmatprep.subr.bf16.mxu0 %v2376
    %7143 = vmatpush1.bf16.msra.mxu0 %v2375
    %7144 = vmatprep.subr.bf16.mxu0 %v2368
    %7145 = vmatpush1.bf16.msra.mxu0 %v2367
    %7146 = vmatprep.subr.bf16.mxu0 %v2360
    %7147 = vmatpush1.bf16.msra.mxu0 %v2359
    %7148 = vmatprep.subr.bf16.mxu0 %v2352
    %7149 = vmatpush1.bf16.msra.mxu0 %v2351
    %7150 = vmatprep.subr.bf16.mxu0 %v2344
    %7151 = vmatpush1.bf16.msra.mxu0 %v2343
    %7152 = vmatprep.subr.bf16.mxu0 %v2336
    %7153 = vmatpush1.bf16.msra.mxu0 %v2335
    %7154 = vmatprep.subr.bf16.mxu0 %v2456
    %7155 = vmatpush2.bf16.msra.mxu0 %v2455
    %7156 = vmatprep.subr.bf16.mxu0 %v2448
    %7157 = vmatpush2.bf16.msra.mxu0 %v2447
    %7158 = vmatprep.subr.bf16.mxu0 %v2440
    %7159 = vmatpush2.bf16.msra.mxu0 %v2439
    %7160 = vmatprep.subr.bf16.mxu0 %v2432
    %7161 = vmatpush2.bf16.msra.mxu0 %v2431
    %7162 = vmatprep.subr.bf16.mxu0 %v2424
    %7163 = vmatpush2.bf16.msra.mxu0 %v2423
    %7164 = vmatprep.subr.bf16.mxu0 %v2416
    %7165 = vmatpush2.bf16.msra.mxu0 %v2415
    %7166 = vmatprep.subr.bf16.mxu0 %v2408
    %7167 = vmatpush2.bf16.msra.mxu0 %v2407
    %7168 = vmatprep.subr.bf16.mxu0 %v2400
    %7169 = vmatpush2.bf16.msra.mxu0 %v2399
    %7170 = vmatprep.mubr.bf16.mxu0 %v7014
    %7171 = vmatmul.mubr.bf16.gmra.mxu0 %v7013
    %v7172 = vpop.f32.mrf.mxu0
    %v7173 = vadd.f32 %v7132, %v7172
    %v7174 = vpop.f32.mrf.mxu0
    %v7175 = vadd.f32 %v7134, %v7174
    %v7176 = vpop.f32.mrf.mxu0
    %v7177 = vpop.f32.mrf.mxu0
    %7178 = vdwg.mxu0
    %7179 = vmatprep.subr.bf16.mxu0 %v2266
    %7180 = vmatpush1.bf16.msra.mxu0 %v2265
    %7181 = vmatprep.subr.bf16.mxu0 %v2258
    %7182 = vmatpush1.bf16.msra.mxu0 %v2257
    %7183 = vmatprep.subr.bf16.mxu0 %v2250
    %7184 = vmatpush1.bf16.msra.mxu0 %v2249
    %7185 = vmatprep.subr.bf16.mxu0 %v2242
    %7186 = vmatpush1.bf16.msra.mxu0 %v2241
    %7187 = vmatprep.subr.bf16.mxu0 %v2234
    %7188 = vmatpush1.bf16.msra.mxu0 %v2233
    %7189 = vmatprep.subr.bf16.mxu0 %v2226
    %7190 = vmatpush1.bf16.msra.mxu0 %v2225
    %7191 = vmatprep.subr.bf16.mxu0 %v2218
    %7192 = vmatpush1.bf16.msra.mxu0 %v2217
    %7193 = vmatprep.subr.bf16.mxu0 %v2210
    %7194 = vmatpush1.bf16.msra.mxu0 %v2209
    %7195 = vmatprep.subr.bf16.mxu0 %v2330
    %7196 = vmatpush2.bf16.msra.mxu0 %v2329
    %7197 = vmatprep.subr.bf16.mxu0 %v2322
    %7198 = vmatpush2.bf16.msra.mxu0 %v2321
    %7199 = vmatprep.subr.bf16.mxu0 %v2314
    %7200 = vmatpush2.bf16.msra.mxu0 %v2313
    %7201 = vmatprep.subr.bf16.mxu0 %v2306
    %7202 = vmatpush2.bf16.msra.mxu0 %v2305
    %7203 = vmatprep.subr.bf16.mxu0 %v2298
    %7204 = vmatpush2.bf16.msra.mxu0 %v2297
    %7205 = vmatprep.subr.bf16.mxu0 %v2290
    %7206 = vmatpush2.bf16.msra.mxu0 %v2289
    %7207 = vmatprep.subr.bf16.mxu0 %v2282
    %7208 = vmatpush2.bf16.msra.mxu0 %v2281
    %7209 = vmatprep.subr.bf16.mxu0 %v2274
    %7210 = vmatpush2.bf16.msra.mxu0 %v2273
    %7211 = vmatprep.mubr.bf16.mxu0 %v7012
    %7212 = vmatmul.mubr.bf16.gmra.mxu0 %v7011
    %v7213 = vpop.f32.mrf.mxu0
    %v7214 = vadd.f32 %v532, %v7213
    %v7215 = vpop.f32.mrf.mxu0
    %v7216 = vadd.f32 %v536, %v7215
    %v7217 = vpop.f32.mrf.mxu0
    %v7218 = vpop.f32.mrf.mxu0
    %7219 = vdwg.mxu0
    %7220 = vmatprep.subr.bf16.mxu0 %v2394
    %7221 = vmatpush1.bf16.msra.mxu0 %v2393
    %7222 = vmatprep.subr.bf16.mxu0 %v2386
    %7223 = vmatpush1.bf16.msra.mxu0 %v2385
    %7224 = vmatprep.subr.bf16.mxu0 %v2378
    %7225 = vmatpush1.bf16.msra.mxu0 %v2377
    %7226 = vmatprep.subr.bf16.mxu0 %v2370
    %7227 = vmatpush1.bf16.msra.mxu0 %v2369
    %7228 = vmatprep.subr.bf16.mxu0 %v2362
    %7229 = vmatpush1.bf16.msra.mxu0 %v2361
    %7230 = vmatprep.subr.bf16.mxu0 %v2354
    %7231 = vmatpush1.bf16.msra.mxu0 %v2353
    %7232 = vmatprep.subr.bf16.mxu0 %v2346
    %7233 = vmatpush1.bf16.msra.mxu0 %v2345
    %7234 = vmatprep.subr.bf16.mxu0 %v2338
    %7235 = vmatpush1.bf16.msra.mxu0 %v2337
    %7236 = vmatprep.subr.bf16.mxu0 %v2458
    %7237 = vmatpush2.bf16.msra.mxu0 %v2457
    %7238 = vmatprep.subr.bf16.mxu0 %v2450
    %7239 = vmatpush2.bf16.msra.mxu0 %v2449
    %7240 = vmatprep.subr.bf16.mxu0 %v2442
    %7241 = vmatpush2.bf16.msra.mxu0 %v2441
    %7242 = vmatprep.subr.bf16.mxu0 %v2434
    %7243 = vmatpush2.bf16.msra.mxu0 %v2433
    %7244 = vmatprep.subr.bf16.mxu0 %v2426
    %7245 = vmatpush2.bf16.msra.mxu0 %v2425
    %7246 = vmatprep.subr.bf16.mxu0 %v2418
    %7247 = vmatpush2.bf16.msra.mxu0 %v2417
    %7248 = vmatprep.subr.bf16.mxu0 %v2410
    %7249 = vmatpush2.bf16.msra.mxu0 %v2409
    %7250 = vmatprep.subr.bf16.mxu0 %v2402
    %7251 = vmatpush2.bf16.msra.mxu0 %v2401
    %7252 = vmatprep.mubr.bf16.mxu0 %v7014
    %7253 = vmatmul.mubr.bf16.gmra.mxu0 %v7013
    %v7254 = vpop.f32.mrf.mxu0
    %v7255 = vadd.f32 %v7214, %v7254
    %v7256 = vpop.f32.mrf.mxu0
    %v7257 = vadd.f32 %v7216, %v7256
    %v7258 = vpop.f32.mrf.mxu0
    %v7259 = vpop.f32.mrf.mxu0
    %7260 = vdwg.mxu0
    %7261 = vmatprep.subr.bf16.mxu0 %v2268
    %7262 = vmatpush1.bf16.msra.mxu0 %v2267
    %7263 = vmatprep.subr.bf16.mxu0 %v2260
    %7264 = vmatpush1.bf16.msra.mxu0 %v2259
    %7265 = vmatprep.subr.bf16.mxu0 %v2252
    %7266 = vmatpush1.bf16.msra.mxu0 %v2251
    %7267 = vmatprep.subr.bf16.mxu0 %v2244
    %7268 = vmatpush1.bf16.msra.mxu0 %v2243
    %7269 = vmatprep.subr.bf16.mxu0 %v2236
    %7270 = vmatpush1.bf16.msra.mxu0 %v2235
    %7271 = vmatprep.subr.bf16.mxu0 %v2228
    %7272 = vmatpush1.bf16.msra.mxu0 %v2227
    %7273 = vmatprep.subr.bf16.mxu0 %v2220
    %7274 = vmatpush1.bf16.msra.mxu0 %v2219
    %7275 = vmatprep.subr.bf16.mxu0 %v2212
    %7276 = vmatpush1.bf16.msra.mxu0 %v2211
    %7277 = vmatprep.subr.bf16.mxu0 %v2332
    %7278 = vmatpush2.bf16.msra.mxu0 %v2331
    %7279 = vmatprep.subr.bf16.mxu0 %v2324
    %7280 = vmatpush2.bf16.msra.mxu0 %v2323
    %7281 = vmatprep.subr.bf16.mxu0 %v2316
    %7282 = vmatpush2.bf16.msra.mxu0 %v2315
    %7283 = vmatprep.subr.bf16.mxu0 %v2308
    %7284 = vmatpush2.bf16.msra.mxu0 %v2307
    %7285 = vmatprep.subr.bf16.mxu0 %v2300
    %7286 = vmatpush2.bf16.msra.mxu0 %v2299
    %7287 = vmatprep.subr.bf16.mxu0 %v2292
    %7288 = vmatpush2.bf16.msra.mxu0 %v2291
    %7289 = vmatprep.subr.bf16.mxu0 %v2284
    %7290 = vmatpush2.bf16.msra.mxu0 %v2283
    %7291 = vmatprep.subr.bf16.mxu0 %v2276
    %7292 = vmatpush2.bf16.msra.mxu0 %v2275
    %7293 = vmatprep.mubr.bf16.mxu0 %v7012
    %7294 = vmatmul.mubr.bf16.gmra.mxu0 %v7011
    %v7295 = vpop.f32.mrf.mxu0
    %v7296 = vadd.f32 %v540, %v7295
    %v7297 = vpop.f32.mrf.mxu0
    %v7298 = vadd.f32 %v544, %v7297
    %v7299 = vpop.f32.mrf.mxu0
    %v7300 = vpop.f32.mrf.mxu0
    %7301 = vdwg.mxu0
    %7302 = vmatprep.subr.bf16.mxu0 %v2396
    %7303 = vmatpush1.bf16.msra.mxu0 %v2395
    %7304 = vmatprep.subr.bf16.mxu0 %v2388
    %7305 = vmatpush1.bf16.msra.mxu0 %v2387
    %7306 = vmatprep.subr.bf16.mxu0 %v2380
    %7307 = vmatpush1.bf16.msra.mxu0 %v2379
    %7308 = vmatprep.subr.bf16.mxu0 %v2372
    %7309 = vmatpush1.bf16.msra.mxu0 %v2371
    %7310 = vmatprep.subr.bf16.mxu0 %v2364
    %7311 = vmatpush1.bf16.msra.mxu0 %v2363
    %7312 = vmatprep.subr.bf16.mxu0 %v2356
    %7313 = vmatpush1.bf16.msra.mxu0 %v2355
    %7314 = vmatprep.subr.bf16.mxu0 %v2348
    %7315 = vmatpush1.bf16.msra.mxu0 %v2347
    %7316 = vmatprep.subr.bf16.mxu0 %v2340
    %7317 = vmatpush1.bf16.msra.mxu0 %v2339
    %7318 = vmatprep.subr.bf16.mxu0 %v2460
    %7319 = vmatpush2.bf16.msra.mxu0 %v2459
    %7320 = vmatprep.subr.bf16.mxu0 %v2452
    %7321 = vmatpush2.bf16.msra.mxu0 %v2451
    %7322 = vmatprep.subr.bf16.mxu0 %v2444
    %7323 = vmatpush2.bf16.msra.mxu0 %v2443
    %7324 = vmatprep.subr.bf16.mxu0 %v2436
    %7325 = vmatpush2.bf16.msra.mxu0 %v2435
    %7326 = vmatprep.subr.bf16.mxu0 %v2428
    %7327 = vmatpush2.bf16.msra.mxu0 %v2427
    %7328 = vmatprep.subr.bf16.mxu0 %v2420
    %7329 = vmatpush2.bf16.msra.mxu0 %v2419
    %7330 = vmatprep.subr.bf16.mxu0 %v2412
    %7331 = vmatpush2.bf16.msra.mxu0 %v2411
    %7332 = vmatprep.subr.bf16.mxu0 %v2404
    %7333 = vmatpush2.bf16.msra.mxu0 %v2403
    %7334 = vmatprep.mubr.bf16.mxu0 %v7014
    %7335 = vmatmul.mubr.bf16.gmra.mxu0 %v7013
    %v7336 = vpop.f32.mrf.mxu0
    %v7337 = vadd.f32 %v7296, %v7336
    %v7338 = vpop.f32.mrf.mxu0
    %v7339 = vadd.f32 %v7298, %v7338
    %v7340 = vpop.f32.mrf.mxu0
    %v7341 = vpop.f32.mrf.mxu0
    %7342 = vdwg.mxu0
    %v7343 = vxor.u32 %v7091, 2147483648
    %v7344 = vxor.u32 %v7093, 2147483648
    %v7345 = vxor.u32 %v7173, 2147483648
    %v7346 = vxor.u32 %v7175, 2147483648
    %v7347 = vmul.f32 %v7343, 1.442695
    %v7348 = vpow.pop %v7347
    %v7349 = vmul.f32 %v7344, 1.442695
    %v7350 = vpow.pop %v7349
    %v7351 = vmul.f32 %v7345, 1.442695
    %v7352 = vpow.pop %v7351
    %v7353 = vmul.f32 %v7346, 1.442695
    %v7354 = vpow.pop %v7353
    %v7355 = vadd.f32 %v7348, 1.0
    %v7356 = vadd.f32 %v7350, 1.0
    %v7357 = vadd.f32 %v7352, 1.0
    %v7358 = vadd.f32 %v7354, 1.0
    %v7359 = vrcp.pop %v7355
    %v7360 = vmul.f32 1.0, %v7359
    %v7361 = vrcp.pop %v7356
    %v7362 = vmul.f32 1.0, %v7361
    %v7363 = vrcp.pop %v7357
    %v7364 = vmul.f32 1.0, %v7363
    %v7365 = vrcp.pop %v7358
    %v7366 = vmul.f32 1.0, %v7365
    %v7367 = vtanh.pop %v7255
    %v7368 = vtanh.pop %v7257
    %v7369 = vxor.u32 %v7337, 2147483648
    %v7370 = vxor.u32 %v7339, 2147483648
    %v7371 = vmul.f32 %v7369, 1.442695
    %v7372 = vpow.pop %v7371
    %v7373 = vmul.f32 %v7370, 1.442695
    %v7374 = vpow.pop %v7373
    %v7375 = vadd.f32 %v7372, 1.0
    %v7376 = vadd.f32 %v7374, 1.0
    %v7377 = vrcp.pop %v7375
    %v7378 = vmul.f32 1.0, %v7377
    %v7379 = vrcp.pop %v7376
    %v7380 = vmul.f32 1.0, %v7379
    %v7381 = vmul.f32 %v7364, %v6771
    %v7382 = vmul.f32 %v7366, %v6772
    %v7383 = vmul.f32 %v7360, %v7367
    %v7384 = vmul.f32 %v7362, %v7368
    %v7385 = vadd.f32 %v7381, %v7383
    %v7386 = vadd.f32 %v7382, %v7384
    %v7387 = vtanh.pop %v7385
    %v7388 = vtanh.pop %v7386
    %v7389 = vmul.f32 %v7378, %v7387
    %v7390 = vmul.f32 %v7380, %v7388
    %s7391 = smul.u32 7, 2
    %s7392 = smul.addr %s7391, 8
    %s7393 = scalar_lea.vmem [#allocation2], %s7392
    %7394 = vst [vmem:[%s7393] sm:$0xff] %v7389
    %7395 = vst [vmem:[%s7393 + $0x8] sm:$0xff] %v7390
    %7396 = vst [vmem:[#allocation16] sm:$0xff] %v7009
    %7397 = vst [vmem:[#allocation16 + $0x8] sm:$0xff] %v7010
    %s7398 = scalar_lea.vmem [#allocation16], 16
    %7399 = vst [vmem:[%s7398] sm:$0xff] %v7389
    %7400 = vst [vmem:[%s7398 + $0x8] sm:$0xff] %v7390
    %7401 = vst [vmem:[#allocation18] sm:$0xff] %v7005
    %7402 = vst [vmem:[#allocation18 + $0x8] sm:$0xff] %v7006
    %s7403 = scalar_lea.vmem [#allocation18], 16
    %7404 = vst [vmem:[%s7403] sm:$0xff] %v7385
    %7405 = vst [vmem:[%s7403 + $0x8] sm:$0xff] %v7386
    %v7406 = vld [vmem:[#allocation2] sm:$0xff]
    %v7407 = vld [vmem:[#allocation2 + $0x8] sm:$0xff]
    %v7408 = vld [vmem:[#allocation2 + $0x10] sm:$0xff]
    %v7409 = vld [vmem:[#allocation2 + $0x18] sm:$0xff]
    %v7410 = vld [vmem:[#allocation2 + $0x20] sm:$0xff]
    %v7411 = vld [vmem:[#allocation2 + $0x28] sm:$0xff]
    %v7412 = vld [vmem:[#allocation2 + $0x30] sm:$0xff]
    %v7413 = vld [vmem:[#allocation2 + $0x38] sm:$0xff]
    %v7414 = vld [vmem:[#allocation2 + $0x40] sm:$0xff]
    %v7415 = vld [vmem:[#allocation2 + $0x48] sm:$0xff]
    %v7416 = vld [vmem:[#allocation2 + $0x50] sm:$0xff]
    %v7417 = vld [vmem:[#allocation2 + $0x58] sm:$0xff]
    %v7418 = vld [vmem:[#allocation2 + $0x60] sm:$0xff]
    %v7419 = vld [vmem:[#allocation2 + $0x68] sm:$0xff]
    %v7420 = vld [vmem:[#allocation2 + $0x70] sm:$0xff]
    %v7421 = vld [vmem:[#allocation2 + $0x78] sm:$0xff]
    %v7422 = vpack.c.bf16 %v7408, %v7406
    %v7423 = vpack.c.bf16 %v7409, %v7407
    %v7424 = vpack.c.bf16 %v7412, %v7410
    %v7425 = vpack.c.bf16 %v7413, %v7411
    %v7426 = vpack.c.bf16 %v7416, %v7414
    %v7427 = vpack.c.bf16 %v7417, %v7415
    %v7428 = vpack.c.bf16 %v7420, %v7418
    %v7429 = vpack.c.bf16 %v7421, %v7419
    %v7430 = vld [vmem:[#allocation14] sm:$0xff]
    %v7431 = vld [vmem:[#allocation14 + $0x8] sm:$0xff]
    %v7432 = vld [vmem:[#allocation14 + $0x10] sm:$0xff]
    %v7433 = vld [vmem:[#allocation14 + $0x18] sm:$0xff]
    %v7434 = vld [vmem:[#allocation14 + $0x20] sm:$0xff]
    %v7435 = vld [vmem:[#allocation14 + $0x28] sm:$0xff]
    %v7436 = vld [vmem:[#allocation14 + $0x30] sm:$0xff]
    %v7437 = vld [vmem:[#allocation14 + $0x38] sm:$0xff]
    %v7438 = vld [vmem:[#allocation14 + $0x40] sm:$0xff]
    %v7439 = vld [vmem:[#allocation14 + $0x48] sm:$0xff]
    %v7440 = vld [vmem:[#allocation14 + $0x50] sm:$0xff]
    %v7441 = vld [vmem:[#allocation14 + $0x58] sm:$0xff]
    %v7442 = vld [vmem:[#allocation14 + $0x60] sm:$0xff]
    %v7443 = vld [vmem:[#allocation14 + $0x68] sm:$0xff]
    %v7444 = vld [vmem:[#allocation14 + $0x70] sm:$0xff]
    %v7445 = vld [vmem:[#allocation14 + $0x78] sm:$0xff]
    %v7446 = vld [vmem:[#allocation14 + $0x80] sm:$0xff]
    %v7447 = vld [vmem:[#allocation14 + $0x88] sm:$0xff]
    %v7448 = vld [vmem:[#allocation14 + $0x90] sm:$0xff]
    %v7449 = vld [vmem:[#allocation14 + $0x98] sm:$0xff]
    %v7450 = vld [vmem:[#allocation14 + $0xa0] sm:$0xff]
    %v7451 = vld [vmem:[#allocation14 + $0xa8] sm:$0xff]
    %v7452 = vld [vmem:[#allocation14 + $0xb0] sm:$0xff]
    %v7453 = vld [vmem:[#allocation14 + $0xb8] sm:$0xff]
    %v7454 = vld [vmem:[#allocation14 + $0xc0] sm:$0xff]
    %v7455 = vld [vmem:[#allocation14 + $0xc8] sm:$0xff]
    %v7456 = vld [vmem:[#allocation14 + $0xd0] sm:$0xff]
    %v7457 = vld [vmem:[#allocation14 + $0xd8] sm:$0xff]
    %v7458 = vld [vmem:[#allocation14 + $0xe0] sm:$0xff]
    %v7459 = vld [vmem:[#allocation14 + $0xe8] sm:$0xff]
    %v7460 = vld [vmem:[#allocation14 + $0xf0] sm:$0xff]
    %v7461 = vld [vmem:[#allocation14 + $0xf8] sm:$0xff]
    %v7462 = vld [vmem:[#allocation14 + $0x100] sm:$0xff]
    %v7463 = vld [vmem:[#allocation14 + $0x108] sm:$0xff]
    %v7464 = vld [vmem:[#allocation14 + $0x110] sm:$0xff]
    %v7465 = vld [vmem:[#allocation14 + $0x118] sm:$0xff]
    %v7466 = vld [vmem:[#allocation14 + $0x120] sm:$0xff]
    %v7467 = vld [vmem:[#allocation14 + $0x128] sm:$0xff]
    %v7468 = vld [vmem:[#allocation14 + $0x130] sm:$0xff]
    %v7469 = vld [vmem:[#allocation14 + $0x138] sm:$0xff]
    %v7470 = vld [vmem:[#allocation14 + $0x140] sm:$0xff]
    %v7471 = vld [vmem:[#allocation14 + $0x148] sm:$0xff]
    %v7472 = vld [vmem:[#allocation14 + $0x150] sm:$0xff]
    %v7473 = vld [vmem:[#allocation14 + $0x158] sm:$0xff]
    %v7474 = vld [vmem:[#allocation14 + $0x160] sm:$0xff]
    %v7475 = vld [vmem:[#allocation14 + $0x168] sm:$0xff]
    %v7476 = vld [vmem:[#allocation14 + $0x170] sm:$0xff]
    %v7477 = vld [vmem:[#allocation14 + $0x178] sm:$0xff]
    %v7478 = vld [vmem:[#allocation14 + $0x180] sm:$0xff]
    %v7479 = vld [vmem:[#allocation14 + $0x188] sm:$0xff]
    %v7480 = vld [vmem:[#allocation14 + $0x190] sm:$0xff]
    %v7481 = vld [vmem:[#allocation14 + $0x198] sm:$0xff]
    %v7482 = vld [vmem:[#allocation14 + $0x1a0] sm:$0xff]
    %v7483 = vld [vmem:[#allocation14 + $0x1a8] sm:$0xff]
    %v7484 = vld [vmem:[#allocation14 + $0x1b0] sm:$0xff]
    %v7485 = vld [vmem:[#allocation14 + $0x1b8] sm:$0xff]
    %v7486 = vld [vmem:[#allocation14 + $0x1c0] sm:$0xff]
    %v7487 = vld [vmem:[#allocation14 + $0x1c8] sm:$0xff]
    %v7488 = vld [vmem:[#allocation14 + $0x1d0] sm:$0xff]
    %v7489 = vld [vmem:[#allocation14 + $0x1d8] sm:$0xff]
    %v7490 = vld [vmem:[#allocation14 + $0x1e0] sm:$0xff]
    %v7491 = vld [vmem:[#allocation14 + $0x1e8] sm:$0xff]
    %v7492 = vld [vmem:[#allocation14 + $0x1f0] sm:$0xff]
    %v7493 = vld [vmem:[#allocation14 + $0x1f8] sm:$0xff]
    %v7494 = vld [vmem:[%s7] sm:$0xf]
    %v7496 = vlaneseq
    %v7497 = vshrl.u32 %v7496, 7
    %v7498 = vsub.s32 0, %v7497
    %v7499 = vrot.slane %v7494, %v7498
    %v7500 = vlaneseq
    %v7501 = vshrl.u32 %v7500, 7
    %v7502 = vsub.s32 1, %v7501
    %v7503 = vrot.slane %v7494, %v7502
    %v7504 = vlaneseq
    %v7505 = vshrl.u32 %v7504, 7
    %v7506 = vsub.s32 2, %v7505
    %v7507 = vrot.slane %v7494, %v7506
    %v7508 = vlaneseq
    %v7509 = vshrl.u32 %v7508, 7
    %v7510 = vsub.s32 3, %v7509
    %v7511 = vrot.slane %v7494, %v7510
    %v7580 = vunpack.c.l.b16 %v7430
    %v7581 = vunpack.c.h.b16 %v7430
    %v7582 = vunpack.c.l.b16 %v7431
    %v7583 = vunpack.c.h.b16 %v7431
    %v7584 = vunpack.c.l.b16 %v7432
    %v7585 = vunpack.c.h.b16 %v7432
    %v7586 = vunpack.c.l.b16 %v7433
    %v7587 = vunpack.c.h.b16 %v7433
    %v7588 = vunpack.c.l.b16 %v7434
    %v7589 = vunpack.c.h.b16 %v7434
    %v7590 = vunpack.c.l.b16 %v7435
    %v7591 = vunpack.c.h.b16 %v7435
    %v7592 = vunpack.c.l.b16 %v7436
    %v7593 = vunpack.c.h.b16 %v7436
    %v7594 = vunpack.c.l.b16 %v7437
    %v7595 = vunpack.c.h.b16 %v7437
    %v7596 = vunpack.c.l.b16 %v7438
    %v7597 = vunpack.c.h.b16 %v7438
    %v7598 = vunpack.c.l.b16 %v7439
    %v7599 = vunpack.c.h.b16 %v7439
    %v7600 = vunpack.c.l.b16 %v7440
    %v7601 = vunpack.c.h.b16 %v7440
    %v7602 = vunpack.c.l.b16 %v7441
    %v7603 = vunpack.c.h.b16 %v7441
    %v7604 = vunpack.c.l.b16 %v7442
    %v7605 = vunpack.c.h.b16 %v7442
    %v7606 = vunpack.c.l.b16 %v7443
    %v7607 = vunpack.c.h.b16 %v7443
    %v7608 = vunpack.c.l.b16 %v7444
    %v7609 = vunpack.c.h.b16 %v7444
    %v7610 = vunpack.c.l.b16 %v7445
    %v7611 = vunpack.c.h.b16 %v7445
    %v7612 = vunpack.c.l.b16 %v7446
    %v7613 = vunpack.c.h.b16 %v7446
    %v7614 = vunpack.c.l.b16 %v7447
    %v7615 = vunpack.c.h.b16 %v7447
    %v7616 = vunpack.c.l.b16 %v7448
    %v7617 = vunpack.c.h.b16 %v7448
    %v7618 = vunpack.c.l.b16 %v7449
    %v7619 = vunpack.c.h.b16 %v7449
    %v7620 = vunpack.c.l.b16 %v7450
    %v7621 = vunpack.c.h.b16 %v7450
    %v7622 = vunpack.c.l.b16 %v7451
    %v7623 = vunpack.c.h.b16 %v7451
    %v7624 = vunpack.c.l.b16 %v7452
    %v7625 = vunpack.c.h.b16 %v7452
    %v7626 = vunpack.c.l.b16 %v7453
    %v7627 = vunpack.c.h.b16 %v7453
    %v7628 = vunpack.c.l.b16 %v7454
    %v7629 = vunpack.c.h.b16 %v7454
    %v7630 = vunpack.c.l.b16 %v7455
    %v7631 = vunpack.c.h.b16 %v7455
    %v7632 = vunpack.c.l.b16 %v7456
    %v7633 = vunpack.c.h.b16 %v7456
    %v7634 = vunpack.c.l.b16 %v7457
    %v7635 = vunpack.c.h.b16 %v7457
    %v7636 = vunpack.c.l.b16 %v7458
    %v7637 = vunpack.c.h.b16 %v7458
    %v7638 = vunpack.c.l.b16 %v7459
    %v7639 = vunpack.c.h.b16 %v7459
    %v7640 = vunpack.c.l.b16 %v7460
    %v7641 = vunpack.c.h.b16 %v7460
    %v7642 = vunpack.c.l.b16 %v7461
    %v7643 = vunpack.c.h.b16 %v7461
    %v7644 = vunpack.c.l.b16 %v7462
    %v7645 = vunpack.c.h.b16 %v7462
    %v7646 = vunpack.c.l.b16 %v7463
    %v7647 = vunpack.c.h.b16 %v7463
    %v7648 = vunpack.c.l.b16 %v7464
    %v7649 = vunpack.c.h.b16 %v7464
    %v7650 = vunpack.c.l.b16 %v7465
    %v7651 = vunpack.c.h.b16 %v7465
    %v7652 = vunpack.c.l.b16 %v7466
    %v7653 = vunpack.c.h.b16 %v7466
    %v7654 = vunpack.c.l.b16 %v7467
    %v7655 = vunpack.c.h.b16 %v7467
    %v7656 = vunpack.c.l.b16 %v7468
    %v7657 = vunpack.c.h.b16 %v7468
    %v7658 = vunpack.c.l.b16 %v7469
    %v7659 = vunpack.c.h.b16 %v7469
    %v7660 = vunpack.c.l.b16 %v7470
    %v7661 = vunpack.c.h.b16 %v7470
    %v7662 = vunpack.c.l.b16 %v7471
    %v7663 = vunpack.c.h.b16 %v7471
    %v7664 = vunpack.c.l.b16 %v7472
    %v7665 = vunpack.c.h.b16 %v7472
    %v7666 = vunpack.c.l.b16 %v7473
    %v7667 = vunpack.c.h.b16 %v7473
    %v7668 = vunpack.c.l.b16 %v7474
    %v7669 = vunpack.c.h.b16 %v7474
    %v7670 = vunpack.c.l.b16 %v7475
    %v7671 = vunpack.c.h.b16 %v7475
    %v7672 = vunpack.c.l.b16 %v7476
    %v7673 = vunpack.c.h.b16 %v7476
    %v7674 = vunpack.c.l.b16 %v7477
    %v7675 = vunpack.c.h.b16 %v7477
    %v7676 = vunpack.c.l.b16 %v7478
    %v7677 = vunpack.c.h.b16 %v7478
    %v7678 = vunpack.c.l.b16 %v7479
    %v7679 = vunpack.c.h.b16 %v7479
    %v7680 = vunpack.c.l.b16 %v7480
    %v7681 = vunpack.c.h.b16 %v7480
    %v7682 = vunpack.c.l.b16 %v7481
    %v7683 = vunpack.c.h.b16 %v7481
    %v7684 = vunpack.c.l.b16 %v7482
    %v7685 = vunpack.c.h.b16 %v7482
    %v7686 = vunpack.c.l.b16 %v7483
    %v7687 = vunpack.c.h.b16 %v7483
    %v7688 = vunpack.c.l.b16 %v7484
    %v7689 = vunpack.c.h.b16 %v7484
    %v7690 = vunpack.c.l.b16 %v7485
    %v7691 = vunpack.c.h.b16 %v7485
    %v7692 = vunpack.c.l.b16 %v7486
    %v7693 = vunpack.c.h.b16 %v7486
    %v7694 = vunpack.c.l.b16 %v7487
    %v7695 = vunpack.c.h.b16 %v7487
    %v7696 = vunpack.c.l.b16 %v7488
    %v7697 = vunpack.c.h.b16 %v7488
    %v7698 = vunpack.c.l.b16 %v7489
    %v7699 = vunpack.c.h.b16 %v7489
    %v7700 = vunpack.c.l.b16 %v7490
    %v7701 = vunpack.c.h.b16 %v7490
    %v7702 = vunpack.c.l.b16 %v7491
    %v7703 = vunpack.c.h.b16 %v7491
    %v7704 = vunpack.c.l.b16 %v7492
    %v7705 = vunpack.c.h.b16 %v7492
    %v7706 = vunpack.c.l.b16 %v7493
    %v7707 = vunpack.c.h.b16 %v7493
    %v7708 = vpack.c.b16 %v7584, %v7580
    %v7709 = vpack.c.b16 %v7585, %v7581
    %v7710 = vpack.c.b16 %v7586, %v7582
    %v7711 = vpack.c.b16 %v7587, %v7583
    %v7712 = vpack.c.b16 %v7592, %v7588
    %v7713 = vpack.c.b16 %v7593, %v7589
    %v7714 = vpack.c.b16 %v7594, %v7590
    %v7715 = vpack.c.b16 %v7595, %v7591
    %v7716 = vpack.c.b16 %v7600, %v7596
    %v7717 = vpack.c.b16 %v7601, %v7597
    %v7718 = vpack.c.b16 %v7602, %v7598
    %v7719 = vpack.c.b16 %v7603, %v7599
    %v7720 = vpack.c.b16 %v7608, %v7604
    %v7721 = vpack.c.b16 %v7609, %v7605
    %v7722 = vpack.c.b16 %v7610, %v7606
    %v7723 = vpack.c.b16 %v7611, %v7607
    %v7724 = vpack.c.b16 %v7616, %v7612
    %v7725 = vpack.c.b16 %v7617, %v7613
    %v7726 = vpack.c.b16 %v7618, %v7614
    %v7727 = vpack.c.b16 %v7619, %v7615
    %v7728 = vpack.c.b16 %v7624, %v7620
    %v7729 = vpack.c.b16 %v7625, %v7621
    %v7730 = vpack.c.b16 %v7626, %v7622
    %v7731 = vpack.c.b16 %v7627, %v7623
    %v7732 = vpack.c.b16 %v7632, %v7628
    %v7733 = vpack.c.b16 %v7633, %v7629
    %v7734 = vpack.c.b16 %v7634, %v7630
    %v7735 = vpack.c.b16 %v7635, %v7631
    %v7736 = vpack.c.b16 %v7640, %v7636
    %v7737 = vpack.c.b16 %v7641, %v7637
    %v7738 = vpack.c.b16 %v7642, %v7638
    %v7739 = vpack.c.b16 %v7643, %v7639
    %v7740 = vpack.c.b16 %v7648, %v7644
    %v7741 = vpack.c.b16 %v7649, %v7645
    %v7742 = vpack.c.b16 %v7650, %v7646
    %v7743 = vpack.c.b16 %v7651, %v7647
    %v7744 = vpack.c.b16 %v7656, %v7652
    %v7745 = vpack.c.b16 %v7657, %v7653
    %v7746 = vpack.c.b16 %v7658, %v7654
    %v7747 = vpack.c.b16 %v7659, %v7655
    %v7748 = vpack.c.b16 %v7664, %v7660
    %v7749 = vpack.c.b16 %v7665, %v7661
    %v7750 = vpack.c.b16 %v7666, %v7662
    %v7751 = vpack.c.b16 %v7667, %v7663
    %v7752 = vpack.c.b16 %v7672, %v7668
    %v7753 = vpack.c.b16 %v7673, %v7669
    %v7754 = vpack.c.b16 %v7674, %v7670
    %v7755 = vpack.c.b16 %v7675, %v7671
    %v7756 = vpack.c.b16 %v7680, %v7676
    %v7757 = vpack.c.b16 %v7681, %v7677
    %v7758 = vpack.c.b16 %v7682, %v7678
    %v7759 = vpack.c.b16 %v7683, %v7679
    %v7760 = vpack.c.b16 %v7688, %v7684
    %v7761 = vpack.c.b16 %v7689, %v7685
    %v7762 = vpack.c.b16 %v7690, %v7686
    %v7763 = vpack.c.b16 %v7691, %v7687
    %v7764 = vpack.c.b16 %v7696, %v7692
    %v7765 = vpack.c.b16 %v7697, %v7693
    %v7766 = vpack.c.b16 %v7698, %v7694
    %v7767 = vpack.c.b16 %v7699, %v7695
    %v7768 = vpack.c.b16 %v7704, %v7700
    %v7769 = vpack.c.b16 %v7705, %v7701
    %v7770 = vpack.c.b16 %v7706, %v7702
    %v7771 = vpack.c.b16 %v7707, %v7703
    %7836 = vmatprep.subr.bf16.mxu0 %v7737
    %7837 = vmatpush1.bf16.msra.mxu0 %v7736
    %7838 = vmatprep.subr.bf16.mxu0 %v7733
    %7839 = vmatpush1.bf16.msra.mxu0 %v7732
    %7840 = vmatprep.subr.bf16.mxu0 %v7729
    %7841 = vmatpush1.bf16.msra.mxu0 %v7728
    %7842 = vmatprep.subr.bf16.mxu0 %v7725
    %7843 = vmatpush1.bf16.msra.mxu0 %v7724
    %7844 = vmatprep.subr.bf16.mxu0 %v7721
    %7845 = vmatpush1.bf16.msra.mxu0 %v7720
    %7846 = vmatprep.subr.bf16.mxu0 %v7717
    %7847 = vmatpush1.bf16.msra.mxu0 %v7716
    %7848 = vmatprep.subr.bf16.mxu0 %v7713
    %7849 = vmatpush1.bf16.msra.mxu0 %v7712
    %7850 = vmatprep.subr.bf16.mxu0 %v7709
    %7851 = vmatpush1.bf16.msra.mxu0 %v7708
    %7852 = vmatprep.subr.bf16.mxu0 %v7769
    %7853 = vmatpush2.bf16.msra.mxu0 %v7768
    %7854 = vmatprep.subr.bf16.mxu0 %v7765
    %7855 = vmatpush2.bf16.msra.mxu0 %v7764
    %7856 = vmatprep.subr.bf16.mxu0 %v7761
    %7857 = vmatpush2.bf16.msra.mxu0 %v7760
    %7858 = vmatprep.subr.bf16.mxu0 %v7757
    %7859 = vmatpush2.bf16.msra.mxu0 %v7756
    %7860 = vmatprep.subr.bf16.mxu0 %v7753
    %7861 = vmatpush2.bf16.msra.mxu0 %v7752
    %7862 = vmatprep.subr.bf16.mxu0 %v7749
    %7863 = vmatpush2.bf16.msra.mxu0 %v7748
    %7864 = vmatprep.subr.bf16.mxu0 %v7745
    %7865 = vmatpush2.bf16.msra.mxu0 %v7744
    %7866 = vmatprep.subr.bf16.mxu0 %v7741
    %7867 = vmatpush2.bf16.msra.mxu0 %v7740
    %7868 = vmatprep.mubr.bf16.mxu0 %v7423
    %7869 = vmatmul.mubr.bf16.gmra.mxu0 %v7422
    %v7870 = vpop.f32.mrf.mxu0
    %v7871 = vadd.f32 %v7499, %v7870
    %v7872 = vpop.f32.mrf.mxu0
    %v7873 = vadd.f32 %v7503, %v7872
    %v7874 = vpop.f32.mrf.mxu0
    %v7875 = vadd.f32 %v7499, %v7874
    %v7876 = vpop.f32.mrf.mxu0
    %v7877 = vadd.f32 %v7503, %v7876
    %7878 = vmatprep.mubr.bf16.mxu0 %v7425
    %7879 = vmatmul.mubr.bf16.gmra.mxu0 %v7424
    %v7880 = vpop.f32.mrf.mxu0
    %v7881 = vadd.f32 %v7499, %v7880
    %v7882 = vpop.f32.mrf.mxu0
    %v7883 = vadd.f32 %v7503, %v7882
    %v7884 = vpop.f32.mrf.mxu0
    %v7885 = vadd.f32 %v7499, %v7884
    %v7886 = vpop.f32.mrf.mxu0
    %v7887 = vadd.f32 %v7503, %v7886
    %7888 = vmatprep.mubr.bf16.mxu0 %v7427
    %7889 = vmatmul.mubr.bf16.gmra.mxu0 %v7426
    %v7890 = vpop.f32.mrf.mxu0
    %v7891 = vadd.f32 %v7499, %v7890
    %v7892 = vpop.f32.mrf.mxu0
    %v7893 = vadd.f32 %v7503, %v7892
    %v7894 = vpop.f32.mrf.mxu0
    %v7895 = vadd.f32 %v7499, %v7894
    %v7896 = vpop.f32.mrf.mxu0
    %v7897 = vadd.f32 %v7503, %v7896
    %7898 = vmatprep.mubr.bf16.mxu0 %v7429
    %7899 = vmatmul.mubr.bf16.gmra.mxu0 %v7428
    %v7900 = vpop.f32.mrf.mxu0
    %v7901 = vadd.f32 %v7499, %v7900
    %v7902 = vpop.f32.mrf.mxu0
    %v7903 = vadd.f32 %v7503, %v7902
    %v7904 = vpop.f32.mrf.mxu0
    %v7905 = vadd.f32 %v7499, %v7904
    %v7906 = vpop.f32.mrf.mxu0
    %v7907 = vadd.f32 %v7503, %v7906
    %7908 = vdwg.mxu0
    %7909 = vmatprep.subr.bf16.mxu0 %v7739
    %7910 = vmatpush1.bf16.msra.mxu0 %v7738
    %7911 = vmatprep.subr.bf16.mxu0 %v7735
    %7912 = vmatpush1.bf16.msra.mxu0 %v7734
    %7913 = vmatprep.subr.bf16.mxu0 %v7731
    %7914 = vmatpush1.bf16.msra.mxu0 %v7730
    %7915 = vmatprep.subr.bf16.mxu0 %v7727
    %7916 = vmatpush1.bf16.msra.mxu0 %v7726
    %7917 = vmatprep.subr.bf16.mxu0 %v7723
    %7918 = vmatpush1.bf16.msra.mxu0 %v7722
    %7919 = vmatprep.subr.bf16.mxu0 %v7719
    %7920 = vmatpush1.bf16.msra.mxu0 %v7718
    %7921 = vmatprep.subr.bf16.mxu0 %v7715
    %7922 = vmatpush1.bf16.msra.mxu0 %v7714
    %7923 = vmatprep.subr.bf16.mxu0 %v7711
    %7924 = vmatpush1.bf16.msra.mxu0 %v7710
    %7925 = vmatprep.subr.bf16.mxu0 %v7771
    %7926 = vmatpush2.bf16.msra.mxu0 %v7770
    %7927 = vmatprep.subr.bf16.mxu0 %v7767
    %7928 = vmatpush2.bf16.msra.mxu0 %v7766
    %7929 = vmatprep.subr.bf16.mxu0 %v7763
    %7930 = vmatpush2.bf16.msra.mxu0 %v7762
    %7931 = vmatprep.subr.bf16.mxu0 %v7759
    %7932 = vmatpush2.bf16.msra.mxu0 %v7758
    %7933 = vmatprep.subr.bf16.mxu0 %v7755
    %7934 = vmatpush2.bf16.msra.mxu0 %v7754
    %7935 = vmatprep.subr.bf16.mxu0 %v7751
    %7936 = vmatpush2.bf16.msra.mxu0 %v7750
    %7937 = vmatprep.subr.bf16.mxu0 %v7747
    %7938 = vmatpush2.bf16.msra.mxu0 %v7746
    %7939 = vmatprep.subr.bf16.mxu0 %v7743
    %7940 = vmatpush2.bf16.msra.mxu0 %v7742
    %7941 = vmatprep.mubr.bf16.mxu0 %v7423
    %7942 = vmatmul.mubr.bf16.gmra.mxu0 %v7422
    %v7943 = vpop.f32.mrf.mxu0
    %v7944 = vadd.f32 %v7507, %v7943
    %v7945 = vpop.f32.mrf.mxu0
    %v7946 = vadd.f32 %v7511, %v7945
    %v7947 = vpop.f32.mrf.mxu0
    %v7948 = vadd.f32 %v7507, %v7947
    %v7949 = vpop.f32.mrf.mxu0
    %v7950 = vadd.f32 %v7511, %v7949
    %7951 = vmatprep.mubr.bf16.mxu0 %v7425
    %7952 = vmatmul.mubr.bf16.gmra.mxu0 %v7424
    %v7953 = vpop.f32.mrf.mxu0
    %v7954 = vadd.f32 %v7507, %v7953
    %v7955 = vpop.f32.mrf.mxu0
    %v7956 = vadd.f32 %v7511, %v7955
    %v7957 = vpop.f32.mrf.mxu0
    %v7958 = vadd.f32 %v7507, %v7957
    %v7959 = vpop.f32.mrf.mxu0
    %v7960 = vadd.f32 %v7511, %v7959
    %7961 = vmatprep.mubr.bf16.mxu0 %v7427
    %7962 = vmatmul.mubr.bf16.gmra.mxu0 %v7426
    %v7963 = vpop.f32.mrf.mxu0
    %v7964 = vadd.f32 %v7507, %v7963
    %v7965 = vpop.f32.mrf.mxu0
    %v7966 = vadd.f32 %v7511, %v7965
    %v7967 = vpop.f32.mrf.mxu0
    %v7968 = vadd.f32 %v7507, %v7967
    %v7969 = vpop.f32.mrf.mxu0
    %v7970 = vadd.f32 %v7511, %v7969
    %7971 = vmatprep.mubr.bf16.mxu0 %v7429
    %7972 = vmatmul.mubr.bf16.gmra.mxu0 %v7428
    %v7973 = vpop.f32.mrf.mxu0
    %v7974 = vadd.f32 %v7507, %v7973
    %v7975 = vpop.f32.mrf.mxu0
    %v7976 = vadd.f32 %v7511, %v7975
    %v7977 = vpop.f32.mrf.mxu0
    %v7978 = vadd.f32 %v7507, %v7977
    %v7979 = vpop.f32.mrf.mxu0
    %v7980 = vadd.f32 %v7511, %v7979
    %7981 = vdwg.mxu0
    %7982 = vst [vmem:[#allocation15] sm:$0xff] %v7871
    %7983 = vst [vmem:[#allocation15 + $0x8] sm:$0xff] %v7873
    %7984 = vst [vmem:[#allocation15 + $0x10] sm:$0xff] %v7944
    %7985 = vst [vmem:[#allocation15 + $0x18] sm:$0xff] %v7946
    %7986 = vst [vmem:[#allocation15 + $0x20] sm:$0xff] %v7875
    %7987 = vst [vmem:[#allocation15 + $0x28] sm:$0xff] %v7877
    %7988 = vst [vmem:[#allocation15 + $0x30] sm:$0xff] %v7948
    %7989 = vst [vmem:[#allocation15 + $0x38] sm:$0xff] %v7950
    %7990 = vst [vmem:[#allocation15 + $0x40] sm:$0xff] %v7881
    %7991 = vst [vmem:[#allocation15 + $0x48] sm:$0xff] %v7883
    %7992 = vst [vmem:[#allocation15 + $0x50] sm:$0xff] %v7954
    %7993 = vst [vmem:[#allocation15 + $0x58] sm:$0xff] %v7956
    %7994 = vst [vmem:[#allocation15 + $0x60] sm:$0xff] %v7885
    %7995 = vst [vmem:[#allocation15 + $0x68] sm:$0xff] %v7887
    %7996 = vst [vmem:[#allocation15 + $0x70] sm:$0xff] %v7958
    %7997 = vst [vmem:[#allocation15 + $0x78] sm:$0xff] %v7960
    %7998 = vst [vmem:[#allocation15 + $0x80] sm:$0xff] %v7891
    %7999 = vst [vmem:[#allocation15 + $0x88] sm:$0xff] %v7893
    %8000 = vst [vmem:[#allocation15 + $0x90] sm:$0xff] %v7964
    %8001 = vst [vmem:[#allocation15 + $0x98] sm:$0xff] %v7966
    %8002 = vst [vmem:[#allocation15 + $0xa0] sm:$0xff] %v7895
    %8003 = vst [vmem:[#allocation15 + $0xa8] sm:$0xff] %v7897
    %8004 = vst [vmem:[#allocation15 + $0xb0] sm:$0xff] %v7968
    %8005 = vst [vmem:[#allocation15 + $0xb8] sm:$0xff] %v7970
    %8006 = vst [vmem:[#allocation15 + $0xc0] sm:$0xff] %v7901
    %8007 = vst [vmem:[#allocation15 + $0xc8] sm:$0xff] %v7903
    %8008 = vst [vmem:[#allocation15 + $0xd0] sm:$0xff] %v7974
    %8009 = vst [vmem:[#allocation15 + $0xd8] sm:$0xff] %v7976
    %8010 = vst [vmem:[#allocation15 + $0xe0] sm:$0xff] %v7905
    %8011 = vst [vmem:[#allocation15 + $0xe8] sm:$0xff] %v7907
    %8012 = vst [vmem:[#allocation15 + $0xf0] sm:$0xff] %v7978
    %8013 = vst [vmem:[#allocation15 + $0xf8] sm:$0xff] %v7980
    // Predicated region
    $region62: #{tpu_custom_call.1} parent=1 // pred_check
      _
    $region63: #{tpu_custom_call.1} parent=1 // pred_check_branch
      %8015 = sbr.rel (0) target = $region65
    $region64: #{tpu_custom_call.1} parent=1 // pred_region
      %s8017 = ssub.s32 4096, 4096
      %8018 = vsyncadd [#allocation5], %s8017
      %s8019 = sshll.u32 [#allocation15], 4
      %s8020 = int_to_ptr.vmem [resolvable:$true] %s8019
      %8025 = dma.vmem_to_hbm [thread:$0]  %s8020, 4096, %s8, [#allocation5], 512, 512, 32
    $region65: #{tpu_custom_call.1} parent=1 // pred_fallthru
      _
    // Predicated region
    $region66: #{tpu_custom_call.1} parent=1 // pred_check
      _
    $region67: #{tpu_custom_call.1} parent=1 // pred_check_branch
      %8027 = sbr.rel (0) target = $region69
    $region68: #{tpu_custom_call.1} parent=1 // pred_region
      %s8029 = ssub.s32 512, 512
      %8030 = vsyncadd [#allocation17], %s8029
      %s8031 = sshll.u32 [#allocation16], 4
      %s8032 = int_to_ptr.vmem [resolvable:$true] %s8031
      %8037 = dma.vmem_to_hbm [thread:$0]  %s8032, 512, %s9, [#allocation17], 256, 256, 16
    $region69: #{tpu_custom_call.1} parent=1 // pred_fallthru
      _
    // Predicated region
    $region70: #{tpu_custom_call.1} parent=1 // pred_check
      _
    $region71: #{tpu_custom_call.1} parent=1 // pred_check_branch
      %8039 = sbr.rel (0) target = $region73
    $region72: #{tpu_custom_call.1} parent=1 // pred_region
      %s8041 = ssub.s32 512, 512
      %8042 = vsyncadd [#allocation17], %s8041
      %s8043 = sshll.u32 [#allocation18], 4
      %s8044 = int_to_ptr.vmem [resolvable:$true] %s8043
      %8049 = dma.vmem_to_hbm [thread:$0]  %s8044, 512, %s10, [#allocation17], 256, 256, 16
    $region73: #{tpu_custom_call.1} parent=1 // pred_fallthru
      _
    // Predicated region
    $region74: #{tpu_custom_call.1} parent=1 // pred_check
      _
    $region75: #{tpu_custom_call.1} parent=1 // pred_check_branch
      %8051 = sbr.rel (0) target = $region77
    $region76: #{tpu_custom_call.1} parent=1 // pred_region
      %8052 = dma.done [#allocation5], 4096
    $region77: #{tpu_custom_call.1} parent=1 // pred_fallthru
      _
    // Predicated region
    $region78: #{tpu_custom_call.1} parent=1 // pred_check
      _
    $region79: #{tpu_custom_call.1} parent=1 // pred_check_branch
      %8054 = sbr.rel (0) target = $region81
    $region80: #{tpu_custom_call.1} parent=1 // pred_region
      %8055 = dma.done [#allocation17], 512
    $region81: #{tpu_custom_call.1} parent=1 // pred_fallthru
      _
    // Predicated region
    $region82: #{tpu_custom_call.1} parent=1 // pred_check
      _
    $region83: #{tpu_custom_call.1} parent=1 // pred_check_branch
      %8057 = sbr.rel (0) target = $region85
    $region84: #{tpu_custom_call.1} parent=1 // pred_region
      %8058 = dma.done [#allocation17], 512
    $region85: #{tpu_custom_call.1} parent=1 // pred_fallthru
      _
    %8059 = vsyncpa [#allocation4], 1
    %8060 = vsyncpa [#allocation7], 1
    %8061 = vsyncpa [#allocation10], 1
    %8062 = vsyncpa [#allocation13], 1
    %8063 = vsyncpa [#allocation5], 1
    %8064 = vsyncpa [#allocation17], 1

</llo_original>
